<compile_context>
chip_gen: v7x
topology: tpu7x:2x2x1
jax: 0.10.0
libtpu: 0.0.40
codegen_flags: <defaults>
</compile_context>

<pallas_src>
import functools

import jax
import jax.numpy as jnp
from jax import lax
from jax.experimental import pallas as pl
from jax.experimental.pallas import tpu as pltpu

DIM = 512
L = 360        # (360-5)//2+1 = 178 -> (178-3)//2+1 = 88 -> 32*88 = 2816
T1 = 178
T2 = 88


# ------------------------------ fused kernel -------------------------------

def _fused_kernel(x_ref, vec_ref, w1_ref, b1_ref, w2_ref, b2_ref,
                  w3_ref, b3_ref, w4a_ref, w4b_ref, b4_ref,
                  o_ref, h1e_s, h1o_s, h2_s, flat_s, *, tb):
    # ---- conv1: Conv1d(1,32,5,stride=2) as 5 VPU broadcast-FMAs -------------
    # x_ref is the laser row split into 4 phases: x_ref[b, p, m] = laser[b, 4m+p].
    # even outputs t1=2*te need laser[4*te + k]; odd t1=2*to+1 need laser[4*to+2+k].
    ev_taps = ((0, 0), (1, 0), (2, 0), (3, 0), (0, 1))   # (phase, offset) per k
    od_taps = ((2, 0), (3, 0), (0, 1), (1, 1), (2, 1))
    h1e = b1_ref[...]                                    # (1, 32) -> broadcasts
    h1o = b1_ref[...]
    for k in range(5):
        wk = w1_ref[k:k + 1, :]                          # (1, 32)
        pe, ae = ev_taps[k]
        h1e = h1e + x_ref[:, pe, ae:ae + 89][:, :, None] * wk
        po, ao = od_taps[k]
        h1o = h1o + x_ref[:, po, ao:ao + 89][:, :, None] * wk
    h1e_s[...] = h1e                                     # (tb, 89, 32) time-major
    h1o_s[...] = h1o

    # ---- conv2: Conv1d(32,32,3,stride=2) as 3 small MXU dots per row --------
    # h1 slices at times 2t (even), 2t+1 (odd), 2t+2 (even, shifted) are
    # contiguous thanks to the parity-split h1 layout.
    taps2 = ((0, h1e_s, 0), (1, h1o_s, 0), (2, h1e_s, 1))
    for b in range(tb):
        acc = b2_ref[...]                                # (1, 32)
        for k, src, a in taps2:
            s = src[b, a:a + T2, :]                      # (88, 32)
            acc = acc + jnp.dot(s, w2_ref[k],
                                preferred_element_type=jnp.float32)
        h2_s[b, :, :] = acc                              # (88, 32)

    # ---- flatten: scatter (tb, 88, 32) into a lane-dense (tb, 2816) slab ----
    # torch's channel-major x.view(B,-1) is matched by the row-permuted w3.
    for tt in range(T2):
        flat_s[:, tt * 32:(tt + 1) * 32] = h2_s[:, tt, :]

    # ---- fc_1d: (tb, 2816) @ (2816, 512) + ReLU -----------------------------
    h = jnp.dot(flat_s[...], w3_ref[...], preferred_element_type=jnp.float32)
    h = jnp.maximum(h + b3_ref[...], 0.0)

    # ---- fc: concat([h, vec]) @ w4.T + b4, ReLU -----------------------------
    y = jnp.dot(h, w4a_ref[...], preferred_element_type=jnp.float32)
    y = y + b4_ref[...]
    for i in range(3):                                   # vec @ w4b as VPU FMAs
        y = y + vec_ref[:, i:i + 1] * w4b_ref[i:i + 1, :]
    o_ref[...] = jnp.maximum(y, 0.0).astype(o_ref.dtype)


# ------------------------------ wrappers ------------------------------------

def prepare_params(params):
    """One-time weight re-layout (do NOT call per forward)."""
    w1p = jnp.transpose(params['w1'], (2, 1, 0)).reshape(5, 32)    # [k, cout]
    w2p = jnp.transpose(params['w2'], (2, 1, 0))                   # [k, cin, cout]
    # w3 rows reordered so a time-major flatten (t*32 + c) matches torch's
    # channel-major flatten (c*88 + t).
    w3t = params['w3'].T                                           # (2816, 512)
    w3p = w3t.reshape(32, T2, w3t.shape[1]).transpose(1, 0, 2).reshape(
        32 * T2, w3t.shape[1])
    dim = params['w4'].shape[0]
    return {
        'w1': w1p, 'b1': params['b1'].reshape(1, 32),
        'w2': w2p, 'b2': params['b2'].reshape(1, 32),
        'w3': w3p, 'b3': params['b3'].reshape(1, 512),
        'w4a': params['w4'][:, :512].T,                            # (512, dim)
        'w4b': params['w4'][:, 512:515].T,                         # (3, dim)
        'b4': params['b4'].reshape(1, dim),
    }


@jax.jit
def forward(prep, laser, vector):
    B = laser.shape[0]
    dim = prep['w4a'].shape[1]

    # Tiny layout glue kept in XLA (a few hundred floats): phase-split laser
    # so the stride-2 conv taps become contiguous slices inside the kernel.
    x4 = laser.reshape(B, 90, 4).transpose(0, 2, 1)                # (B, 4, 90)
    vec = vector[:, 0:3]

    # Batch tiling: weights stay VMEM-resident across tiles, activations pipeline.
    if B <= 8:
        tb, bp = B, B
    else:
        tb = 8
        bp = ((B + 7) // 8) * 8
        if bp != B:
            x4 = jnp.pad(x4, ((0, bp - B), (0, 0), (0, 0)))
            vec = jnp.pad(vec, ((0, bp - B), (0, 0)))

    out = pl.pallas_call(
        functools.partial(_fused_kernel, tb=tb),
        out_shape=jax.ShapeDtypeStruct((bp, dim), jnp.float32),
        grid=(bp // tb,),
        in_specs=[
            pl.BlockSpec((tb, 4, 90), lambda i: (i, 0, 0)),        # laser phases
            pl.BlockSpec((tb, 3), lambda i: (i, 0)),               # vector[:, :3]
            pl.BlockSpec((5, 32), lambda i: (0, 0)),               # w1
            pl.BlockSpec((1, 32), lambda i: (0, 0)),               # b1
            pl.BlockSpec((3, 32, 32), lambda i: (0, 0, 0)),        # w2
            pl.BlockSpec((1, 32), lambda i: (0, 0)),               # b2
            pl.BlockSpec((32 * T2, 512), lambda i: (0, 0)),        # w3 (permuted)
            pl.BlockSpec((1, 512), lambda i: (0, 0)),              # b3
            pl.BlockSpec((512, dim), lambda i: (0, 0)),            # w4a
            pl.BlockSpec((3, dim), lambda i: (0, 0)),              # w4b
            pl.BlockSpec((1, dim), lambda i: (0, 0)),              # b4
        ],
        out_specs=pl.BlockSpec((tb, dim), lambda i: (i, 0)),
        scratch_shapes=[
            pltpu.VMEM((tb, 89, 32), jnp.float32),                 # h1 even times
            pltpu.VMEM((tb, 89, 32), jnp.float32),                 # h1 odd times
            pltpu.VMEM((tb, T2, 32), jnp.float32),                 # h2
            pltpu.VMEM((tb, 32 * T2), jnp.float32),                # flat
        ],
        compiler_params=pltpu.CompilerParams(
            dimension_semantics=("parallel",),
            vmem_limit_bytes=28 * 1024 * 1024),
    )(x4, vec, prep['w1'], prep['b1'], prep['w2'], prep['b2'],
      prep['w3'], prep['b3'], prep['w4a'], prep['w4b'], prep['b4'])
    return out[:B]


# ------------------------------ reference -----------------------------------

def reference(params, laser, vector):
    """Pure-JAX reference matching the PyTorch forward."""
    vec = vector[:, 0:3]
    dn1 = lax.conv_dimension_numbers(laser.shape, params['w1'].shape,
                                     ('NCH', 'OIH', 'NCH'))
    x = lax.conv_general_dilated(laser, params['w1'], (2,), 'VALID',
                                 dimension_numbers=dn1)
    x = x + params['b1'][None, :, None]
    dn2 = lax.conv_dimension_numbers(x.shape, params['w2'].shape,
                                     ('NCH', 'OIH', 'NCH'))
    x = lax.conv_general_dilated(x, params['w2'], (2,), 'VALID',
                                 dimension_numbers=dn2)
    x = x + params['b2'][None, :, None]
    flat = x.reshape(x.shape[0], -1)
    h = jnp.maximum(flat @ params['w3'].T + params['b3'], 0.0)
    cat = jnp.concatenate([h, vec], axis=1)
    return jnp.maximum(cat @ params['w4'].T + params['b4'], 0.0)


def init_params(key, dim=DIM):
    ks = jax.random.split(key, 8)

    def u(k, shape, fan_in):
        bound = 1.0 / jnp.sqrt(jnp.float32(fan_in))
        return jax.random.uniform(k, shape, jnp.float32, -bound, bound)

    return {
        'w1': u(ks[0], (32, 1, 5), 1 * 5),        # Conv1d(1, 32, 5)
        'b1': u(ks[1], (32,), 1 * 5),
        'w2': u(ks[2], (32, 32, 3), 32 * 3),      # Conv1d(32, 32, 3)
        'b2': u(ks[3], (32,), 32 * 3),
        'w3': u(ks[4], (512, 2816), 2816),        # Linear(2816, 512)
        'b3': u(ks[5], (512,), 2816),
        'w4': u(ks[6], (dim, 515), 515),          # Linear(515, dim)
        'b4': u(ks[7], (dim,), 515),
    }


if __name__ == "__main__":
    key = jax.random.PRNGKey(0)
    kp, kl, kv = jax.random.split(key, 3)
    params = init_params(kp)
    prep = prepare_params(params)

    B = 2
    laser = jax.random.normal(kl, (B, 1, L), jnp.float32)     # states[0]
    vector = jax.random.normal(kv, (B, 5), jnp.float32)       # states[1]

    out = jax.block_until_ready(forward(prep, laser, vector))
    ref = reference(params, laser, vector)

    assert out.shape == (B, DIM), out.shape
    max_err = float(jnp.max(jnp.abs(out - ref)))
    assert jnp.allclose(out, ref, atol=2e-3, rtol=2e-3), max_err
    print("KERNEL_OK")
</pallas_src>

<mosaic_0001>
module attributes {stable_mosaic.version = 11 : i64} {
  func.func @_fused_kernel(%arg0: i32, %arg1: memref<2x4x90xf32, #tpu.memory_space<vmem>>, %arg2: memref<2x3xf32, #tpu.memory_space<vmem>>, %arg3: memref<5x32xf32, #tpu.memory_space<vmem>>, %arg4: memref<1x32xf32, #tpu.memory_space<vmem>>, %arg5: memref<3x32x32xf32, #tpu.memory_space<vmem>>, %arg6: memref<1x32xf32, #tpu.memory_space<vmem>>, %arg7: memref<2816x512xf32, #tpu.memory_space<vmem>>, %arg8: memref<1x512xf32, #tpu.memory_space<vmem>>, %arg9: memref<512x512xf32, #tpu.memory_space<vmem>>, %arg10: memref<3x512xf32, #tpu.memory_space<vmem>>, %arg11: memref<1x512xf32, #tpu.memory_space<vmem>>, %arg12: memref<2x512xf32, #tpu.memory_space<vmem>>, %arg13: memref<2x89x32xf32, #tpu.memory_space<vmem>>, %arg14: memref<2x89x32xf32, #tpu.memory_space<vmem>>, %arg15: memref<2x88x32xf32, #tpu.memory_space<vmem>>, %arg16: memref<2x2816xf32, #tpu.memory_space<vmem>>) attributes {dimension_semantics = [#tpu.dimension_semantics<parallel>], iteration_bounds = array<i64: 1>, scalar_prefetch = 0 : i64, scratch_operands = 4 : i64, tpu.core_type = #tpu.core_type<tc>, window_params = [{transform_indices = @transform_0, window_bounds = array<i64: 2, 4, 90>}, {transform_indices = @transform_1, window_bounds = array<i64: 2, 3>}, {pipeline_mode = #tpu.pipeline_mode<synchronous>, transform_indices = @transform_2, window_bounds = array<i64: 5, 32>}, {pipeline_mode = #tpu.pipeline_mode<synchronous>, transform_indices = @transform_3, window_bounds = array<i64: 1, 32>}, {pipeline_mode = #tpu.pipeline_mode<synchronous>, transform_indices = @transform_4, window_bounds = array<i64: 3, 32, 32>}, {pipeline_mode = #tpu.pipeline_mode<synchronous>, transform_indices = @transform_5, window_bounds = array<i64: 1, 32>}, {pipeline_mode = #tpu.pipeline_mode<synchronous>, transform_indices = @transform_6, window_bounds = array<i64: 2816, 512>}, {pipeline_mode = #tpu.pipeline_mode<synchronous>, transform_indices = @transform_7, window_bounds = array<i64: 1, 512>}, {pipeline_mode = #tpu.pipeline_mode<synchronous>, transform_indices = @transform_8, window_bounds = array<i64: 512, 512>}, {pipeline_mode = #tpu.pipeline_mode<synchronous>, transform_indices = @transform_9, window_bounds = array<i64: 3, 512>}, {pipeline_mode = #tpu.pipeline_mode<synchronous>, transform_indices = @transform_10, window_bounds = array<i64: 1, 512>}, {transform_indices = @transform_11, window_bounds = array<i64: 2, 512>}]} {
    %c0 = arith.constant 0 : index
    %c0_0 = arith.constant 0 : index
    %0 = vector.load %arg4[%c0, %c0_0] : memref<1x32xf32, #tpu.memory_space<vmem>>, vector<1x32xf32>
    %c0_1 = arith.constant 0 : index
    %c0_2 = arith.constant 0 : index
    %1 = vector.load %arg4[%c0_1, %c0_2] : memref<1x32xf32, #tpu.memory_space<vmem>>, vector<1x32xf32>
    %c0_3 = arith.constant 0 : index
    %c0_4 = arith.constant 0 : index
    %2 = vector.load %arg3[%c0_3, %c0_4] : memref<5x32xf32, #tpu.memory_space<vmem>>, vector<1x32xf32>
    %c0_5 = arith.constant 0 : index
    %c0_6 = arith.constant 0 : index
    %c0_7 = arith.constant 0 : index
    %3 = vector.load %arg1[%c0_5, %c0_6, %c0_7] : memref<2x4x90xf32, #tpu.memory_space<vmem>>, vector<2x1x89xf32>
    %4 = vector.shape_cast %3 : vector<2x1x89xf32> to vector<2x89xf32>
    %5 = vector.shape_cast %4 : vector<2x89xf32> to vector<2x89x1xf32>
    %6 = vector.shape_cast %2 : vector<1x32xf32> to vector<1x1x32xf32>
    %7 = vector.broadcast %5 : vector<2x89x1xf32> to vector<2x89x32xf32>
    %8 = vector.broadcast %6 : vector<1x1x32xf32> to vector<2x89x32xf32>
    %9 = arith.mulf %7, %8 : vector<2x89x32xf32>
    %10 = vector.shape_cast %0 : vector<1x32xf32> to vector<1x1x32xf32>
    %11 = vector.broadcast %10 : vector<1x1x32xf32> to vector<2x89x32xf32>
    %12 = arith.addf %11, %9 : vector<2x89x32xf32>
    %c0_8 = arith.constant 0 : index
    %c2 = arith.constant 2 : index
    %c0_9 = arith.constant 0 : index
    %13 = vector.load %arg1[%c0_8, %c2, %c0_9] : memref<2x4x90xf32, #tpu.memory_space<vmem>>, vector<2x1x89xf32>
    %14 = vector.shape_cast %13 : vector<2x1x89xf32> to vector<2x89xf32>
    %15 = vector.shape_cast %14 : vector<2x89xf32> to vector<2x89x1xf32>
    %16 = vector.shape_cast %2 : vector<1x32xf32> to vector<1x1x32xf32>
    %17 = vector.broadcast %15 : vector<2x89x1xf32> to vector<2x89x32xf32>
    %18 = vector.broadcast %16 : vector<1x1x32xf32> to vector<2x89x32xf32>
    %19 = arith.mulf %17, %18 : vector<2x89x32xf32>
    %20 = vector.shape_cast %1 : vector<1x32xf32> to vector<1x1x32xf32>
    %21 = vector.broadcast %20 : vector<1x1x32xf32> to vector<2x89x32xf32>
    %22 = arith.addf %21, %19 : vector<2x89x32xf32>
    %c1 = arith.constant 1 : index
    %c0_10 = arith.constant 0 : index
    %23 = vector.load %arg3[%c1, %c0_10] : memref<5x32xf32, #tpu.memory_space<vmem>>, vector<1x32xf32>
    %c0_11 = arith.constant 0 : index
    %c1_12 = arith.constant 1 : index
    %c0_13 = arith.constant 0 : index
    %24 = vector.load %arg1[%c0_11, %c1_12, %c0_13] : memref<2x4x90xf32, #tpu.memory_space<vmem>>, vector<2x1x89xf32>
    %25 = vector.shape_cast %24 : vector<2x1x89xf32> to vector<2x89xf32>
    %26 = vector.shape_cast %25 : vector<2x89xf32> to vector<2x89x1xf32>
    %27 = vector.shape_cast %23 : vector<1x32xf32> to vector<1x1x32xf32>
    %28 = vector.broadcast %26 : vector<2x89x1xf32> to vector<2x89x32xf32>
    %29 = vector.broadcast %27 : vector<1x1x32xf32> to vector<2x89x32xf32>
    %30 = arith.mulf %28, %29 : vector<2x89x32xf32>
    %31 = arith.addf %12, %30 : vector<2x89x32xf32>
    %c0_14 = arith.constant 0 : index
    %c3 = arith.constant 3 : index
    %c0_15 = arith.constant 0 : index
    %32 = vector.load %arg1[%c0_14, %c3, %c0_15] : memref<2x4x90xf32, #tpu.memory_space<vmem>>, vector<2x1x89xf32>
    %33 = vector.shape_cast %32 : vector<2x1x89xf32> to vector<2x89xf32>
    %34 = vector.shape_cast %33 : vector<2x89xf32> to vector<2x89x1xf32>
    %35 = vector.shape_cast %23 : vector<1x32xf32> to vector<1x1x32xf32>
    %36 = vector.broadcast %34 : vector<2x89x1xf32> to vector<2x89x32xf32>
    %37 = vector.broadcast %35 : vector<1x1x32xf32> to vector<2x89x32xf32>
    %38 = arith.mulf %36, %37 : vector<2x89x32xf32>
    %39 = arith.addf %22, %38 : vector<2x89x32xf32>
    %c2_16 = arith.constant 2 : index
    %c0_17 = arith.constant 0 : index
    %40 = vector.load %arg3[%c2_16, %c0_17] : memref<5x32xf32, #tpu.memory_space<vmem>>, vector<1x32xf32>
    %c0_18 = arith.constant 0 : index
    %c2_19 = arith.constant 2 : index
    %c0_20 = arith.constant 0 : index
    %41 = vector.load %arg1[%c0_18, %c2_19, %c0_20] : memref<2x4x90xf32, #tpu.memory_space<vmem>>, vector<2x1x89xf32>
    %42 = vector.shape_cast %41 : vector<2x1x89xf32> to vector<2x89xf32>
    %43 = vector.shape_cast %42 : vector<2x89xf32> to vector<2x89x1xf32>
    %44 = vector.shape_cast %40 : vector<1x32xf32> to vector<1x1x32xf32>
    %45 = vector.broadcast %43 : vector<2x89x1xf32> to vector<2x89x32xf32>
    %46 = vector.broadcast %44 : vector<1x1x32xf32> to vector<2x89x32xf32>
    %47 = arith.mulf %45, %46 : vector<2x89x32xf32>
    %48 = arith.addf %31, %47 : vector<2x89x32xf32>
    %c0_21 = arith.constant 0 : index
    %c0_22 = arith.constant 0 : index
    %c1_23 = arith.constant 1 : index
    %49 = vector.load %arg1[%c0_21, %c0_22, %c1_23] : memref<2x4x90xf32, #tpu.memory_space<vmem>>, vector<2x1x89xf32>
    %50 = vector.shape_cast %49 : vector<2x1x89xf32> to vector<2x89xf32>
    %51 = vector.shape_cast %50 : vector<2x89xf32> to vector<2x89x1xf32>
    %52 = vector.shape_cast %40 : vector<1x32xf32> to vector<1x1x32xf32>
    %53 = vector.broadcast %51 : vector<2x89x1xf32> to vector<2x89x32xf32>
    %54 = vector.broadcast %52 : vector<1x1x32xf32> to vector<2x89x32xf32>
    %55 = arith.mulf %53, %54 : vector<2x89x32xf32>
    %56 = arith.addf %39, %55 : vector<2x89x32xf32>
    %c3_24 = arith.constant 3 : index
    %c0_25 = arith.constant 0 : index
    %57 = vector.load %arg3[%c3_24, %c0_25] : memref<5x32xf32, #tpu.memory_space<vmem>>, vector<1x32xf32>
    %c0_26 = arith.constant 0 : index
    %c3_27 = arith.constant 3 : index
    %c0_28 = arith.constant 0 : index
    %58 = vector.load %arg1[%c0_26, %c3_27, %c0_28] : memref<2x4x90xf32, #tpu.memory_space<vmem>>, vector<2x1x89xf32>
    %59 = vector.shape_cast %58 : vector<2x1x89xf32> to vector<2x89xf32>
    %60 = vector.shape_cast %59 : vector<2x89xf32> to vector<2x89x1xf32>
    %61 = vector.shape_cast %57 : vector<1x32xf32> to vector<1x1x32xf32>
    %62 = vector.broadcast %60 : vector<2x89x1xf32> to vector<2x89x32xf32>
    %63 = vector.broadcast %61 : vector<1x1x32xf32> to vector<2x89x32xf32>
    %64 = arith.mulf %62, %63 : vector<2x89x32xf32>
    %65 = arith.addf %48, %64 : vector<2x89x32xf32>
    %c0_29 = arith.constant 0 : index
    %c1_30 = arith.constant 1 : index
    %c1_31 = arith.constant 1 : index
    %66 = vector.load %arg1[%c0_29, %c1_30, %c1_31] : memref<2x4x90xf32, #tpu.memory_space<vmem>>, vector<2x1x89xf32>
    %67 = vector.shape_cast %66 : vector<2x1x89xf32> to vector<2x89xf32>
    %68 = vector.shape_cast %67 : vector<2x89xf32> to vector<2x89x1xf32>
    %69 = vector.shape_cast %57 : vector<1x32xf32> to vector<1x1x32xf32>
    %70 = vector.broadcast %68 : vector<2x89x1xf32> to vector<2x89x32xf32>
    %71 = vector.broadcast %69 : vector<1x1x32xf32> to vector<2x89x32xf32>
    %72 = arith.mulf %70, %71 : vector<2x89x32xf32>
    %73 = arith.addf %56, %72 : vector<2x89x32xf32>
    %c4 = arith.constant 4 : index
    %c0_32 = arith.constant 0 : index
    %74 = vector.load %arg3[%c4, %c0_32] : memref<5x32xf32, #tpu.memory_space<vmem>>, vector<1x32xf32>
    %c0_33 = arith.constant 0 : index
    %c0_34 = arith.constant 0 : index
    %c1_35 = arith.constant 1 : index
    %75 = vector.load %arg1[%c0_33, %c0_34, %c1_35] : memref<2x4x90xf32, #tpu.memory_space<vmem>>, vector<2x1x89xf32>
    %76 = vector.shape_cast %75 : vector<2x1x89xf32> to vector<2x89xf32>
    %77 = vector.shape_cast %76 : vector<2x89xf32> to vector<2x89x1xf32>
    %78 = vector.shape_cast %74 : vector<1x32xf32> to vector<1x1x32xf32>
    %79 = vector.broadcast %77 : vector<2x89x1xf32> to vector<2x89x32xf32>
    %80 = vector.broadcast %78 : vector<1x1x32xf32> to vector<2x89x32xf32>
    %81 = arith.mulf %79, %80 : vector<2x89x32xf32>
    %82 = arith.addf %65, %81 : vector<2x89x32xf32>
    %c0_36 = arith.constant 0 : index
    %c2_37 = arith.constant 2 : index
    %c1_38 = arith.constant 1 : index
    %83 = vector.load %arg1[%c0_36, %c2_37, %c1_38] : memref<2x4x90xf32, #tpu.memory_space<vmem>>, vector<2x1x89xf32>
    %84 = vector.shape_cast %83 : vector<2x1x89xf32> to vector<2x89xf32>
    %85 = vector.shape_cast %84 : vector<2x89xf32> to vector<2x89x1xf32>
    %86 = vector.shape_cast %74 : vector<1x32xf32> to vector<1x1x32xf32>
    %87 = vector.broadcast %85 : vector<2x89x1xf32> to vector<2x89x32xf32>
    %88 = vector.broadcast %86 : vector<1x1x32xf32> to vector<2x89x32xf32>
    %89 = arith.mulf %87, %88 : vector<2x89x32xf32>
    %90 = arith.addf %73, %89 : vector<2x89x32xf32>
    %c0_39 = arith.constant 0 : index
    %c0_40 = arith.constant 0 : index
    %c0_41 = arith.constant 0 : index
    %91 = vector.load %arg13[%c0_39, %c0_40, %c0_41] : memref<2x89x32xf32, #tpu.memory_space<vmem>>, vector<2x89x32xf32>
    tpu.vector_store %arg13[%c0_39, %c0_40, %c0_41], %82 {strides = array<i32>} : memref<2x89x32xf32, #tpu.memory_space<vmem>>, vector<2x89x32xf32>,
    %c0_42 = arith.constant 0 : index
    %c0_43 = arith.constant 0 : index
    %c0_44 = arith.constant 0 : index
    %92 = vector.load %arg14[%c0_42, %c0_43, %c0_44] : memref<2x89x32xf32, #tpu.memory_space<vmem>>, vector<2x89x32xf32>
    tpu.vector_store %arg14[%c0_42, %c0_43, %c0_44], %90 {strides = array<i32>} : memref<2x89x32xf32, #tpu.memory_space<vmem>>, vector<2x89x32xf32>,
    %c0_45 = arith.constant 0 : index
    %c0_46 = arith.constant 0 : index
    %93 = vector.load %arg6[%c0_45, %c0_46] : memref<1x32xf32, #tpu.memory_space<vmem>>, vector<1x32xf32>
    %c0_47 = arith.constant 0 : index
    %c0_48 = arith.constant 0 : index
    %c0_49 = arith.constant 0 : index
    %94 = vector.load %arg13[%c0_47, %c0_48, %c0_49] : memref<2x89x32xf32, #tpu.memory_space<vmem>>, vector<1x88x32xf32>
    %95 = vector.shape_cast %94 : vector<1x88x32xf32> to vector<88x32xf32>
    %c0_50 = arith.constant 0 : index
    %c0_51 = arith.constant 0 : index
    %c0_52 = arith.constant 0 : index
    %96 = vector.load %arg5[%c0_50, %c0_51, %c0_52] : memref<3x32x32xf32, #tpu.memory_space<vmem>>, vector<1x32x32xf32>
    %97 = vector.shape_cast %96 : vector<1x32x32xf32> to vector<32x32xf32>
    %cst = arith.constant dense<0.000000e+00> : vector<88x32xf32>
    %98 = tpu.matmul %95, %97, %cst {dimension_numbers = #tpu.dot_dimension_numbers<[1], [0], [0], [1], [0, 0, 1, 1], [], []>} : vector<88x32xf32>, vector<32x32xf32>, vector<88x32xf32> -> vector<88x32xf32>
    %99 = vector.broadcast %93 : vector<1x32xf32> to vector<88x32xf32>
    %100 = arith.addf %99, %98 : vector<88x32xf32>
    %c0_53 = arith.constant 0 : index
    %c0_54 = arith.constant 0 : index
    %c0_55 = arith.constant 0 : index
    %101 = vector.load %arg14[%c0_53, %c0_54, %c0_55] : memref<2x89x32xf32, #tpu.memory_space<vmem>>, vector<1x88x32xf32>
    %102 = vector.shape_cast %101 : vector<1x88x32xf32> to vector<88x32xf32>
    %c1_56 = arith.constant 1 : index
    %c0_57 = arith.constant 0 : index
    %c0_58 = arith.constant 0 : index
    %103 = vector.load %arg5[%c1_56, %c0_57, %c0_58] : memref<3x32x32xf32, #tpu.memory_space<vmem>>, vector<1x32x32xf32>
    %104 = vector.shape_cast %103 : vector<1x32x32xf32> to vector<32x32xf32>
    %cst_59 = arith.constant dense<0.000000e+00> : vector<88x32xf32>
    %105 = tpu.matmul %102, %104, %cst_59 {dimension_numbers = #tpu.dot_dimension_numbers<[1], [0], [0], [1], [0, 0, 1, 1], [], []>} : vector<88x32xf32>, vector<32x32xf32>, vector<88x32xf32> -> vector<88x32xf32>
    %106 = arith.addf %100, %105 : vector<88x32xf32>
    %c0_60 = arith.constant 0 : index
    %c1_61 = arith.constant 1 : index
    %c0_62 = arith.constant 0 : index
    %107 = vector.load %arg13[%c0_60, %c1_61, %c0_62] : memref<2x89x32xf32, #tpu.memory_space<vmem>>, vector<1x88x32xf32>
    %108 = vector.shape_cast %107 : vector<1x88x32xf32> to vector<88x32xf32>
    %c2_63 = arith.constant 2 : index
    %c0_64 = arith.constant 0 : index
    %c0_65 = arith.constant 0 : index
    %109 = vector.load %arg5[%c2_63, %c0_64, %c0_65] : memref<3x32x32xf32, #tpu.memory_space<vmem>>, vector<1x32x32xf32>
    %110 = vector.shape_cast %109 : vector<1x32x32xf32> to vector<32x32xf32>
    %cst_66 = arith.constant dense<0.000000e+00> : vector<88x32xf32>
    %111 = tpu.matmul %108, %110, %cst_66 {dimension_numbers = #tpu.dot_dimension_numbers<[1], [0], [0], [1], [0, 0, 1, 1], [], []>} : vector<88x32xf32>, vector<32x32xf32>, vector<88x32xf32> -> vector<88x32xf32>
    %112 = arith.addf %106, %111 : vector<88x32xf32>
    %c0_67 = arith.constant 0 : index
    %c0_68 = arith.constant 0 : index
    %c0_69 = arith.constant 0 : index
    %113 = vector.load %arg15[%c0_67, %c0_68, %c0_69] : memref<2x88x32xf32, #tpu.memory_space<vmem>>, vector<1x88x32xf32>
    %114 = vector.shape_cast %113 : vector<1x88x32xf32> to vector<88x32xf32>
    %115 = vector.shape_cast %112 : vector<88x32xf32> to vector<1x88x32xf32>
    tpu.vector_store %arg15[%c0_67, %c0_68, %c0_69], %115 {strides = array<i32>} : memref<2x88x32xf32, #tpu.memory_space<vmem>>, vector<1x88x32xf32>,
    %c0_70 = arith.constant 0 : index
    %c0_71 = arith.constant 0 : index
    %116 = vector.load %arg6[%c0_70, %c0_71] : memref<1x32xf32, #tpu.memory_space<vmem>>, vector<1x32xf32>
    %c1_72 = arith.constant 1 : index
    %c0_73 = arith.constant 0 : index
    %c0_74 = arith.constant 0 : index
    %117 = vector.load %arg13[%c1_72, %c0_73, %c0_74] : memref<2x89x32xf32, #tpu.memory_space<vmem>>, vector<1x88x32xf32>
    %118 = vector.shape_cast %117 : vector<1x88x32xf32> to vector<88x32xf32>
    %c0_75 = arith.constant 0 : index
    %c0_76 = arith.constant 0 : index
    %c0_77 = arith.constant 0 : index
    %119 = vector.load %arg5[%c0_75, %c0_76, %c0_77] : memref<3x32x32xf32, #tpu.memory_space<vmem>>, vector<1x32x32xf32>
    %120 = vector.shape_cast %119 : vector<1x32x32xf32> to vector<32x32xf32>
    %cst_78 = arith.constant dense<0.000000e+00> : vector<88x32xf32>
    %121 = tpu.matmul %118, %120, %cst_78 {dimension_numbers = #tpu.dot_dimension_numbers<[1], [0], [0], [1], [0, 0, 1, 1], [], []>} : vector<88x32xf32>, vector<32x32xf32>, vector<88x32xf32> -> vector<88x32xf32>
    %122 = vector.broadcast %116 : vector<1x32xf32> to vector<88x32xf32>
    %123 = arith.addf %122, %121 : vector<88x32xf32>
    %c1_79 = arith.constant 1 : index
    %c0_80 = arith.constant 0 : index
    %c0_81 = arith.constant 0 : index
    %124 = vector.load %arg14[%c1_79, %c0_80, %c0_81] : memref<2x89x32xf32, #tpu.memory_space<vmem>>, vector<1x88x32xf32>
    %125 = vector.shape_cast %124 : vector<1x88x32xf32> to vector<88x32xf32>
    %c1_82 = arith.constant 1 : index
    %c0_83 = arith.constant 0 : index
    %c0_84 = arith.constant 0 : index
    %126 = vector.load %arg5[%c1_82, %c0_83, %c0_84] : memref<3x32x32xf32, #tpu.memory_space<vmem>>, vector<1x32x32xf32>
    %127 = vector.shape_cast %126 : vector<1x32x32xf32> to vector<32x32xf32>
    %cst_85 = arith.constant dense<0.000000e+00> : vector<88x32xf32>
    %128 = tpu.matmul %125, %127, %cst_85 {dimension_numbers = #tpu.dot_dimension_numbers<[1], [0], [0], [1], [0, 0, 1, 1], [], []>} : vector<88x32xf32>, vector<32x32xf32>, vector<88x32xf32> -> vector<88x32xf32>
    %129 = arith.addf %123, %128 : vector<88x32xf32>
    %c1_86 = arith.constant 1 : index
    %c1_87 = arith.constant 1 : index
    %c0_88 = arith.constant 0 : index
    %130 = vector.load %arg13[%c1_86, %c1_87, %c0_88] : memref<2x89x32xf32, #tpu.memory_space<vmem>>, vector<1x88x32xf32>
    %131 = vector.shape_cast %130 : vector<1x88x32xf32> to vector<88x32xf32>
    %c2_89 = arith.constant 2 : index
    %c0_90 = arith.constant 0 : index
    %c0_91 = arith.constant 0 : index
    %132 = vector.load %arg5[%c2_89, %c0_90, %c0_91] : memref<3x32x32xf32, #tpu.memory_space<vmem>>, vector<1x32x32xf32>
    %133 = vector.shape_cast %132 : vector<1x32x32xf32> to vector<32x32xf32>
    %cst_92 = arith.constant dense<0.000000e+00> : vector<88x32xf32>
    %134 = tpu.matmul %131, %133, %cst_92 {dimension_numbers = #tpu.dot_dimension_numbers<[1], [0], [0], [1], [0, 0, 1, 1], [], []>} : vector<88x32xf32>, vector<32x32xf32>, vector<88x32xf32> -> vector<88x32xf32>
    %135 = arith.addf %129, %134 : vector<88x32xf32>
    %c1_93 = arith.constant 1 : index
    %c0_94 = arith.constant 0 : index
    %c0_95 = arith.constant 0 : index
    %136 = vector.load %arg15[%c1_93, %c0_94, %c0_95] : memref<2x88x32xf32, #tpu.memory_space<vmem>>, vector<1x88x32xf32>
    %137 = vector.shape_cast %136 : vector<1x88x32xf32> to vector<88x32xf32>
    %138 = vector.shape_cast %135 : vector<88x32xf32> to vector<1x88x32xf32>
    tpu.vector_store %arg15[%c1_93, %c0_94, %c0_95], %138 {strides = array<i32>} : memref<2x88x32xf32, #tpu.memory_space<vmem>>, vector<1x88x32xf32>,
    %c0_96 = arith.constant 0 : index
    %c0_97 = arith.constant 0 : index
    %c0_98 = arith.constant 0 : index
    %139 = vector.load %arg15[%c0_96, %c0_97, %c0_98] : memref<2x88x32xf32, #tpu.memory_space<vmem>>, vector<2x1x32xf32>
    %140 = vector.shape_cast %139 : vector<2x1x32xf32> to vector<2x32xf32>
    %c0_99 = arith.constant 0 : index
    %c0_100 = arith.constant 0 : index
    %141 = vector.load %arg16[%c0_99, %c0_100] : memref<2x2816xf32, #tpu.memory_space<vmem>>, vector<2x32xf32>
    tpu.vector_store %arg16[%c0_99, %c0_100], %140 {strides = array<i32>} : memref<2x2816xf32, #tpu.memory_space<vmem>>, vector<2x32xf32>,
    %c0_101 = arith.constant 0 : index
    %c1_102 = arith.constant 1 : index
    %c0_103 = arith.constant 0 : index
    %142 = vector.load %arg15[%c0_101, %c1_102, %c0_103] : memref<2x88x32xf32, #tpu.memory_space<vmem>>, vector<2x1x32xf32>
    %143 = vector.shape_cast %142 : vector<2x1x32xf32> to vector<2x32xf32>
    %c0_104 = arith.constant 0 : index
    %c32 = arith.constant 32 : index
    %144 = vector.load %arg16[%c0_104, %c32] : memref<2x2816xf32, #tpu.memory_space<vmem>>, vector<2x32xf32>
    tpu.vector_store %arg16[%c0_104, %c32], %143 {strides = array<i32>} : memref<2x2816xf32, #tpu.memory_space<vmem>>, vector<2x32xf32>,
    %c0_105 = arith.constant 0 : index
    %c2_106 = arith.constant 2 : index
    %c0_107 = arith.constant 0 : index
    %145 = vector.load %arg15[%c0_105, %c2_106, %c0_107] : memref<2x88x32xf32, #tpu.memory_space<vmem>>, vector<2x1x32xf32>
    %146 = vector.shape_cast %145 : vector<2x1x32xf32> to vector<2x32xf32>
    %c0_108 = arith.constant 0 : index
    %c64 = arith.constant 64 : index
    %147 = vector.load %arg16[%c0_108, %c64] : memref<2x2816xf32, #tpu.memory_space<vmem>>, vector<2x32xf32>
    tpu.vector_store %arg16[%c0_108, %c64], %146 {strides = array<i32>} : memref<2x2816xf32, #tpu.memory_space<vmem>>, vector<2x32xf32>,
    %c0_109 = arith.constant 0 : index
    %c3_110 = arith.constant 3 : index
    %c0_111 = arith.constant 0 : index
    %148 = vector.load %arg15[%c0_109, %c3_110, %c0_111] : memref<2x88x32xf32, #tpu.memory_space<vmem>>, vector<2x1x32xf32>
    %149 = vector.shape_cast %148 : vector<2x1x32xf32> to vector<2x32xf32>
    %c0_112 = arith.constant 0 : index
    %c96 = arith.constant 96 : index
    %150 = vector.load %arg16[%c0_112, %c96] : memref<2x2816xf32, #tpu.memory_space<vmem>>, vector<2x32xf32>
    tpu.vector_store %arg16[%c0_112, %c96], %149 {strides = array<i32>} : memref<2x2816xf32, #tpu.memory_space<vmem>>, vector<2x32xf32>,
    %c0_113 = arith.constant 0 : index
    %c4_114 = arith.constant 4 : index
    %c0_115 = arith.constant 0 : index
    %151 = vector.load %arg15[%c0_113, %c4_114, %c0_115] : memref<2x88x32xf32, #tpu.memory_space<vmem>>, vector<2x1x32xf32>
    %152 = vector.shape_cast %151 : vector<2x1x32xf32> to vector<2x32xf32>
    %c0_116 = arith.constant 0 : index
    %c128 = arith.constant 128 : index
    %153 = vector.load %arg16[%c0_116, %c128] : memref<2x2816xf32, #tpu.memory_space<vmem>>, vector<2x32xf32>
    tpu.vector_store %arg16[%c0_116, %c128], %152 {strides = array<i32>} : memref<2x2816xf32, #tpu.memory_space<vmem>>, vector<2x32xf32>,
    %c0_117 = arith.constant 0 : index
    %c5 = arith.constant 5 : index
    %c0_118 = arith.constant 0 : index
    %154 = vector.load %arg15[%c0_117, %c5, %c0_118] : memref<2x88x32xf32, #tpu.memory_space<vmem>>, vector<2x1x32xf32>
    %155 = vector.shape_cast %154 : vector<2x1x32xf32> to vector<2x32xf32>
    %c0_119 = arith.constant 0 : index
    %c160 = arith.constant 160 : index
    %156 = vector.load %arg16[%c0_119, %c160] : memref<2x2816xf32, #tpu.memory_space<vmem>>, vector<2x32xf32>
    tpu.vector_store %arg16[%c0_119, %c160], %155 {strides = array<i32>} : memref<2x2816xf32, #tpu.memory_space<vmem>>, vector<2x32xf32>,
    %c0_120 = arith.constant 0 : index
    %c6 = arith.constant 6 : index
    %c0_121 = arith.constant 0 : index
    %157 = vector.load %arg15[%c0_120, %c6, %c0_121] : memref<2x88x32xf32, #tpu.memory_space<vmem>>, vector<2x1x32xf32>
    %158 = vector.shape_cast %157 : vector<2x1x32xf32> to vector<2x32xf32>
    %c0_122 = arith.constant 0 : index
    %c192 = arith.constant 192 : index
    %159 = vector.load %arg16[%c0_122, %c192] : memref<2x2816xf32, #tpu.memory_space<vmem>>, vector<2x32xf32>
    tpu.vector_store %arg16[%c0_122, %c192], %158 {strides = array<i32>} : memref<2x2816xf32, #tpu.memory_space<vmem>>, vector<2x32xf32>,
    %c0_123 = arith.constant 0 : index
    %c7 = arith.constant 7 : index
    %c0_124 = arith.constant 0 : index
    %160 = vector.load %arg15[%c0_123, %c7, %c0_124] : memref<2x88x32xf32, #tpu.memory_space<vmem>>, vector<2x1x32xf32>
    %161 = vector.shape_cast %160 : vector<2x1x32xf32> to vector<2x32xf32>
    %c0_125 = arith.constant 0 : index
    %c224 = arith.constant 224 : index
    %162 = vector.load %arg16[%c0_125, %c224] : memref<2x2816xf32, #tpu.memory_space<vmem>>, vector<2x32xf32>
    tpu.vector_store %arg16[%c0_125, %c224], %161 {strides = array<i32>} : memref<2x2816xf32, #tpu.memory_space<vmem>>, vector<2x32xf32>,
    %c0_126 = arith.constant 0 : index
    %c8 = arith.constant 8 : index
    %c0_127 = arith.constant 0 : index
    %163 = vector.load %arg15[%c0_126, %c8, %c0_127] : memref<2x88x32xf32, #tpu.memory_space<vmem>>, vector<2x1x32xf32>
    %164 = vector.shape_cast %163 : vector<2x1x32xf32> to vector<2x32xf32>
    %c0_128 = arith.constant 0 : index
    %c256 = arith.constant 256 : index
    %165 = vector.load %arg16[%c0_128, %c256] : memref<2x2816xf32, #tpu.memory_space<vmem>>, vector<2x32xf32>
    tpu.vector_store %arg16[%c0_128, %c256], %164 {strides = array<i32>} : memref<2x2816xf32, #tpu.memory_space<vmem>>, vector<2x32xf32>,
    %c0_129 = arith.constant 0 : index
    %c9 = arith.constant 9 : index
    %c0_130 = arith.constant 0 : index
    %166 = vector.load %arg15[%c0_129, %c9, %c0_130] : memref<2x88x32xf32, #tpu.memory_space<vmem>>, vector<2x1x32xf32>
    %167 = vector.shape_cast %166 : vector<2x1x32xf32> to vector<2x32xf32>
    %c0_131 = arith.constant 0 : index
    %c288 = arith.constant 288 : index
    %168 = vector.load %arg16[%c0_131, %c288] : memref<2x2816xf32, #tpu.memory_space<vmem>>, vector<2x32xf32>
    tpu.vector_store %arg16[%c0_131, %c288], %167 {strides = array<i32>} : memref<2x2816xf32, #tpu.memory_space<vmem>>, vector<2x32xf32>,
    %c0_132 = arith.constant 0 : index
    %c10 = arith.constant 10 : index
    %c0_133 = arith.constant 0 : index
    %169 = vector.load %arg15[%c0_132, %c10, %c0_133] : memref<2x88x32xf32, #tpu.memory_space<vmem>>, vector<2x1x32xf32>
    %170 = vector.shape_cast %169 : vector<2x1x32xf32> to vector<2x32xf32>
    %c0_134 = arith.constant 0 : index
    %c320 = arith.constant 320 : index
    %171 = vector.load %arg16[%c0_134, %c320] : memref<2x2816xf32, #tpu.memory_space<vmem>>, vector<2x32xf32>
    tpu.vector_store %arg16[%c0_134, %c320], %170 {strides = array<i32>} : memref<2x2816xf32, #tpu.memory_space<vmem>>, vector<2x32xf32>,
    %c0_135 = arith.constant 0 : index
    %c11 = arith.constant 11 : index
    %c0_136 = arith.constant 0 : index
    %172 = vector.load %arg15[%c0_135, %c11, %c0_136] : memref<2x88x32xf32, #tpu.memory_space<vmem>>, vector<2x1x32xf32>
    %173 = vector.shape_cast %172 : vector<2x1x32xf32> to vector<2x32xf32>
    %c0_137 = arith.constant 0 : index
    %c352 = arith.constant 352 : index
    %174 = vector.load %arg16[%c0_137, %c352] : memref<2x2816xf32, #tpu.memory_space<vmem>>, vector<2x32xf32>
    tpu.vector_store %arg16[%c0_137, %c352], %173 {strides = array<i32>} : memref<2x2816xf32, #tpu.memory_space<vmem>>, vector<2x32xf32>,
    %c0_138 = arith.constant 0 : index
    %c12 = arith.constant 12 : index
    %c0_139 = arith.constant 0 : index
    %175 = vector.load %arg15[%c0_138, %c12, %c0_139] : memref<2x88x32xf32, #tpu.memory_space<vmem>>, vector<2x1x32xf32>
    %176 = vector.shape_cast %175 : vector<2x1x32xf32> to vector<2x32xf32>
    %c0_140 = arith.constant 0 : index
    %c384 = arith.constant 384 : index
    %177 = vector.load %arg16[%c0_140, %c384] : memref<2x2816xf32, #tpu.memory_space<vmem>>, vector<2x32xf32>
    tpu.vector_store %arg16[%c0_140, %c384], %176 {strides = array<i32>} : memref<2x2816xf32, #tpu.memory_space<vmem>>, vector<2x32xf32>,
    %c0_141 = arith.constant 0 : index
    %c13 = arith.constant 13 : index
    %c0_142 = arith.constant 0 : index
    %178 = vector.load %arg15[%c0_141, %c13, %c0_142] : memref<2x88x32xf32, #tpu.memory_space<vmem>>, vector<2x1x32xf32>
    %179 = vector.shape_cast %178 : vector<2x1x32xf32> to vector<2x32xf32>
    %c0_143 = arith.constant 0 : index
    %c416 = arith.constant 416 : index
    %180 = vector.load %arg16[%c0_143, %c416] : memref<2x2816xf32, #tpu.memory_space<vmem>>, vector<2x32xf32>
    tpu.vector_store %arg16[%c0_143, %c416], %179 {strides = array<i32>} : memref<2x2816xf32, #tpu.memory_space<vmem>>, vector<2x32xf32>,
    %c0_144 = arith.constant 0 : index
    %c14 = arith.constant 14 : index
    %c0_145 = arith.constant 0 : index
    %181 = vector.load %arg15[%c0_144, %c14, %c0_145] : memref<2x88x32xf32, #tpu.memory_space<vmem>>, vector<2x1x32xf32>
    %182 = vector.shape_cast %181 : vector<2x1x32xf32> to vector<2x32xf32>
    %c0_146 = arith.constant 0 : index
    %c448 = arith.constant 448 : index
    %183 = vector.load %arg16[%c0_146, %c448] : memref<2x2816xf32, #tpu.memory_space<vmem>>, vector<2x32xf32>
    tpu.vector_store %arg16[%c0_146, %c448], %182 {strides = array<i32>} : memref<2x2816xf32, #tpu.memory_space<vmem>>, vector<2x32xf32>,
    %c0_147 = arith.constant 0 : index
    %c15 = arith.constant 15 : index
    %c0_148 = arith.constant 0 : index
    %184 = vector.load %arg15[%c0_147, %c15, %c0_148] : memref<2x88x32xf32, #tpu.memory_space<vmem>>, vector<2x1x32xf32>
    %185 = vector.shape_cast %184 : vector<2x1x32xf32> to vector<2x32xf32>
    %c0_149 = arith.constant 0 : index
    %c480 = arith.constant 480 : index
    %186 = vector.load %arg16[%c0_149, %c480] : memref<2x2816xf32, #tpu.memory_space<vmem>>, vector<2x32xf32>
    tpu.vector_store %arg16[%c0_149, %c480], %185 {strides = array<i32>} : memref<2x2816xf32, #tpu.memory_space<vmem>>, vector<2x32xf32>,
    %c0_150 = arith.constant 0 : index
    %c16 = arith.constant 16 : index
    %c0_151 = arith.constant 0 : index
    %187 = vector.load %arg15[%c0_150, %c16, %c0_151] : memref<2x88x32xf32, #tpu.memory_space<vmem>>, vector<2x1x32xf32>
    %188 = vector.shape_cast %187 : vector<2x1x32xf32> to vector<2x32xf32>
    %c0_152 = arith.constant 0 : index
    %c512 = arith.constant 512 : index
    %189 = vector.load %arg16[%c0_152, %c512] : memref<2x2816xf32, #tpu.memory_space<vmem>>, vector<2x32xf32>
    tpu.vector_store %arg16[%c0_152, %c512], %188 {strides = array<i32>} : memref<2x2816xf32, #tpu.memory_space<vmem>>, vector<2x32xf32>,
    %c0_153 = arith.constant 0 : index
    %c17 = arith.constant 17 : index
    %c0_154 = arith.constant 0 : index
    %190 = vector.load %arg15[%c0_153, %c17, %c0_154] : memref<2x88x32xf32, #tpu.memory_space<vmem>>, vector<2x1x32xf32>
    %191 = vector.shape_cast %190 : vector<2x1x32xf32> to vector<2x32xf32>
    %c0_155 = arith.constant 0 : index
    %c544 = arith.constant 544 : index
    %192 = vector.load %arg16[%c0_155, %c544] : memref<2x2816xf32, #tpu.memory_space<vmem>>, vector<2x32xf32>
    tpu.vector_store %arg16[%c0_155, %c544], %191 {strides = array<i32>} : memref<2x2816xf32, #tpu.memory_space<vmem>>, vector<2x32xf32>,
    %c0_156 = arith.constant 0 : index
    %c18 = arith.constant 18 : index
    %c0_157 = arith.constant 0 : index
    %193 = vector.load %arg15[%c0_156, %c18, %c0_157] : memref<2x88x32xf32, #tpu.memory_space<vmem>>, vector<2x1x32xf32>
    %194 = vector.shape_cast %193 : vector<2x1x32xf32> to vector<2x32xf32>
    %c0_158 = arith.constant 0 : index
    %c576 = arith.constant 576 : index
    %195 = vector.load %arg16[%c0_158, %c576] : memref<2x2816xf32, #tpu.memory_space<vmem>>, vector<2x32xf32>
    tpu.vector_store %arg16[%c0_158, %c576], %194 {strides = array<i32>} : memref<2x2816xf32, #tpu.memory_space<vmem>>, vector<2x32xf32>,
    %c0_159 = arith.constant 0 : index
    %c19 = arith.constant 19 : index
    %c0_160 = arith.constant 0 : index
    %196 = vector.load %arg15[%c0_159, %c19, %c0_160] : memref<2x88x32xf32, #tpu.memory_space<vmem>>, vector<2x1x32xf32>
    %197 = vector.shape_cast %196 : vector<2x1x32xf32> to vector<2x32xf32>
    %c0_161 = arith.constant 0 : index
    %c608 = arith.constant 608 : index
    %198 = vector.load %arg16[%c0_161, %c608] : memref<2x2816xf32, #tpu.memory_space<vmem>>, vector<2x32xf32>
    tpu.vector_store %arg16[%c0_161, %c608], %197 {strides = array<i32>} : memref<2x2816xf32, #tpu.memory_space<vmem>>, vector<2x32xf32>,
    %c0_162 = arith.constant 0 : index
    %c20 = arith.constant 20 : index
    %c0_163 = arith.constant 0 : index
    %199 = vector.load %arg15[%c0_162, %c20, %c0_163] : memref<2x88x32xf32, #tpu.memory_space<vmem>>, vector<2x1x32xf32>
    %200 = vector.shape_cast %199 : vector<2x1x32xf32> to vector<2x32xf32>
    %c0_164 = arith.constant 0 : index
    %c640 = arith.constant 640 : index
    %201 = vector.load %arg16[%c0_164, %c640] : memref<2x2816xf32, #tpu.memory_space<vmem>>, vector<2x32xf32>
    tpu.vector_store %arg16[%c0_164, %c640], %200 {strides = array<i32>} : memref<2x2816xf32, #tpu.memory_space<vmem>>, vector<2x32xf32>,
    %c0_165 = arith.constant 0 : index
    %c21 = arith.constant 21 : index
    %c0_166 = arith.constant 0 : index
    %202 = vector.load %arg15[%c0_165, %c21, %c0_166] : memref<2x88x32xf32, #tpu.memory_space<vmem>>, vector<2x1x32xf32>
    %203 = vector.shape_cast %202 : vector<2x1x32xf32> to vector<2x32xf32>
    %c0_167 = arith.constant 0 : index
    %c672 = arith.constant 672 : index
    %204 = vector.load %arg16[%c0_167, %c672] : memref<2x2816xf32, #tpu.memory_space<vmem>>, vector<2x32xf32>
    tpu.vector_store %arg16[%c0_167, %c672], %203 {strides = array<i32>} : memref<2x2816xf32, #tpu.memory_space<vmem>>, vector<2x32xf32>,
    %c0_168 = arith.constant 0 : index
    %c22 = arith.constant 22 : index
    %c0_169 = arith.constant 0 : index
    %205 = vector.load %arg15[%c0_168, %c22, %c0_169] : memref<2x88x32xf32, #tpu.memory_space<vmem>>, vector<2x1x32xf32>
    %206 = vector.shape_cast %205 : vector<2x1x32xf32> to vector<2x32xf32>
    %c0_170 = arith.constant 0 : index
    %c704 = arith.constant 704 : index
    %207 = vector.load %arg16[%c0_170, %c704] : memref<2x2816xf32, #tpu.memory_space<vmem>>, vector<2x32xf32>
    tpu.vector_store %arg16[%c0_170, %c704], %206 {strides = array<i32>} : memref<2x2816xf32, #tpu.memory_space<vmem>>, vector<2x32xf32>,
    %c0_171 = arith.constant 0 : index
    %c23 = arith.constant 23 : index
    %c0_172 = arith.constant 0 : index
    %208 = vector.load %arg15[%c0_171, %c23, %c0_172] : memref<2x88x32xf32, #tpu.memory_space<vmem>>, vector<2x1x32xf32>
    %209 = vector.shape_cast %208 : vector<2x1x32xf32> to vector<2x32xf32>
    %c0_173 = arith.constant 0 : index
    %c736 = arith.constant 736 : index
    %210 = vector.load %arg16[%c0_173, %c736] : memref<2x2816xf32, #tpu.memory_space<vmem>>, vector<2x32xf32>
    tpu.vector_store %arg16[%c0_173, %c736], %209 {strides = array<i32>} : memref<2x2816xf32, #tpu.memory_space<vmem>>, vector<2x32xf32>,
    %c0_174 = arith.constant 0 : index
    %c24 = arith.constant 24 : index
    %c0_175 = arith.constant 0 : index
    %211 = vector.load %arg15[%c0_174, %c24, %c0_175] : memref<2x88x32xf32, #tpu.memory_space<vmem>>, vector<2x1x32xf32>
    %212 = vector.shape_cast %211 : vector<2x1x32xf32> to vector<2x32xf32>
    %c0_176 = arith.constant 0 : index
    %c768 = arith.constant 768 : index
    %213 = vector.load %arg16[%c0_176, %c768] : memref<2x2816xf32, #tpu.memory_space<vmem>>, vector<2x32xf32>
    tpu.vector_store %arg16[%c0_176, %c768], %212 {strides = array<i32>} : memref<2x2816xf32, #tpu.memory_space<vmem>>, vector<2x32xf32>,
    %c0_177 = arith.constant 0 : index
    %c25 = arith.constant 25 : index
    %c0_178 = arith.constant 0 : index
    %214 = vector.load %arg15[%c0_177, %c25, %c0_178] : memref<2x88x32xf32, #tpu.memory_space<vmem>>, vector<2x1x32xf32>
    %215 = vector.shape_cast %214 : vector<2x1x32xf32> to vector<2x32xf32>
    %c0_179 = arith.constant 0 : index
    %c800 = arith.constant 800 : index
    %216 = vector.load %arg16[%c0_179, %c800] : memref<2x2816xf32, #tpu.memory_space<vmem>>, vector<2x32xf32>
    tpu.vector_store %arg16[%c0_179, %c800], %215 {strides = array<i32>} : memref<2x2816xf32, #tpu.memory_space<vmem>>, vector<2x32xf32>,
    %c0_180 = arith.constant 0 : index
    %c26 = arith.constant 26 : index
    %c0_181 = arith.constant 0 : index
    %217 = vector.load %arg15[%c0_180, %c26, %c0_181] : memref<2x88x32xf32, #tpu.memory_space<vmem>>, vector<2x1x32xf32>
    %218 = vector.shape_cast %217 : vector<2x1x32xf32> to vector<2x32xf32>
    %c0_182 = arith.constant 0 : index
    %c832 = arith.constant 832 : index
    %219 = vector.load %arg16[%c0_182, %c832] : memref<2x2816xf32, #tpu.memory_space<vmem>>, vector<2x32xf32>
    tpu.vector_store %arg16[%c0_182, %c832], %218 {strides = array<i32>} : memref<2x2816xf32, #tpu.memory_space<vmem>>, vector<2x32xf32>,
    %c0_183 = arith.constant 0 : index
    %c27 = arith.constant 27 : index
    %c0_184 = arith.constant 0 : index
    %220 = vector.load %arg15[%c0_183, %c27, %c0_184] : memref<2x88x32xf32, #tpu.memory_space<vmem>>, vector<2x1x32xf32>
    %221 = vector.shape_cast %220 : vector<2x1x32xf32> to vector<2x32xf32>
    %c0_185 = arith.constant 0 : index
    %c864 = arith.constant 864 : index
    %222 = vector.load %arg16[%c0_185, %c864] : memref<2x2816xf32, #tpu.memory_space<vmem>>, vector<2x32xf32>
    tpu.vector_store %arg16[%c0_185, %c864], %221 {strides = array<i32>} : memref<2x2816xf32, #tpu.memory_space<vmem>>, vector<2x32xf32>,
    %c0_186 = arith.constant 0 : index
    %c28 = arith.constant 28 : index
    %c0_187 = arith.constant 0 : index
    %223 = vector.load %arg15[%c0_186, %c28, %c0_187] : memref<2x88x32xf32, #tpu.memory_space<vmem>>, vector<2x1x32xf32>
    %224 = vector.shape_cast %223 : vector<2x1x32xf32> to vector<2x32xf32>
    %c0_188 = arith.constant 0 : index
    %c896 = arith.constant 896 : index
    %225 = vector.load %arg16[%c0_188, %c896] : memref<2x2816xf32, #tpu.memory_space<vmem>>, vector<2x32xf32>
    tpu.vector_store %arg16[%c0_188, %c896], %224 {strides = array<i32>} : memref<2x2816xf32, #tpu.memory_space<vmem>>, vector<2x32xf32>,
    %c0_189 = arith.constant 0 : index
    %c29 = arith.constant 29 : index
    %c0_190 = arith.constant 0 : index
    %226 = vector.load %arg15[%c0_189, %c29, %c0_190] : memref<2x88x32xf32, #tpu.memory_space<vmem>>, vector<2x1x32xf32>
    %227 = vector.shape_cast %226 : vector<2x1x32xf32> to vector<2x32xf32>
    %c0_191 = arith.constant 0 : index
    %c928 = arith.constant 928 : index
    %228 = vector.load %arg16[%c0_191, %c928] : memref<2x2816xf32, #tpu.memory_space<vmem>>, vector<2x32xf32>
    tpu.vector_store %arg16[%c0_191, %c928], %227 {strides = array<i32>} : memref<2x2816xf32, #tpu.memory_space<vmem>>, vector<2x32xf32>,
    %c0_192 = arith.constant 0 : index
    %c30 = arith.constant 30 : index
    %c0_193 = arith.constant 0 : index
    %229 = vector.load %arg15[%c0_192, %c30, %c0_193] : memref<2x88x32xf32, #tpu.memory_space<vmem>>, vector<2x1x32xf32>
    %230 = vector.shape_cast %229 : vector<2x1x32xf32> to vector<2x32xf32>
    %c0_194 = arith.constant 0 : index
    %c960 = arith.constant 960 : index
    %231 = vector.load %arg16[%c0_194, %c960] : memref<2x2816xf32, #tpu.memory_space<vmem>>, vector<2x32xf32>
    tpu.vector_store %arg16[%c0_194, %c960], %230 {strides = array<i32>} : memref<2x2816xf32, #tpu.memory_space<vmem>>, vector<2x32xf32>,
    %c0_195 = arith.constant 0 : index
    %c31 = arith.constant 31 : index
    %c0_196 = arith.constant 0 : index
    %232 = vector.load %arg15[%c0_195, %c31, %c0_196] : memref<2x88x32xf32, #tpu.memory_space<vmem>>, vector<2x1x32xf32>
    %233 = vector.shape_cast %232 : vector<2x1x32xf32> to vector<2x32xf32>
    %c0_197 = arith.constant 0 : index
    %c992 = arith.constant 992 : index
    %234 = vector.load %arg16[%c0_197, %c992] : memref<2x2816xf32, #tpu.memory_space<vmem>>, vector<2x32xf32>
    tpu.vector_store %arg16[%c0_197, %c992], %233 {strides = array<i32>} : memref<2x2816xf32, #tpu.memory_space<vmem>>, vector<2x32xf32>,
    %c0_198 = arith.constant 0 : index
    %c32_199 = arith.constant 32 : index
    %c0_200 = arith.constant 0 : index
    %235 = vector.load %arg15[%c0_198, %c32_199, %c0_200] : memref<2x88x32xf32, #tpu.memory_space<vmem>>, vector<2x1x32xf32>
    %236 = vector.shape_cast %235 : vector<2x1x32xf32> to vector<2x32xf32>
    %c0_201 = arith.constant 0 : index
    %c1024 = arith.constant 1024 : index
    %237 = vector.load %arg16[%c0_201, %c1024] : memref<2x2816xf32, #tpu.memory_space<vmem>>, vector<2x32xf32>
    tpu.vector_store %arg16[%c0_201, %c1024], %236 {strides = array<i32>} : memref<2x2816xf32, #tpu.memory_space<vmem>>, vector<2x32xf32>,
    %c0_202 = arith.constant 0 : index
    %c33 = arith.constant 33 : index
    %c0_203 = arith.constant 0 : index
    %238 = vector.load %arg15[%c0_202, %c33, %c0_203] : memref<2x88x32xf32, #tpu.memory_space<vmem>>, vector<2x1x32xf32>
    %239 = vector.shape_cast %238 : vector<2x1x32xf32> to vector<2x32xf32>
    %c0_204 = arith.constant 0 : index
    %c1056 = arith.constant 1056 : index
    %240 = vector.load %arg16[%c0_204, %c1056] : memref<2x2816xf32, #tpu.memory_space<vmem>>, vector<2x32xf32>
    tpu.vector_store %arg16[%c0_204, %c1056], %239 {strides = array<i32>} : memref<2x2816xf32, #tpu.memory_space<vmem>>, vector<2x32xf32>,
    %c0_205 = arith.constant 0 : index
    %c34 = arith.constant 34 : index
    %c0_206 = arith.constant 0 : index
    %241 = vector.load %arg15[%c0_205, %c34, %c0_206] : memref<2x88x32xf32, #tpu.memory_space<vmem>>, vector<2x1x32xf32>
    %242 = vector.shape_cast %241 : vector<2x1x32xf32> to vector<2x32xf32>
    %c0_207 = arith.constant 0 : index
    %c1088 = arith.constant 1088 : index
    %243 = vector.load %arg16[%c0_207, %c1088] : memref<2x2816xf32, #tpu.memory_space<vmem>>, vector<2x32xf32>
    tpu.vector_store %arg16[%c0_207, %c1088], %242 {strides = array<i32>} : memref<2x2816xf32, #tpu.memory_space<vmem>>, vector<2x32xf32>,
    %c0_208 = arith.constant 0 : index
    %c35 = arith.constant 35 : index
    %c0_209 = arith.constant 0 : index
    %244 = vector.load %arg15[%c0_208, %c35, %c0_209] : memref<2x88x32xf32, #tpu.memory_space<vmem>>, vector<2x1x32xf32>
    %245 = vector.shape_cast %244 : vector<2x1x32xf32> to vector<2x32xf32>
    %c0_210 = arith.constant 0 : index
    %c1120 = arith.constant 1120 : index
    %246 = vector.load %arg16[%c0_210, %c1120] : memref<2x2816xf32, #tpu.memory_space<vmem>>, vector<2x32xf32>
    tpu.vector_store %arg16[%c0_210, %c1120], %245 {strides = array<i32>} : memref<2x2816xf32, #tpu.memory_space<vmem>>, vector<2x32xf32>,
    %c0_211 = arith.constant 0 : index
    %c36 = arith.constant 36 : index
    %c0_212 = arith.constant 0 : index
    %247 = vector.load %arg15[%c0_211, %c36, %c0_212] : memref<2x88x32xf32, #tpu.memory_space<vmem>>, vector<2x1x32xf32>
    %248 = vector.shape_cast %247 : vector<2x1x32xf32> to vector<2x32xf32>
    %c0_213 = arith.constant 0 : index
    %c1152 = arith.constant 1152 : index
    %249 = vector.load %arg16[%c0_213, %c1152] : memref<2x2816xf32, #tpu.memory_space<vmem>>, vector<2x32xf32>
    tpu.vector_store %arg16[%c0_213, %c1152], %248 {strides = array<i32>} : memref<2x2816xf32, #tpu.memory_space<vmem>>, vector<2x32xf32>,
    %c0_214 = arith.constant 0 : index
    %c37 = arith.constant 37 : index
    %c0_215 = arith.constant 0 : index
    %250 = vector.load %arg15[%c0_214, %c37, %c0_215] : memref<2x88x32xf32, #tpu.memory_space<vmem>>, vector<2x1x32xf32>
    %251 = vector.shape_cast %250 : vector<2x1x32xf32> to vector<2x32xf32>
    %c0_216 = arith.constant 0 : index
    %c1184 = arith.constant 1184 : index
    %252 = vector.load %arg16[%c0_216, %c1184] : memref<2x2816xf32, #tpu.memory_space<vmem>>, vector<2x32xf32>
    tpu.vector_store %arg16[%c0_216, %c1184], %251 {strides = array<i32>} : memref<2x2816xf32, #tpu.memory_space<vmem>>, vector<2x32xf32>,
    %c0_217 = arith.constant 0 : index
    %c38 = arith.constant 38 : index
    %c0_218 = arith.constant 0 : index
    %253 = vector.load %arg15[%c0_217, %c38, %c0_218] : memref<2x88x32xf32, #tpu.memory_space<vmem>>, vector<2x1x32xf32>
    %254 = vector.shape_cast %253 : vector<2x1x32xf32> to vector<2x32xf32>
    %c0_219 = arith.constant 0 : index
    %c1216 = arith.constant 1216 : index
    %255 = vector.load %arg16[%c0_219, %c1216] : memref<2x2816xf32, #tpu.memory_space<vmem>>, vector<2x32xf32>
    tpu.vector_store %arg16[%c0_219, %c1216], %254 {strides = array<i32>} : memref<2x2816xf32, #tpu.memory_space<vmem>>, vector<2x32xf32>,
    %c0_220 = arith.constant 0 : index
    %c39 = arith.constant 39 : index
    %c0_221 = arith.constant 0 : index
    %256 = vector.load %arg15[%c0_220, %c39, %c0_221] : memref<2x88x32xf32, #tpu.memory_space<vmem>>, vector<2x1x32xf32>
    %257 = vector.shape_cast %256 : vector<2x1x32xf32> to vector<2x32xf32>
    %c0_222 = arith.constant 0 : index
    %c1248 = arith.constant 1248 : index
    %258 = vector.load %arg16[%c0_222, %c1248] : memref<2x2816xf32, #tpu.memory_space<vmem>>, vector<2x32xf32>
    tpu.vector_store %arg16[%c0_222, %c1248], %257 {strides = array<i32>} : memref<2x2816xf32, #tpu.memory_space<vmem>>, vector<2x32xf32>,
    %c0_223 = arith.constant 0 : index
    %c40 = arith.constant 40 : index
    %c0_224 = arith.constant 0 : index
    %259 = vector.load %arg15[%c0_223, %c40, %c0_224] : memref<2x88x32xf32, #tpu.memory_space<vmem>>, vector<2x1x32xf32>
    %260 = vector.shape_cast %259 : vector<2x1x32xf32> to vector<2x32xf32>
    %c0_225 = arith.constant 0 : index
    %c1280 = arith.constant 1280 : index
    %261 = vector.load %arg16[%c0_225, %c1280] : memref<2x2816xf32, #tpu.memory_space<vmem>>, vector<2x32xf32>
    tpu.vector_store %arg16[%c0_225, %c1280], %260 {strides = array<i32>} : memref<2x2816xf32, #tpu.memory_space<vmem>>, vector<2x32xf32>,
    %c0_226 = arith.constant 0 : index
    %c41 = arith.constant 41 : index
    %c0_227 = arith.constant 0 : index
    %262 = vector.load %arg15[%c0_226, %c41, %c0_227] : memref<2x88x32xf32, #tpu.memory_space<vmem>>, vector<2x1x32xf32>
    %263 = vector.shape_cast %262 : vector<2x1x32xf32> to vector<2x32xf32>
    %c0_228 = arith.constant 0 : index
    %c1312 = arith.constant 1312 : index
    %264 = vector.load %arg16[%c0_228, %c1312] : memref<2x2816xf32, #tpu.memory_space<vmem>>, vector<2x32xf32>
    tpu.vector_store %arg16[%c0_228, %c1312], %263 {strides = array<i32>} : memref<2x2816xf32, #tpu.memory_space<vmem>>, vector<2x32xf32>,
    %c0_229 = arith.constant 0 : index
    %c42 = arith.constant 42 : index
    %c0_230 = arith.constant 0 : index
    %265 = vector.load %arg15[%c0_229, %c42, %c0_230] : memref<2x88x32xf32, #tpu.memory_space<vmem>>, vector<2x1x32xf32>
    %266 = vector.shape_cast %265 : vector<2x1x32xf32> to vector<2x32xf32>
    %c0_231 = arith.constant 0 : index
    %c1344 = arith.constant 1344 : index
    %267 = vector.load %arg16[%c0_231, %c1344] : memref<2x2816xf32, #tpu.memory_space<vmem>>, vector<2x32xf32>
    tpu.vector_store %arg16[%c0_231, %c1344], %266 {strides = array<i32>} : memref<2x2816xf32, #tpu.memory_space<vmem>>, vector<2x32xf32>,
    %c0_232 = arith.constant 0 : index
    %c43 = arith.constant 43 : index
    %c0_233 = arith.constant 0 : index
    %268 = vector.load %arg15[%c0_232, %c43, %c0_233] : memref<2x88x32xf32, #tpu.memory_space<vmem>>, vector<2x1x32xf32>
    %269 = vector.shape_cast %268 : vector<2x1x32xf32> to vector<2x32xf32>
    %c0_234 = arith.constant 0 : index
    %c1376 = arith.constant 1376 : index
    %270 = vector.load %arg16[%c0_234, %c1376] : memref<2x2816xf32, #tpu.memory_space<vmem>>, vector<2x32xf32>
    tpu.vector_store %arg16[%c0_234, %c1376], %269 {strides = array<i32>} : memref<2x2816xf32, #tpu.memory_space<vmem>>, vector<2x32xf32>,
    %c0_235 = arith.constant 0 : index
    %c44 = arith.constant 44 : index
    %c0_236 = arith.constant 0 : index
    %271 = vector.load %arg15[%c0_235, %c44, %c0_236] : memref<2x88x32xf32, #tpu.memory_space<vmem>>, vector<2x1x32xf32>
    %272 = vector.shape_cast %271 : vector<2x1x32xf32> to vector<2x32xf32>
    %c0_237 = arith.constant 0 : index
    %c1408 = arith.constant 1408 : index
    %273 = vector.load %arg16[%c0_237, %c1408] : memref<2x2816xf32, #tpu.memory_space<vmem>>, vector<2x32xf32>
    tpu.vector_store %arg16[%c0_237, %c1408], %272 {strides = array<i32>} : memref<2x2816xf32, #tpu.memory_space<vmem>>, vector<2x32xf32>,
    %c0_238 = arith.constant 0 : index
    %c45 = arith.constant 45 : index
    %c0_239 = arith.constant 0 : index
    %274 = vector.load %arg15[%c0_238, %c45, %c0_239] : memref<2x88x32xf32, #tpu.memory_space<vmem>>, vector<2x1x32xf32>
    %275 = vector.shape_cast %274 : vector<2x1x32xf32> to vector<2x32xf32>
    %c0_240 = arith.constant 0 : index
    %c1440 = arith.constant 1440 : index
    %276 = vector.load %arg16[%c0_240, %c1440] : memref<2x2816xf32, #tpu.memory_space<vmem>>, vector<2x32xf32>
    tpu.vector_store %arg16[%c0_240, %c1440], %275 {strides = array<i32>} : memref<2x2816xf32, #tpu.memory_space<vmem>>, vector<2x32xf32>,
    %c0_241 = arith.constant 0 : index
    %c46 = arith.constant 46 : index
    %c0_242 = arith.constant 0 : index
    %277 = vector.load %arg15[%c0_241, %c46, %c0_242] : memref<2x88x32xf32, #tpu.memory_space<vmem>>, vector<2x1x32xf32>
    %278 = vector.shape_cast %277 : vector<2x1x32xf32> to vector<2x32xf32>
    %c0_243 = arith.constant 0 : index
    %c1472 = arith.constant 1472 : index
    %279 = vector.load %arg16[%c0_243, %c1472] : memref<2x2816xf32, #tpu.memory_space<vmem>>, vector<2x32xf32>
    tpu.vector_store %arg16[%c0_243, %c1472], %278 {strides = array<i32>} : memref<2x2816xf32, #tpu.memory_space<vmem>>, vector<2x32xf32>,
    %c0_244 = arith.constant 0 : index
    %c47 = arith.constant 47 : index
    %c0_245 = arith.constant 0 : index
    %280 = vector.load %arg15[%c0_244, %c47, %c0_245] : memref<2x88x32xf32, #tpu.memory_space<vmem>>, vector<2x1x32xf32>
    %281 = vector.shape_cast %280 : vector<2x1x32xf32> to vector<2x32xf32>
    %c0_246 = arith.constant 0 : index
    %c1504 = arith.constant 1504 : index
    %282 = vector.load %arg16[%c0_246, %c1504] : memref<2x2816xf32, #tpu.memory_space<vmem>>, vector<2x32xf32>
    tpu.vector_store %arg16[%c0_246, %c1504], %281 {strides = array<i32>} : memref<2x2816xf32, #tpu.memory_space<vmem>>, vector<2x32xf32>,
    %c0_247 = arith.constant 0 : index
    %c48 = arith.constant 48 : index
    %c0_248 = arith.constant 0 : index
    %283 = vector.load %arg15[%c0_247, %c48, %c0_248] : memref<2x88x32xf32, #tpu.memory_space<vmem>>, vector<2x1x32xf32>
    %284 = vector.shape_cast %283 : vector<2x1x32xf32> to vector<2x32xf32>
    %c0_249 = arith.constant 0 : index
    %c1536 = arith.constant 1536 : index
    %285 = vector.load %arg16[%c0_249, %c1536] : memref<2x2816xf32, #tpu.memory_space<vmem>>, vector<2x32xf32>
    tpu.vector_store %arg16[%c0_249, %c1536], %284 {strides = array<i32>} : memref<2x2816xf32, #tpu.memory_space<vmem>>, vector<2x32xf32>,
    %c0_250 = arith.constant 0 : index
    %c49 = arith.constant 49 : index
    %c0_251 = arith.constant 0 : index
    %286 = vector.load %arg15[%c0_250, %c49, %c0_251] : memref<2x88x32xf32, #tpu.memory_space<vmem>>, vector<2x1x32xf32>
    %287 = vector.shape_cast %286 : vector<2x1x32xf32> to vector<2x32xf32>
    %c0_252 = arith.constant 0 : index
    %c1568 = arith.constant 1568 : index
    %288 = vector.load %arg16[%c0_252, %c1568] : memref<2x2816xf32, #tpu.memory_space<vmem>>, vector<2x32xf32>
    tpu.vector_store %arg16[%c0_252, %c1568], %287 {strides = array<i32>} : memref<2x2816xf32, #tpu.memory_space<vmem>>, vector<2x32xf32>,
    %c0_253 = arith.constant 0 : index
    %c50 = arith.constant 50 : index
    %c0_254 = arith.constant 0 : index
    %289 = vector.load %arg15[%c0_253, %c50, %c0_254] : memref<2x88x32xf32, #tpu.memory_space<vmem>>, vector<2x1x32xf32>
    %290 = vector.shape_cast %289 : vector<2x1x32xf32> to vector<2x32xf32>
    %c0_255 = arith.constant 0 : index
    %c1600 = arith.constant 1600 : index
    %291 = vector.load %arg16[%c0_255, %c1600] : memref<2x2816xf32, #tpu.memory_space<vmem>>, vector<2x32xf32>
    tpu.vector_store %arg16[%c0_255, %c1600], %290 {strides = array<i32>} : memref<2x2816xf32, #tpu.memory_space<vmem>>, vector<2x32xf32>,
    %c0_256 = arith.constant 0 : index
    %c51 = arith.constant 51 : index
    %c0_257 = arith.constant 0 : index
    %292 = vector.load %arg15[%c0_256, %c51, %c0_257] : memref<2x88x32xf32, #tpu.memory_space<vmem>>, vector<2x1x32xf32>
    %293 = vector.shape_cast %292 : vector<2x1x32xf32> to vector<2x32xf32>
    %c0_258 = arith.constant 0 : index
    %c1632 = arith.constant 1632 : index
    %294 = vector.load %arg16[%c0_258, %c1632] : memref<2x2816xf32, #tpu.memory_space<vmem>>, vector<2x32xf32>
    tpu.vector_store %arg16[%c0_258, %c1632], %293 {strides = array<i32>} : memref<2x2816xf32, #tpu.memory_space<vmem>>, vector<2x32xf32>,
    %c0_259 = arith.constant 0 : index
    %c52 = arith.constant 52 : index
    %c0_260 = arith.constant 0 : index
    %295 = vector.load %arg15[%c0_259, %c52, %c0_260] : memref<2x88x32xf32, #tpu.memory_space<vmem>>, vector<2x1x32xf32>
    %296 = vector.shape_cast %295 : vector<2x1x32xf32> to vector<2x32xf32>
    %c0_261 = arith.constant 0 : index
    %c1664 = arith.constant 1664 : index
    %297 = vector.load %arg16[%c0_261, %c1664] : memref<2x2816xf32, #tpu.memory_space<vmem>>, vector<2x32xf32>
    tpu.vector_store %arg16[%c0_261, %c1664], %296 {strides = array<i32>} : memref<2x2816xf32, #tpu.memory_space<vmem>>, vector<2x32xf32>,
    %c0_262 = arith.constant 0 : index
    %c53 = arith.constant 53 : index
    %c0_263 = arith.constant 0 : index
    %298 = vector.load %arg15[%c0_262, %c53, %c0_263] : memref<2x88x32xf32, #tpu.memory_space<vmem>>, vector<2x1x32xf32>
    %299 = vector.shape_cast %298 : vector<2x1x32xf32> to vector<2x32xf32>
    %c0_264 = arith.constant 0 : index
    %c1696 = arith.constant 1696 : index
    %300 = vector.load %arg16[%c0_264, %c1696] : memref<2x2816xf32, #tpu.memory_space<vmem>>, vector<2x32xf32>
    tpu.vector_store %arg16[%c0_264, %c1696], %299 {strides = array<i32>} : memref<2x2816xf32, #tpu.memory_space<vmem>>, vector<2x32xf32>,
    %c0_265 = arith.constant 0 : index
    %c54 = arith.constant 54 : index
    %c0_266 = arith.constant 0 : index
    %301 = vector.load %arg15[%c0_265, %c54, %c0_266] : memref<2x88x32xf32, #tpu.memory_space<vmem>>, vector<2x1x32xf32>
    %302 = vector.shape_cast %301 : vector<2x1x32xf32> to vector<2x32xf32>
    %c0_267 = arith.constant 0 : index
    %c1728 = arith.constant 1728 : index
    %303 = vector.load %arg16[%c0_267, %c1728] : memref<2x2816xf32, #tpu.memory_space<vmem>>, vector<2x32xf32>
    tpu.vector_store %arg16[%c0_267, %c1728], %302 {strides = array<i32>} : memref<2x2816xf32, #tpu.memory_space<vmem>>, vector<2x32xf32>,
    %c0_268 = arith.constant 0 : index
    %c55 = arith.constant 55 : index
    %c0_269 = arith.constant 0 : index
    %304 = vector.load %arg15[%c0_268, %c55, %c0_269] : memref<2x88x32xf32, #tpu.memory_space<vmem>>, vector<2x1x32xf32>
    %305 = vector.shape_cast %304 : vector<2x1x32xf32> to vector<2x32xf32>
    %c0_270 = arith.constant 0 : index
    %c1760 = arith.constant 1760 : index
    %306 = vector.load %arg16[%c0_270, %c1760] : memref<2x2816xf32, #tpu.memory_space<vmem>>, vector<2x32xf32>
    tpu.vector_store %arg16[%c0_270, %c1760], %305 {strides = array<i32>} : memref<2x2816xf32, #tpu.memory_space<vmem>>, vector<2x32xf32>,
    %c0_271 = arith.constant 0 : index
    %c56 = arith.constant 56 : index
    %c0_272 = arith.constant 0 : index
    %307 = vector.load %arg15[%c0_271, %c56, %c0_272] : memref<2x88x32xf32, #tpu.memory_space<vmem>>, vector<2x1x32xf32>
    %308 = vector.shape_cast %307 : vector<2x1x32xf32> to vector<2x32xf32>
    %c0_273 = arith.constant 0 : index
    %c1792 = arith.constant 1792 : index
    %309 = vector.load %arg16[%c0_273, %c1792] : memref<2x2816xf32, #tpu.memory_space<vmem>>, vector<2x32xf32>
    tpu.vector_store %arg16[%c0_273, %c1792], %308 {strides = array<i32>} : memref<2x2816xf32, #tpu.memory_space<vmem>>, vector<2x32xf32>,
    %c0_274 = arith.constant 0 : index
    %c57 = arith.constant 57 : index
    %c0_275 = arith.constant 0 : index
    %310 = vector.load %arg15[%c0_274, %c57, %c0_275] : memref<2x88x32xf32, #tpu.memory_space<vmem>>, vector<2x1x32xf32>
    %311 = vector.shape_cast %310 : vector<2x1x32xf32> to vector<2x32xf32>
    %c0_276 = arith.constant 0 : index
    %c1824 = arith.constant 1824 : index
    %312 = vector.load %arg16[%c0_276, %c1824] : memref<2x2816xf32, #tpu.memory_space<vmem>>, vector<2x32xf32>
    tpu.vector_store %arg16[%c0_276, %c1824], %311 {strides = array<i32>} : memref<2x2816xf32, #tpu.memory_space<vmem>>, vector<2x32xf32>,
    %c0_277 = arith.constant 0 : index
    %c58 = arith.constant 58 : index
    %c0_278 = arith.constant 0 : index
    %313 = vector.load %arg15[%c0_277, %c58, %c0_278] : memref<2x88x32xf32, #tpu.memory_space<vmem>>, vector<2x1x32xf32>
    %314 = vector.shape_cast %313 : vector<2x1x32xf32> to vector<2x32xf32>
    %c0_279 = arith.constant 0 : index
    %c1856 = arith.constant 1856 : index
    %315 = vector.load %arg16[%c0_279, %c1856] : memref<2x2816xf32, #tpu.memory_space<vmem>>, vector<2x32xf32>
    tpu.vector_store %arg16[%c0_279, %c1856], %314 {strides = array<i32>} : memref<2x2816xf32, #tpu.memory_space<vmem>>, vector<2x32xf32>,
    %c0_280 = arith.constant 0 : index
    %c59 = arith.constant 59 : index
    %c0_281 = arith.constant 0 : index
    %316 = vector.load %arg15[%c0_280, %c59, %c0_281] : memref<2x88x32xf32, #tpu.memory_space<vmem>>, vector<2x1x32xf32>
    %317 = vector.shape_cast %316 : vector<2x1x32xf32> to vector<2x32xf32>
    %c0_282 = arith.constant 0 : index
    %c1888 = arith.constant 1888 : index
    %318 = vector.load %arg16[%c0_282, %c1888] : memref<2x2816xf32, #tpu.memory_space<vmem>>, vector<2x32xf32>
    tpu.vector_store %arg16[%c0_282, %c1888], %317 {strides = array<i32>} : memref<2x2816xf32, #tpu.memory_space<vmem>>, vector<2x32xf32>,
    %c0_283 = arith.constant 0 : index
    %c60 = arith.constant 60 : index
    %c0_284 = arith.constant 0 : index
    %319 = vector.load %arg15[%c0_283, %c60, %c0_284] : memref<2x88x32xf32, #tpu.memory_space<vmem>>, vector<2x1x32xf32>
    %320 = vector.shape_cast %319 : vector<2x1x32xf32> to vector<2x32xf32>
    %c0_285 = arith.constant 0 : index
    %c1920 = arith.constant 1920 : index
    %321 = vector.load %arg16[%c0_285, %c1920] : memref<2x2816xf32, #tpu.memory_space<vmem>>, vector<2x32xf32>
    tpu.vector_store %arg16[%c0_285, %c1920], %320 {strides = array<i32>} : memref<2x2816xf32, #tpu.memory_space<vmem>>, vector<2x32xf32>,
    %c0_286 = arith.constant 0 : index
    %c61 = arith.constant 61 : index
    %c0_287 = arith.constant 0 : index
    %322 = vector.load %arg15[%c0_286, %c61, %c0_287] : memref<2x88x32xf32, #tpu.memory_space<vmem>>, vector<2x1x32xf32>
    %323 = vector.shape_cast %322 : vector<2x1x32xf32> to vector<2x32xf32>
    %c0_288 = arith.constant 0 : index
    %c1952 = arith.constant 1952 : index
    %324 = vector.load %arg16[%c0_288, %c1952] : memref<2x2816xf32, #tpu.memory_space<vmem>>, vector<2x32xf32>
    tpu.vector_store %arg16[%c0_288, %c1952], %323 {strides = array<i32>} : memref<2x2816xf32, #tpu.memory_space<vmem>>, vector<2x32xf32>,
    %c0_289 = arith.constant 0 : index
    %c62 = arith.constant 62 : index
    %c0_290 = arith.constant 0 : index
    %325 = vector.load %arg15[%c0_289, %c62, %c0_290] : memref<2x88x32xf32, #tpu.memory_space<vmem>>, vector<2x1x32xf32>
    %326 = vector.shape_cast %325 : vector<2x1x32xf32> to vector<2x32xf32>
    %c0_291 = arith.constant 0 : index
    %c1984 = arith.constant 1984 : index
    %327 = vector.load %arg16[%c0_291, %c1984] : memref<2x2816xf32, #tpu.memory_space<vmem>>, vector<2x32xf32>
    tpu.vector_store %arg16[%c0_291, %c1984], %326 {strides = array<i32>} : memref<2x2816xf32, #tpu.memory_space<vmem>>, vector<2x32xf32>,
    %c0_292 = arith.constant 0 : index
    %c63 = arith.constant 63 : index
    %c0_293 = arith.constant 0 : index
    %328 = vector.load %arg15[%c0_292, %c63, %c0_293] : memref<2x88x32xf32, #tpu.memory_space<vmem>>, vector<2x1x32xf32>
    %329 = vector.shape_cast %328 : vector<2x1x32xf32> to vector<2x32xf32>
    %c0_294 = arith.constant 0 : index
    %c2016 = arith.constant 2016 : index
    %330 = vector.load %arg16[%c0_294, %c2016] : memref<2x2816xf32, #tpu.memory_space<vmem>>, vector<2x32xf32>
    tpu.vector_store %arg16[%c0_294, %c2016], %329 {strides = array<i32>} : memref<2x2816xf32, #tpu.memory_space<vmem>>, vector<2x32xf32>,
    %c0_295 = arith.constant 0 : index
    %c64_296 = arith.constant 64 : index
    %c0_297 = arith.constant 0 : index
    %331 = vector.load %arg15[%c0_295, %c64_296, %c0_297] : memref<2x88x32xf32, #tpu.memory_space<vmem>>, vector<2x1x32xf32>
    %332 = vector.shape_cast %331 : vector<2x1x32xf32> to vector<2x32xf32>
    %c0_298 = arith.constant 0 : index
    %c2048 = arith.constant 2048 : index
    %333 = vector.load %arg16[%c0_298, %c2048] : memref<2x2816xf32, #tpu.memory_space<vmem>>, vector<2x32xf32>
    tpu.vector_store %arg16[%c0_298, %c2048], %332 {strides = array<i32>} : memref<2x2816xf32, #tpu.memory_space<vmem>>, vector<2x32xf32>,
    %c0_299 = arith.constant 0 : index
    %c65 = arith.constant 65 : index
    %c0_300 = arith.constant 0 : index
    %334 = vector.load %arg15[%c0_299, %c65, %c0_300] : memref<2x88x32xf32, #tpu.memory_space<vmem>>, vector<2x1x32xf32>
    %335 = vector.shape_cast %334 : vector<2x1x32xf32> to vector<2x32xf32>
    %c0_301 = arith.constant 0 : index
    %c2080 = arith.constant 2080 : index
    %336 = vector.load %arg16[%c0_301, %c2080] : memref<2x2816xf32, #tpu.memory_space<vmem>>, vector<2x32xf32>
    tpu.vector_store %arg16[%c0_301, %c2080], %335 {strides = array<i32>} : memref<2x2816xf32, #tpu.memory_space<vmem>>, vector<2x32xf32>,
    %c0_302 = arith.constant 0 : index
    %c66 = arith.constant 66 : index
    %c0_303 = arith.constant 0 : index
    %337 = vector.load %arg15[%c0_302, %c66, %c0_303] : memref<2x88x32xf32, #tpu.memory_space<vmem>>, vector<2x1x32xf32>
    %338 = vector.shape_cast %337 : vector<2x1x32xf32> to vector<2x32xf32>
    %c0_304 = arith.constant 0 : index
    %c2112 = arith.constant 2112 : index
    %339 = vector.load %arg16[%c0_304, %c2112] : memref<2x2816xf32, #tpu.memory_space<vmem>>, vector<2x32xf32>
    tpu.vector_store %arg16[%c0_304, %c2112], %338 {strides = array<i32>} : memref<2x2816xf32, #tpu.memory_space<vmem>>, vector<2x32xf32>,
    %c0_305 = arith.constant 0 : index
    %c67 = arith.constant 67 : index
    %c0_306 = arith.constant 0 : index
    %340 = vector.load %arg15[%c0_305, %c67, %c0_306] : memref<2x88x32xf32, #tpu.memory_space<vmem>>, vector<2x1x32xf32>
    %341 = vector.shape_cast %340 : vector<2x1x32xf32> to vector<2x32xf32>
    %c0_307 = arith.constant 0 : index
    %c2144 = arith.constant 2144 : index
    %342 = vector.load %arg16[%c0_307, %c2144] : memref<2x2816xf32, #tpu.memory_space<vmem>>, vector<2x32xf32>
    tpu.vector_store %arg16[%c0_307, %c2144], %341 {strides = array<i32>} : memref<2x2816xf32, #tpu.memory_space<vmem>>, vector<2x32xf32>,
    %c0_308 = arith.constant 0 : index
    %c68 = arith.constant 68 : index
    %c0_309 = arith.constant 0 : index
    %343 = vector.load %arg15[%c0_308, %c68, %c0_309] : memref<2x88x32xf32, #tpu.memory_space<vmem>>, vector<2x1x32xf32>
    %344 = vector.shape_cast %343 : vector<2x1x32xf32> to vector<2x32xf32>
    %c0_310 = arith.constant 0 : index
    %c2176 = arith.constant 2176 : index
    %345 = vector.load %arg16[%c0_310, %c2176] : memref<2x2816xf32, #tpu.memory_space<vmem>>, vector<2x32xf32>
    tpu.vector_store %arg16[%c0_310, %c2176], %344 {strides = array<i32>} : memref<2x2816xf32, #tpu.memory_space<vmem>>, vector<2x32xf32>,
    %c0_311 = arith.constant 0 : index
    %c69 = arith.constant 69 : index
    %c0_312 = arith.constant 0 : index
    %346 = vector.load %arg15[%c0_311, %c69, %c0_312] : memref<2x88x32xf32, #tpu.memory_space<vmem>>, vector<2x1x32xf32>
    %347 = vector.shape_cast %346 : vector<2x1x32xf32> to vector<2x32xf32>
    %c0_313 = arith.constant 0 : index
    %c2208 = arith.constant 2208 : index
    %348 = vector.load %arg16[%c0_313, %c2208] : memref<2x2816xf32, #tpu.memory_space<vmem>>, vector<2x32xf32>
    tpu.vector_store %arg16[%c0_313, %c2208], %347 {strides = array<i32>} : memref<2x2816xf32, #tpu.memory_space<vmem>>, vector<2x32xf32>,
    %c0_314 = arith.constant 0 : index
    %c70 = arith.constant 70 : index
    %c0_315 = arith.constant 0 : index
    %349 = vector.load %arg15[%c0_314, %c70, %c0_315] : memref<2x88x32xf32, #tpu.memory_space<vmem>>, vector<2x1x32xf32>
    %350 = vector.shape_cast %349 : vector<2x1x32xf32> to vector<2x32xf32>
    %c0_316 = arith.constant 0 : index
    %c2240 = arith.constant 2240 : index
    %351 = vector.load %arg16[%c0_316, %c2240] : memref<2x2816xf32, #tpu.memory_space<vmem>>, vector<2x32xf32>
    tpu.vector_store %arg16[%c0_316, %c2240], %350 {strides = array<i32>} : memref<2x2816xf32, #tpu.memory_space<vmem>>, vector<2x32xf32>,
    %c0_317 = arith.constant 0 : index
    %c71 = arith.constant 71 : index
    %c0_318 = arith.constant 0 : index
    %352 = vector.load %arg15[%c0_317, %c71, %c0_318] : memref<2x88x32xf32, #tpu.memory_space<vmem>>, vector<2x1x32xf32>
    %353 = vector.shape_cast %352 : vector<2x1x32xf32> to vector<2x32xf32>
    %c0_319 = arith.constant 0 : index
    %c2272 = arith.constant 2272 : index
    %354 = vector.load %arg16[%c0_319, %c2272] : memref<2x2816xf32, #tpu.memory_space<vmem>>, vector<2x32xf32>
    tpu.vector_store %arg16[%c0_319, %c2272], %353 {strides = array<i32>} : memref<2x2816xf32, #tpu.memory_space<vmem>>, vector<2x32xf32>,
    %c0_320 = arith.constant 0 : index
    %c72 = arith.constant 72 : index
    %c0_321 = arith.constant 0 : index
    %355 = vector.load %arg15[%c0_320, %c72, %c0_321] : memref<2x88x32xf32, #tpu.memory_space<vmem>>, vector<2x1x32xf32>
    %356 = vector.shape_cast %355 : vector<2x1x32xf32> to vector<2x32xf32>
    %c0_322 = arith.constant 0 : index
    %c2304 = arith.constant 2304 : index
    %357 = vector.load %arg16[%c0_322, %c2304] : memref<2x2816xf32, #tpu.memory_space<vmem>>, vector<2x32xf32>
    tpu.vector_store %arg16[%c0_322, %c2304], %356 {strides = array<i32>} : memref<2x2816xf32, #tpu.memory_space<vmem>>, vector<2x32xf32>,
    %c0_323 = arith.constant 0 : index
    %c73 = arith.constant 73 : index
    %c0_324 = arith.constant 0 : index
    %358 = vector.load %arg15[%c0_323, %c73, %c0_324] : memref<2x88x32xf32, #tpu.memory_space<vmem>>, vector<2x1x32xf32>
    %359 = vector.shape_cast %358 : vector<2x1x32xf32> to vector<2x32xf32>
    %c0_325 = arith.constant 0 : index
    %c2336 = arith.constant 2336 : index
    %360 = vector.load %arg16[%c0_325, %c2336] : memref<2x2816xf32, #tpu.memory_space<vmem>>, vector<2x32xf32>
    tpu.vector_store %arg16[%c0_325, %c2336], %359 {strides = array<i32>} : memref<2x2816xf32, #tpu.memory_space<vmem>>, vector<2x32xf32>,
    %c0_326 = arith.constant 0 : index
    %c74 = arith.constant 74 : index
    %c0_327 = arith.constant 0 : index
    %361 = vector.load %arg15[%c0_326, %c74, %c0_327] : memref<2x88x32xf32, #tpu.memory_space<vmem>>, vector<2x1x32xf32>
    %362 = vector.shape_cast %361 : vector<2x1x32xf32> to vector<2x32xf32>
    %c0_328 = arith.constant 0 : index
    %c2368 = arith.constant 2368 : index
    %363 = vector.load %arg16[%c0_328, %c2368] : memref<2x2816xf32, #tpu.memory_space<vmem>>, vector<2x32xf32>
    tpu.vector_store %arg16[%c0_328, %c2368], %362 {strides = array<i32>} : memref<2x2816xf32, #tpu.memory_space<vmem>>, vector<2x32xf32>,
    %c0_329 = arith.constant 0 : index
    %c75 = arith.constant 75 : index
    %c0_330 = arith.constant 0 : index
    %364 = vector.load %arg15[%c0_329, %c75, %c0_330] : memref<2x88x32xf32, #tpu.memory_space<vmem>>, vector<2x1x32xf32>
    %365 = vector.shape_cast %364 : vector<2x1x32xf32> to vector<2x32xf32>
    %c0_331 = arith.constant 0 : index
    %c2400 = arith.constant 2400 : index
    %366 = vector.load %arg16[%c0_331, %c2400] : memref<2x2816xf32, #tpu.memory_space<vmem>>, vector<2x32xf32>
    tpu.vector_store %arg16[%c0_331, %c2400], %365 {strides = array<i32>} : memref<2x2816xf32, #tpu.memory_space<vmem>>, vector<2x32xf32>,
    %c0_332 = arith.constant 0 : index
    %c76 = arith.constant 76 : index
    %c0_333 = arith.constant 0 : index
    %367 = vector.load %arg15[%c0_332, %c76, %c0_333] : memref<2x88x32xf32, #tpu.memory_space<vmem>>, vector<2x1x32xf32>
    %368 = vector.shape_cast %367 : vector<2x1x32xf32> to vector<2x32xf32>
    %c0_334 = arith.constant 0 : index
    %c2432 = arith.constant 2432 : index
    %369 = vector.load %arg16[%c0_334, %c2432] : memref<2x2816xf32, #tpu.memory_space<vmem>>, vector<2x32xf32>
    tpu.vector_store %arg16[%c0_334, %c2432], %368 {strides = array<i32>} : memref<2x2816xf32, #tpu.memory_space<vmem>>, vector<2x32xf32>,
    %c0_335 = arith.constant 0 : index
    %c77 = arith.constant 77 : index
    %c0_336 = arith.constant 0 : index
    %370 = vector.load %arg15[%c0_335, %c77, %c0_336] : memref<2x88x32xf32, #tpu.memory_space<vmem>>, vector<2x1x32xf32>
    %371 = vector.shape_cast %370 : vector<2x1x32xf32> to vector<2x32xf32>
    %c0_337 = arith.constant 0 : index
    %c2464 = arith.constant 2464 : index
    %372 = vector.load %arg16[%c0_337, %c2464] : memref<2x2816xf32, #tpu.memory_space<vmem>>, vector<2x32xf32>
    tpu.vector_store %arg16[%c0_337, %c2464], %371 {strides = array<i32>} : memref<2x2816xf32, #tpu.memory_space<vmem>>, vector<2x32xf32>,
    %c0_338 = arith.constant 0 : index
    %c78 = arith.constant 78 : index
    %c0_339 = arith.constant 0 : index
    %373 = vector.load %arg15[%c0_338, %c78, %c0_339] : memref<2x88x32xf32, #tpu.memory_space<vmem>>, vector<2x1x32xf32>
    %374 = vector.shape_cast %373 : vector<2x1x32xf32> to vector<2x32xf32>
    %c0_340 = arith.constant 0 : index
    %c2496 = arith.constant 2496 : index
    %375 = vector.load %arg16[%c0_340, %c2496] : memref<2x2816xf32, #tpu.memory_space<vmem>>, vector<2x32xf32>
    tpu.vector_store %arg16[%c0_340, %c2496], %374 {strides = array<i32>} : memref<2x2816xf32, #tpu.memory_space<vmem>>, vector<2x32xf32>,
    %c0_341 = arith.constant 0 : index
    %c79 = arith.constant 79 : index
    %c0_342 = arith.constant 0 : index
    %376 = vector.load %arg15[%c0_341, %c79, %c0_342] : memref<2x88x32xf32, #tpu.memory_space<vmem>>, vector<2x1x32xf32>
    %377 = vector.shape_cast %376 : vector<2x1x32xf32> to vector<2x32xf32>
    %c0_343 = arith.constant 0 : index
    %c2528 = arith.constant 2528 : index
    %378 = vector.load %arg16[%c0_343, %c2528] : memref<2x2816xf32, #tpu.memory_space<vmem>>, vector<2x32xf32>
    tpu.vector_store %arg16[%c0_343, %c2528], %377 {strides = array<i32>} : memref<2x2816xf32, #tpu.memory_space<vmem>>, vector<2x32xf32>,
    %c0_344 = arith.constant 0 : index
    %c80 = arith.constant 80 : index
    %c0_345 = arith.constant 0 : index
    %379 = vector.load %arg15[%c0_344, %c80, %c0_345] : memref<2x88x32xf32, #tpu.memory_space<vmem>>, vector<2x1x32xf32>
    %380 = vector.shape_cast %379 : vector<2x1x32xf32> to vector<2x32xf32>
    %c0_346 = arith.constant 0 : index
    %c2560 = arith.constant 2560 : index
    %381 = vector.load %arg16[%c0_346, %c2560] : memref<2x2816xf32, #tpu.memory_space<vmem>>, vector<2x32xf32>
    tpu.vector_store %arg16[%c0_346, %c2560], %380 {strides = array<i32>} : memref<2x2816xf32, #tpu.memory_space<vmem>>, vector<2x32xf32>,
    %c0_347 = arith.constant 0 : index
    %c81 = arith.constant 81 : index
    %c0_348 = arith.constant 0 : index
    %382 = vector.load %arg15[%c0_347, %c81, %c0_348] : memref<2x88x32xf32, #tpu.memory_space<vmem>>, vector<2x1x32xf32>
    %383 = vector.shape_cast %382 : vector<2x1x32xf32> to vector<2x32xf32>
    %c0_349 = arith.constant 0 : index
    %c2592 = arith.constant 2592 : index
    %384 = vector.load %arg16[%c0_349, %c2592] : memref<2x2816xf32, #tpu.memory_space<vmem>>, vector<2x32xf32>
    tpu.vector_store %arg16[%c0_349, %c2592], %383 {strides = array<i32>} : memref<2x2816xf32, #tpu.memory_space<vmem>>, vector<2x32xf32>,
    %c0_350 = arith.constant 0 : index
    %c82 = arith.constant 82 : index
    %c0_351 = arith.constant 0 : index
    %385 = vector.load %arg15[%c0_350, %c82, %c0_351] : memref<2x88x32xf32, #tpu.memory_space<vmem>>, vector<2x1x32xf32>
    %386 = vector.shape_cast %385 : vector<2x1x32xf32> to vector<2x32xf32>
    %c0_352 = arith.constant 0 : index
    %c2624 = arith.constant 2624 : index
    %387 = vector.load %arg16[%c0_352, %c2624] : memref<2x2816xf32, #tpu.memory_space<vmem>>, vector<2x32xf32>
    tpu.vector_store %arg16[%c0_352, %c2624], %386 {strides = array<i32>} : memref<2x2816xf32, #tpu.memory_space<vmem>>, vector<2x32xf32>,
    %c0_353 = arith.constant 0 : index
    %c83 = arith.constant 83 : index
    %c0_354 = arith.constant 0 : index
    %388 = vector.load %arg15[%c0_353, %c83, %c0_354] : memref<2x88x32xf32, #tpu.memory_space<vmem>>, vector<2x1x32xf32>
    %389 = vector.shape_cast %388 : vector<2x1x32xf32> to vector<2x32xf32>
    %c0_355 = arith.constant 0 : index
    %c2656 = arith.constant 2656 : index
    %390 = vector.load %arg16[%c0_355, %c2656] : memref<2x2816xf32, #tpu.memory_space<vmem>>, vector<2x32xf32>
    tpu.vector_store %arg16[%c0_355, %c2656], %389 {strides = array<i32>} : memref<2x2816xf32, #tpu.memory_space<vmem>>, vector<2x32xf32>,
    %c0_356 = arith.constant 0 : index
    %c84 = arith.constant 84 : index
    %c0_357 = arith.constant 0 : index
    %391 = vector.load %arg15[%c0_356, %c84, %c0_357] : memref<2x88x32xf32, #tpu.memory_space<vmem>>, vector<2x1x32xf32>
    %392 = vector.shape_cast %391 : vector<2x1x32xf32> to vector<2x32xf32>
    %c0_358 = arith.constant 0 : index
    %c2688 = arith.constant 2688 : index
    %393 = vector.load %arg16[%c0_358, %c2688] : memref<2x2816xf32, #tpu.memory_space<vmem>>, vector<2x32xf32>
    tpu.vector_store %arg16[%c0_358, %c2688], %392 {strides = array<i32>} : memref<2x2816xf32, #tpu.memory_space<vmem>>, vector<2x32xf32>,
    %c0_359 = arith.constant 0 : index
    %c85 = arith.constant 85 : index
    %c0_360 = arith.constant 0 : index
    %394 = vector.load %arg15[%c0_359, %c85, %c0_360] : memref<2x88x32xf32, #tpu.memory_space<vmem>>, vector<2x1x32xf32>
    %395 = vector.shape_cast %394 : vector<2x1x32xf32> to vector<2x32xf32>
    %c0_361 = arith.constant 0 : index
    %c2720 = arith.constant 2720 : index
    %396 = vector.load %arg16[%c0_361, %c2720] : memref<2x2816xf32, #tpu.memory_space<vmem>>, vector<2x32xf32>
    tpu.vector_store %arg16[%c0_361, %c2720], %395 {strides = array<i32>} : memref<2x2816xf32, #tpu.memory_space<vmem>>, vector<2x32xf32>,
    %c0_362 = arith.constant 0 : index
    %c86 = arith.constant 86 : index
    %c0_363 = arith.constant 0 : index
    %397 = vector.load %arg15[%c0_362, %c86, %c0_363] : memref<2x88x32xf32, #tpu.memory_space<vmem>>, vector<2x1x32xf32>
    %398 = vector.shape_cast %397 : vector<2x1x32xf32> to vector<2x32xf32>
    %c0_364 = arith.constant 0 : index
    %c2752 = arith.constant 2752 : index
    %399 = vector.load %arg16[%c0_364, %c2752] : memref<2x2816xf32, #tpu.memory_space<vmem>>, vector<2x32xf32>
    tpu.vector_store %arg16[%c0_364, %c2752], %398 {strides = array<i32>} : memref<2x2816xf32, #tpu.memory_space<vmem>>, vector<2x32xf32>,
    %c0_365 = arith.constant 0 : index
    %c87 = arith.constant 87 : index
    %c0_366 = arith.constant 0 : index
    %400 = vector.load %arg15[%c0_365, %c87, %c0_366] : memref<2x88x32xf32, #tpu.memory_space<vmem>>, vector<2x1x32xf32>
    %401 = vector.shape_cast %400 : vector<2x1x32xf32> to vector<2x32xf32>
    %c0_367 = arith.constant 0 : index
    %c2784 = arith.constant 2784 : index
    %402 = vector.load %arg16[%c0_367, %c2784] : memref<2x2816xf32, #tpu.memory_space<vmem>>, vector<2x32xf32>
    tpu.vector_store %arg16[%c0_367, %c2784], %401 {strides = array<i32>} : memref<2x2816xf32, #tpu.memory_space<vmem>>, vector<2x32xf32>,
    %c0_368 = arith.constant 0 : index
    %c0_369 = arith.constant 0 : index
    %403 = vector.load %arg16[%c0_368, %c0_369] : memref<2x2816xf32, #tpu.memory_space<vmem>>, vector<2x2816xf32>
    %c0_370 = arith.constant 0 : index
    %c0_371 = arith.constant 0 : index
    %404 = vector.load %arg7[%c0_370, %c0_371] : memref<2816x512xf32, #tpu.memory_space<vmem>>, vector<2816x512xf32>
    %cst_372 = arith.constant dense<0.000000e+00> : vector<2x512xf32>
    %405 = tpu.matmul %403, %404, %cst_372 {dimension_numbers = #tpu.dot_dimension_numbers<[1], [0], [0], [1], [0, 0, 1, 1], [], []>} : vector<2x2816xf32>, vector<2816x512xf32>, vector<2x512xf32> -> vector<2x512xf32>
    %c0_373 = arith.constant 0 : index
    %c0_374 = arith.constant 0 : index
    %406 = vector.load %arg8[%c0_373, %c0_374] : memref<1x512xf32, #tpu.memory_space<vmem>>, vector<1x512xf32>
    %407 = vector.broadcast %406 : vector<1x512xf32> to vector<2x512xf32>
    %408 = arith.addf %405, %407 : vector<2x512xf32>
    %cst_375 = arith.constant 0.000000e+00 : f32
    %409 = vector.broadcast %cst_375 : f32 to vector<2x512xf32>
    %410 = arith.maximumf %408, %409 : vector<2x512xf32>
    %c0_376 = arith.constant 0 : index
    %c0_377 = arith.constant 0 : index
    %411 = vector.load %arg9[%c0_376, %c0_377] : memref<512x512xf32, #tpu.memory_space<vmem>>, vector<512x512xf32>
    %cst_378 = arith.constant dense<0.000000e+00> : vector<2x512xf32>
    %412 = tpu.matmul %410, %411, %cst_378 {dimension_numbers = #tpu.dot_dimension_numbers<[1], [0], [0], [1], [0, 0, 1, 1], [], []>} : vector<2x512xf32>, vector<512x512xf32>, vector<2x512xf32> -> vector<2x512xf32>
    %c0_379 = arith.constant 0 : index
    %c0_380 = arith.constant 0 : index
    %413 = vector.load %arg11[%c0_379, %c0_380] : memref<1x512xf32, #tpu.memory_space<vmem>>, vector<1x512xf32>
    %414 = vector.broadcast %413 : vector<1x512xf32> to vector<2x512xf32>
    %415 = arith.addf %412, %414 : vector<2x512xf32>
    %c0_381 = arith.constant 0 : index
    %c0_382 = arith.constant 0 : index
    %416 = vector.load %arg2[%c0_381, %c0_382] : memref<2x3xf32, #tpu.memory_space<vmem>>, vector<2x1xf32>
    %c0_383 = arith.constant 0 : index
    %c0_384 = arith.constant 0 : index
    %417 = vector.load %arg10[%c0_383, %c0_384] : memref<3x512xf32, #tpu.memory_space<vmem>>, vector<1x512xf32>
    %418 = vector.broadcast %416 : vector<2x1xf32> to vector<2x512xf32>
    %419 = vector.broadcast %417 : vector<1x512xf32> to vector<2x512xf32>
    %420 = arith.mulf %418, %419 : vector<2x512xf32>
    %421 = arith.addf %415, %420 : vector<2x512xf32>
    %c0_385 = arith.constant 0 : index
    %c1_386 = arith.constant 1 : index
    %422 = vector.load %arg2[%c0_385, %c1_386] : memref<2x3xf32, #tpu.memory_space<vmem>>, vector<2x1xf32>
    %c1_387 = arith.constant 1 : index
    %c0_388 = arith.constant 0 : index
    %423 = vector.load %arg10[%c1_387, %c0_388] : memref<3x512xf32, #tpu.memory_space<vmem>>, vector<1x512xf32>
    %424 = vector.broadcast %422 : vector<2x1xf32> to vector<2x512xf32>
    %425 = vector.broadcast %423 : vector<1x512xf32> to vector<2x512xf32>
    %426 = arith.mulf %424, %425 : vector<2x512xf32>
    %427 = arith.addf %421, %426 : vector<2x512xf32>
    %c0_389 = arith.constant 0 : index
    %c2_390 = arith.constant 2 : index
    %428 = vector.load %arg2[%c0_389, %c2_390] : memref<2x3xf32, #tpu.memory_space<vmem>>, vector<2x1xf32>
    %c2_391 = arith.constant 2 : index
    %c0_392 = arith.constant 0 : index
    %429 = vector.load %arg10[%c2_391, %c0_392] : memref<3x512xf32, #tpu.memory_space<vmem>>, vector<1x512xf32>
    %430 = vector.broadcast %428 : vector<2x1xf32> to vector<2x512xf32>
    %431 = vector.broadcast %429 : vector<1x512xf32> to vector<2x512xf32>
    %432 = arith.mulf %430, %431 : vector<2x512xf32>
    %433 = arith.addf %427, %432 : vector<2x512xf32>
    %cst_393 = arith.constant 0.000000e+00 : f32
    %434 = vector.broadcast %cst_393 : f32 to vector<2x512xf32>
    %435 = arith.maximumf %433, %434 : vector<2x512xf32>
    %c0_394 = arith.constant 0 : index
    %c0_395 = arith.constant 0 : index
    %436 = vector.load %arg12[%c0_394, %c0_395] : memref<2x512xf32, #tpu.memory_space<vmem>>, vector<2x512xf32>
    tpu.vector_store %arg12[%c0_394, %c0_395], %435 {strides = array<i32>} : memref<2x512xf32, #tpu.memory_space<vmem>>, vector<2x512xf32>,
    return
  }
  func.func @transform_0(%arg0: i32) -> (i32, i32, i32) {
    %c0_i32 = arith.constant 0 : i32
    %c0_i32_0 = arith.constant 0 : i32
    %c0_i32_1 = arith.constant 0 : i32
    return %arg0, %c0_i32, %c0_i32_0 : i32, i32, i32
  }
  func.func @transform_1(%arg0: i32) -> (i32, i32) {
    %c0_i32 = arith.constant 0 : i32
    %c0_i32_0 = arith.constant 0 : i32
    return %arg0, %c0_i32 : i32, i32
  }
  func.func @transform_2(%arg0: i32) -> (i32, i32) {
    %c0_i32 = arith.constant 0 : i32
    %c0_i32_0 = arith.constant 0 : i32
    %c0_i32_1 = arith.constant 0 : i32
    return %c0_i32, %c0_i32_0 : i32, i32
  }
  func.func @transform_3(%arg0: i32) -> (i32, i32) {
    %c0_i32 = arith.constant 0 : i32
    %c0_i32_0 = arith.constant 0 : i32
    %c0_i32_1 = arith.constant 0 : i32
    return %c0_i32, %c0_i32_0 : i32, i32
  }
  func.func @transform_4(%arg0: i32) -> (i32, i32, i32) {
    %c0_i32 = arith.constant 0 : i32
    %c0_i32_0 = arith.constant 0 : i32
    %c0_i32_1 = arith.constant 0 : i32
    %c0_i32_2 = arith.constant 0 : i32
    return %c0_i32, %c0_i32_0, %c0_i32_1 : i32, i32, i32
  }
  func.func @transform_5(%arg0: i32) -> (i32, i32) {
    %c0_i32 = arith.constant 0 : i32
    %c0_i32_0 = arith.constant 0 : i32
    %c0_i32_1 = arith.constant 0 : i32
    return %c0_i32, %c0_i32_0 : i32, i32
  }
  func.func @transform_6(%arg0: i32) -> (i32, i32) {
    %c0_i32 = arith.constant 0 : i32
    %c0_i32_0 = arith.constant 0 : i32
    %c0_i32_1 = arith.constant 0 : i32
    return %c0_i32, %c0_i32_0 : i32, i32
  }
  func.func @transform_7(%arg0: i32) -> (i32, i32) {
    %c0_i32 = arith.constant 0 : i32
    %c0_i32_0 = arith.constant 0 : i32
    %c0_i32_1 = arith.constant 0 : i32
    return %c0_i32, %c0_i32_0 : i32, i32
  }
  func.func @transform_8(%arg0: i32) -> (i32, i32) {
    %c0_i32 = arith.constant 0 : i32
    %c0_i32_0 = arith.constant 0 : i32
    %c0_i32_1 = arith.constant 0 : i32
    return %c0_i32, %c0_i32_0 : i32, i32
  }
  func.func @transform_9(%arg0: i32) -> (i32, i32) {
    %c0_i32 = arith.constant 0 : i32
    %c0_i32_0 = arith.constant 0 : i32
    %c0_i32_1 = arith.constant 0 : i32
    return %c0_i32, %c0_i32_0 : i32, i32
  }
  func.func @transform_10(%arg0: i32) -> (i32, i32) {
    %c0_i32 = arith.constant 0 : i32
    %c0_i32_0 = arith.constant 0 : i32
    %c0_i32_1 = arith.constant 0 : i32
    return %c0_i32, %c0_i32_0 : i32, i32
  }
  func.func @transform_11(%arg0: i32) -> (i32, i32) {
    %c0_i32 = arith.constant 0 : i32
    %c0_i32_0 = arith.constant 0 : i32
    return %arg0, %c0_i32 : i32, i32
  }
}

</mosaic_0001>

<llo_original>
// kernel: forward.1
$region0: #{forward.1}
  #allocation0 [shape = 'u32[]', space=smem, size = 0x4, offset = 0x4, fixed_abs, tag = 'smem constant byte address 0x4 - core index']
  #allocation1 [shape = 'u32[144,128]{1,0:T(1,128)}', space=vmem, size = 0x12000, scoped, tag = 'internal scratch']
  #allocation2 [shape = 'f32[2,89,32]{2,1,0:T(8,128)}', space=vmem, size = 0x18000, scoped, tag = 'scratch operand']
  #allocation3 [shape = 'f32[2,89,32]{2,1,0:T(8,128)}', space=vmem, size = 0x18000, scoped, tag = 'scratch operand']
  #allocation4 [shape = 'f32[2,88,32]{2,1,0:T(8,128)}', space=vmem, size = 0x16000, scoped, tag = 'scratch operand']
  #allocation5 [shape = 'f32[2,2816]{1,0:T(2,128)}', space=vmem, size = 0x5800, scoped, tag = 'scratch operand']
  %s0 = inlined_call_operand.vmem [shape: f32[2,4,90], index: 0, kind: input, shape index: {}]
  %s1 = inlined_call_operand.hbm [shape: f32[2,3], index: 1, kind: input, shape index: {}]
  %s2 = inlined_call_operand.hbm [shape: f32[5,32], index: 2, kind: input, shape index: {}]
  %s3 = inlined_call_operand.hbm [shape: f32[1,32], index: 3, kind: input, shape index: {}]
  %s4 = inlined_call_operand.hbm [shape: f32[3,32,32], index: 4, kind: input, shape index: {}]
  %s5 = inlined_call_operand.hbm [shape: f32[1,32], index: 5, kind: input, shape index: {}]
  %s6 = inlined_call_operand.hbm [shape: f32[2816,512], index: 6, kind: input, shape index: {}]
  %s7 = inlined_call_operand.hbm [shape: f32[1,512], index: 7, kind: input, shape index: {}]
  %s8 = inlined_call_operand.hbm [shape: f32[512,512], index: 8, kind: input, shape index: {}]
  %s9 = inlined_call_operand.hbm [shape: f32[3,512], index: 9, kind: input, shape index: {}]
  %s10 = inlined_call_operand.hbm [shape: f32[1,512], index: 10, kind: input, shape index: {}]
  %s11 = inlined_call_operand.hbm [shape: f32[2,512], index: 11, kind: output, shape index: {}]
  %s12 = sld [smem:[#allocation0]]
  $region94: #{forward.1} parent=0
    _
  %s14 = ssub.s32 1, %s12
  %s15 = scalar_select 0, %s14, %s12
  $region1: #{forward.1} parent=0
    #allocation6 [shape = 'u8[1024]{0}', space=vmem, size = 0x400, scoped, tag = 'input window, operand 1, single buffered']
    #allocation7 [shape = 's32[1]{0}', space=sflag, size = 0x4, scoped, tag = 'scoped memory for forward.1']
    #allocation8 [shape = 's32[1]{0}', space=sflag, size = 0x4, scoped, tag = 'scoped memory for forward.1']
    #allocation9 [shape = 'u8[4096]{0}', space=vmem, size = 0x1000, scoped, tag = 'input window, operand 2, single buffered']
    #allocation10 [shape = 's32[1]{0}', space=sflag, size = 0x4, scoped, tag = 'scoped memory for forward.1']
    #allocation11 [shape = 'u8[512]{0}', space=vmem, size = 0x400, scoped, tag = 'input window, operand 3, single buffered']
    #allocation12 [shape = 'u8[49152]{0}', space=vmem, size = 0xc000, scoped, tag = 'input window, operand 4, single buffered']
    #allocation13 [shape = 's32[1]{0}', space=sflag, size = 0x4, scoped, tag = 'scoped memory for forward.1']
    #allocation14 [shape = 'u8[512]{0}', space=vmem, size = 0x400, scoped, tag = 'input window, operand 5, single buffered']
    #allocation15 [shape = 'u8[5767168]{0}', space=vmem, size = 0x580000, scoped, tag = 'input window, operand 6, single buffered']
    #allocation16 [shape = 's32[1]{0}', space=sflag, size = 0x4, scoped, tag = 'scoped memory for forward.1']
    #allocation17 [shape = 'u8[2048]{0}', space=vmem, size = 0x800, scoped, tag = 'input window, operand 7, single buffered']
    #allocation18 [shape = 'u8[1048576]{0}', space=vmem, size = 0x100000, scoped, tag = 'input window, operand 8, single buffered']
    #allocation19 [shape = 's32[1]{0}', space=sflag, size = 0x4, scoped, tag = 'scoped memory for forward.1']
    #allocation20 [shape = 'u8[8192]{0}', space=vmem, size = 0x2000, scoped, tag = 'input window, operand 9, single buffered']
    #allocation21 [shape = 'u8[2048]{0}', space=vmem, size = 0x800, scoped, tag = 'input window, operand 10, single buffered']
    #allocation22 [shape = 's32[1]{0}', space=sflag, size = 0x4, scoped, tag = 'scoped memory for forward.1']
    #allocation23 [shape = 'u8[4096]{0}', space=vmem, size = 0x1000, scoped, tag = 'output window, operand 0, single buffered']
    %16 = vsyncpa [#allocation7], 0
    %17 = vsyncpa [#allocation10], 0
    %18 = vsyncpa [#allocation13], 0
    %19 = vsyncpa [#allocation16], 0
    %20 = vsyncpa [#allocation19], 0
    %21 = vsyncpa [#allocation22], 0
    %22 = vsyncpa [#allocation8], 0
    // Predicated region
    $region2: #{forward.1} parent=1 // pred_check
      _
    $region3: #{forward.1} parent=1 // pred_check_branch
      %24 = sbr.rel (0) target = $region5
    $region4: #{forward.1} parent=1 // pred_region
      _
    $region5: #{forward.1} parent=1 // pred_fallthru
      _
    // Predicated region
    $region6: #{forward.1} parent=1 // pred_check
      _
    $region7: #{forward.1} parent=1 // pred_check_branch
      %26 = sbr.rel (0) target = $region9
    $region8: #{forward.1} parent=1 // pred_region
      %s28 = ssub.s32 32, 32
      %29 = vsyncadd [#allocation7], %s28
      %s31 = sshll.u32 [#allocation6], 4
      %s32 = int_to_ptr.vmem [resolvable:$true] %s31
      %34 = dma.hbm_to_vmem [thread:$0]  %s1, 32, %s32, [#allocation7]
    $region9: #{forward.1} parent=1 // pred_fallthru
      _
    // Predicated region
    $region10: #{forward.1} parent=1 // pred_check
      _
    $region11: #{forward.1} parent=1 // pred_check_branch
      %36 = sbr.rel (0) target = $region13
    $region12: #{forward.1} parent=1 // pred_region
      %s38 = ssub.s32 128, 128
      %39 = vsyncadd [#allocation10], %s38
      %s41 = sshll.u32 [#allocation9], 4
      %s42 = int_to_ptr.vmem [resolvable:$true] %s41
      %44 = dma.hbm_to_vmem [thread:$0]  %s2, 128, %s42, [#allocation10]
    $region13: #{forward.1} parent=1 // pred_fallthru
      _
    // Predicated region
    $region14: #{forward.1} parent=1 // pred_check
      _
    $region15: #{forward.1} parent=1 // pred_check_branch
      %46 = sbr.rel (0) target = $region17
    $region16: #{forward.1} parent=1 // pred_region
      %s48 = ssub.s32 16, 16
      %49 = vsyncadd [#allocation10], %s48
      %s51 = sshll.u32 [#allocation11], 4
      %s52 = int_to_ptr.vmem [resolvable:$true] %s51
      %54 = dma.hbm_to_vmem [thread:$0]  %s3, 16, %s52, [#allocation10]
    $region17: #{forward.1} parent=1 // pred_fallthru
      _
    // Predicated region
    $region18: #{forward.1} parent=1 // pred_check
      _
    $region19: #{forward.1} parent=1 // pred_check_branch
      %56 = sbr.rel (0) target = $region21
    $region20: #{forward.1} parent=1 // pred_region
      %s58 = ssub.s32 1536, 1536
      %59 = vsyncadd [#allocation13], %s58
      %s60 = sshll.u32 [#allocation12], 4
      %s61 = int_to_ptr.vmem [resolvable:$true] %s60
      %66 = dma.hbm_to_vmem [thread:$0]  %s4, 1536, %s61, [#allocation13], 128, 128, 8
    $region21: #{forward.1} parent=1 // pred_fallthru
      _
    // Predicated region
    $region22: #{forward.1} parent=1 // pred_check
      _
    $region23: #{forward.1} parent=1 // pred_check_branch
      %68 = sbr.rel (0) target = $region25
    $region24: #{forward.1} parent=1 // pred_region
      %s70 = ssub.s32 16, 16
      %71 = vsyncadd [#allocation13], %s70
      %s73 = sshll.u32 [#allocation14], 4
      %s74 = int_to_ptr.vmem [resolvable:$true] %s73
      %76 = dma.hbm_to_vmem [thread:$0]  %s5, 16, %s74, [#allocation13]
    $region25: #{forward.1} parent=1 // pred_fallthru
      _
    // Predicated region
    $region26: #{forward.1} parent=1 // pred_check
      _
    $region27: #{forward.1} parent=1 // pred_check_branch
      %78 = sbr.rel (0) target = $region29
    $region28: #{forward.1} parent=1 // pred_region
      %s80 = ssub.s32 180224, 180224
      %81 = vsyncadd [#allocation16], %s80
      %s82 = sshll.u32 [#allocation15], 4
      %s83 = int_to_ptr.vmem [resolvable:$true] %s82
      %88 = dma.hbm_to_vmem [thread:$0]  %s6, 180224, %s83, [#allocation16], 512, 512, 32
    $region29: #{forward.1} parent=1 // pred_fallthru
      _
    // Predicated region
    $region30: #{forward.1} parent=1 // pred_check
      _
    $region31: #{forward.1} parent=1 // pred_check_branch
      %90 = sbr.rel (0) target = $region33
    $region32: #{forward.1} parent=1 // pred_region
      %s92 = ssub.s32 64, 64
      %93 = vsyncadd [#allocation16], %s92
      %s95 = sshll.u32 [#allocation17], 4
      %s96 = int_to_ptr.vmem [resolvable:$true] %s95
      %98 = dma.hbm_to_vmem [thread:$0]  %s7, 64, %s96, [#allocation16]
    $region33: #{forward.1} parent=1 // pred_fallthru
      _
    // Predicated region
    $region34: #{forward.1} parent=1 // pred_check
      _
    $region35: #{forward.1} parent=1 // pred_check_branch
      %100 = sbr.rel (0) target = $region37
    $region36: #{forward.1} parent=1 // pred_region
      %s102 = ssub.s32 32768, 32768
      %103 = vsyncadd [#allocation19], %s102
      %s104 = sshll.u32 [#allocation18], 4
      %s105 = int_to_ptr.vmem [resolvable:$true] %s104
      %110 = dma.hbm_to_vmem [thread:$0]  %s8, 32768, %s105, [#allocation19], 512, 512, 32
    $region37: #{forward.1} parent=1 // pred_fallthru
      _
    // Predicated region
    $region38: #{forward.1} parent=1 // pred_check
      _
    $region39: #{forward.1} parent=1 // pred_check_branch
      %112 = sbr.rel (0) target = $region41
    $region40: #{forward.1} parent=1 // pred_region
      %s114 = ssub.s32 256, 256
      %115 = vsyncadd [#allocation19], %s114
      %s117 = sshll.u32 [#allocation20], 4
      %s118 = int_to_ptr.vmem [resolvable:$true] %s117
      %120 = dma.hbm_to_vmem [thread:$0]  %s9, 256, %s118, [#allocation19]
    $region41: #{forward.1} parent=1 // pred_fallthru
      _
    // Predicated region
    $region42: #{forward.1} parent=1 // pred_check
      _
    $region43: #{forward.1} parent=1 // pred_check_branch
      %122 = sbr.rel (0) target = $region45
    $region44: #{forward.1} parent=1 // pred_region
      %s124 = ssub.s32 64, 64
      %125 = vsyncadd [#allocation22], %s124
      %s127 = sshll.u32 [#allocation21], 4
      %s128 = int_to_ptr.vmem [resolvable:$true] %s127
      %130 = dma.hbm_to_vmem [thread:$0]  %s10, 64, %s128, [#allocation22]
    $region45: #{forward.1} parent=1 // pred_fallthru
      _
    // Predicated region
    $region46: #{forward.1} parent=1 // pred_check
      _
    $region47: #{forward.1} parent=1 // pred_check_branch
      %132 = sbr.rel (0) target = $region49
    $region48: #{forward.1} parent=1 // pred_region
      %133 = dma.done [#allocation7], 32
    $region49: #{forward.1} parent=1 // pred_fallthru
      _
    // Predicated region
    $region50: #{forward.1} parent=1 // pred_check
      _
    $region51: #{forward.1} parent=1 // pred_check_branch
      %135 = sbr.rel (0) target = $region53
    $region52: #{forward.1} parent=1 // pred_region
      %136 = dma.done [#allocation10], 128
    $region53: #{forward.1} parent=1 // pred_fallthru
      _
    // Predicated region
    $region54: #{forward.1} parent=1 // pred_check
      _
    $region55: #{forward.1} parent=1 // pred_check_branch
      %138 = sbr.rel (0) target = $region57
    $region56: #{forward.1} parent=1 // pred_region
      %139 = dma.done [#allocation10], 16
    $region57: #{forward.1} parent=1 // pred_fallthru
      _
    // Predicated region
    $region58: #{forward.1} parent=1 // pred_check
      _
    $region59: #{forward.1} parent=1 // pred_check_branch
      %141 = sbr.rel (0) target = $region61
    $region60: #{forward.1} parent=1 // pred_region
      %142 = dma.done [#allocation13], 1536
    $region61: #{forward.1} parent=1 // pred_fallthru
      _
    // Predicated region
    $region62: #{forward.1} parent=1 // pred_check
      _
    $region63: #{forward.1} parent=1 // pred_check_branch
      %144 = sbr.rel (0) target = $region65
    $region64: #{forward.1} parent=1 // pred_region
      %145 = dma.done [#allocation13], 16
    $region65: #{forward.1} parent=1 // pred_fallthru
      _
    // Predicated region
    $region66: #{forward.1} parent=1 // pred_check
      _
    $region67: #{forward.1} parent=1 // pred_check_branch
      %147 = sbr.rel (0) target = $region69
    $region68: #{forward.1} parent=1 // pred_region
      %148 = dma.done [#allocation16], 180224
    $region69: #{forward.1} parent=1 // pred_fallthru
      _
    // Predicated region
    $region70: #{forward.1} parent=1 // pred_check
      _
    $region71: #{forward.1} parent=1 // pred_check_branch
      %150 = sbr.rel (0) target = $region73
    $region72: #{forward.1} parent=1 // pred_region
      %151 = dma.done [#allocation16], 64
    $region73: #{forward.1} parent=1 // pred_fallthru
      _
    // Predicated region
    $region74: #{forward.1} parent=1 // pred_check
      _
    $region75: #{forward.1} parent=1 // pred_check_branch
      %153 = sbr.rel (0) target = $region77
    $region76: #{forward.1} parent=1 // pred_region
      %154 = dma.done [#allocation19], 32768
    $region77: #{forward.1} parent=1 // pred_fallthru
      _
    // Predicated region
    $region78: #{forward.1} parent=1 // pred_check
      _
    $region79: #{forward.1} parent=1 // pred_check_branch
      %156 = sbr.rel (0) target = $region81
    $region80: #{forward.1} parent=1 // pred_region
      %157 = dma.done [#allocation19], 256
    $region81: #{forward.1} parent=1 // pred_fallthru
      _
    // Predicated region
    $region82: #{forward.1} parent=1 // pred_check
      _
    $region83: #{forward.1} parent=1 // pred_check_branch
      %159 = sbr.rel (0) target = $region85
    $region84: #{forward.1} parent=1 // pred_region
      %160 = dma.done [#allocation22], 64
    $region85: #{forward.1} parent=1 // pred_fallthru
      _
    %v161 = vld [vmem:[#allocation11] sm:$0x1]
    %v162 = vld [vmem:[#allocation9] sm:$0x1]
    %v163 = vld [vmem:[%s0] sm:$0x1]
    %v164 = vld [vmem:[%s0 + $0x4] sm:$0x1]
    %v165 = vlaneseq
    %v166 = vshrl.u32 %v165, 7
    %v167 = vsub.s32 0, %v166
    %v168 = vrot.slane %v163, %v167
    %170 = vbcast.lane.b32.xlu0 %v168, 256
    %v171 = vpop.permute.xlu0 %170
    %s173 = sor.u32 256, 8
    %174 = vbcast.lane.b32.xlu0 %v168, %s173
    %v175 = vpop.permute.xlu0 %174
    %s177 = sor.u32 256, 16
    %178 = vbcast.lane.b32.xlu0 %v168, %s177
    %v179 = vpop.permute.xlu0 %178
    %s181 = sor.u32 256, 24
    %182 = vbcast.lane.b32.xlu0 %v168, %s181
    %v183 = vpop.permute.xlu0 %182
    %s185 = sor.u32 256, 32
    %186 = vbcast.lane.b32.xlu0 %v168, %s185
    %v187 = vpop.permute.xlu0 %186
    %s189 = sor.u32 256, 40
    %190 = vbcast.lane.b32.xlu0 %v168, %s189
    %v191 = vpop.permute.xlu0 %190
    %s193 = sor.u32 256, 48
    %194 = vbcast.lane.b32.xlu0 %v168, %s193
    %v195 = vpop.permute.xlu0 %194
    %s197 = sor.u32 256, 56
    %198 = vbcast.lane.b32.xlu0 %v168, %s197
    %v199 = vpop.permute.xlu0 %198
    %s201 = sor.u32 256, 64
    %202 = vbcast.lane.b32.xlu0 %v168, %s201
    %v203 = vpop.permute.xlu0 %202
    %s205 = sor.u32 256, 72
    %206 = vbcast.lane.b32.xlu0 %v168, %s205
    %v207 = vpop.permute.xlu0 %206
    %s209 = sor.u32 256, 80
    %210 = vbcast.lane.b32.xlu0 %v168, %s209
    %v211 = vpop.permute.xlu0 %210
    %s213 = sor.u32 256, 88
    %214 = vbcast.lane.b32.xlu0 %v168, %s213
    %v215 = vpop.permute.xlu0 %214
    %v216 = vlaneseq
    %v217 = vshrl.u32 %v216, 7
    %v218 = vsub.s32 0, %v217
    %v219 = vrot.slane %v164, %v218
    %221 = vbcast.lane.b32.xlu0 %v219, 256
    %v222 = vpop.permute.xlu0 %221
    %s224 = sor.u32 256, 8
    %225 = vbcast.lane.b32.xlu0 %v219, %s224
    %v226 = vpop.permute.xlu0 %225
    %s228 = sor.u32 256, 16
    %229 = vbcast.lane.b32.xlu0 %v219, %s228
    %v230 = vpop.permute.xlu0 %229
    %s232 = sor.u32 256, 24
    %233 = vbcast.lane.b32.xlu0 %v219, %s232
    %v234 = vpop.permute.xlu0 %233
    %s236 = sor.u32 256, 32
    %237 = vbcast.lane.b32.xlu0 %v219, %s236
    %v238 = vpop.permute.xlu0 %237
    %s240 = sor.u32 256, 40
    %241 = vbcast.lane.b32.xlu0 %v219, %s240
    %v242 = vpop.permute.xlu0 %241
    %s244 = sor.u32 256, 48
    %245 = vbcast.lane.b32.xlu0 %v219, %s244
    %v246 = vpop.permute.xlu0 %245
    %s248 = sor.u32 256, 56
    %249 = vbcast.lane.b32.xlu0 %v219, %s248
    %v250 = vpop.permute.xlu0 %249
    %s252 = sor.u32 256, 64
    %253 = vbcast.lane.b32.xlu0 %v219, %s252
    %v254 = vpop.permute.xlu0 %253
    %s256 = sor.u32 256, 72
    %257 = vbcast.lane.b32.xlu0 %v219, %s256
    %v258 = vpop.permute.xlu0 %257
    %s260 = sor.u32 256, 80
    %261 = vbcast.lane.b32.xlu0 %v219, %s260
    %v262 = vpop.permute.xlu0 %261
    %s264 = sor.u32 256, 88
    %265 = vbcast.lane.b32.xlu0 %v219, %s264
    %v266 = vpop.permute.xlu0 %265
    %v267 = vlaneseq
    %v268 = vshrl.u32 %v267, 7
    %v269 = vsub.s32 0, %v268
    %v270 = vrot.slane %v162, %v269
    %v271 = vmul.f32 %v171, %v270
    %v272 = vmul.f32 %v175, %v270
    %v273 = vmul.f32 %v179, %v270
    %v274 = vmul.f32 %v183, %v270
    %v275 = vmul.f32 %v187, %v270
    %v276 = vmul.f32 %v191, %v270
    %v277 = vmul.f32 %v195, %v270
    %v278 = vmul.f32 %v199, %v270
    %v279 = vmul.f32 %v203, %v270
    %v280 = vmul.f32 %v207, %v270
    %v281 = vmul.f32 %v211, %v270
    %v282 = vmul.f32 %v215, %v270
    %v283 = vmul.f32 %v222, %v270
    %v284 = vmul.f32 %v226, %v270
    %v285 = vmul.f32 %v230, %v270
    %v286 = vmul.f32 %v234, %v270
    %v287 = vmul.f32 %v238, %v270
    %v288 = vmul.f32 %v242, %v270
    %v289 = vmul.f32 %v246, %v270
    %v290 = vmul.f32 %v250, %v270
    %v291 = vmul.f32 %v254, %v270
    %v292 = vmul.f32 %v258, %v270
    %v293 = vmul.f32 %v262, %v270
    %v294 = vmul.f32 %v266, %v270
    %v296 = vlaneseq
    %v297 = vshrl.u32 %v296, 7
    %v298 = vsub.s32 0, %v297
    %v299 = vrot.slane %v161, %v298
    %v301 = vadd.f32 %v299, %v271
    %v302 = vadd.f32 %v299, %v272
    %v303 = vadd.f32 %v299, %v273
    %v304 = vadd.f32 %v299, %v274
    %v305 = vadd.f32 %v299, %v275
    %v306 = vadd.f32 %v299, %v276
    %v307 = vadd.f32 %v299, %v277
    %v308 = vadd.f32 %v299, %v278
    %v309 = vadd.f32 %v299, %v279
    %v310 = vadd.f32 %v299, %v280
    %v311 = vadd.f32 %v299, %v281
    %v312 = vadd.f32 %v299, %v282
    %v313 = vadd.f32 %v299, %v283
    %v314 = vadd.f32 %v299, %v284
    %v315 = vadd.f32 %v299, %v285
    %v316 = vadd.f32 %v299, %v286
    %v317 = vadd.f32 %v299, %v287
    %v318 = vadd.f32 %v299, %v288
    %v319 = vadd.f32 %v299, %v289
    %v320 = vadd.f32 %v299, %v290
    %v321 = vadd.f32 %v299, %v291
    %v322 = vadd.f32 %v299, %v292
    %v323 = vadd.f32 %v299, %v293
    %v324 = vadd.f32 %v299, %v294
    %v325 = vld [vmem:[%s0 + $0x2] sm:$0x1]
    %v326 = vld [vmem:[%s0 + $0x6] sm:$0x1]
    %v327 = vlaneseq
    %v328 = vshrl.u32 %v327, 7
    %v329 = vsub.s32 0, %v328
    %v330 = vrot.slane %v325, %v329
    %332 = vbcast.lane.b32.xlu0 %v330, 256
    %v333 = vpop.permute.xlu0 %332
    %s335 = sor.u32 256, 8
    %336 = vbcast.lane.b32.xlu0 %v330, %s335
    %v337 = vpop.permute.xlu0 %336
    %s339 = sor.u32 256, 16
    %340 = vbcast.lane.b32.xlu0 %v330, %s339
    %v341 = vpop.permute.xlu0 %340
    %s343 = sor.u32 256, 24
    %344 = vbcast.lane.b32.xlu0 %v330, %s343
    %v345 = vpop.permute.xlu0 %344
    %s347 = sor.u32 256, 32
    %348 = vbcast.lane.b32.xlu0 %v330, %s347
    %v349 = vpop.permute.xlu0 %348
    %s351 = sor.u32 256, 40
    %352 = vbcast.lane.b32.xlu0 %v330, %s351
    %v353 = vpop.permute.xlu0 %352
    %s355 = sor.u32 256, 48
    %356 = vbcast.lane.b32.xlu0 %v330, %s355
    %v357 = vpop.permute.xlu0 %356
    %s359 = sor.u32 256, 56
    %360 = vbcast.lane.b32.xlu0 %v330, %s359
    %v361 = vpop.permute.xlu0 %360
    %s363 = sor.u32 256, 64
    %364 = vbcast.lane.b32.xlu0 %v330, %s363
    %v365 = vpop.permute.xlu0 %364
    %s367 = sor.u32 256, 72
    %368 = vbcast.lane.b32.xlu0 %v330, %s367
    %v369 = vpop.permute.xlu0 %368
    %s371 = sor.u32 256, 80
    %372 = vbcast.lane.b32.xlu0 %v330, %s371
    %v373 = vpop.permute.xlu0 %372
    %s375 = sor.u32 256, 88
    %376 = vbcast.lane.b32.xlu0 %v330, %s375
    %v377 = vpop.permute.xlu0 %376
    %v378 = vlaneseq
    %v379 = vshrl.u32 %v378, 7
    %v380 = vsub.s32 0, %v379
    %v381 = vrot.slane %v326, %v380
    %383 = vbcast.lane.b32.xlu0 %v381, 256
    %v384 = vpop.permute.xlu0 %383
    %s386 = sor.u32 256, 8
    %387 = vbcast.lane.b32.xlu0 %v381, %s386
    %v388 = vpop.permute.xlu0 %387
    %s390 = sor.u32 256, 16
    %391 = vbcast.lane.b32.xlu0 %v381, %s390
    %v392 = vpop.permute.xlu0 %391
    %s394 = sor.u32 256, 24
    %395 = vbcast.lane.b32.xlu0 %v381, %s394
    %v396 = vpop.permute.xlu0 %395
    %s398 = sor.u32 256, 32
    %399 = vbcast.lane.b32.xlu0 %v381, %s398
    %v400 = vpop.permute.xlu0 %399
    %s402 = sor.u32 256, 40
    %403 = vbcast.lane.b32.xlu0 %v381, %s402
    %v404 = vpop.permute.xlu0 %403
    %s406 = sor.u32 256, 48
    %407 = vbcast.lane.b32.xlu0 %v381, %s406
    %v408 = vpop.permute.xlu0 %407
    %s410 = sor.u32 256, 56
    %411 = vbcast.lane.b32.xlu0 %v381, %s410
    %v412 = vpop.permute.xlu0 %411
    %s414 = sor.u32 256, 64
    %415 = vbcast.lane.b32.xlu0 %v381, %s414
    %v416 = vpop.permute.xlu0 %415
    %s418 = sor.u32 256, 72
    %419 = vbcast.lane.b32.xlu0 %v381, %s418
    %v420 = vpop.permute.xlu0 %419
    %s422 = sor.u32 256, 80
    %423 = vbcast.lane.b32.xlu0 %v381, %s422
    %v424 = vpop.permute.xlu0 %423
    %s426 = sor.u32 256, 88
    %427 = vbcast.lane.b32.xlu0 %v381, %s426
    %v428 = vpop.permute.xlu0 %427
    %v429 = vmul.f32 %v333, %v270
    %v430 = vmul.f32 %v337, %v270
    %v431 = vmul.f32 %v341, %v270
    %v432 = vmul.f32 %v345, %v270
    %v433 = vmul.f32 %v349, %v270
    %v434 = vmul.f32 %v353, %v270
    %v435 = vmul.f32 %v357, %v270
    %v436 = vmul.f32 %v361, %v270
    %v437 = vmul.f32 %v365, %v270
    %v438 = vmul.f32 %v369, %v270
    %v439 = vmul.f32 %v373, %v270
    %v440 = vmul.f32 %v377, %v270
    %v441 = vmul.f32 %v384, %v270
    %v442 = vmul.f32 %v388, %v270
    %v443 = vmul.f32 %v392, %v270
    %v444 = vmul.f32 %v396, %v270
    %v445 = vmul.f32 %v400, %v270
    %v446 = vmul.f32 %v404, %v270
    %v447 = vmul.f32 %v408, %v270
    %v448 = vmul.f32 %v412, %v270
    %v449 = vmul.f32 %v416, %v270
    %v450 = vmul.f32 %v420, %v270
    %v451 = vmul.f32 %v424, %v270
    %v452 = vmul.f32 %v428, %v270
    %v453 = vadd.f32 %v299, %v429
    %v454 = vadd.f32 %v299, %v430
    %v455 = vadd.f32 %v299, %v431
    %v456 = vadd.f32 %v299, %v432
    %v457 = vadd.f32 %v299, %v433
    %v458 = vadd.f32 %v299, %v434
    %v459 = vadd.f32 %v299, %v435
    %v460 = vadd.f32 %v299, %v436
    %v461 = vadd.f32 %v299, %v437
    %v462 = vadd.f32 %v299, %v438
    %v463 = vadd.f32 %v299, %v439
    %v464 = vadd.f32 %v299, %v440
    %v465 = vadd.f32 %v299, %v441
    %v466 = vadd.f32 %v299, %v442
    %v467 = vadd.f32 %v299, %v443
    %v468 = vadd.f32 %v299, %v444
    %v469 = vadd.f32 %v299, %v445
    %v470 = vadd.f32 %v299, %v446
    %v471 = vadd.f32 %v299, %v447
    %v472 = vadd.f32 %v299, %v448
    %v473 = vadd.f32 %v299, %v449
    %v474 = vadd.f32 %v299, %v450
    %v475 = vadd.f32 %v299, %v451
    %v476 = vadd.f32 %v299, %v452
    %v477 = vld [vmem:[#allocation9 + $0x1] sm:$0x1]
    %v478 = vld [vmem:[%s0 + $0x1] sm:$0x1]
    %v479 = vld [vmem:[%s0 + $0x5] sm:$0x1]
    %v480 = vlaneseq
    %v481 = vshrl.u32 %v480, 7
    %v482 = vsub.s32 0, %v481
    %v483 = vrot.slane %v478, %v482
    %485 = vbcast.lane.b32.xlu0 %v483, 256
    %v486 = vpop.permute.xlu0 %485
    %s488 = sor.u32 256, 8
    %489 = vbcast.lane.b32.xlu0 %v483, %s488
    %v490 = vpop.permute.xlu0 %489
    %s492 = sor.u32 256, 16
    %493 = vbcast.lane.b32.xlu0 %v483, %s492
    %v494 = vpop.permute.xlu0 %493
    %s496 = sor.u32 256, 24
    %497 = vbcast.lane.b32.xlu0 %v483, %s496
    %v498 = vpop.permute.xlu0 %497
    %s500 = sor.u32 256, 32
    %501 = vbcast.lane.b32.xlu0 %v483, %s500
    %v502 = vpop.permute.xlu0 %501
    %s504 = sor.u32 256, 40
    %505 = vbcast.lane.b32.xlu0 %v483, %s504
    %v506 = vpop.permute.xlu0 %505
    %s508 = sor.u32 256, 48
    %509 = vbcast.lane.b32.xlu0 %v483, %s508
    %v510 = vpop.permute.xlu0 %509
    %s512 = sor.u32 256, 56
    %513 = vbcast.lane.b32.xlu0 %v483, %s512
    %v514 = vpop.permute.xlu0 %513
    %s516 = sor.u32 256, 64
    %517 = vbcast.lane.b32.xlu0 %v483, %s516
    %v518 = vpop.permute.xlu0 %517
    %s520 = sor.u32 256, 72
    %521 = vbcast.lane.b32.xlu0 %v483, %s520
    %v522 = vpop.permute.xlu0 %521
    %s524 = sor.u32 256, 80
    %525 = vbcast.lane.b32.xlu0 %v483, %s524
    %v526 = vpop.permute.xlu0 %525
    %s528 = sor.u32 256, 88
    %529 = vbcast.lane.b32.xlu0 %v483, %s528
    %v530 = vpop.permute.xlu0 %529
    %v531 = vlaneseq
    %v532 = vshrl.u32 %v531, 7
    %v533 = vsub.s32 0, %v532
    %v534 = vrot.slane %v479, %v533
    %536 = vbcast.lane.b32.xlu0 %v534, 256
    %v537 = vpop.permute.xlu0 %536
    %s539 = sor.u32 256, 8
    %540 = vbcast.lane.b32.xlu0 %v534, %s539
    %v541 = vpop.permute.xlu0 %540
    %s543 = sor.u32 256, 16
    %544 = vbcast.lane.b32.xlu0 %v534, %s543
    %v545 = vpop.permute.xlu0 %544
    %s547 = sor.u32 256, 24
    %548 = vbcast.lane.b32.xlu0 %v534, %s547
    %v549 = vpop.permute.xlu0 %548
    %s551 = sor.u32 256, 32
    %552 = vbcast.lane.b32.xlu0 %v534, %s551
    %v553 = vpop.permute.xlu0 %552
    %s555 = sor.u32 256, 40
    %556 = vbcast.lane.b32.xlu0 %v534, %s555
    %v557 = vpop.permute.xlu0 %556
    %s559 = sor.u32 256, 48
    %560 = vbcast.lane.b32.xlu0 %v534, %s559
    %v561 = vpop.permute.xlu0 %560
    %s563 = sor.u32 256, 56
    %564 = vbcast.lane.b32.xlu0 %v534, %s563
    %v565 = vpop.permute.xlu0 %564
    %s567 = sor.u32 256, 64
    %568 = vbcast.lane.b32.xlu0 %v534, %s567
    %v569 = vpop.permute.xlu0 %568
    %s571 = sor.u32 256, 72
    %572 = vbcast.lane.b32.xlu0 %v534, %s571
    %v573 = vpop.permute.xlu0 %572
    %s575 = sor.u32 256, 80
    %576 = vbcast.lane.b32.xlu0 %v534, %s575
    %v577 = vpop.permute.xlu0 %576
    %s579 = sor.u32 256, 88
    %580 = vbcast.lane.b32.xlu0 %v534, %s579
    %v581 = vpop.permute.xlu0 %580
    %v582 = vlaneseq
    %v583 = vshrl.u32 %v582, 7
    %v584 = vsub.s32 0, %v583
    %v585 = vrot.slane %v477, %v584
    %v586 = vmul.f32 %v486, %v585
    %v587 = vmul.f32 %v490, %v585
    %v588 = vmul.f32 %v494, %v585
    %v589 = vmul.f32 %v498, %v585
    %v590 = vmul.f32 %v502, %v585
    %v591 = vmul.f32 %v506, %v585
    %v592 = vmul.f32 %v510, %v585
    %v593 = vmul.f32 %v514, %v585
    %v594 = vmul.f32 %v518, %v585
    %v595 = vmul.f32 %v522, %v585
    %v596 = vmul.f32 %v526, %v585
    %v597 = vmul.f32 %v530, %v585
    %v598 = vmul.f32 %v537, %v585
    %v599 = vmul.f32 %v541, %v585
    %v600 = vmul.f32 %v545, %v585
    %v601 = vmul.f32 %v549, %v585
    %v602 = vmul.f32 %v553, %v585
    %v603 = vmul.f32 %v557, %v585
    %v604 = vmul.f32 %v561, %v585
    %v605 = vmul.f32 %v565, %v585
    %v606 = vmul.f32 %v569, %v585
    %v607 = vmul.f32 %v573, %v585
    %v608 = vmul.f32 %v577, %v585
    %v609 = vmul.f32 %v581, %v585
    %v610 = vadd.f32 %v301, %v586
    %v611 = vadd.f32 %v302, %v587
    %v612 = vadd.f32 %v303, %v588
    %v613 = vadd.f32 %v304, %v589
    %v614 = vadd.f32 %v305, %v590
    %v615 = vadd.f32 %v306, %v591
    %v616 = vadd.f32 %v307, %v592
    %v617 = vadd.f32 %v308, %v593
    %v618 = vadd.f32 %v309, %v594
    %v619 = vadd.f32 %v310, %v595
    %v620 = vadd.f32 %v311, %v596
    %v621 = vadd.f32 %v312, %v597
    %v622 = vadd.f32 %v313, %v598
    %v623 = vadd.f32 %v314, %v599
    %v624 = vadd.f32 %v315, %v600
    %v625 = vadd.f32 %v316, %v601
    %v626 = vadd.f32 %v317, %v602
    %v627 = vadd.f32 %v318, %v603
    %v628 = vadd.f32 %v319, %v604
    %v629 = vadd.f32 %v320, %v605
    %v630 = vadd.f32 %v321, %v606
    %v631 = vadd.f32 %v322, %v607
    %v632 = vadd.f32 %v323, %v608
    %v633 = vadd.f32 %v324, %v609
    %v634 = vld [vmem:[%s0 + $0x3] sm:$0x1]
    %v635 = vld [vmem:[%s0 + $0x7] sm:$0x1]
    %v636 = vlaneseq
    %v637 = vshrl.u32 %v636, 7
    %v638 = vsub.s32 0, %v637
    %v639 = vrot.slane %v634, %v638
    %641 = vbcast.lane.b32.xlu0 %v639, 256
    %v642 = vpop.permute.xlu0 %641
    %s644 = sor.u32 256, 8
    %645 = vbcast.lane.b32.xlu0 %v639, %s644
    %v646 = vpop.permute.xlu0 %645
    %s648 = sor.u32 256, 16
    %649 = vbcast.lane.b32.xlu0 %v639, %s648
    %v650 = vpop.permute.xlu0 %649
    %s652 = sor.u32 256, 24
    %653 = vbcast.lane.b32.xlu0 %v639, %s652
    %v654 = vpop.permute.xlu0 %653
    %s656 = sor.u32 256, 32
    %657 = vbcast.lane.b32.xlu0 %v639, %s656
    %v658 = vpop.permute.xlu0 %657
    %s660 = sor.u32 256, 40
    %661 = vbcast.lane.b32.xlu0 %v639, %s660
    %v662 = vpop.permute.xlu0 %661
    %s664 = sor.u32 256, 48
    %665 = vbcast.lane.b32.xlu0 %v639, %s664
    %v666 = vpop.permute.xlu0 %665
    %s668 = sor.u32 256, 56
    %669 = vbcast.lane.b32.xlu0 %v639, %s668
    %v670 = vpop.permute.xlu0 %669
    %s672 = sor.u32 256, 64
    %673 = vbcast.lane.b32.xlu0 %v639, %s672
    %v674 = vpop.permute.xlu0 %673
    %s676 = sor.u32 256, 72
    %677 = vbcast.lane.b32.xlu0 %v639, %s676
    %v678 = vpop.permute.xlu0 %677
    %s680 = sor.u32 256, 80
    %681 = vbcast.lane.b32.xlu0 %v639, %s680
    %v682 = vpop.permute.xlu0 %681
    %s684 = sor.u32 256, 88
    %685 = vbcast.lane.b32.xlu0 %v639, %s684
    %v686 = vpop.permute.xlu0 %685
    %v687 = vlaneseq
    %v688 = vshrl.u32 %v687, 7
    %v689 = vsub.s32 0, %v688
    %v690 = vrot.slane %v635, %v689
    %692 = vbcast.lane.b32.xlu0 %v690, 256
    %v693 = vpop.permute.xlu0 %692
    %s695 = sor.u32 256, 8
    %696 = vbcast.lane.b32.xlu0 %v690, %s695
    %v697 = vpop.permute.xlu0 %696
    %s699 = sor.u32 256, 16
    %700 = vbcast.lane.b32.xlu0 %v690, %s699
    %v701 = vpop.permute.xlu0 %700
    %s703 = sor.u32 256, 24
    %704 = vbcast.lane.b32.xlu0 %v690, %s703
    %v705 = vpop.permute.xlu0 %704
    %s707 = sor.u32 256, 32
    %708 = vbcast.lane.b32.xlu0 %v690, %s707
    %v709 = vpop.permute.xlu0 %708
    %s711 = sor.u32 256, 40
    %712 = vbcast.lane.b32.xlu0 %v690, %s711
    %v713 = vpop.permute.xlu0 %712
    %s715 = sor.u32 256, 48
    %716 = vbcast.lane.b32.xlu0 %v690, %s715
    %v717 = vpop.permute.xlu0 %716
    %s719 = sor.u32 256, 56
    %720 = vbcast.lane.b32.xlu0 %v690, %s719
    %v721 = vpop.permute.xlu0 %720
    %s723 = sor.u32 256, 64
    %724 = vbcast.lane.b32.xlu0 %v690, %s723
    %v725 = vpop.permute.xlu0 %724
    %s727 = sor.u32 256, 72
    %728 = vbcast.lane.b32.xlu0 %v690, %s727
    %v729 = vpop.permute.xlu0 %728
    %s731 = sor.u32 256, 80
    %732 = vbcast.lane.b32.xlu0 %v690, %s731
    %v733 = vpop.permute.xlu0 %732
    %s735 = sor.u32 256, 88
    %736 = vbcast.lane.b32.xlu0 %v690, %s735
    %v737 = vpop.permute.xlu0 %736
    %v738 = vmul.f32 %v642, %v585
    %v739 = vmul.f32 %v646, %v585
    %v740 = vmul.f32 %v650, %v585
    %v741 = vmul.f32 %v654, %v585
    %v742 = vmul.f32 %v658, %v585
    %v743 = vmul.f32 %v662, %v585
    %v744 = vmul.f32 %v666, %v585
    %v745 = vmul.f32 %v670, %v585
    %v746 = vmul.f32 %v674, %v585
    %v747 = vmul.f32 %v678, %v585
    %v748 = vmul.f32 %v682, %v585
    %v749 = vmul.f32 %v686, %v585
    %v750 = vmul.f32 %v693, %v585
    %v751 = vmul.f32 %v697, %v585
    %v752 = vmul.f32 %v701, %v585
    %v753 = vmul.f32 %v705, %v585
    %v754 = vmul.f32 %v709, %v585
    %v755 = vmul.f32 %v713, %v585
    %v756 = vmul.f32 %v717, %v585
    %v757 = vmul.f32 %v721, %v585
    %v758 = vmul.f32 %v725, %v585
    %v759 = vmul.f32 %v729, %v585
    %v760 = vmul.f32 %v733, %v585
    %v761 = vmul.f32 %v737, %v585
    %v762 = vadd.f32 %v453, %v738
    %v763 = vadd.f32 %v454, %v739
    %v764 = vadd.f32 %v455, %v740
    %v765 = vadd.f32 %v456, %v741
    %v766 = vadd.f32 %v457, %v742
    %v767 = vadd.f32 %v458, %v743
    %v768 = vadd.f32 %v459, %v744
    %v769 = vadd.f32 %v460, %v745
    %v770 = vadd.f32 %v461, %v746
    %v771 = vadd.f32 %v462, %v747
    %v772 = vadd.f32 %v463, %v748
    %v773 = vadd.f32 %v464, %v749
    %v774 = vadd.f32 %v465, %v750
    %v775 = vadd.f32 %v466, %v751
    %v776 = vadd.f32 %v467, %v752
    %v777 = vadd.f32 %v468, %v753
    %v778 = vadd.f32 %v469, %v754
    %v779 = vadd.f32 %v470, %v755
    %v780 = vadd.f32 %v471, %v756
    %v781 = vadd.f32 %v472, %v757
    %v782 = vadd.f32 %v473, %v758
    %v783 = vadd.f32 %v474, %v759
    %v784 = vadd.f32 %v475, %v760
    %v785 = vadd.f32 %v476, %v761
    %v786 = vld [vmem:[#allocation9 + $0x2] sm:$0x1]
    %v787 = vlaneseq
    %v788 = vshrl.u32 %v787, 7
    %v789 = vsub.s32 0, %v788
    %v790 = vrot.slane %v786, %v789
    %v791 = vmul.f32 %v333, %v790
    %v792 = vmul.f32 %v337, %v790
    %v793 = vmul.f32 %v341, %v790
    %v794 = vmul.f32 %v345, %v790
    %v795 = vmul.f32 %v349, %v790
    %v796 = vmul.f32 %v353, %v790
    %v797 = vmul.f32 %v357, %v790
    %v798 = vmul.f32 %v361, %v790
    %v799 = vmul.f32 %v365, %v790
    %v800 = vmul.f32 %v369, %v790
    %v801 = vmul.f32 %v373, %v790
    %v802 = vmul.f32 %v377, %v790
    %v803 = vmul.f32 %v384, %v790
    %v804 = vmul.f32 %v388, %v790
    %v805 = vmul.f32 %v392, %v790
    %v806 = vmul.f32 %v396, %v790
    %v807 = vmul.f32 %v400, %v790
    %v808 = vmul.f32 %v404, %v790
    %v809 = vmul.f32 %v408, %v790
    %v810 = vmul.f32 %v412, %v790
    %v811 = vmul.f32 %v416, %v790
    %v812 = vmul.f32 %v420, %v790
    %v813 = vmul.f32 %v424, %v790
    %v814 = vmul.f32 %v428, %v790
    %v815 = vadd.f32 %v610, %v791
    %v816 = vadd.f32 %v611, %v792
    %v817 = vadd.f32 %v612, %v793
    %v818 = vadd.f32 %v613, %v794
    %v819 = vadd.f32 %v614, %v795
    %v820 = vadd.f32 %v615, %v796
    %v821 = vadd.f32 %v616, %v797
    %v822 = vadd.f32 %v617, %v798
    %v823 = vadd.f32 %v618, %v799
    %v824 = vadd.f32 %v619, %v800
    %v825 = vadd.f32 %v620, %v801
    %v826 = vadd.f32 %v621, %v802
    %v827 = vadd.f32 %v622, %v803
    %v828 = vadd.f32 %v623, %v804
    %v829 = vadd.f32 %v624, %v805
    %v830 = vadd.f32 %v625, %v806
    %v831 = vadd.f32 %v626, %v807
    %v832 = vadd.f32 %v627, %v808
    %v833 = vadd.f32 %v628, %v809
    %v834 = vadd.f32 %v629, %v810
    %v835 = vadd.f32 %v630, %v811
    %v836 = vadd.f32 %v631, %v812
    %v837 = vadd.f32 %v632, %v813
    %v838 = vadd.f32 %v633, %v814
    %s840 = sor.u32 256, 1
    %841 = vbcast.lane.b32.xlu0 %v168, %s840
    %v842 = vpop.permute.xlu0 %841
    %s844 = sor.u32 256, 9
    %845 = vbcast.lane.b32.xlu0 %v168, %s844
    %v846 = vpop.permute.xlu0 %845
    %s848 = sor.u32 256, 17
    %849 = vbcast.lane.b32.xlu0 %v168, %s848
    %v850 = vpop.permute.xlu0 %849
    %s852 = sor.u32 256, 25
    %853 = vbcast.lane.b32.xlu0 %v168, %s852
    %v854 = vpop.permute.xlu0 %853
    %s856 = sor.u32 256, 33
    %857 = vbcast.lane.b32.xlu0 %v168, %s856
    %v858 = vpop.permute.xlu0 %857
    %s860 = sor.u32 256, 41
    %861 = vbcast.lane.b32.xlu0 %v168, %s860
    %v862 = vpop.permute.xlu0 %861
    %s864 = sor.u32 256, 49
    %865 = vbcast.lane.b32.xlu0 %v168, %s864
    %v866 = vpop.permute.xlu0 %865
    %s868 = sor.u32 256, 57
    %869 = vbcast.lane.b32.xlu0 %v168, %s868
    %v870 = vpop.permute.xlu0 %869
    %s872 = sor.u32 256, 65
    %873 = vbcast.lane.b32.xlu0 %v168, %s872
    %v874 = vpop.permute.xlu0 %873
    %s876 = sor.u32 256, 73
    %877 = vbcast.lane.b32.xlu0 %v168, %s876
    %v878 = vpop.permute.xlu0 %877
    %s880 = sor.u32 256, 81
    %881 = vbcast.lane.b32.xlu0 %v168, %s880
    %v882 = vpop.permute.xlu0 %881
    %s884 = sor.u32 256, 89
    %885 = vbcast.lane.b32.xlu0 %v168, %s884
    %v886 = vpop.permute.xlu0 %885
    %s888 = sor.u32 256, 1
    %889 = vbcast.lane.b32.xlu0 %v219, %s888
    %v890 = vpop.permute.xlu0 %889
    %s892 = sor.u32 256, 9
    %893 = vbcast.lane.b32.xlu0 %v219, %s892
    %v894 = vpop.permute.xlu0 %893
    %s896 = sor.u32 256, 17
    %897 = vbcast.lane.b32.xlu0 %v219, %s896
    %v898 = vpop.permute.xlu0 %897
    %s900 = sor.u32 256, 25
    %901 = vbcast.lane.b32.xlu0 %v219, %s900
    %v902 = vpop.permute.xlu0 %901
    %s904 = sor.u32 256, 33
    %905 = vbcast.lane.b32.xlu0 %v219, %s904
    %v906 = vpop.permute.xlu0 %905
    %s908 = sor.u32 256, 41
    %909 = vbcast.lane.b32.xlu0 %v219, %s908
    %v910 = vpop.permute.xlu0 %909
    %s912 = sor.u32 256, 49
    %913 = vbcast.lane.b32.xlu0 %v219, %s912
    %v914 = vpop.permute.xlu0 %913
    %s916 = sor.u32 256, 57
    %917 = vbcast.lane.b32.xlu0 %v219, %s916
    %v918 = vpop.permute.xlu0 %917
    %s920 = sor.u32 256, 65
    %921 = vbcast.lane.b32.xlu0 %v219, %s920
    %v922 = vpop.permute.xlu0 %921
    %s924 = sor.u32 256, 73
    %925 = vbcast.lane.b32.xlu0 %v219, %s924
    %v926 = vpop.permute.xlu0 %925
    %s928 = sor.u32 256, 81
    %929 = vbcast.lane.b32.xlu0 %v219, %s928
    %v930 = vpop.permute.xlu0 %929
    %s932 = sor.u32 256, 89
    %933 = vbcast.lane.b32.xlu0 %v219, %s932
    %v934 = vpop.permute.xlu0 %933
    %v935 = vmul.f32 %v842, %v790
    %v936 = vmul.f32 %v846, %v790
    %v937 = vmul.f32 %v850, %v790
    %v938 = vmul.f32 %v854, %v790
    %v939 = vmul.f32 %v858, %v790
    %v940 = vmul.f32 %v862, %v790
    %v941 = vmul.f32 %v866, %v790
    %v942 = vmul.f32 %v870, %v790
    %v943 = vmul.f32 %v874, %v790
    %v944 = vmul.f32 %v878, %v790
    %v945 = vmul.f32 %v882, %v790
    %v946 = vmul.f32 %v886, %v790
    %v947 = vmul.f32 %v890, %v790
    %v948 = vmul.f32 %v894, %v790
    %v949 = vmul.f32 %v898, %v790
    %v950 = vmul.f32 %v902, %v790
    %v951 = vmul.f32 %v906, %v790
    %v952 = vmul.f32 %v910, %v790
    %v953 = vmul.f32 %v914, %v790
    %v954 = vmul.f32 %v918, %v790
    %v955 = vmul.f32 %v922, %v790
    %v956 = vmul.f32 %v926, %v790
    %v957 = vmul.f32 %v930, %v790
    %v958 = vmul.f32 %v934, %v790
    %v959 = vadd.f32 %v762, %v935
    %v960 = vadd.f32 %v763, %v936
    %v961 = vadd.f32 %v764, %v937
    %v962 = vadd.f32 %v765, %v938
    %v963 = vadd.f32 %v766, %v939
    %v964 = vadd.f32 %v767, %v940
    %v965 = vadd.f32 %v768, %v941
    %v966 = vadd.f32 %v769, %v942
    %v967 = vadd.f32 %v770, %v943
    %v968 = vadd.f32 %v771, %v944
    %v969 = vadd.f32 %v772, %v945
    %v970 = vadd.f32 %v773, %v946
    %v971 = vadd.f32 %v774, %v947
    %v972 = vadd.f32 %v775, %v948
    %v973 = vadd.f32 %v776, %v949
    %v974 = vadd.f32 %v777, %v950
    %v975 = vadd.f32 %v778, %v951
    %v976 = vadd.f32 %v779, %v952
    %v977 = vadd.f32 %v780, %v953
    %v978 = vadd.f32 %v781, %v954
    %v979 = vadd.f32 %v782, %v955
    %v980 = vadd.f32 %v783, %v956
    %v981 = vadd.f32 %v784, %v957
    %v982 = vadd.f32 %v785, %v958
    %v983 = vld [vmem:[#allocation9 + $0x3] sm:$0x1]
    %v984 = vlaneseq
    %v985 = vshrl.u32 %v984, 7
    %v986 = vsub.s32 0, %v985
    %v987 = vrot.slane %v983, %v986
    %v988 = vmul.f32 %v642, %v987
    %v989 = vmul.f32 %v646, %v987
    %v990 = vmul.f32 %v650, %v987
    %v991 = vmul.f32 %v654, %v987
    %v992 = vmul.f32 %v658, %v987
    %v993 = vmul.f32 %v662, %v987
    %v994 = vmul.f32 %v666, %v987
    %v995 = vmul.f32 %v670, %v987
    %v996 = vmul.f32 %v674, %v987
    %v997 = vmul.f32 %v678, %v987
    %v998 = vmul.f32 %v682, %v987
    %v999 = vmul.f32 %v686, %v987
    %v1000 = vmul.f32 %v693, %v987
    %v1001 = vmul.f32 %v697, %v987
    %v1002 = vmul.f32 %v701, %v987
    %v1003 = vmul.f32 %v705, %v987
    %v1004 = vmul.f32 %v709, %v987
    %v1005 = vmul.f32 %v713, %v987
    %v1006 = vmul.f32 %v717, %v987
    %v1007 = vmul.f32 %v721, %v987
    %v1008 = vmul.f32 %v725, %v987
    %v1009 = vmul.f32 %v729, %v987
    %v1010 = vmul.f32 %v733, %v987
    %v1011 = vmul.f32 %v737, %v987
    %v1012 = vadd.f32 %v815, %v988
    %v1013 = vadd.f32 %v816, %v989
    %v1014 = vadd.f32 %v817, %v990
    %v1015 = vadd.f32 %v818, %v991
    %v1016 = vadd.f32 %v819, %v992
    %v1017 = vadd.f32 %v820, %v993
    %v1018 = vadd.f32 %v821, %v994
    %v1019 = vadd.f32 %v822, %v995
    %v1020 = vadd.f32 %v823, %v996
    %v1021 = vadd.f32 %v824, %v997
    %v1022 = vadd.f32 %v825, %v998
    %v1023 = vadd.f32 %v826, %v999
    %v1024 = vadd.f32 %v827, %v1000
    %v1025 = vadd.f32 %v828, %v1001
    %v1026 = vadd.f32 %v829, %v1002
    %v1027 = vadd.f32 %v830, %v1003
    %v1028 = vadd.f32 %v831, %v1004
    %v1029 = vadd.f32 %v832, %v1005
    %v1030 = vadd.f32 %v833, %v1006
    %v1031 = vadd.f32 %v834, %v1007
    %v1032 = vadd.f32 %v835, %v1008
    %v1033 = vadd.f32 %v836, %v1009
    %v1034 = vadd.f32 %v837, %v1010
    %v1035 = vadd.f32 %v838, %v1011
    %s1037 = sor.u32 256, 1
    %1038 = vbcast.lane.b32.xlu0 %v483, %s1037
    %v1039 = vpop.permute.xlu0 %1038
    %s1041 = sor.u32 256, 9
    %1042 = vbcast.lane.b32.xlu0 %v483, %s1041
    %v1043 = vpop.permute.xlu0 %1042
    %s1045 = sor.u32 256, 17
    %1046 = vbcast.lane.b32.xlu0 %v483, %s1045
    %v1047 = vpop.permute.xlu0 %1046
    %s1049 = sor.u32 256, 25
    %1050 = vbcast.lane.b32.xlu0 %v483, %s1049
    %v1051 = vpop.permute.xlu0 %1050
    %s1053 = sor.u32 256, 33
    %1054 = vbcast.lane.b32.xlu0 %v483, %s1053
    %v1055 = vpop.permute.xlu0 %1054
    %s1057 = sor.u32 256, 41
    %1058 = vbcast.lane.b32.xlu0 %v483, %s1057
    %v1059 = vpop.permute.xlu0 %1058
    %s1061 = sor.u32 256, 49
    %1062 = vbcast.lane.b32.xlu0 %v483, %s1061
    %v1063 = vpop.permute.xlu0 %1062
    %s1065 = sor.u32 256, 57
    %1066 = vbcast.lane.b32.xlu0 %v483, %s1065
    %v1067 = vpop.permute.xlu0 %1066
    %s1069 = sor.u32 256, 65
    %1070 = vbcast.lane.b32.xlu0 %v483, %s1069
    %v1071 = vpop.permute.xlu0 %1070
    %s1073 = sor.u32 256, 73
    %1074 = vbcast.lane.b32.xlu0 %v483, %s1073
    %v1075 = vpop.permute.xlu0 %1074
    %s1077 = sor.u32 256, 81
    %1078 = vbcast.lane.b32.xlu0 %v483, %s1077
    %v1079 = vpop.permute.xlu0 %1078
    %s1081 = sor.u32 256, 89
    %1082 = vbcast.lane.b32.xlu0 %v483, %s1081
    %v1083 = vpop.permute.xlu0 %1082
    %s1085 = sor.u32 256, 1
    %1086 = vbcast.lane.b32.xlu0 %v534, %s1085
    %v1087 = vpop.permute.xlu0 %1086
    %s1089 = sor.u32 256, 9
    %1090 = vbcast.lane.b32.xlu0 %v534, %s1089
    %v1091 = vpop.permute.xlu0 %1090
    %s1093 = sor.u32 256, 17
    %1094 = vbcast.lane.b32.xlu0 %v534, %s1093
    %v1095 = vpop.permute.xlu0 %1094
    %s1097 = sor.u32 256, 25
    %1098 = vbcast.lane.b32.xlu0 %v534, %s1097
    %v1099 = vpop.permute.xlu0 %1098
    %s1101 = sor.u32 256, 33
    %1102 = vbcast.lane.b32.xlu0 %v534, %s1101
    %v1103 = vpop.permute.xlu0 %1102
    %s1105 = sor.u32 256, 41
    %1106 = vbcast.lane.b32.xlu0 %v534, %s1105
    %v1107 = vpop.permute.xlu0 %1106
    %s1109 = sor.u32 256, 49
    %1110 = vbcast.lane.b32.xlu0 %v534, %s1109
    %v1111 = vpop.permute.xlu0 %1110
    %s1113 = sor.u32 256, 57
    %1114 = vbcast.lane.b32.xlu0 %v534, %s1113
    %v1115 = vpop.permute.xlu0 %1114
    %s1117 = sor.u32 256, 65
    %1118 = vbcast.lane.b32.xlu0 %v534, %s1117
    %v1119 = vpop.permute.xlu0 %1118
    %s1121 = sor.u32 256, 73
    %1122 = vbcast.lane.b32.xlu0 %v534, %s1121
    %v1123 = vpop.permute.xlu0 %1122
    %s1125 = sor.u32 256, 81
    %1126 = vbcast.lane.b32.xlu0 %v534, %s1125
    %v1127 = vpop.permute.xlu0 %1126
    %s1129 = sor.u32 256, 89
    %1130 = vbcast.lane.b32.xlu0 %v534, %s1129
    %v1131 = vpop.permute.xlu0 %1130
    %v1132 = vmul.f32 %v1039, %v987
    %v1133 = vmul.f32 %v1043, %v987
    %v1134 = vmul.f32 %v1047, %v987
    %v1135 = vmul.f32 %v1051, %v987
    %v1136 = vmul.f32 %v1055, %v987
    %v1137 = vmul.f32 %v1059, %v987
    %v1138 = vmul.f32 %v1063, %v987
    %v1139 = vmul.f32 %v1067, %v987
    %v1140 = vmul.f32 %v1071, %v987
    %v1141 = vmul.f32 %v1075, %v987
    %v1142 = vmul.f32 %v1079, %v987
    %v1143 = vmul.f32 %v1083, %v987
    %v1144 = vmul.f32 %v1087, %v987
    %v1145 = vmul.f32 %v1091, %v987
    %v1146 = vmul.f32 %v1095, %v987
    %v1147 = vmul.f32 %v1099, %v987
    %v1148 = vmul.f32 %v1103, %v987
    %v1149 = vmul.f32 %v1107, %v987
    %v1150 = vmul.f32 %v1111, %v987
    %v1151 = vmul.f32 %v1115, %v987
    %v1152 = vmul.f32 %v1119, %v987
    %v1153 = vmul.f32 %v1123, %v987
    %v1154 = vmul.f32 %v1127, %v987
    %v1155 = vmul.f32 %v1131, %v987
    %v1156 = vadd.f32 %v959, %v1132
    %v1157 = vadd.f32 %v960, %v1133
    %v1158 = vadd.f32 %v961, %v1134
    %v1159 = vadd.f32 %v962, %v1135
    %v1160 = vadd.f32 %v963, %v1136
    %v1161 = vadd.f32 %v964, %v1137
    %v1162 = vadd.f32 %v965, %v1138
    %v1163 = vadd.f32 %v966, %v1139
    %v1164 = vadd.f32 %v967, %v1140
    %v1165 = vadd.f32 %v968, %v1141
    %v1166 = vadd.f32 %v969, %v1142
    %v1167 = vadd.f32 %v970, %v1143
    %v1168 = vadd.f32 %v971, %v1144
    %v1169 = vadd.f32 %v972, %v1145
    %v1170 = vadd.f32 %v973, %v1146
    %v1171 = vadd.f32 %v974, %v1147
    %v1172 = vadd.f32 %v975, %v1148
    %v1173 = vadd.f32 %v976, %v1149
    %v1174 = vadd.f32 %v977, %v1150
    %v1175 = vadd.f32 %v978, %v1151
    %v1176 = vadd.f32 %v979, %v1152
    %v1177 = vadd.f32 %v980, %v1153
    %v1178 = vadd.f32 %v981, %v1154
    %v1179 = vadd.f32 %v982, %v1155
    %v1180 = vld [vmem:[#allocation9 + $0x4] sm:$0x1]
    %v1181 = vlaneseq
    %v1182 = vshrl.u32 %v1181, 7
    %v1183 = vsub.s32 0, %v1182
    %v1184 = vrot.slane %v1180, %v1183
    %v1185 = vmul.f32 %v842, %v1184
    %v1186 = vmul.f32 %v846, %v1184
    %v1187 = vmul.f32 %v850, %v1184
    %v1188 = vmul.f32 %v854, %v1184
    %v1189 = vmul.f32 %v858, %v1184
    %v1190 = vmul.f32 %v862, %v1184
    %v1191 = vmul.f32 %v866, %v1184
    %v1192 = vmul.f32 %v870, %v1184
    %v1193 = vmul.f32 %v874, %v1184
    %v1194 = vmul.f32 %v878, %v1184
    %v1195 = vmul.f32 %v882, %v1184
    %v1196 = vmul.f32 %v886, %v1184
    %v1197 = vmul.f32 %v890, %v1184
    %v1198 = vmul.f32 %v894, %v1184
    %v1199 = vmul.f32 %v898, %v1184
    %v1200 = vmul.f32 %v902, %v1184
    %v1201 = vmul.f32 %v906, %v1184
    %v1202 = vmul.f32 %v910, %v1184
    %v1203 = vmul.f32 %v914, %v1184
    %v1204 = vmul.f32 %v918, %v1184
    %v1205 = vmul.f32 %v922, %v1184
    %v1206 = vmul.f32 %v926, %v1184
    %v1207 = vmul.f32 %v930, %v1184
    %v1208 = vmul.f32 %v934, %v1184
    %v1209 = vadd.f32 %v1012, %v1185
    %v1210 = vadd.f32 %v1013, %v1186
    %v1211 = vadd.f32 %v1014, %v1187
    %v1212 = vadd.f32 %v1015, %v1188
    %v1213 = vadd.f32 %v1016, %v1189
    %v1214 = vadd.f32 %v1017, %v1190
    %v1215 = vadd.f32 %v1018, %v1191
    %v1216 = vadd.f32 %v1019, %v1192
    %v1217 = vadd.f32 %v1020, %v1193
    %v1218 = vadd.f32 %v1021, %v1194
    %v1219 = vadd.f32 %v1022, %v1195
    %v1220 = vadd.f32 %v1023, %v1196
    %v1221 = vadd.f32 %v1024, %v1197
    %v1222 = vadd.f32 %v1025, %v1198
    %v1223 = vadd.f32 %v1026, %v1199
    %v1224 = vadd.f32 %v1027, %v1200
    %v1225 = vadd.f32 %v1028, %v1201
    %v1226 = vadd.f32 %v1029, %v1202
    %v1227 = vadd.f32 %v1030, %v1203
    %v1228 = vadd.f32 %v1031, %v1204
    %v1229 = vadd.f32 %v1032, %v1205
    %v1230 = vadd.f32 %v1033, %v1206
    %v1231 = vadd.f32 %v1034, %v1207
    %v1232 = vadd.f32 %v1035, %v1208
    %s1234 = sor.u32 256, 1
    %1235 = vbcast.lane.b32.xlu0 %v330, %s1234
    %v1236 = vpop.permute.xlu0 %1235
    %s1238 = sor.u32 256, 9
    %1239 = vbcast.lane.b32.xlu0 %v330, %s1238
    %v1240 = vpop.permute.xlu0 %1239
    %s1242 = sor.u32 256, 17
    %1243 = vbcast.lane.b32.xlu0 %v330, %s1242
    %v1244 = vpop.permute.xlu0 %1243
    %s1246 = sor.u32 256, 25
    %1247 = vbcast.lane.b32.xlu0 %v330, %s1246
    %v1248 = vpop.permute.xlu0 %1247
    %s1250 = sor.u32 256, 33
    %1251 = vbcast.lane.b32.xlu0 %v330, %s1250
    %v1252 = vpop.permute.xlu0 %1251
    %s1254 = sor.u32 256, 41
    %1255 = vbcast.lane.b32.xlu0 %v330, %s1254
    %v1256 = vpop.permute.xlu0 %1255
    %s1258 = sor.u32 256, 49
    %1259 = vbcast.lane.b32.xlu0 %v330, %s1258
    %v1260 = vpop.permute.xlu0 %1259
    %s1262 = sor.u32 256, 57
    %1263 = vbcast.lane.b32.xlu0 %v330, %s1262
    %v1264 = vpop.permute.xlu0 %1263
    %s1266 = sor.u32 256, 65
    %1267 = vbcast.lane.b32.xlu0 %v330, %s1266
    %v1268 = vpop.permute.xlu0 %1267
    %s1270 = sor.u32 256, 73
    %1271 = vbcast.lane.b32.xlu0 %v330, %s1270
    %v1272 = vpop.permute.xlu0 %1271
    %s1274 = sor.u32 256, 81
    %1275 = vbcast.lane.b32.xlu0 %v330, %s1274
    %v1276 = vpop.permute.xlu0 %1275
    %s1278 = sor.u32 256, 89
    %1279 = vbcast.lane.b32.xlu0 %v330, %s1278
    %v1280 = vpop.permute.xlu0 %1279
    %s1282 = sor.u32 256, 1
    %1283 = vbcast.lane.b32.xlu0 %v381, %s1282
    %v1284 = vpop.permute.xlu0 %1283
    %s1286 = sor.u32 256, 9
    %1287 = vbcast.lane.b32.xlu0 %v381, %s1286
    %v1288 = vpop.permute.xlu0 %1287
    %s1290 = sor.u32 256, 17
    %1291 = vbcast.lane.b32.xlu0 %v381, %s1290
    %v1292 = vpop.permute.xlu0 %1291
    %s1294 = sor.u32 256, 25
    %1295 = vbcast.lane.b32.xlu0 %v381, %s1294
    %v1296 = vpop.permute.xlu0 %1295
    %s1298 = sor.u32 256, 33
    %1299 = vbcast.lane.b32.xlu0 %v381, %s1298
    %v1300 = vpop.permute.xlu0 %1299
    %s1302 = sor.u32 256, 41
    %1303 = vbcast.lane.b32.xlu0 %v381, %s1302
    %v1304 = vpop.permute.xlu0 %1303
    %s1306 = sor.u32 256, 49
    %1307 = vbcast.lane.b32.xlu0 %v381, %s1306
    %v1308 = vpop.permute.xlu0 %1307
    %s1310 = sor.u32 256, 57
    %1311 = vbcast.lane.b32.xlu0 %v381, %s1310
    %v1312 = vpop.permute.xlu0 %1311
    %s1314 = sor.u32 256, 65
    %1315 = vbcast.lane.b32.xlu0 %v381, %s1314
    %v1316 = vpop.permute.xlu0 %1315
    %s1318 = sor.u32 256, 73
    %1319 = vbcast.lane.b32.xlu0 %v381, %s1318
    %v1320 = vpop.permute.xlu0 %1319
    %s1322 = sor.u32 256, 81
    %1323 = vbcast.lane.b32.xlu0 %v381, %s1322
    %v1324 = vpop.permute.xlu0 %1323
    %s1326 = sor.u32 256, 89
    %1327 = vbcast.lane.b32.xlu0 %v381, %s1326
    %v1328 = vpop.permute.xlu0 %1327
    %v1329 = vmul.f32 %v1236, %v1184
    %v1330 = vmul.f32 %v1240, %v1184
    %v1331 = vmul.f32 %v1244, %v1184
    %v1332 = vmul.f32 %v1248, %v1184
    %v1333 = vmul.f32 %v1252, %v1184
    %v1334 = vmul.f32 %v1256, %v1184
    %v1335 = vmul.f32 %v1260, %v1184
    %v1336 = vmul.f32 %v1264, %v1184
    %v1337 = vmul.f32 %v1268, %v1184
    %v1338 = vmul.f32 %v1272, %v1184
    %v1339 = vmul.f32 %v1276, %v1184
    %v1340 = vmul.f32 %v1280, %v1184
    %v1341 = vmul.f32 %v1284, %v1184
    %v1342 = vmul.f32 %v1288, %v1184
    %v1343 = vmul.f32 %v1292, %v1184
    %v1344 = vmul.f32 %v1296, %v1184
    %v1345 = vmul.f32 %v1300, %v1184
    %v1346 = vmul.f32 %v1304, %v1184
    %v1347 = vmul.f32 %v1308, %v1184
    %v1348 = vmul.f32 %v1312, %v1184
    %v1349 = vmul.f32 %v1316, %v1184
    %v1350 = vmul.f32 %v1320, %v1184
    %v1351 = vmul.f32 %v1324, %v1184
    %v1352 = vmul.f32 %v1328, %v1184
    %v1353 = vadd.f32 %v1156, %v1329
    %v1354 = vadd.f32 %v1157, %v1330
    %v1355 = vadd.f32 %v1158, %v1331
    %v1356 = vadd.f32 %v1159, %v1332
    %v1357 = vadd.f32 %v1160, %v1333
    %v1358 = vadd.f32 %v1161, %v1334
    %v1359 = vadd.f32 %v1162, %v1335
    %v1360 = vadd.f32 %v1163, %v1336
    %v1361 = vadd.f32 %v1164, %v1337
    %v1362 = vadd.f32 %v1165, %v1338
    %v1363 = vadd.f32 %v1166, %v1339
    %v1364 = vadd.f32 %v1167, %v1340
    %v1365 = vadd.f32 %v1168, %v1341
    %v1366 = vadd.f32 %v1169, %v1342
    %v1367 = vadd.f32 %v1170, %v1343
    %v1368 = vadd.f32 %v1171, %v1344
    %v1369 = vadd.f32 %v1172, %v1345
    %v1370 = vadd.f32 %v1173, %v1346
    %v1371 = vadd.f32 %v1174, %v1347
    %v1372 = vadd.f32 %v1175, %v1348
    %v1373 = vadd.f32 %v1176, %v1349
    %v1374 = vadd.f32 %v1177, %v1350
    %v1375 = vadd.f32 %v1178, %v1351
    %v1376 = vadd.f32 %v1179, %v1352
    %vm1377 = vcmask 261120
    %1378 = vst.msk [vmem:[#allocation2] sm:$0xff] %vm1377, %v1209
    %1379 = vst.msk [vmem:[#allocation2 + $0x8] sm:$0xff] %vm1377, %v1210
    %1380 = vst.msk [vmem:[#allocation2 + $0x10] sm:$0xff] %vm1377, %v1211
    %1381 = vst.msk [vmem:[#allocation2 + $0x18] sm:$0xff] %vm1377, %v1212
    %1382 = vst.msk [vmem:[#allocation2 + $0x20] sm:$0xff] %vm1377, %v1213
    %1383 = vst.msk [vmem:[#allocation2 + $0x28] sm:$0xff] %vm1377, %v1214
    %1384 = vst.msk [vmem:[#allocation2 + $0x30] sm:$0xff] %vm1377, %v1215
    %1385 = vst.msk [vmem:[#allocation2 + $0x38] sm:$0xff] %vm1377, %v1216
    %1386 = vst.msk [vmem:[#allocation2 + $0x40] sm:$0xff] %vm1377, %v1217
    %1387 = vst.msk [vmem:[#allocation2 + $0x48] sm:$0xff] %vm1377, %v1218
    %1388 = vst.msk [vmem:[#allocation2 + $0x50] sm:$0xff] %vm1377, %v1219
    %vm1389 = vcmask 253952
    %1390 = vst.msk [vmem:[#allocation2 + $0x58] sm:$0x1] %vm1389, %v1220
    %1391 = vst.msk [vmem:[#allocation2 + $0x60] sm:$0xff] %vm1377, %v1221
    %1392 = vst.msk [vmem:[#allocation2 + $0x68] sm:$0xff] %vm1377, %v1222
    %1393 = vst.msk [vmem:[#allocation2 + $0x70] sm:$0xff] %vm1377, %v1223
    %1394 = vst.msk [vmem:[#allocation2 + $0x78] sm:$0xff] %vm1377, %v1224
    %1395 = vst.msk [vmem:[#allocation2 + $0x80] sm:$0xff] %vm1377, %v1225
    %1396 = vst.msk [vmem:[#allocation2 + $0x88] sm:$0xff] %vm1377, %v1226
    %1397 = vst.msk [vmem:[#allocation2 + $0x90] sm:$0xff] %vm1377, %v1227
    %1398 = vst.msk [vmem:[#allocation2 + $0x98] sm:$0xff] %vm1377, %v1228
    %1399 = vst.msk [vmem:[#allocation2 + $0xa0] sm:$0xff] %vm1377, %v1229
    %1400 = vst.msk [vmem:[#allocation2 + $0xa8] sm:$0xff] %vm1377, %v1230
    %1401 = vst.msk [vmem:[#allocation2 + $0xb0] sm:$0xff] %vm1377, %v1231
    %1402 = vst.msk [vmem:[#allocation2 + $0xb8] sm:$0x1] %vm1389, %v1232
    %1403 = vst.msk [vmem:[#allocation3] sm:$0xff] %vm1377, %v1353
    %1404 = vst.msk [vmem:[#allocation3 + $0x8] sm:$0xff] %vm1377, %v1354
    %1405 = vst.msk [vmem:[#allocation3 + $0x10] sm:$0xff] %vm1377, %v1355
    %1406 = vst.msk [vmem:[#allocation3 + $0x18] sm:$0xff] %vm1377, %v1356
    %1407 = vst.msk [vmem:[#allocation3 + $0x20] sm:$0xff] %vm1377, %v1357
    %1408 = vst.msk [vmem:[#allocation3 + $0x28] sm:$0xff] %vm1377, %v1358
    %1409 = vst.msk [vmem:[#allocation3 + $0x30] sm:$0xff] %vm1377, %v1359
    %1410 = vst.msk [vmem:[#allocation3 + $0x38] sm:$0xff] %vm1377, %v1360
    %1411 = vst.msk [vmem:[#allocation3 + $0x40] sm:$0xff] %vm1377, %v1361
    %1412 = vst.msk [vmem:[#allocation3 + $0x48] sm:$0xff] %vm1377, %v1362
    %1413 = vst.msk [vmem:[#allocation3 + $0x50] sm:$0xff] %vm1377, %v1363
    %1414 = vst.msk [vmem:[#allocation3 + $0x58] sm:$0x1] %vm1389, %v1364
    %1415 = vst.msk [vmem:[#allocation3 + $0x60] sm:$0xff] %vm1377, %v1365
    %1416 = vst.msk [vmem:[#allocation3 + $0x68] sm:$0xff] %vm1377, %v1366
    %1417 = vst.msk [vmem:[#allocation3 + $0x70] sm:$0xff] %vm1377, %v1367
    %1418 = vst.msk [vmem:[#allocation3 + $0x78] sm:$0xff] %vm1377, %v1368
    %1419 = vst.msk [vmem:[#allocation3 + $0x80] sm:$0xff] %vm1377, %v1369
    %1420 = vst.msk [vmem:[#allocation3 + $0x88] sm:$0xff] %vm1377, %v1370
    %1421 = vst.msk [vmem:[#allocation3 + $0x90] sm:$0xff] %vm1377, %v1371
    %1422 = vst.msk [vmem:[#allocation3 + $0x98] sm:$0xff] %vm1377, %v1372
    %1423 = vst.msk [vmem:[#allocation3 + $0xa0] sm:$0xff] %vm1377, %v1373
    %1424 = vst.msk [vmem:[#allocation3 + $0xa8] sm:$0xff] %vm1377, %v1374
    %1425 = vst.msk [vmem:[#allocation3 + $0xb0] sm:$0xff] %vm1377, %v1375
    %1426 = vst.msk [vmem:[#allocation3 + $0xb8] sm:$0x1] %vm1389, %v1376
    %v1427 = vld [vmem:[#allocation14] sm:$0x1]
    %v1428 = vld [vmem:[#allocation2] sm:$0xff]
    %v1429 = vld [vmem:[#allocation2 + $0x8] sm:$0xff]
    %v1430 = vld [vmem:[#allocation2 + $0x10] sm:$0xff]
    %v1431 = vld [vmem:[#allocation2 + $0x18] sm:$0xff]
    %v1432 = vld [vmem:[#allocation2 + $0x20] sm:$0xff]
    %v1433 = vld [vmem:[#allocation2 + $0x28] sm:$0xff]
    %v1434 = vld [vmem:[#allocation2 + $0x30] sm:$0xff]
    %v1435 = vld [vmem:[#allocation2 + $0x38] sm:$0xff]
    %v1436 = vld [vmem:[#allocation2 + $0x40] sm:$0xff]
    %v1437 = vld [vmem:[#allocation2 + $0x48] sm:$0xff]
    %v1438 = vld [vmem:[#allocation2 + $0x50] sm:$0xff]
    %v1439 = vld [vmem:[#allocation12] sm:$0xff]
    %v1440 = vld [vmem:[#allocation12 + $0x8] sm:$0xff]
    %v1441 = vld [vmem:[#allocation12 + $0x10] sm:$0xff]
    %v1442 = vld [vmem:[#allocation12 + $0x18] sm:$0xff]
    %v1444 = vsel %vm1377, %v1428, 0
    %v1447 = vsel %vm1377, %v1429, 0
    %v1450 = vsel %vm1377, %v1430, 0
    %v1453 = vsel %vm1377, %v1431, 0
    %v1456 = vsel %vm1377, %v1432, 0
    %v1459 = vsel %vm1377, %v1433, 0
    %v1462 = vsel %vm1377, %v1434, 0
    %v1465 = vsel %vm1377, %v1435, 0
    %v1468 = vsel %vm1377, %v1436, 0
    %v1471 = vsel %vm1377, %v1437, 0
    %v1474 = vsel %vm1377, %v1438, 0
    %1476 = vmatprep.subr.mxu0 0.0
    %1477 = vmatpush1.msra.mxu0 %v1439
    %1478 = vmatprep.subr.mxu0 0.0
    %1479 = vmatpush1.msra.mxu0 %v1440
    %1480 = vmatprep.subr.mxu0 0.0
    %1481 = vmatpush1.msra.mxu0 %v1441
    %1482 = vmatprep.subr.mxu0 0.0
    %1483 = vmatpush1.msra.mxu0 %v1442
    %1484 = vmatprep.subr.mxu0 0.0
    %1485 = vmatpush1.msra.mxu0 0.0
    %1486 = vmatprep.subr.mxu0 0.0
    %1487 = vmatpush1.msra.mxu0 0.0
    %1488 = vmatprep.subr.mxu0 0.0
    %1489 = vmatpush1.msra.mxu0 0.0
    %1490 = vmatprep.subr.mxu0 0.0
    %1491 = vmatpush1.msra.mxu0 0.0
    %1492 = vmatprep.subr.mxu0 0.0
    %1493 = vmatpush1.msra.mxu0 0.0
    %1494 = vmatprep.subr.mxu0 0.0
    %1495 = vmatpush1.msra.mxu0 0.0
    %1496 = vmatprep.subr.mxu0 0.0
    %1497 = vmatpush1.msra.mxu0 0.0
    %1498 = vmatprep.subr.mxu0 0.0
    %1499 = vmatpush1.msra.mxu0 0.0
    %1500 = vmatprep.subr.mxu0 0.0
    %1501 = vmatpush1.msra.mxu0 0.0
    %1502 = vmatprep.subr.mxu0 0.0
    %1503 = vmatpush1.msra.mxu0 0.0
    %1504 = vmatprep.subr.mxu0 0.0
    %1505 = vmatpush1.msra.mxu0 0.0
    %1506 = vmatprep.subr.mxu0 0.0
    %1507 = vmatpush1.msra.mxu0 0.0
    %1508 = vmatprep.subr.mxu0 0.0
    %1509 = vmatpush1.msra.mxu0 0.0
    %1510 = vmatprep.subr.mxu0 0.0
    %1511 = vmatpush1.msra.mxu0 0.0
    %1512 = vmatprep.subr.mxu0 0.0
    %1513 = vmatpush1.msra.mxu0 0.0
    %1514 = vmatprep.subr.mxu0 0.0
    %1515 = vmatpush1.msra.mxu0 0.0
    %1516 = vmatprep.subr.mxu0 0.0
    %1517 = vmatpush1.msra.mxu0 0.0
    %1518 = vmatprep.subr.mxu0 0.0
    %1519 = vmatpush1.msra.mxu0 0.0
    %1520 = vmatprep.subr.mxu0 0.0
    %1521 = vmatpush1.msra.mxu0 0.0
    %1522 = vmatprep.subr.mxu0 0.0
    %1523 = vmatpush1.msra.mxu0 0.0
    %1524 = vmatprep.subr.mxu0 0.0
    %1525 = vmatpush1.msra.mxu0 0.0
    %1526 = vmatprep.subr.mxu0 0.0
    %1527 = vmatpush1.msra.mxu0 0.0
    %1528 = vmatprep.subr.mxu0 0.0
    %1529 = vmatpush1.msra.mxu0 0.0
    %1530 = vmatprep.subr.mxu0 0.0
    %1531 = vmatpush1.msra.mxu0 0.0
    %1532 = vmatprep.subr.mxu0 0.0
    %1533 = vmatpush1.msra.mxu0 0.0
    %1534 = vmatprep.subr.mxu0 0.0
    %1535 = vmatpush1.msra.mxu0 0.0
    %1536 = vmatprep.subr.mxu0 0.0
    %1537 = vmatpush1.msra.mxu0 0.0
    %1538 = vmatprep.subr.mxu0 0.0
    %1539 = vmatpush1.msra.mxu0 0.0
    %1540 = vmatprep.mubr.f32.mxu0 0.0
    %1541 = vmatmul.mubr.f32.gmra.mrb[0].mxu0 %v1444
    %v1542 = vpop.f32.mrb[0].mxu0
    %v1543 = vadd.f32 0.0, %v1542
    %v1544 = vpop.f32.mrb[0].mxu0
    %1545 = vmatprep.mubr.f32.mxu0 0.0
    %1546 = vmatmul.mubr.f32.gmra.mrb[0].mxu0 %v1447
    %v1547 = vpop.f32.mrb[0].mxu0
    %v1548 = vadd.f32 0.0, %v1547
    %v1549 = vpop.f32.mrb[0].mxu0
    %1550 = vmatprep.mubr.f32.mxu0 0.0
    %1551 = vmatmul.mubr.f32.gmra.mrb[0].mxu0 %v1450
    %v1552 = vpop.f32.mrb[0].mxu0
    %v1553 = vadd.f32 0.0, %v1552
    %v1554 = vpop.f32.mrb[0].mxu0
    %1555 = vmatprep.mubr.f32.mxu0 0.0
    %1556 = vmatmul.mubr.f32.gmra.mrb[0].mxu0 %v1453
    %v1557 = vpop.f32.mrb[0].mxu0
    %v1558 = vadd.f32 0.0, %v1557
    %v1559 = vpop.f32.mrb[0].mxu0
    %1560 = vmatprep.mubr.f32.mxu0 0.0
    %1561 = vmatmul.mubr.f32.gmra.mrb[0].mxu0 %v1456
    %v1562 = vpop.f32.mrb[0].mxu0
    %v1563 = vadd.f32 0.0, %v1562
    %v1564 = vpop.f32.mrb[0].mxu0
    %1565 = vmatprep.mubr.f32.mxu0 0.0
    %1566 = vmatmul.mubr.f32.gmra.mrb[0].mxu0 %v1459
    %v1567 = vpop.f32.mrb[0].mxu0
    %v1568 = vadd.f32 0.0, %v1567
    %v1569 = vpop.f32.mrb[0].mxu0
    %1570 = vmatprep.mubr.f32.mxu0 0.0
    %1571 = vmatmul.mubr.f32.gmra.mrb[0].mxu0 %v1462
    %v1572 = vpop.f32.mrb[0].mxu0
    %v1573 = vadd.f32 0.0, %v1572
    %v1574 = vpop.f32.mrb[0].mxu0
    %1575 = vmatprep.mubr.f32.mxu0 0.0
    %1576 = vmatmul.mubr.f32.gmra.mrb[0].mxu0 %v1465
    %v1577 = vpop.f32.mrb[0].mxu0
    %v1578 = vadd.f32 0.0, %v1577
    %v1579 = vpop.f32.mrb[0].mxu0
    %1580 = vmatprep.mubr.f32.mxu0 0.0
    %1581 = vmatmul.mubr.f32.gmra.mrb[0].mxu0 %v1468
    %v1582 = vpop.f32.mrb[0].mxu0
    %v1583 = vadd.f32 0.0, %v1582
    %v1584 = vpop.f32.mrb[0].mxu0
    %1585 = vmatprep.mubr.f32.mxu0 0.0
    %1586 = vmatmul.mubr.f32.gmra.mrb[0].mxu0 %v1471
    %v1587 = vpop.f32.mrb[0].mxu0
    %v1588 = vadd.f32 0.0, %v1587
    %v1589 = vpop.f32.mrb[0].mxu0
    %1590 = vmatprep.mubr.f32.mxu0 0.0
    %1591 = vmatmul.mubr.f32.gmra.mrb[0].mxu0 %v1474
    %v1592 = vpop.f32.mrb[0].mxu0
    %v1593 = vadd.f32 0.0, %v1592
    %v1594 = vpop.f32.mrb[0].mxu0
    %1595 = vdwg.mxu0
    %v1597 = vlaneseq
    %v1598 = vshrl.u32 %v1597, 7
    %v1599 = vsub.s32 0, %v1598
    %v1600 = vrot.slane %v1427, %v1599
    %v1602 = vadd.f32 %v1600, %v1543
    %v1603 = vadd.f32 %v1600, %v1548
    %v1604 = vadd.f32 %v1600, %v1553
    %v1605 = vadd.f32 %v1600, %v1558
    %v1606 = vadd.f32 %v1600, %v1563
    %v1607 = vadd.f32 %v1600, %v1568
    %v1608 = vadd.f32 %v1600, %v1573
    %v1609 = vadd.f32 %v1600, %v1578
    %v1610 = vadd.f32 %v1600, %v1583
    %v1611 = vadd.f32 %v1600, %v1588
    %v1612 = vadd.f32 %v1600, %v1593
    %v1613 = vld [vmem:[#allocation3] sm:$0xff]
    %v1614 = vld [vmem:[#allocation3 + $0x8] sm:$0xff]
    %v1615 = vld [vmem:[#allocation3 + $0x10] sm:$0xff]
    %v1616 = vld [vmem:[#allocation3 + $0x18] sm:$0xff]
    %v1617 = vld [vmem:[#allocation3 + $0x20] sm:$0xff]
    %v1618 = vld [vmem:[#allocation3 + $0x28] sm:$0xff]
    %v1619 = vld [vmem:[#allocation3 + $0x30] sm:$0xff]
    %v1620 = vld [vmem:[#allocation3 + $0x38] sm:$0xff]
    %v1621 = vld [vmem:[#allocation3 + $0x40] sm:$0xff]
    %v1622 = vld [vmem:[#allocation3 + $0x48] sm:$0xff]
    %v1623 = vld [vmem:[#allocation3 + $0x50] sm:$0xff]
    %s1624 = scalar_lea.vmem [#allocation12], 32
    %v1625 = vld [vmem:[%s1624] sm:$0xff]
    %v1626 = vld [vmem:[%s1624 + $0x8] sm:$0xff]
    %v1627 = vld [vmem:[%s1624 + $0x10] sm:$0xff]
    %v1628 = vld [vmem:[%s1624 + $0x18] sm:$0xff]
    %v1630 = vsel %vm1377, %v1613, 0
    %v1633 = vsel %vm1377, %v1614, 0
    %v1636 = vsel %vm1377, %v1615, 0
    %v1639 = vsel %vm1377, %v1616, 0
    %v1642 = vsel %vm1377, %v1617, 0
    %v1645 = vsel %vm1377, %v1618, 0
    %v1648 = vsel %vm1377, %v1619, 0
    %v1651 = vsel %vm1377, %v1620, 0
    %v1654 = vsel %vm1377, %v1621, 0
    %v1657 = vsel %vm1377, %v1622, 0
    %v1660 = vsel %vm1377, %v1623, 0
    %1662 = vmatprep.subr.mxu0 0.0
    %1663 = vmatpush1.msra.mxu0 %v1625
    %1664 = vmatprep.subr.mxu0 0.0
    %1665 = vmatpush1.msra.mxu0 %v1626
    %1666 = vmatprep.subr.mxu0 0.0
    %1667 = vmatpush1.msra.mxu0 %v1627
    %1668 = vmatprep.subr.mxu0 0.0
    %1669 = vmatpush1.msra.mxu0 %v1628
    %1670 = vmatprep.subr.mxu0 0.0
    %1671 = vmatpush1.msra.mxu0 0.0
    %1672 = vmatprep.subr.mxu0 0.0
    %1673 = vmatpush1.msra.mxu0 0.0
    %1674 = vmatprep.subr.mxu0 0.0
    %1675 = vmatpush1.msra.mxu0 0.0
    %1676 = vmatprep.subr.mxu0 0.0
    %1677 = vmatpush1.msra.mxu0 0.0
    %1678 = vmatprep.subr.mxu0 0.0
    %1679 = vmatpush1.msra.mxu0 0.0
    %1680 = vmatprep.subr.mxu0 0.0
    %1681 = vmatpush1.msra.mxu0 0.0
    %1682 = vmatprep.subr.mxu0 0.0
    %1683 = vmatpush1.msra.mxu0 0.0
    %1684 = vmatprep.subr.mxu0 0.0
    %1685 = vmatpush1.msra.mxu0 0.0
    %1686 = vmatprep.subr.mxu0 0.0
    %1687 = vmatpush1.msra.mxu0 0.0
    %1688 = vmatprep.subr.mxu0 0.0
    %1689 = vmatpush1.msra.mxu0 0.0
    %1690 = vmatprep.subr.mxu0 0.0
    %1691 = vmatpush1.msra.mxu0 0.0
    %1692 = vmatprep.subr.mxu0 0.0
    %1693 = vmatpush1.msra.mxu0 0.0
    %1694 = vmatprep.subr.mxu0 0.0
    %1695 = vmatpush1.msra.mxu0 0.0
    %1696 = vmatprep.subr.mxu0 0.0
    %1697 = vmatpush1.msra.mxu0 0.0
    %1698 = vmatprep.subr.mxu0 0.0
    %1699 = vmatpush1.msra.mxu0 0.0
    %1700 = vmatprep.subr.mxu0 0.0
    %1701 = vmatpush1.msra.mxu0 0.0
    %1702 = vmatprep.subr.mxu0 0.0
    %1703 = vmatpush1.msra.mxu0 0.0
    %1704 = vmatprep.subr.mxu0 0.0
    %1705 = vmatpush1.msra.mxu0 0.0
    %1706 = vmatprep.subr.mxu0 0.0
    %1707 = vmatpush1.msra.mxu0 0.0
    %1708 = vmatprep.subr.mxu0 0.0
    %1709 = vmatpush1.msra.mxu0 0.0
    %1710 = vmatprep.subr.mxu0 0.0
    %1711 = vmatpush1.msra.mxu0 0.0
    %1712 = vmatprep.subr.mxu0 0.0
    %1713 = vmatpush1.msra.mxu0 0.0
    %1714 = vmatprep.subr.mxu0 0.0
    %1715 = vmatpush1.msra.mxu0 0.0
    %1716 = vmatprep.subr.mxu0 0.0
    %1717 = vmatpush1.msra.mxu0 0.0
    %1718 = vmatprep.subr.mxu0 0.0
    %1719 = vmatpush1.msra.mxu0 0.0
    %1720 = vmatprep.subr.mxu0 0.0
    %1721 = vmatpush1.msra.mxu0 0.0
    %1722 = vmatprep.subr.mxu0 0.0
    %1723 = vmatpush1.msra.mxu0 0.0
    %1724 = vmatprep.subr.mxu0 0.0
    %1725 = vmatpush1.msra.mxu0 0.0
    %1726 = vmatprep.mubr.f32.mxu0 0.0
    %1727 = vmatmul.mubr.f32.gmra.mrb[0].mxu0 %v1630
    %v1728 = vpop.f32.mrb[0].mxu0
    %v1729 = vadd.f32 0.0, %v1728
    %v1730 = vpop.f32.mrb[0].mxu0
    %1731 = vmatprep.mubr.f32.mxu0 0.0
    %1732 = vmatmul.mubr.f32.gmra.mrb[0].mxu0 %v1633
    %v1733 = vpop.f32.mrb[0].mxu0
    %v1734 = vadd.f32 0.0, %v1733
    %v1735 = vpop.f32.mrb[0].mxu0
    %1736 = vmatprep.mubr.f32.mxu0 0.0
    %1737 = vmatmul.mubr.f32.gmra.mrb[0].mxu0 %v1636
    %v1738 = vpop.f32.mrb[0].mxu0
    %v1739 = vadd.f32 0.0, %v1738
    %v1740 = vpop.f32.mrb[0].mxu0
    %1741 = vmatprep.mubr.f32.mxu0 0.0
    %1742 = vmatmul.mubr.f32.gmra.mrb[0].mxu0 %v1639
    %v1743 = vpop.f32.mrb[0].mxu0
    %v1744 = vadd.f32 0.0, %v1743
    %v1745 = vpop.f32.mrb[0].mxu0
    %1746 = vmatprep.mubr.f32.mxu0 0.0
    %1747 = vmatmul.mubr.f32.gmra.mrb[0].mxu0 %v1642
    %v1748 = vpop.f32.mrb[0].mxu0
    %v1749 = vadd.f32 0.0, %v1748
    %v1750 = vpop.f32.mrb[0].mxu0
    %1751 = vmatprep.mubr.f32.mxu0 0.0
    %1752 = vmatmul.mubr.f32.gmra.mrb[0].mxu0 %v1645
    %v1753 = vpop.f32.mrb[0].mxu0
    %v1754 = vadd.f32 0.0, %v1753
    %v1755 = vpop.f32.mrb[0].mxu0
    %1756 = vmatprep.mubr.f32.mxu0 0.0
    %1757 = vmatmul.mubr.f32.gmra.mrb[0].mxu0 %v1648
    %v1758 = vpop.f32.mrb[0].mxu0
    %v1759 = vadd.f32 0.0, %v1758
    %v1760 = vpop.f32.mrb[0].mxu0
    %1761 = vmatprep.mubr.f32.mxu0 0.0
    %1762 = vmatmul.mubr.f32.gmra.mrb[0].mxu0 %v1651
    %v1763 = vpop.f32.mrb[0].mxu0
    %v1764 = vadd.f32 0.0, %v1763
    %v1765 = vpop.f32.mrb[0].mxu0
    %1766 = vmatprep.mubr.f32.mxu0 0.0
    %1767 = vmatmul.mubr.f32.gmra.mrb[0].mxu0 %v1654
    %v1768 = vpop.f32.mrb[0].mxu0
    %v1769 = vadd.f32 0.0, %v1768
    %v1770 = vpop.f32.mrb[0].mxu0
    %1771 = vmatprep.mubr.f32.mxu0 0.0
    %1772 = vmatmul.mubr.f32.gmra.mrb[0].mxu0 %v1657
    %v1773 = vpop.f32.mrb[0].mxu0
    %v1774 = vadd.f32 0.0, %v1773
    %v1775 = vpop.f32.mrb[0].mxu0
    %1776 = vmatprep.mubr.f32.mxu0 0.0
    %1777 = vmatmul.mubr.f32.gmra.mrb[0].mxu0 %v1660
    %v1778 = vpop.f32.mrb[0].mxu0
    %v1779 = vadd.f32 0.0, %v1778
    %v1780 = vpop.f32.mrb[0].mxu0
    %1781 = vdwg.mxu0
    %v1782 = vadd.f32 %v1602, %v1729
    %v1783 = vadd.f32 %v1603, %v1734
    %v1784 = vadd.f32 %v1604, %v1739
    %v1785 = vadd.f32 %v1605, %v1744
    %v1786 = vadd.f32 %v1606, %v1749
    %v1787 = vadd.f32 %v1607, %v1754
    %v1788 = vadd.f32 %v1608, %v1759
    %v1789 = vadd.f32 %v1609, %v1764
    %v1790 = vadd.f32 %v1610, %v1769
    %v1791 = vadd.f32 %v1611, %v1774
    %v1792 = vadd.f32 %v1612, %v1779
    %v1793 = vld [vmem:[#allocation2 + $0x1] sm:$0xff]
    %v1794 = vld [vmem:[#allocation2 + $0x9] sm:$0xff]
    %v1795 = vld [vmem:[#allocation2 + $0x11] sm:$0xff]
    %v1796 = vld [vmem:[#allocation2 + $0x19] sm:$0xff]
    %v1797 = vld [vmem:[#allocation2 + $0x21] sm:$0xff]
    %v1798 = vld [vmem:[#allocation2 + $0x29] sm:$0xff]
    %v1799 = vld [vmem:[#allocation2 + $0x31] sm:$0xff]
    %v1800 = vld [vmem:[#allocation2 + $0x39] sm:$0xff]
    %v1801 = vld [vmem:[#allocation2 + $0x41] sm:$0xff]
    %v1802 = vld [vmem:[#allocation2 + $0x49] sm:$0xff]
    %v1803 = vld [vmem:[#allocation2 + $0x51] sm:$0xff]
    %s1804 = scalar_lea.vmem [#allocation12], 64
    %v1805 = vld [vmem:[%s1804] sm:$0xff]
    %v1806 = vld [vmem:[%s1804 + $0x8] sm:$0xff]
    %v1807 = vld [vmem:[%s1804 + $0x10] sm:$0xff]
    %v1808 = vld [vmem:[%s1804 + $0x18] sm:$0xff]
    %v1810 = vsel %vm1377, %v1793, 0
    %v1813 = vsel %vm1377, %v1794, 0
    %v1816 = vsel %vm1377, %v1795, 0
    %v1819 = vsel %vm1377, %v1796, 0
    %v1822 = vsel %vm1377, %v1797, 0
    %v1825 = vsel %vm1377, %v1798, 0
    %v1828 = vsel %vm1377, %v1799, 0
    %v1831 = vsel %vm1377, %v1800, 0
    %v1834 = vsel %vm1377, %v1801, 0
    %v1837 = vsel %vm1377, %v1802, 0
    %v1840 = vsel %vm1377, %v1803, 0
    %1842 = vmatprep.subr.mxu0 0.0
    %1843 = vmatpush1.msra.mxu0 %v1805
    %1844 = vmatprep.subr.mxu0 0.0
    %1845 = vmatpush1.msra.mxu0 %v1806
    %1846 = vmatprep.subr.mxu0 0.0
    %1847 = vmatpush1.msra.mxu0 %v1807
    %1848 = vmatprep.subr.mxu0 0.0
    %1849 = vmatpush1.msra.mxu0 %v1808
    %1850 = vmatprep.subr.mxu0 0.0
    %1851 = vmatpush1.msra.mxu0 0.0
    %1852 = vmatprep.subr.mxu0 0.0
    %1853 = vmatpush1.msra.mxu0 0.0
    %1854 = vmatprep.subr.mxu0 0.0
    %1855 = vmatpush1.msra.mxu0 0.0
    %1856 = vmatprep.subr.mxu0 0.0
    %1857 = vmatpush1.msra.mxu0 0.0
    %1858 = vmatprep.subr.mxu0 0.0
    %1859 = vmatpush1.msra.mxu0 0.0
    %1860 = vmatprep.subr.mxu0 0.0
    %1861 = vmatpush1.msra.mxu0 0.0
    %1862 = vmatprep.subr.mxu0 0.0
    %1863 = vmatpush1.msra.mxu0 0.0
    %1864 = vmatprep.subr.mxu0 0.0
    %1865 = vmatpush1.msra.mxu0 0.0
    %1866 = vmatprep.subr.mxu0 0.0
    %1867 = vmatpush1.msra.mxu0 0.0
    %1868 = vmatprep.subr.mxu0 0.0
    %1869 = vmatpush1.msra.mxu0 0.0
    %1870 = vmatprep.subr.mxu0 0.0
    %1871 = vmatpush1.msra.mxu0 0.0
    %1872 = vmatprep.subr.mxu0 0.0
    %1873 = vmatpush1.msra.mxu0 0.0
    %1874 = vmatprep.subr.mxu0 0.0
    %1875 = vmatpush1.msra.mxu0 0.0
    %1876 = vmatprep.subr.mxu0 0.0
    %1877 = vmatpush1.msra.mxu0 0.0
    %1878 = vmatprep.subr.mxu0 0.0
    %1879 = vmatpush1.msra.mxu0 0.0
    %1880 = vmatprep.subr.mxu0 0.0
    %1881 = vmatpush1.msra.mxu0 0.0
    %1882 = vmatprep.subr.mxu0 0.0
    %1883 = vmatpush1.msra.mxu0 0.0
    %1884 = vmatprep.subr.mxu0 0.0
    %1885 = vmatpush1.msra.mxu0 0.0
    %1886 = vmatprep.subr.mxu0 0.0
    %1887 = vmatpush1.msra.mxu0 0.0
    %1888 = vmatprep.subr.mxu0 0.0
    %1889 = vmatpush1.msra.mxu0 0.0
    %1890 = vmatprep.subr.mxu0 0.0
    %1891 = vmatpush1.msra.mxu0 0.0
    %1892 = vmatprep.subr.mxu0 0.0
    %1893 = vmatpush1.msra.mxu0 0.0
    %1894 = vmatprep.subr.mxu0 0.0
    %1895 = vmatpush1.msra.mxu0 0.0
    %1896 = vmatprep.subr.mxu0 0.0
    %1897 = vmatpush1.msra.mxu0 0.0
    %1898 = vmatprep.subr.mxu0 0.0
    %1899 = vmatpush1.msra.mxu0 0.0
    %1900 = vmatprep.subr.mxu0 0.0
    %1901 = vmatpush1.msra.mxu0 0.0
    %1902 = vmatprep.subr.mxu0 0.0
    %1903 = vmatpush1.msra.mxu0 0.0
    %1904 = vmatprep.subr.mxu0 0.0
    %1905 = vmatpush1.msra.mxu0 0.0
    %1906 = vmatprep.mubr.f32.mxu0 0.0
    %1907 = vmatmul.mubr.f32.gmra.mrb[0].mxu0 %v1810
    %v1908 = vpop.f32.mrb[0].mxu0
    %v1909 = vadd.f32 0.0, %v1908
    %v1910 = vpop.f32.mrb[0].mxu0
    %1911 = vmatprep.mubr.f32.mxu0 0.0
    %1912 = vmatmul.mubr.f32.gmra.mrb[0].mxu0 %v1813
    %v1913 = vpop.f32.mrb[0].mxu0
    %v1914 = vadd.f32 0.0, %v1913
    %v1915 = vpop.f32.mrb[0].mxu0
    %1916 = vmatprep.mubr.f32.mxu0 0.0
    %1917 = vmatmul.mubr.f32.gmra.mrb[0].mxu0 %v1816
    %v1918 = vpop.f32.mrb[0].mxu0
    %v1919 = vadd.f32 0.0, %v1918
    %v1920 = vpop.f32.mrb[0].mxu0
    %1921 = vmatprep.mubr.f32.mxu0 0.0
    %1922 = vmatmul.mubr.f32.gmra.mrb[0].mxu0 %v1819
    %v1923 = vpop.f32.mrb[0].mxu0
    %v1924 = vadd.f32 0.0, %v1923
    %v1925 = vpop.f32.mrb[0].mxu0
    %1926 = vmatprep.mubr.f32.mxu0 0.0
    %1927 = vmatmul.mubr.f32.gmra.mrb[0].mxu0 %v1822
    %v1928 = vpop.f32.mrb[0].mxu0
    %v1929 = vadd.f32 0.0, %v1928
    %v1930 = vpop.f32.mrb[0].mxu0
    %1931 = vmatprep.mubr.f32.mxu0 0.0
    %1932 = vmatmul.mubr.f32.gmra.mrb[0].mxu0 %v1825
    %v1933 = vpop.f32.mrb[0].mxu0
    %v1934 = vadd.f32 0.0, %v1933
    %v1935 = vpop.f32.mrb[0].mxu0
    %1936 = vmatprep.mubr.f32.mxu0 0.0
    %1937 = vmatmul.mubr.f32.gmra.mrb[0].mxu0 %v1828
    %v1938 = vpop.f32.mrb[0].mxu0
    %v1939 = vadd.f32 0.0, %v1938
    %v1940 = vpop.f32.mrb[0].mxu0
    %1941 = vmatprep.mubr.f32.mxu0 0.0
    %1942 = vmatmul.mubr.f32.gmra.mrb[0].mxu0 %v1831
    %v1943 = vpop.f32.mrb[0].mxu0
    %v1944 = vadd.f32 0.0, %v1943
    %v1945 = vpop.f32.mrb[0].mxu0
    %1946 = vmatprep.mubr.f32.mxu0 0.0
    %1947 = vmatmul.mubr.f32.gmra.mrb[0].mxu0 %v1834
    %v1948 = vpop.f32.mrb[0].mxu0
    %v1949 = vadd.f32 0.0, %v1948
    %v1950 = vpop.f32.mrb[0].mxu0
    %1951 = vmatprep.mubr.f32.mxu0 0.0
    %1952 = vmatmul.mubr.f32.gmra.mrb[0].mxu0 %v1837
    %v1953 = vpop.f32.mrb[0].mxu0
    %v1954 = vadd.f32 0.0, %v1953
    %v1955 = vpop.f32.mrb[0].mxu0
    %1956 = vmatprep.mubr.f32.mxu0 0.0
    %1957 = vmatmul.mubr.f32.gmra.mrb[0].mxu0 %v1840
    %v1958 = vpop.f32.mrb[0].mxu0
    %v1959 = vadd.f32 0.0, %v1958
    %v1960 = vpop.f32.mrb[0].mxu0
    %1961 = vdwg.mxu0
    %v1962 = vadd.f32 %v1782, %v1909
    %v1963 = vadd.f32 %v1783, %v1914
    %v1964 = vadd.f32 %v1784, %v1919
    %v1965 = vadd.f32 %v1785, %v1924
    %v1966 = vadd.f32 %v1786, %v1929
    %v1967 = vadd.f32 %v1787, %v1934
    %v1968 = vadd.f32 %v1788, %v1939
    %v1969 = vadd.f32 %v1789, %v1944
    %v1970 = vadd.f32 %v1790, %v1949
    %v1971 = vadd.f32 %v1791, %v1954
    %v1972 = vadd.f32 %v1792, %v1959
    %1973 = vst.msk [vmem:[#allocation4] sm:$0xff] %vm1377, %v1962
    %1974 = vst.msk [vmem:[#allocation4 + $0x8] sm:$0xff] %vm1377, %v1963
    %1975 = vst.msk [vmem:[#allocation4 + $0x10] sm:$0xff] %vm1377, %v1964
    %1976 = vst.msk [vmem:[#allocation4 + $0x18] sm:$0xff] %vm1377, %v1965
    %1977 = vst.msk [vmem:[#allocation4 + $0x20] sm:$0xff] %vm1377, %v1966
    %1978 = vst.msk [vmem:[#allocation4 + $0x28] sm:$0xff] %vm1377, %v1967
    %1979 = vst.msk [vmem:[#allocation4 + $0x30] sm:$0xff] %vm1377, %v1968
    %1980 = vst.msk [vmem:[#allocation4 + $0x38] sm:$0xff] %vm1377, %v1969
    %1981 = vst.msk [vmem:[#allocation4 + $0x40] sm:$0xff] %vm1377, %v1970
    %1982 = vst.msk [vmem:[#allocation4 + $0x48] sm:$0xff] %vm1377, %v1971
    %1983 = vst.msk [vmem:[#allocation4 + $0x50] sm:$0xff] %vm1377, %v1972
    %v1984 = vld [vmem:[#allocation14] sm:$0x1]
    %s1985 = scalar_lea.vmem [#allocation2], 96
    %v1986 = vld [vmem:[%s1985] sm:$0xff]
    %v1987 = vld [vmem:[%s1985 + $0x8] sm:$0xff]
    %v1988 = vld [vmem:[%s1985 + $0x10] sm:$0xff]
    %v1989 = vld [vmem:[%s1985 + $0x18] sm:$0xff]
    %v1990 = vld [vmem:[%s1985 + $0x20] sm:$0xff]
    %v1991 = vld [vmem:[%s1985 + $0x28] sm:$0xff]
    %v1992 = vld [vmem:[%s1985 + $0x30] sm:$0xff]
    %v1993 = vld [vmem:[%s1985 + $0x38] sm:$0xff]
    %v1994 = vld [vmem:[%s1985 + $0x40] sm:$0xff]
    %v1995 = vld [vmem:[%s1985 + $0x48] sm:$0xff]
    %v1996 = vld [vmem:[%s1985 + $0x50] sm:$0xff]
    %v1997 = vld [vmem:[#allocation12] sm:$0xff]
    %v1998 = vld [vmem:[#allocation12 + $0x8] sm:$0xff]
    %v1999 = vld [vmem:[#allocation12 + $0x10] sm:$0xff]
    %v2000 = vld [vmem:[#allocation12 + $0x18] sm:$0xff]
    %v2002 = vsel %vm1377, %v1986, 0
    %v2005 = vsel %vm1377, %v1987, 0
    %v2008 = vsel %vm1377, %v1988, 0
    %v2011 = vsel %vm1377, %v1989, 0
    %v2014 = vsel %vm1377, %v1990, 0
    %v2017 = vsel %vm1377, %v1991, 0
    %v2020 = vsel %vm1377, %v1992, 0
    %v2023 = vsel %vm1377, %v1993, 0
    %v2026 = vsel %vm1377, %v1994, 0
    %v2029 = vsel %vm1377, %v1995, 0
    %v2032 = vsel %vm1377, %v1996, 0
    %2034 = vmatprep.subr.mxu0 0.0
    %2035 = vmatpush1.msra.mxu0 %v1997
    %2036 = vmatprep.subr.mxu0 0.0
    %2037 = vmatpush1.msra.mxu0 %v1998
    %2038 = vmatprep.subr.mxu0 0.0
    %2039 = vmatpush1.msra.mxu0 %v1999
    %2040 = vmatprep.subr.mxu0 0.0
    %2041 = vmatpush1.msra.mxu0 %v2000
    %2042 = vmatprep.subr.mxu0 0.0
    %2043 = vmatpush1.msra.mxu0 0.0
    %2044 = vmatprep.subr.mxu0 0.0
    %2045 = vmatpush1.msra.mxu0 0.0
    %2046 = vmatprep.subr.mxu0 0.0
    %2047 = vmatpush1.msra.mxu0 0.0
    %2048 = vmatprep.subr.mxu0 0.0
    %2049 = vmatpush1.msra.mxu0 0.0
    %2050 = vmatprep.subr.mxu0 0.0
    %2051 = vmatpush1.msra.mxu0 0.0
    %2052 = vmatprep.subr.mxu0 0.0
    %2053 = vmatpush1.msra.mxu0 0.0
    %2054 = vmatprep.subr.mxu0 0.0
    %2055 = vmatpush1.msra.mxu0 0.0
    %2056 = vmatprep.subr.mxu0 0.0
    %2057 = vmatpush1.msra.mxu0 0.0
    %2058 = vmatprep.subr.mxu0 0.0
    %2059 = vmatpush1.msra.mxu0 0.0
    %2060 = vmatprep.subr.mxu0 0.0
    %2061 = vmatpush1.msra.mxu0 0.0
    %2062 = vmatprep.subr.mxu0 0.0
    %2063 = vmatpush1.msra.mxu0 0.0
    %2064 = vmatprep.subr.mxu0 0.0
    %2065 = vmatpush1.msra.mxu0 0.0
    %2066 = vmatprep.subr.mxu0 0.0
    %2067 = vmatpush1.msra.mxu0 0.0
    %2068 = vmatprep.subr.mxu0 0.0
    %2069 = vmatpush1.msra.mxu0 0.0
    %2070 = vmatprep.subr.mxu0 0.0
    %2071 = vmatpush1.msra.mxu0 0.0
    %2072 = vmatprep.subr.mxu0 0.0
    %2073 = vmatpush1.msra.mxu0 0.0
    %2074 = vmatprep.subr.mxu0 0.0
    %2075 = vmatpush1.msra.mxu0 0.0
    %2076 = vmatprep.subr.mxu0 0.0
    %2077 = vmatpush1.msra.mxu0 0.0
    %2078 = vmatprep.subr.mxu0 0.0
    %2079 = vmatpush1.msra.mxu0 0.0
    %2080 = vmatprep.subr.mxu0 0.0
    %2081 = vmatpush1.msra.mxu0 0.0
    %2082 = vmatprep.subr.mxu0 0.0
    %2083 = vmatpush1.msra.mxu0 0.0
    %2084 = vmatprep.subr.mxu0 0.0
    %2085 = vmatpush1.msra.mxu0 0.0
    %2086 = vmatprep.subr.mxu0 0.0
    %2087 = vmatpush1.msra.mxu0 0.0
    %2088 = vmatprep.subr.mxu0 0.0
    %2089 = vmatpush1.msra.mxu0 0.0
    %2090 = vmatprep.subr.mxu0 0.0
    %2091 = vmatpush1.msra.mxu0 0.0
    %2092 = vmatprep.subr.mxu0 0.0
    %2093 = vmatpush1.msra.mxu0 0.0
    %2094 = vmatprep.subr.mxu0 0.0
    %2095 = vmatpush1.msra.mxu0 0.0
    %2096 = vmatprep.subr.mxu0 0.0
    %2097 = vmatpush1.msra.mxu0 0.0
    %2098 = vmatprep.mubr.f32.mxu0 0.0
    %2099 = vmatmul.mubr.f32.gmra.mrb[0].mxu0 %v2002
    %v2100 = vpop.f32.mrb[0].mxu0
    %v2101 = vadd.f32 0.0, %v2100
    %v2102 = vpop.f32.mrb[0].mxu0
    %2103 = vmatprep.mubr.f32.mxu0 0.0
    %2104 = vmatmul.mubr.f32.gmra.mrb[0].mxu0 %v2005
    %v2105 = vpop.f32.mrb[0].mxu0
    %v2106 = vadd.f32 0.0, %v2105
    %v2107 = vpop.f32.mrb[0].mxu0
    %2108 = vmatprep.mubr.f32.mxu0 0.0
    %2109 = vmatmul.mubr.f32.gmra.mrb[0].mxu0 %v2008
    %v2110 = vpop.f32.mrb[0].mxu0
    %v2111 = vadd.f32 0.0, %v2110
    %v2112 = vpop.f32.mrb[0].mxu0
    %2113 = vmatprep.mubr.f32.mxu0 0.0
    %2114 = vmatmul.mubr.f32.gmra.mrb[0].mxu0 %v2011
    %v2115 = vpop.f32.mrb[0].mxu0
    %v2116 = vadd.f32 0.0, %v2115
    %v2117 = vpop.f32.mrb[0].mxu0
    %2118 = vmatprep.mubr.f32.mxu0 0.0
    %2119 = vmatmul.mubr.f32.gmra.mrb[0].mxu0 %v2014
    %v2120 = vpop.f32.mrb[0].mxu0
    %v2121 = vadd.f32 0.0, %v2120
    %v2122 = vpop.f32.mrb[0].mxu0
    %2123 = vmatprep.mubr.f32.mxu0 0.0
    %2124 = vmatmul.mubr.f32.gmra.mrb[0].mxu0 %v2017
    %v2125 = vpop.f32.mrb[0].mxu0
    %v2126 = vadd.f32 0.0, %v2125
    %v2127 = vpop.f32.mrb[0].mxu0
    %2128 = vmatprep.mubr.f32.mxu0 0.0
    %2129 = vmatmul.mubr.f32.gmra.mrb[0].mxu0 %v2020
    %v2130 = vpop.f32.mrb[0].mxu0
    %v2131 = vadd.f32 0.0, %v2130
    %v2132 = vpop.f32.mrb[0].mxu0
    %2133 = vmatprep.mubr.f32.mxu0 0.0
    %2134 = vmatmul.mubr.f32.gmra.mrb[0].mxu0 %v2023
    %v2135 = vpop.f32.mrb[0].mxu0
    %v2136 = vadd.f32 0.0, %v2135
    %v2137 = vpop.f32.mrb[0].mxu0
    %2138 = vmatprep.mubr.f32.mxu0 0.0
    %2139 = vmatmul.mubr.f32.gmra.mrb[0].mxu0 %v2026
    %v2140 = vpop.f32.mrb[0].mxu0
    %v2141 = vadd.f32 0.0, %v2140
    %v2142 = vpop.f32.mrb[0].mxu0
    %2143 = vmatprep.mubr.f32.mxu0 0.0
    %2144 = vmatmul.mubr.f32.gmra.mrb[0].mxu0 %v2029
    %v2145 = vpop.f32.mrb[0].mxu0
    %v2146 = vadd.f32 0.0, %v2145
    %v2147 = vpop.f32.mrb[0].mxu0
    %2148 = vmatprep.mubr.f32.mxu0 0.0
    %2149 = vmatmul.mubr.f32.gmra.mrb[0].mxu0 %v2032
    %v2150 = vpop.f32.mrb[0].mxu0
    %v2151 = vadd.f32 0.0, %v2150
    %v2152 = vpop.f32.mrb[0].mxu0
    %2153 = vdwg.mxu0
    %v2155 = vlaneseq
    %v2156 = vshrl.u32 %v2155, 7
    %v2157 = vsub.s32 0, %v2156
    %v2158 = vrot.slane %v1984, %v2157
    %v2160 = vadd.f32 %v2158, %v2101
    %v2161 = vadd.f32 %v2158, %v2106
    %v2162 = vadd.f32 %v2158, %v2111
    %v2163 = vadd.f32 %v2158, %v2116
    %v2164 = vadd.f32 %v2158, %v2121
    %v2165 = vadd.f32 %v2158, %v2126
    %v2166 = vadd.f32 %v2158, %v2131
    %v2167 = vadd.f32 %v2158, %v2136
    %v2168 = vadd.f32 %v2158, %v2141
    %v2169 = vadd.f32 %v2158, %v2146
    %v2170 = vadd.f32 %v2158, %v2151
    %s2171 = scalar_lea.vmem [#allocation3], 96
    %v2172 = vld [vmem:[%s2171] sm:$0xff]
    %v2173 = vld [vmem:[%s2171 + $0x8] sm:$0xff]
    %v2174 = vld [vmem:[%s2171 + $0x10] sm:$0xff]
    %v2175 = vld [vmem:[%s2171 + $0x18] sm:$0xff]
    %v2176 = vld [vmem:[%s2171 + $0x20] sm:$0xff]
    %v2177 = vld [vmem:[%s2171 + $0x28] sm:$0xff]
    %v2178 = vld [vmem:[%s2171 + $0x30] sm:$0xff]
    %v2179 = vld [vmem:[%s2171 + $0x38] sm:$0xff]
    %v2180 = vld [vmem:[%s2171 + $0x40] sm:$0xff]
    %v2181 = vld [vmem:[%s2171 + $0x48] sm:$0xff]
    %v2182 = vld [vmem:[%s2171 + $0x50] sm:$0xff]
    %v2183 = vld [vmem:[%s1624] sm:$0xff]
    %v2184 = vld [vmem:[%s1624 + $0x8] sm:$0xff]
    %v2185 = vld [vmem:[%s1624 + $0x10] sm:$0xff]
    %v2186 = vld [vmem:[%s1624 + $0x18] sm:$0xff]
    %v2188 = vsel %vm1377, %v2172, 0
    %v2191 = vsel %vm1377, %v2173, 0
    %v2194 = vsel %vm1377, %v2174, 0
    %v2197 = vsel %vm1377, %v2175, 0
    %v2200 = vsel %vm1377, %v2176, 0
    %v2203 = vsel %vm1377, %v2177, 0
    %v2206 = vsel %vm1377, %v2178, 0
    %v2209 = vsel %vm1377, %v2179, 0
    %v2212 = vsel %vm1377, %v2180, 0
    %v2215 = vsel %vm1377, %v2181, 0
    %v2218 = vsel %vm1377, %v2182, 0
    %2220 = vmatprep.subr.mxu0 0.0
    %2221 = vmatpush1.msra.mxu0 %v2183
    %2222 = vmatprep.subr.mxu0 0.0
    %2223 = vmatpush1.msra.mxu0 %v2184
    %2224 = vmatprep.subr.mxu0 0.0
    %2225 = vmatpush1.msra.mxu0 %v2185
    %2226 = vmatprep.subr.mxu0 0.0
    %2227 = vmatpush1.msra.mxu0 %v2186
    %2228 = vmatprep.subr.mxu0 0.0
    %2229 = vmatpush1.msra.mxu0 0.0
    %2230 = vmatprep.subr.mxu0 0.0
    %2231 = vmatpush1.msra.mxu0 0.0
    %2232 = vmatprep.subr.mxu0 0.0
    %2233 = vmatpush1.msra.mxu0 0.0
    %2234 = vmatprep.subr.mxu0 0.0
    %2235 = vmatpush1.msra.mxu0 0.0
    %2236 = vmatprep.subr.mxu0 0.0
    %2237 = vmatpush1.msra.mxu0 0.0
    %2238 = vmatprep.subr.mxu0 0.0
    %2239 = vmatpush1.msra.mxu0 0.0
    %2240 = vmatprep.subr.mxu0 0.0
    %2241 = vmatpush1.msra.mxu0 0.0
    %2242 = vmatprep.subr.mxu0 0.0
    %2243 = vmatpush1.msra.mxu0 0.0
    %2244 = vmatprep.subr.mxu0 0.0
    %2245 = vmatpush1.msra.mxu0 0.0
    %2246 = vmatprep.subr.mxu0 0.0
    %2247 = vmatpush1.msra.mxu0 0.0
    %2248 = vmatprep.subr.mxu0 0.0
    %2249 = vmatpush1.msra.mxu0 0.0
    %2250 = vmatprep.subr.mxu0 0.0
    %2251 = vmatpush1.msra.mxu0 0.0
    %2252 = vmatprep.subr.mxu0 0.0
    %2253 = vmatpush1.msra.mxu0 0.0
    %2254 = vmatprep.subr.mxu0 0.0
    %2255 = vmatpush1.msra.mxu0 0.0
    %2256 = vmatprep.subr.mxu0 0.0
    %2257 = vmatpush1.msra.mxu0 0.0
    %2258 = vmatprep.subr.mxu0 0.0
    %2259 = vmatpush1.msra.mxu0 0.0
    %2260 = vmatprep.subr.mxu0 0.0
    %2261 = vmatpush1.msra.mxu0 0.0
    %2262 = vmatprep.subr.mxu0 0.0
    %2263 = vmatpush1.msra.mxu0 0.0
    %2264 = vmatprep.subr.mxu0 0.0
    %2265 = vmatpush1.msra.mxu0 0.0
    %2266 = vmatprep.subr.mxu0 0.0
    %2267 = vmatpush1.msra.mxu0 0.0
    %2268 = vmatprep.subr.mxu0 0.0
    %2269 = vmatpush1.msra.mxu0 0.0
    %2270 = vmatprep.subr.mxu0 0.0
    %2271 = vmatpush1.msra.mxu0 0.0
    %2272 = vmatprep.subr.mxu0 0.0
    %2273 = vmatpush1.msra.mxu0 0.0
    %2274 = vmatprep.subr.mxu0 0.0
    %2275 = vmatpush1.msra.mxu0 0.0
    %2276 = vmatprep.subr.mxu0 0.0
    %2277 = vmatpush1.msra.mxu0 0.0
    %2278 = vmatprep.subr.mxu0 0.0
    %2279 = vmatpush1.msra.mxu0 0.0
    %2280 = vmatprep.subr.mxu0 0.0
    %2281 = vmatpush1.msra.mxu0 0.0
    %2282 = vmatprep.subr.mxu0 0.0
    %2283 = vmatpush1.msra.mxu0 0.0
    %2284 = vmatprep.mubr.f32.mxu0 0.0
    %2285 = vmatmul.mubr.f32.gmra.mrb[0].mxu0 %v2188
    %v2286 = vpop.f32.mrb[0].mxu0
    %v2287 = vadd.f32 0.0, %v2286
    %v2288 = vpop.f32.mrb[0].mxu0
    %2289 = vmatprep.mubr.f32.mxu0 0.0
    %2290 = vmatmul.mubr.f32.gmra.mrb[0].mxu0 %v2191
    %v2291 = vpop.f32.mrb[0].mxu0
    %v2292 = vadd.f32 0.0, %v2291
    %v2293 = vpop.f32.mrb[0].mxu0
    %2294 = vmatprep.mubr.f32.mxu0 0.0
    %2295 = vmatmul.mubr.f32.gmra.mrb[0].mxu0 %v2194
    %v2296 = vpop.f32.mrb[0].mxu0
    %v2297 = vadd.f32 0.0, %v2296
    %v2298 = vpop.f32.mrb[0].mxu0
    %2299 = vmatprep.mubr.f32.mxu0 0.0
    %2300 = vmatmul.mubr.f32.gmra.mrb[0].mxu0 %v2197
    %v2301 = vpop.f32.mrb[0].mxu0
    %v2302 = vadd.f32 0.0, %v2301
    %v2303 = vpop.f32.mrb[0].mxu0
    %2304 = vmatprep.mubr.f32.mxu0 0.0
    %2305 = vmatmul.mubr.f32.gmra.mrb[0].mxu0 %v2200
    %v2306 = vpop.f32.mrb[0].mxu0
    %v2307 = vadd.f32 0.0, %v2306
    %v2308 = vpop.f32.mrb[0].mxu0
    %2309 = vmatprep.mubr.f32.mxu0 0.0
    %2310 = vmatmul.mubr.f32.gmra.mrb[0].mxu0 %v2203
    %v2311 = vpop.f32.mrb[0].mxu0
    %v2312 = vadd.f32 0.0, %v2311
    %v2313 = vpop.f32.mrb[0].mxu0
    %2314 = vmatprep.mubr.f32.mxu0 0.0
    %2315 = vmatmul.mubr.f32.gmra.mrb[0].mxu0 %v2206
    %v2316 = vpop.f32.mrb[0].mxu0
    %v2317 = vadd.f32 0.0, %v2316
    %v2318 = vpop.f32.mrb[0].mxu0
    %2319 = vmatprep.mubr.f32.mxu0 0.0
    %2320 = vmatmul.mubr.f32.gmra.mrb[0].mxu0 %v2209
    %v2321 = vpop.f32.mrb[0].mxu0
    %v2322 = vadd.f32 0.0, %v2321
    %v2323 = vpop.f32.mrb[0].mxu0
    %2324 = vmatprep.mubr.f32.mxu0 0.0
    %2325 = vmatmul.mubr.f32.gmra.mrb[0].mxu0 %v2212
    %v2326 = vpop.f32.mrb[0].mxu0
    %v2327 = vadd.f32 0.0, %v2326
    %v2328 = vpop.f32.mrb[0].mxu0
    %2329 = vmatprep.mubr.f32.mxu0 0.0
    %2330 = vmatmul.mubr.f32.gmra.mrb[0].mxu0 %v2215
    %v2331 = vpop.f32.mrb[0].mxu0
    %v2332 = vadd.f32 0.0, %v2331
    %v2333 = vpop.f32.mrb[0].mxu0
    %2334 = vmatprep.mubr.f32.mxu0 0.0
    %2335 = vmatmul.mubr.f32.gmra.mrb[0].mxu0 %v2218
    %v2336 = vpop.f32.mrb[0].mxu0
    %v2337 = vadd.f32 0.0, %v2336
    %v2338 = vpop.f32.mrb[0].mxu0
    %2339 = vdwg.mxu0
    %v2340 = vadd.f32 %v2160, %v2287
    %v2341 = vadd.f32 %v2161, %v2292
    %v2342 = vadd.f32 %v2162, %v2297
    %v2343 = vadd.f32 %v2163, %v2302
    %v2344 = vadd.f32 %v2164, %v2307
    %v2345 = vadd.f32 %v2165, %v2312
    %v2346 = vadd.f32 %v2166, %v2317
    %v2347 = vadd.f32 %v2167, %v2322
    %v2348 = vadd.f32 %v2168, %v2327
    %v2349 = vadd.f32 %v2169, %v2332
    %v2350 = vadd.f32 %v2170, %v2337
    %v2351 = vld [vmem:[%s1985 + $0x1] sm:$0xff]
    %v2352 = vld [vmem:[%s1985 + $0x9] sm:$0xff]
    %v2353 = vld [vmem:[%s1985 + $0x11] sm:$0xff]
    %v2354 = vld [vmem:[%s1985 + $0x19] sm:$0xff]
    %v2355 = vld [vmem:[%s1985 + $0x21] sm:$0xff]
    %v2356 = vld [vmem:[%s1985 + $0x29] sm:$0xff]
    %v2357 = vld [vmem:[%s1985 + $0x31] sm:$0xff]
    %v2358 = vld [vmem:[%s1985 + $0x39] sm:$0xff]
    %v2359 = vld [vmem:[%s1985 + $0x41] sm:$0xff]
    %v2360 = vld [vmem:[%s1985 + $0x49] sm:$0xff]
    %v2361 = vld [vmem:[%s1985 + $0x51] sm:$0xff]
    %v2362 = vld [vmem:[%s1804] sm:$0xff]
    %v2363 = vld [vmem:[%s1804 + $0x8] sm:$0xff]
    %v2364 = vld [vmem:[%s1804 + $0x10] sm:$0xff]
    %v2365 = vld [vmem:[%s1804 + $0x18] sm:$0xff]
    %v2367 = vsel %vm1377, %v2351, 0
    %v2370 = vsel %vm1377, %v2352, 0
    %v2373 = vsel %vm1377, %v2353, 0
    %v2376 = vsel %vm1377, %v2354, 0
    %v2379 = vsel %vm1377, %v2355, 0
    %v2382 = vsel %vm1377, %v2356, 0
    %v2385 = vsel %vm1377, %v2357, 0
    %v2388 = vsel %vm1377, %v2358, 0
    %v2391 = vsel %vm1377, %v2359, 0
    %v2394 = vsel %vm1377, %v2360, 0
    %v2397 = vsel %vm1377, %v2361, 0
    %2399 = vmatprep.subr.mxu0 0.0
    %2400 = vmatpush1.msra.mxu0 %v2362
    %2401 = vmatprep.subr.mxu0 0.0
    %2402 = vmatpush1.msra.mxu0 %v2363
    %2403 = vmatprep.subr.mxu0 0.0
    %2404 = vmatpush1.msra.mxu0 %v2364
    %2405 = vmatprep.subr.mxu0 0.0
    %2406 = vmatpush1.msra.mxu0 %v2365
    %2407 = vmatprep.subr.mxu0 0.0
    %2408 = vmatpush1.msra.mxu0 0.0
    %2409 = vmatprep.subr.mxu0 0.0
    %2410 = vmatpush1.msra.mxu0 0.0
    %2411 = vmatprep.subr.mxu0 0.0
    %2412 = vmatpush1.msra.mxu0 0.0
    %2413 = vmatprep.subr.mxu0 0.0
    %2414 = vmatpush1.msra.mxu0 0.0
    %2415 = vmatprep.subr.mxu0 0.0
    %2416 = vmatpush1.msra.mxu0 0.0
    %2417 = vmatprep.subr.mxu0 0.0
    %2418 = vmatpush1.msra.mxu0 0.0
    %2419 = vmatprep.subr.mxu0 0.0
    %2420 = vmatpush1.msra.mxu0 0.0
    %2421 = vmatprep.subr.mxu0 0.0
    %2422 = vmatpush1.msra.mxu0 0.0
    %2423 = vmatprep.subr.mxu0 0.0
    %2424 = vmatpush1.msra.mxu0 0.0
    %2425 = vmatprep.subr.mxu0 0.0
    %2426 = vmatpush1.msra.mxu0 0.0
    %2427 = vmatprep.subr.mxu0 0.0
    %2428 = vmatpush1.msra.mxu0 0.0
    %2429 = vmatprep.subr.mxu0 0.0
    %2430 = vmatpush1.msra.mxu0 0.0
    %2431 = vmatprep.subr.mxu0 0.0
    %2432 = vmatpush1.msra.mxu0 0.0
    %2433 = vmatprep.subr.mxu0 0.0
    %2434 = vmatpush1.msra.mxu0 0.0
    %2435 = vmatprep.subr.mxu0 0.0
    %2436 = vmatpush1.msra.mxu0 0.0
    %2437 = vmatprep.subr.mxu0 0.0
    %2438 = vmatpush1.msra.mxu0 0.0
    %2439 = vmatprep.subr.mxu0 0.0
    %2440 = vmatpush1.msra.mxu0 0.0
    %2441 = vmatprep.subr.mxu0 0.0
    %2442 = vmatpush1.msra.mxu0 0.0
    %2443 = vmatprep.subr.mxu0 0.0
    %2444 = vmatpush1.msra.mxu0 0.0
    %2445 = vmatprep.subr.mxu0 0.0
    %2446 = vmatpush1.msra.mxu0 0.0
    %2447 = vmatprep.subr.mxu0 0.0
    %2448 = vmatpush1.msra.mxu0 0.0
    %2449 = vmatprep.subr.mxu0 0.0
    %2450 = vmatpush1.msra.mxu0 0.0
    %2451 = vmatprep.subr.mxu0 0.0
    %2452 = vmatpush1.msra.mxu0 0.0
    %2453 = vmatprep.subr.mxu0 0.0
    %2454 = vmatpush1.msra.mxu0 0.0
    %2455 = vmatprep.subr.mxu0 0.0
    %2456 = vmatpush1.msra.mxu0 0.0
    %2457 = vmatprep.subr.mxu0 0.0
    %2458 = vmatpush1.msra.mxu0 0.0
    %2459 = vmatprep.subr.mxu0 0.0
    %2460 = vmatpush1.msra.mxu0 0.0
    %2461 = vmatprep.subr.mxu0 0.0
    %2462 = vmatpush1.msra.mxu0 0.0
    %2463 = vmatprep.mubr.f32.mxu0 0.0
    %2464 = vmatmul.mubr.f32.gmra.mrb[0].mxu0 %v2367
    %v2465 = vpop.f32.mrb[0].mxu0
    %v2466 = vadd.f32 0.0, %v2465
    %v2467 = vpop.f32.mrb[0].mxu0
    %2468 = vmatprep.mubr.f32.mxu0 0.0
    %2469 = vmatmul.mubr.f32.gmra.mrb[0].mxu0 %v2370
    %v2470 = vpop.f32.mrb[0].mxu0
    %v2471 = vadd.f32 0.0, %v2470
    %v2472 = vpop.f32.mrb[0].mxu0
    %2473 = vmatprep.mubr.f32.mxu0 0.0
    %2474 = vmatmul.mubr.f32.gmra.mrb[0].mxu0 %v2373
    %v2475 = vpop.f32.mrb[0].mxu0
    %v2476 = vadd.f32 0.0, %v2475
    %v2477 = vpop.f32.mrb[0].mxu0
    %2478 = vmatprep.mubr.f32.mxu0 0.0
    %2479 = vmatmul.mubr.f32.gmra.mrb[0].mxu0 %v2376
    %v2480 = vpop.f32.mrb[0].mxu0
    %v2481 = vadd.f32 0.0, %v2480
    %v2482 = vpop.f32.mrb[0].mxu0
    %2483 = vmatprep.mubr.f32.mxu0 0.0
    %2484 = vmatmul.mubr.f32.gmra.mrb[0].mxu0 %v2379
    %v2485 = vpop.f32.mrb[0].mxu0
    %v2486 = vadd.f32 0.0, %v2485
    %v2487 = vpop.f32.mrb[0].mxu0
    %2488 = vmatprep.mubr.f32.mxu0 0.0
    %2489 = vmatmul.mubr.f32.gmra.mrb[0].mxu0 %v2382
    %v2490 = vpop.f32.mrb[0].mxu0
    %v2491 = vadd.f32 0.0, %v2490
    %v2492 = vpop.f32.mrb[0].mxu0
    %2493 = vmatprep.mubr.f32.mxu0 0.0
    %2494 = vmatmul.mubr.f32.gmra.mrb[0].mxu0 %v2385
    %v2495 = vpop.f32.mrb[0].mxu0
    %v2496 = vadd.f32 0.0, %v2495
    %v2497 = vpop.f32.mrb[0].mxu0
    %2498 = vmatprep.mubr.f32.mxu0 0.0
    %2499 = vmatmul.mubr.f32.gmra.mrb[0].mxu0 %v2388
    %v2500 = vpop.f32.mrb[0].mxu0
    %v2501 = vadd.f32 0.0, %v2500
    %v2502 = vpop.f32.mrb[0].mxu0
    %2503 = vmatprep.mubr.f32.mxu0 0.0
    %2504 = vmatmul.mubr.f32.gmra.mrb[0].mxu0 %v2391
    %v2505 = vpop.f32.mrb[0].mxu0
    %v2506 = vadd.f32 0.0, %v2505
    %v2507 = vpop.f32.mrb[0].mxu0
    %2508 = vmatprep.mubr.f32.mxu0 0.0
    %2509 = vmatmul.mubr.f32.gmra.mrb[0].mxu0 %v2394
    %v2510 = vpop.f32.mrb[0].mxu0
    %v2511 = vadd.f32 0.0, %v2510
    %v2512 = vpop.f32.mrb[0].mxu0
    %2513 = vmatprep.mubr.f32.mxu0 0.0
    %2514 = vmatmul.mubr.f32.gmra.mrb[0].mxu0 %v2397
    %v2515 = vpop.f32.mrb[0].mxu0
    %v2516 = vadd.f32 0.0, %v2515
    %v2517 = vpop.f32.mrb[0].mxu0
    %2518 = vdwg.mxu0
    %v2519 = vadd.f32 %v2340, %v2466
    %v2520 = vadd.f32 %v2341, %v2471
    %v2521 = vadd.f32 %v2342, %v2476
    %v2522 = vadd.f32 %v2343, %v2481
    %v2523 = vadd.f32 %v2344, %v2486
    %v2524 = vadd.f32 %v2345, %v2491
    %v2525 = vadd.f32 %v2346, %v2496
    %v2526 = vadd.f32 %v2347, %v2501
    %v2527 = vadd.f32 %v2348, %v2506
    %v2528 = vadd.f32 %v2349, %v2511
    %v2529 = vadd.f32 %v2350, %v2516
    %s2530 = scalar_lea.vmem [#allocation4], 88
    %2531 = vst.msk [vmem:[%s2530] sm:$0xff] %vm1377, %v2519
    %2532 = vst.msk [vmem:[%s2530 + $0x8] sm:$0xff] %vm1377, %v2520
    %2533 = vst.msk [vmem:[%s2530 + $0x10] sm:$0xff] %vm1377, %v2521
    %2534 = vst.msk [vmem:[%s2530 + $0x18] sm:$0xff] %vm1377, %v2522
    %2535 = vst.msk [vmem:[%s2530 + $0x20] sm:$0xff] %vm1377, %v2523
    %2536 = vst.msk [vmem:[%s2530 + $0x28] sm:$0xff] %vm1377, %v2524
    %2537 = vst.msk [vmem:[%s2530 + $0x30] sm:$0xff] %vm1377, %v2525
    %2538 = vst.msk [vmem:[%s2530 + $0x38] sm:$0xff] %vm1377, %v2526
    %2539 = vst.msk [vmem:[%s2530 + $0x40] sm:$0xff] %vm1377, %v2527
    %2540 = vst.msk [vmem:[%s2530 + $0x48] sm:$0xff] %vm1377, %v2528
    %2541 = vst.msk [vmem:[%s2530 + $0x50] sm:$0xff] %vm1377, %v2529
    %v2542 = vld [vmem:[#allocation4] sm:$0x1]
    %v2543 = vld [vmem:[#allocation4 + $0x58] sm:$0x1]
    %v2547 = vunpack.c.l.s4 1983009808
    %v2548 = vunpack.c.0.s8 %v2547
    %v2549 = vlaneseq
    %v2550 = vshrl.u32 %v2549, 7
    %v2551 = vsub.s32 %v2548, %v2550
    %v2552 = vrot.slane %v2542, %v2551
    %v2554 = vunpack.c.l.s4 1983009808
    %v2555 = vunpack.c.0.s8 %v2554
    %v2556 = vlaneseq
    %v2557 = vshrl.u32 %v2556, 7
    %v2558 = vsub.s32 %v2555, %v2557
    %v2559 = vrot.slane %v2543, %v2558
    %vm2560 = vcmask 1044484
    %v2561 = vsel %vm2560, %v2552, %v2552
    %vm2562 = vcmask 1046534
    %v2563 = vsel %vm2562, %v2552, %v2561
    %v2564 = vrot.slane %v2559, 7
    %vm2565 = vcmask 1041409
    %v2566 = vsel %vm2565, %v2564, %v2563
    %vm2567 = vcmask 1043459
    %v2568 = vsel %vm2567, %v2564, %v2566
    %vm2569 = vcmask 1045509
    %v2570 = vsel %vm2569, %v2564, %v2568
    %vm2571 = vcmask 1047559
    %v2572 = vsel %vm2571, %v2564, %v2570
    %vm2574 = vcmask 254976
    %2575 = vst.msk [vmem:[#allocation5] sm:$0x3] %vm2574, %v2572
    %v2576 = vld [vmem:[#allocation4 + $0x1] sm:$0x1]
    %v2577 = vld [vmem:[#allocation4 + $0x59] sm:$0x1]
    %v2581 = vunpack.c.l.s4 1983009808
    %v2582 = vunpack.c.0.s8 %v2581
    %v2583 = vlaneseq
    %v2584 = vshrl.u32 %v2583, 7
    %v2585 = vsub.s32 %v2582, %v2584
    %v2586 = vrot.slane %v2576, %v2585
    %v2588 = vunpack.c.l.s4 1983009808
    %v2589 = vunpack.c.0.s8 %v2588
    %v2590 = vlaneseq
    %v2591 = vshrl.u32 %v2590, 7
    %v2592 = vsub.s32 %v2589, %v2591
    %v2593 = vrot.slane %v2577, %v2592
    %v2594 = vsel %vm2560, %v2586, %v2586
    %v2595 = vsel %vm2562, %v2586, %v2594
    %v2596 = vrot.slane %v2593, 7
    %v2597 = vsel %vm2565, %v2596, %v2595
    %v2598 = vsel %vm2567, %v2596, %v2597
    %v2599 = vsel %vm2569, %v2596, %v2598
    %v2600 = vsel %vm2571, %v2596, %v2599
    %2601 = vrot.lane.b32.xlu0 %v2600, 32
    %v2602 = vpop.permute.xlu0 %2601
    %vm2604 = vcmask 517376
    %2605 = vst.msk [vmem:[#allocation5] sm:$0x3] %vm2604, %v2602
    %v2606 = vld [vmem:[#allocation4 + $0x2] sm:$0x1]
    %v2607 = vld [vmem:[#allocation4 + $0x5a] sm:$0x1]
    %v2611 = vunpack.c.l.s4 1983009808
    %v2612 = vunpack.c.0.s8 %v2611
    %v2613 = vlaneseq
    %v2614 = vshrl.u32 %v2613, 7
    %v2615 = vsub.s32 %v2612, %v2614
    %v2616 = vrot.slane %v2606, %v2615
    %v2618 = vunpack.c.l.s4 1983009808
    %v2619 = vunpack.c.0.s8 %v2618
    %v2620 = vlaneseq
    %v2621 = vshrl.u32 %v2620, 7
    %v2622 = vsub.s32 %v2619, %v2621
    %v2623 = vrot.slane %v2607, %v2622
    %v2624 = vsel %vm2560, %v2616, %v2616
    %v2625 = vsel %vm2562, %v2616, %v2624
    %v2626 = vrot.slane %v2623, 7
    %v2627 = vsel %vm2565, %v2626, %v2625
    %v2628 = vsel %vm2567, %v2626, %v2627
    %v2629 = vsel %vm2569, %v2626, %v2628
    %v2630 = vsel %vm2571, %v2626, %v2629
    %2631 = vrot.lane.b32.xlu0 %v2630, 64
    %v2632 = vpop.permute.xlu0 %2631
    %vm2634 = vcmask 779776
    %2635 = vst.msk [vmem:[#allocation5] sm:$0x3] %vm2634, %v2632
    %v2636 = vld [vmem:[#allocation4 + $0x3] sm:$0x1]
    %v2637 = vld [vmem:[#allocation4 + $0x5b] sm:$0x1]
    %v2641 = vunpack.c.l.s4 1983009808
    %v2642 = vunpack.c.0.s8 %v2641
    %v2643 = vlaneseq
    %v2644 = vshrl.u32 %v2643, 7
    %v2645 = vsub.s32 %v2642, %v2644
    %v2646 = vrot.slane %v2636, %v2645
    %v2648 = vunpack.c.l.s4 1983009808
    %v2649 = vunpack.c.0.s8 %v2648
    %v2650 = vlaneseq
    %v2651 = vshrl.u32 %v2650, 7
    %v2652 = vsub.s32 %v2649, %v2651
    %v2653 = vrot.slane %v2637, %v2652
    %v2654 = vsel %vm2560, %v2646, %v2646
    %v2655 = vsel %vm2562, %v2646, %v2654
    %v2656 = vrot.slane %v2653, 7
    %v2657 = vsel %vm2565, %v2656, %v2655
    %v2658 = vsel %vm2567, %v2656, %v2657
    %v2659 = vsel %vm2569, %v2656, %v2658
    %v2660 = vsel %vm2571, %v2656, %v2659
    %2661 = vrot.lane.b32.xlu0 %v2660, 96
    %v2662 = vpop.permute.xlu0 %2661
    %vm2664 = vcmask 1042176
    %2665 = vst.msk [vmem:[#allocation5] sm:$0x3] %vm2664, %v2662
    %v2666 = vld [vmem:[#allocation4 + $0x4] sm:$0x1]
    %v2667 = vld [vmem:[#allocation4 + $0x5c] sm:$0x1]
    %v2671 = vunpack.c.l.s4 1983009808
    %v2672 = vunpack.c.0.s8 %v2671
    %v2673 = vlaneseq
    %v2674 = vshrl.u32 %v2673, 7
    %v2675 = vsub.s32 %v2672, %v2674
    %v2676 = vrot.slane %v2666, %v2675
    %v2678 = vunpack.c.l.s4 1983009808
    %v2679 = vunpack.c.0.s8 %v2678
    %v2680 = vlaneseq
    %v2681 = vshrl.u32 %v2680, 7
    %v2682 = vsub.s32 %v2679, %v2681
    %v2683 = vrot.slane %v2667, %v2682
    %v2684 = vsel %vm2560, %v2676, %v2676
    %v2685 = vsel %vm2562, %v2676, %v2684
    %v2686 = vrot.slane %v2683, 7
    %v2687 = vsel %vm2565, %v2686, %v2685
    %v2688 = vsel %vm2567, %v2686, %v2687
    %v2689 = vsel %vm2569, %v2686, %v2688
    %v2690 = vsel %vm2571, %v2686, %v2689
    %2692 = vst.msk [vmem:[#allocation5 + $0x2] sm:$0x3] %vm2574, %v2690
    %v2693 = vld [vmem:[#allocation4 + $0x5] sm:$0x1]
    %v2694 = vld [vmem:[#allocation4 + $0x5d] sm:$0x1]
    %v2698 = vunpack.c.l.s4 1983009808
    %v2699 = vunpack.c.0.s8 %v2698
    %v2700 = vlaneseq
    %v2701 = vshrl.u32 %v2700, 7
    %v2702 = vsub.s32 %v2699, %v2701
    %v2703 = vrot.slane %v2693, %v2702
    %v2705 = vunpack.c.l.s4 1983009808
    %v2706 = vunpack.c.0.s8 %v2705
    %v2707 = vlaneseq
    %v2708 = vshrl.u32 %v2707, 7
    %v2709 = vsub.s32 %v2706, %v2708
    %v2710 = vrot.slane %v2694, %v2709
    %v2711 = vsel %vm2560, %v2703, %v2703
    %v2712 = vsel %vm2562, %v2703, %v2711
    %v2713 = vrot.slane %v2710, 7
    %v2714 = vsel %vm2565, %v2713, %v2712
    %v2715 = vsel %vm2567, %v2713, %v2714
    %v2716 = vsel %vm2569, %v2713, %v2715
    %v2717 = vsel %vm2571, %v2713, %v2716
    %2718 = vrot.lane.b32.xlu0 %v2717, 32
    %v2719 = vpop.permute.xlu0 %2718
    %2721 = vst.msk [vmem:[#allocation5 + $0x2] sm:$0x3] %vm2604, %v2719
    %v2722 = vld [vmem:[#allocation4 + $0x6] sm:$0x1]
    %v2723 = vld [vmem:[#allocation4 + $0x5e] sm:$0x1]
    %v2727 = vunpack.c.l.s4 1983009808
    %v2728 = vunpack.c.0.s8 %v2727
    %v2729 = vlaneseq
    %v2730 = vshrl.u32 %v2729, 7
    %v2731 = vsub.s32 %v2728, %v2730
    %v2732 = vrot.slane %v2722, %v2731
    %v2734 = vunpack.c.l.s4 1983009808
    %v2735 = vunpack.c.0.s8 %v2734
    %v2736 = vlaneseq
    %v2737 = vshrl.u32 %v2736, 7
    %v2738 = vsub.s32 %v2735, %v2737
    %v2739 = vrot.slane %v2723, %v2738
    %v2740 = vsel %vm2560, %v2732, %v2732
    %v2741 = vsel %vm2562, %v2732, %v2740
    %v2742 = vrot.slane %v2739, 7
    %v2743 = vsel %vm2565, %v2742, %v2741
    %v2744 = vsel %vm2567, %v2742, %v2743
    %v2745 = vsel %vm2569, %v2742, %v2744
    %v2746 = vsel %vm2571, %v2742, %v2745
    %2747 = vrot.lane.b32.xlu0 %v2746, 64
    %v2748 = vpop.permute.xlu0 %2747
    %2750 = vst.msk [vmem:[#allocation5 + $0x2] sm:$0x3] %vm2634, %v2748
    %v2751 = vld [vmem:[#allocation4 + $0x7] sm:$0x1]
    %v2752 = vld [vmem:[#allocation4 + $0x5f] sm:$0x1]
    %v2756 = vunpack.c.l.s4 1983009808
    %v2757 = vunpack.c.0.s8 %v2756
    %v2758 = vlaneseq
    %v2759 = vshrl.u32 %v2758, 7
    %v2760 = vsub.s32 %v2757, %v2759
    %v2761 = vrot.slane %v2751, %v2760
    %v2763 = vunpack.c.l.s4 1983009808
    %v2764 = vunpack.c.0.s8 %v2763
    %v2765 = vlaneseq
    %v2766 = vshrl.u32 %v2765, 7
    %v2767 = vsub.s32 %v2764, %v2766
    %v2768 = vrot.slane %v2752, %v2767
    %v2769 = vsel %vm2560, %v2761, %v2761
    %v2770 = vsel %vm2562, %v2761, %v2769
    %v2771 = vrot.slane %v2768, 7
    %v2772 = vsel %vm2565, %v2771, %v2770
    %v2773 = vsel %vm2567, %v2771, %v2772
    %v2774 = vsel %vm2569, %v2771, %v2773
    %v2775 = vsel %vm2571, %v2771, %v2774
    %2776 = vrot.lane.b32.xlu0 %v2775, 96
    %v2777 = vpop.permute.xlu0 %2776
    %2779 = vst.msk [vmem:[#allocation5 + $0x2] sm:$0x3] %vm2664, %v2777
    %v2780 = vld [vmem:[#allocation4 + $0x8] sm:$0x1]
    %v2781 = vld [vmem:[#allocation4 + $0x60] sm:$0x1]
    %v2785 = vunpack.c.l.s4 1983009808
    %v2786 = vunpack.c.0.s8 %v2785
    %v2787 = vlaneseq
    %v2788 = vshrl.u32 %v2787, 7
    %v2789 = vsub.s32 %v2786, %v2788
    %v2790 = vrot.slane %v2780, %v2789
    %v2792 = vunpack.c.l.s4 1983009808
    %v2793 = vunpack.c.0.s8 %v2792
    %v2794 = vlaneseq
    %v2795 = vshrl.u32 %v2794, 7
    %v2796 = vsub.s32 %v2793, %v2795
    %v2797 = vrot.slane %v2781, %v2796
    %v2798 = vsel %vm2560, %v2790, %v2790
    %v2799 = vsel %vm2562, %v2790, %v2798
    %v2800 = vrot.slane %v2797, 7
    %v2801 = vsel %vm2565, %v2800, %v2799
    %v2802 = vsel %vm2567, %v2800, %v2801
    %v2803 = vsel %vm2569, %v2800, %v2802
    %v2804 = vsel %vm2571, %v2800, %v2803
    %2806 = vst.msk [vmem:[#allocation5 + $0x4] sm:$0x3] %vm2574, %v2804
    %v2807 = vld [vmem:[#allocation4 + $0x9] sm:$0x1]
    %v2808 = vld [vmem:[#allocation4 + $0x61] sm:$0x1]
    %v2812 = vunpack.c.l.s4 1983009808
    %v2813 = vunpack.c.0.s8 %v2812
    %v2814 = vlaneseq
    %v2815 = vshrl.u32 %v2814, 7
    %v2816 = vsub.s32 %v2813, %v2815
    %v2817 = vrot.slane %v2807, %v2816
    %v2819 = vunpack.c.l.s4 1983009808
    %v2820 = vunpack.c.0.s8 %v2819
    %v2821 = vlaneseq
    %v2822 = vshrl.u32 %v2821, 7
    %v2823 = vsub.s32 %v2820, %v2822
    %v2824 = vrot.slane %v2808, %v2823
    %v2825 = vsel %vm2560, %v2817, %v2817
    %v2826 = vsel %vm2562, %v2817, %v2825
    %v2827 = vrot.slane %v2824, 7
    %v2828 = vsel %vm2565, %v2827, %v2826
    %v2829 = vsel %vm2567, %v2827, %v2828
    %v2830 = vsel %vm2569, %v2827, %v2829
    %v2831 = vsel %vm2571, %v2827, %v2830
    %2832 = vrot.lane.b32.xlu0 %v2831, 32
    %v2833 = vpop.permute.xlu0 %2832
    %2835 = vst.msk [vmem:[#allocation5 + $0x4] sm:$0x3] %vm2604, %v2833
    %v2836 = vld [vmem:[#allocation4 + $0xa] sm:$0x1]
    %v2837 = vld [vmem:[#allocation4 + $0x62] sm:$0x1]
    %v2841 = vunpack.c.l.s4 1983009808
    %v2842 = vunpack.c.0.s8 %v2841
    %v2843 = vlaneseq
    %v2844 = vshrl.u32 %v2843, 7
    %v2845 = vsub.s32 %v2842, %v2844
    %v2846 = vrot.slane %v2836, %v2845
    %v2848 = vunpack.c.l.s4 1983009808
    %v2849 = vunpack.c.0.s8 %v2848
    %v2850 = vlaneseq
    %v2851 = vshrl.u32 %v2850, 7
    %v2852 = vsub.s32 %v2849, %v2851
    %v2853 = vrot.slane %v2837, %v2852
    %v2854 = vsel %vm2560, %v2846, %v2846
    %v2855 = vsel %vm2562, %v2846, %v2854
    %v2856 = vrot.slane %v2853, 7
    %v2857 = vsel %vm2565, %v2856, %v2855
    %v2858 = vsel %vm2567, %v2856, %v2857
    %v2859 = vsel %vm2569, %v2856, %v2858
    %v2860 = vsel %vm2571, %v2856, %v2859
    %2861 = vrot.lane.b32.xlu0 %v2860, 64
    %v2862 = vpop.permute.xlu0 %2861
    %2864 = vst.msk [vmem:[#allocation5 + $0x4] sm:$0x3] %vm2634, %v2862
    %v2865 = vld [vmem:[#allocation4 + $0xb] sm:$0x1]
    %v2866 = vld [vmem:[#allocation4 + $0x63] sm:$0x1]
    %v2870 = vunpack.c.l.s4 1983009808
    %v2871 = vunpack.c.0.s8 %v2870
    %v2872 = vlaneseq
    %v2873 = vshrl.u32 %v2872, 7
    %v2874 = vsub.s32 %v2871, %v2873
    %v2875 = vrot.slane %v2865, %v2874
    %v2877 = vunpack.c.l.s4 1983009808
    %v2878 = vunpack.c.0.s8 %v2877
    %v2879 = vlaneseq
    %v2880 = vshrl.u32 %v2879, 7
    %v2881 = vsub.s32 %v2878, %v2880
    %v2882 = vrot.slane %v2866, %v2881
    %v2883 = vsel %vm2560, %v2875, %v2875
    %v2884 = vsel %vm2562, %v2875, %v2883
    %v2885 = vrot.slane %v2882, 7
    %v2886 = vsel %vm2565, %v2885, %v2884
    %v2887 = vsel %vm2567, %v2885, %v2886
    %v2888 = vsel %vm2569, %v2885, %v2887
    %v2889 = vsel %vm2571, %v2885, %v2888
    %2890 = vrot.lane.b32.xlu0 %v2889, 96
    %v2891 = vpop.permute.xlu0 %2890
    %2893 = vst.msk [vmem:[#allocation5 + $0x4] sm:$0x3] %vm2664, %v2891
    %v2894 = vld [vmem:[#allocation4 + $0xc] sm:$0x1]
    %v2895 = vld [vmem:[#allocation4 + $0x64] sm:$0x1]
    %v2899 = vunpack.c.l.s4 1983009808
    %v2900 = vunpack.c.0.s8 %v2899
    %v2901 = vlaneseq
    %v2902 = vshrl.u32 %v2901, 7
    %v2903 = vsub.s32 %v2900, %v2902
    %v2904 = vrot.slane %v2894, %v2903
    %v2906 = vunpack.c.l.s4 1983009808
    %v2907 = vunpack.c.0.s8 %v2906
    %v2908 = vlaneseq
    %v2909 = vshrl.u32 %v2908, 7
    %v2910 = vsub.s32 %v2907, %v2909
    %v2911 = vrot.slane %v2895, %v2910
    %v2912 = vsel %vm2560, %v2904, %v2904
    %v2913 = vsel %vm2562, %v2904, %v2912
    %v2914 = vrot.slane %v2911, 7
    %v2915 = vsel %vm2565, %v2914, %v2913
    %v2916 = vsel %vm2567, %v2914, %v2915
    %v2917 = vsel %vm2569, %v2914, %v2916
    %v2918 = vsel %vm2571, %v2914, %v2917
    %2920 = vst.msk [vmem:[#allocation5 + $0x6] sm:$0x3] %vm2574, %v2918
    %v2921 = vld [vmem:[#allocation4 + $0xd] sm:$0x1]
    %v2922 = vld [vmem:[#allocation4 + $0x65] sm:$0x1]
    %v2926 = vunpack.c.l.s4 1983009808
    %v2927 = vunpack.c.0.s8 %v2926
    %v2928 = vlaneseq
    %v2929 = vshrl.u32 %v2928, 7
    %v2930 = vsub.s32 %v2927, %v2929
    %v2931 = vrot.slane %v2921, %v2930
    %v2933 = vunpack.c.l.s4 1983009808
    %v2934 = vunpack.c.0.s8 %v2933
    %v2935 = vlaneseq
    %v2936 = vshrl.u32 %v2935, 7
    %v2937 = vsub.s32 %v2934, %v2936
    %v2938 = vrot.slane %v2922, %v2937
    %v2939 = vsel %vm2560, %v2931, %v2931
    %v2940 = vsel %vm2562, %v2931, %v2939
    %v2941 = vrot.slane %v2938, 7
    %v2942 = vsel %vm2565, %v2941, %v2940
    %v2943 = vsel %vm2567, %v2941, %v2942
    %v2944 = vsel %vm2569, %v2941, %v2943
    %v2945 = vsel %vm2571, %v2941, %v2944
    %2946 = vrot.lane.b32.xlu0 %v2945, 32
    %v2947 = vpop.permute.xlu0 %2946
    %2949 = vst.msk [vmem:[#allocation5 + $0x6] sm:$0x3] %vm2604, %v2947
    %v2950 = vld [vmem:[#allocation4 + $0xe] sm:$0x1]
    %v2951 = vld [vmem:[#allocation4 + $0x66] sm:$0x1]
    %v2955 = vunpack.c.l.s4 1983009808
    %v2956 = vunpack.c.0.s8 %v2955
    %v2957 = vlaneseq
    %v2958 = vshrl.u32 %v2957, 7
    %v2959 = vsub.s32 %v2956, %v2958
    %v2960 = vrot.slane %v2950, %v2959
    %v2962 = vunpack.c.l.s4 1983009808
    %v2963 = vunpack.c.0.s8 %v2962
    %v2964 = vlaneseq
    %v2965 = vshrl.u32 %v2964, 7
    %v2966 = vsub.s32 %v2963, %v2965
    %v2967 = vrot.slane %v2951, %v2966
    %v2968 = vsel %vm2560, %v2960, %v2960
    %v2969 = vsel %vm2562, %v2960, %v2968
    %v2970 = vrot.slane %v2967, 7
    %v2971 = vsel %vm2565, %v2970, %v2969
    %v2972 = vsel %vm2567, %v2970, %v2971
    %v2973 = vsel %vm2569, %v2970, %v2972
    %v2974 = vsel %vm2571, %v2970, %v2973
    %2975 = vrot.lane.b32.xlu0 %v2974, 64
    %v2976 = vpop.permute.xlu0 %2975
    %2978 = vst.msk [vmem:[#allocation5 + $0x6] sm:$0x3] %vm2634, %v2976
    %v2979 = vld [vmem:[#allocation4 + $0xf] sm:$0x1]
    %v2980 = vld [vmem:[#allocation4 + $0x67] sm:$0x1]
    %v2984 = vunpack.c.l.s4 1983009808
    %v2985 = vunpack.c.0.s8 %v2984
    %v2986 = vlaneseq
    %v2987 = vshrl.u32 %v2986, 7
    %v2988 = vsub.s32 %v2985, %v2987
    %v2989 = vrot.slane %v2979, %v2988
    %v2991 = vunpack.c.l.s4 1983009808
    %v2992 = vunpack.c.0.s8 %v2991
    %v2993 = vlaneseq
    %v2994 = vshrl.u32 %v2993, 7
    %v2995 = vsub.s32 %v2992, %v2994
    %v2996 = vrot.slane %v2980, %v2995
    %v2997 = vsel %vm2560, %v2989, %v2989
    %v2998 = vsel %vm2562, %v2989, %v2997
    %v2999 = vrot.slane %v2996, 7
    %v3000 = vsel %vm2565, %v2999, %v2998
    %v3001 = vsel %vm2567, %v2999, %v3000
    %v3002 = vsel %vm2569, %v2999, %v3001
    %v3003 = vsel %vm2571, %v2999, %v3002
    %3004 = vrot.lane.b32.xlu0 %v3003, 96
    %v3005 = vpop.permute.xlu0 %3004
    %3007 = vst.msk [vmem:[#allocation5 + $0x6] sm:$0x3] %vm2664, %v3005
    %v3008 = vld [vmem:[#allocation4 + $0x10] sm:$0x1]
    %v3009 = vld [vmem:[#allocation4 + $0x68] sm:$0x1]
    %v3013 = vunpack.c.l.s4 1983009808
    %v3014 = vunpack.c.0.s8 %v3013
    %v3015 = vlaneseq
    %v3016 = vshrl.u32 %v3015, 7
    %v3017 = vsub.s32 %v3014, %v3016
    %v3018 = vrot.slane %v3008, %v3017
    %v3020 = vunpack.c.l.s4 1983009808
    %v3021 = vunpack.c.0.s8 %v3020
    %v3022 = vlaneseq
    %v3023 = vshrl.u32 %v3022, 7
    %v3024 = vsub.s32 %v3021, %v3023
    %v3025 = vrot.slane %v3009, %v3024
    %v3026 = vsel %vm2560, %v3018, %v3018
    %v3027 = vsel %vm2562, %v3018, %v3026
    %v3028 = vrot.slane %v3025, 7
    %v3029 = vsel %vm2565, %v3028, %v3027
    %v3030 = vsel %vm2567, %v3028, %v3029
    %v3031 = vsel %vm2569, %v3028, %v3030
    %v3032 = vsel %vm2571, %v3028, %v3031
    %3034 = vst.msk [vmem:[#allocation5 + $0x8] sm:$0x3] %vm2574, %v3032
    %v3035 = vld [vmem:[#allocation4 + $0x11] sm:$0x1]
    %v3036 = vld [vmem:[#allocation4 + $0x69] sm:$0x1]
    %v3040 = vunpack.c.l.s4 1983009808
    %v3041 = vunpack.c.0.s8 %v3040
    %v3042 = vlaneseq
    %v3043 = vshrl.u32 %v3042, 7
    %v3044 = vsub.s32 %v3041, %v3043
    %v3045 = vrot.slane %v3035, %v3044
    %v3047 = vunpack.c.l.s4 1983009808
    %v3048 = vunpack.c.0.s8 %v3047
    %v3049 = vlaneseq
    %v3050 = vshrl.u32 %v3049, 7
    %v3051 = vsub.s32 %v3048, %v3050
    %v3052 = vrot.slane %v3036, %v3051
    %v3053 = vsel %vm2560, %v3045, %v3045
    %v3054 = vsel %vm2562, %v3045, %v3053
    %v3055 = vrot.slane %v3052, 7
    %v3056 = vsel %vm2565, %v3055, %v3054
    %v3057 = vsel %vm2567, %v3055, %v3056
    %v3058 = vsel %vm2569, %v3055, %v3057
    %v3059 = vsel %vm2571, %v3055, %v3058
    %3060 = vrot.lane.b32.xlu0 %v3059, 32
    %v3061 = vpop.permute.xlu0 %3060
    %3063 = vst.msk [vmem:[#allocation5 + $0x8] sm:$0x3] %vm2604, %v3061
    %v3064 = vld [vmem:[#allocation4 + $0x12] sm:$0x1]
    %v3065 = vld [vmem:[#allocation4 + $0x6a] sm:$0x1]
    %v3069 = vunpack.c.l.s4 1983009808
    %v3070 = vunpack.c.0.s8 %v3069
    %v3071 = vlaneseq
    %v3072 = vshrl.u32 %v3071, 7
    %v3073 = vsub.s32 %v3070, %v3072
    %v3074 = vrot.slane %v3064, %v3073
    %v3076 = vunpack.c.l.s4 1983009808
    %v3077 = vunpack.c.0.s8 %v3076
    %v3078 = vlaneseq
    %v3079 = vshrl.u32 %v3078, 7
    %v3080 = vsub.s32 %v3077, %v3079
    %v3081 = vrot.slane %v3065, %v3080
    %v3082 = vsel %vm2560, %v3074, %v3074
    %v3083 = vsel %vm2562, %v3074, %v3082
    %v3084 = vrot.slane %v3081, 7
    %v3085 = vsel %vm2565, %v3084, %v3083
    %v3086 = vsel %vm2567, %v3084, %v3085
    %v3087 = vsel %vm2569, %v3084, %v3086
    %v3088 = vsel %vm2571, %v3084, %v3087
    %3089 = vrot.lane.b32.xlu0 %v3088, 64
    %v3090 = vpop.permute.xlu0 %3089
    %3092 = vst.msk [vmem:[#allocation5 + $0x8] sm:$0x3] %vm2634, %v3090
    %v3093 = vld [vmem:[#allocation4 + $0x13] sm:$0x1]
    %v3094 = vld [vmem:[#allocation4 + $0x6b] sm:$0x1]
    %v3098 = vunpack.c.l.s4 1983009808
    %v3099 = vunpack.c.0.s8 %v3098
    %v3100 = vlaneseq
    %v3101 = vshrl.u32 %v3100, 7
    %v3102 = vsub.s32 %v3099, %v3101
    %v3103 = vrot.slane %v3093, %v3102
    %v3105 = vunpack.c.l.s4 1983009808
    %v3106 = vunpack.c.0.s8 %v3105
    %v3107 = vlaneseq
    %v3108 = vshrl.u32 %v3107, 7
    %v3109 = vsub.s32 %v3106, %v3108
    %v3110 = vrot.slane %v3094, %v3109
    %v3111 = vsel %vm2560, %v3103, %v3103
    %v3112 = vsel %vm2562, %v3103, %v3111
    %v3113 = vrot.slane %v3110, 7
    %v3114 = vsel %vm2565, %v3113, %v3112
    %v3115 = vsel %vm2567, %v3113, %v3114
    %v3116 = vsel %vm2569, %v3113, %v3115
    %v3117 = vsel %vm2571, %v3113, %v3116
    %3118 = vrot.lane.b32.xlu0 %v3117, 96
    %v3119 = vpop.permute.xlu0 %3118
    %3121 = vst.msk [vmem:[#allocation5 + $0x8] sm:$0x3] %vm2664, %v3119
    %v3122 = vld [vmem:[#allocation4 + $0x14] sm:$0x1]
    %v3123 = vld [vmem:[#allocation4 + $0x6c] sm:$0x1]
    %v3127 = vunpack.c.l.s4 1983009808
    %v3128 = vunpack.c.0.s8 %v3127
    %v3129 = vlaneseq
    %v3130 = vshrl.u32 %v3129, 7
    %v3131 = vsub.s32 %v3128, %v3130
    %v3132 = vrot.slane %v3122, %v3131
    %v3134 = vunpack.c.l.s4 1983009808
    %v3135 = vunpack.c.0.s8 %v3134
    %v3136 = vlaneseq
    %v3137 = vshrl.u32 %v3136, 7
    %v3138 = vsub.s32 %v3135, %v3137
    %v3139 = vrot.slane %v3123, %v3138
    %v3140 = vsel %vm2560, %v3132, %v3132
    %v3141 = vsel %vm2562, %v3132, %v3140
    %v3142 = vrot.slane %v3139, 7
    %v3143 = vsel %vm2565, %v3142, %v3141
    %v3144 = vsel %vm2567, %v3142, %v3143
    %v3145 = vsel %vm2569, %v3142, %v3144
    %v3146 = vsel %vm2571, %v3142, %v3145
    %3148 = vst.msk [vmem:[#allocation5 + $0xa] sm:$0x3] %vm2574, %v3146
    %v3149 = vld [vmem:[#allocation4 + $0x15] sm:$0x1]
    %v3150 = vld [vmem:[#allocation4 + $0x6d] sm:$0x1]
    %v3154 = vunpack.c.l.s4 1983009808
    %v3155 = vunpack.c.0.s8 %v3154
    %v3156 = vlaneseq
    %v3157 = vshrl.u32 %v3156, 7
    %v3158 = vsub.s32 %v3155, %v3157
    %v3159 = vrot.slane %v3149, %v3158
    %v3161 = vunpack.c.l.s4 1983009808
    %v3162 = vunpack.c.0.s8 %v3161
    %v3163 = vlaneseq
    %v3164 = vshrl.u32 %v3163, 7
    %v3165 = vsub.s32 %v3162, %v3164
    %v3166 = vrot.slane %v3150, %v3165
    %v3167 = vsel %vm2560, %v3159, %v3159
    %v3168 = vsel %vm2562, %v3159, %v3167
    %v3169 = vrot.slane %v3166, 7
    %v3170 = vsel %vm2565, %v3169, %v3168
    %v3171 = vsel %vm2567, %v3169, %v3170
    %v3172 = vsel %vm2569, %v3169, %v3171
    %v3173 = vsel %vm2571, %v3169, %v3172
    %3174 = vrot.lane.b32.xlu0 %v3173, 32
    %v3175 = vpop.permute.xlu0 %3174
    %3177 = vst.msk [vmem:[#allocation5 + $0xa] sm:$0x3] %vm2604, %v3175
    %v3178 = vld [vmem:[#allocation4 + $0x16] sm:$0x1]
    %v3179 = vld [vmem:[#allocation4 + $0x6e] sm:$0x1]
    %v3183 = vunpack.c.l.s4 1983009808
    %v3184 = vunpack.c.0.s8 %v3183
    %v3185 = vlaneseq
    %v3186 = vshrl.u32 %v3185, 7
    %v3187 = vsub.s32 %v3184, %v3186
    %v3188 = vrot.slane %v3178, %v3187
    %v3190 = vunpack.c.l.s4 1983009808
    %v3191 = vunpack.c.0.s8 %v3190
    %v3192 = vlaneseq
    %v3193 = vshrl.u32 %v3192, 7
    %v3194 = vsub.s32 %v3191, %v3193
    %v3195 = vrot.slane %v3179, %v3194
    %v3196 = vsel %vm2560, %v3188, %v3188
    %v3197 = vsel %vm2562, %v3188, %v3196
    %v3198 = vrot.slane %v3195, 7
    %v3199 = vsel %vm2565, %v3198, %v3197
    %v3200 = vsel %vm2567, %v3198, %v3199
    %v3201 = vsel %vm2569, %v3198, %v3200
    %v3202 = vsel %vm2571, %v3198, %v3201
    %3203 = vrot.lane.b32.xlu0 %v3202, 64
    %v3204 = vpop.permute.xlu0 %3203
    %3206 = vst.msk [vmem:[#allocation5 + $0xa] sm:$0x3] %vm2634, %v3204
    %v3207 = vld [vmem:[#allocation4 + $0x17] sm:$0x1]
    %v3208 = vld [vmem:[#allocation4 + $0x6f] sm:$0x1]
    %v3212 = vunpack.c.l.s4 1983009808
    %v3213 = vunpack.c.0.s8 %v3212
    %v3214 = vlaneseq
    %v3215 = vshrl.u32 %v3214, 7
    %v3216 = vsub.s32 %v3213, %v3215
    %v3217 = vrot.slane %v3207, %v3216
    %v3219 = vunpack.c.l.s4 1983009808
    %v3220 = vunpack.c.0.s8 %v3219
    %v3221 = vlaneseq
    %v3222 = vshrl.u32 %v3221, 7
    %v3223 = vsub.s32 %v3220, %v3222
    %v3224 = vrot.slane %v3208, %v3223
    %v3225 = vsel %vm2560, %v3217, %v3217
    %v3226 = vsel %vm2562, %v3217, %v3225
    %v3227 = vrot.slane %v3224, 7
    %v3228 = vsel %vm2565, %v3227, %v3226
    %v3229 = vsel %vm2567, %v3227, %v3228
    %v3230 = vsel %vm2569, %v3227, %v3229
    %v3231 = vsel %vm2571, %v3227, %v3230
    %3232 = vrot.lane.b32.xlu0 %v3231, 96
    %v3233 = vpop.permute.xlu0 %3232
    %3235 = vst.msk [vmem:[#allocation5 + $0xa] sm:$0x3] %vm2664, %v3233
    %v3236 = vld [vmem:[#allocation4 + $0x18] sm:$0x1]
    %v3237 = vld [vmem:[#allocation4 + $0x70] sm:$0x1]
    %v3241 = vunpack.c.l.s4 1983009808
    %v3242 = vunpack.c.0.s8 %v3241
    %v3243 = vlaneseq
    %v3244 = vshrl.u32 %v3243, 7
    %v3245 = vsub.s32 %v3242, %v3244
    %v3246 = vrot.slane %v3236, %v3245
    %v3248 = vunpack.c.l.s4 1983009808
    %v3249 = vunpack.c.0.s8 %v3248
    %v3250 = vlaneseq
    %v3251 = vshrl.u32 %v3250, 7
    %v3252 = vsub.s32 %v3249, %v3251
    %v3253 = vrot.slane %v3237, %v3252
    %v3254 = vsel %vm2560, %v3246, %v3246
    %v3255 = vsel %vm2562, %v3246, %v3254
    %v3256 = vrot.slane %v3253, 7
    %v3257 = vsel %vm2565, %v3256, %v3255
    %v3258 = vsel %vm2567, %v3256, %v3257
    %v3259 = vsel %vm2569, %v3256, %v3258
    %v3260 = vsel %vm2571, %v3256, %v3259
    %3262 = vst.msk [vmem:[#allocation5 + $0xc] sm:$0x3] %vm2574, %v3260
    %v3263 = vld [vmem:[#allocation4 + $0x19] sm:$0x1]
    %v3264 = vld [vmem:[#allocation4 + $0x71] sm:$0x1]
    %v3268 = vunpack.c.l.s4 1983009808
    %v3269 = vunpack.c.0.s8 %v3268
    %v3270 = vlaneseq
    %v3271 = vshrl.u32 %v3270, 7
    %v3272 = vsub.s32 %v3269, %v3271
    %v3273 = vrot.slane %v3263, %v3272
    %v3275 = vunpack.c.l.s4 1983009808
    %v3276 = vunpack.c.0.s8 %v3275
    %v3277 = vlaneseq
    %v3278 = vshrl.u32 %v3277, 7
    %v3279 = vsub.s32 %v3276, %v3278
    %v3280 = vrot.slane %v3264, %v3279
    %v3281 = vsel %vm2560, %v3273, %v3273
    %v3282 = vsel %vm2562, %v3273, %v3281
    %v3283 = vrot.slane %v3280, 7
    %v3284 = vsel %vm2565, %v3283, %v3282
    %v3285 = vsel %vm2567, %v3283, %v3284
    %v3286 = vsel %vm2569, %v3283, %v3285
    %v3287 = vsel %vm2571, %v3283, %v3286
    %3288 = vrot.lane.b32.xlu0 %v3287, 32
    %v3289 = vpop.permute.xlu0 %3288
    %3291 = vst.msk [vmem:[#allocation5 + $0xc] sm:$0x3] %vm2604, %v3289
    %v3292 = vld [vmem:[#allocation4 + $0x1a] sm:$0x1]
    %v3293 = vld [vmem:[#allocation4 + $0x72] sm:$0x1]
    %v3297 = vunpack.c.l.s4 1983009808
    %v3298 = vunpack.c.0.s8 %v3297
    %v3299 = vlaneseq
    %v3300 = vshrl.u32 %v3299, 7
    %v3301 = vsub.s32 %v3298, %v3300
    %v3302 = vrot.slane %v3292, %v3301
    %v3304 = vunpack.c.l.s4 1983009808
    %v3305 = vunpack.c.0.s8 %v3304
    %v3306 = vlaneseq
    %v3307 = vshrl.u32 %v3306, 7
    %v3308 = vsub.s32 %v3305, %v3307
    %v3309 = vrot.slane %v3293, %v3308
    %v3310 = vsel %vm2560, %v3302, %v3302
    %v3311 = vsel %vm2562, %v3302, %v3310
    %v3312 = vrot.slane %v3309, 7
    %v3313 = vsel %vm2565, %v3312, %v3311
    %v3314 = vsel %vm2567, %v3312, %v3313
    %v3315 = vsel %vm2569, %v3312, %v3314
    %v3316 = vsel %vm2571, %v3312, %v3315
    %3317 = vrot.lane.b32.xlu0 %v3316, 64
    %v3318 = vpop.permute.xlu0 %3317
    %3320 = vst.msk [vmem:[#allocation5 + $0xc] sm:$0x3] %vm2634, %v3318
    %v3321 = vld [vmem:[#allocation4 + $0x1b] sm:$0x1]
    %v3322 = vld [vmem:[#allocation4 + $0x73] sm:$0x1]
    %v3326 = vunpack.c.l.s4 1983009808
    %v3327 = vunpack.c.0.s8 %v3326
    %v3328 = vlaneseq
    %v3329 = vshrl.u32 %v3328, 7
    %v3330 = vsub.s32 %v3327, %v3329
    %v3331 = vrot.slane %v3321, %v3330
    %v3333 = vunpack.c.l.s4 1983009808
    %v3334 = vunpack.c.0.s8 %v3333
    %v3335 = vlaneseq
    %v3336 = vshrl.u32 %v3335, 7
    %v3337 = vsub.s32 %v3334, %v3336
    %v3338 = vrot.slane %v3322, %v3337
    %v3339 = vsel %vm2560, %v3331, %v3331
    %v3340 = vsel %vm2562, %v3331, %v3339
    %v3341 = vrot.slane %v3338, 7
    %v3342 = vsel %vm2565, %v3341, %v3340
    %v3343 = vsel %vm2567, %v3341, %v3342
    %v3344 = vsel %vm2569, %v3341, %v3343
    %v3345 = vsel %vm2571, %v3341, %v3344
    %3346 = vrot.lane.b32.xlu0 %v3345, 96
    %v3347 = vpop.permute.xlu0 %3346
    %3349 = vst.msk [vmem:[#allocation5 + $0xc] sm:$0x3] %vm2664, %v3347
    %v3350 = vld [vmem:[#allocation4 + $0x1c] sm:$0x1]
    %v3351 = vld [vmem:[#allocation4 + $0x74] sm:$0x1]
    %v3355 = vunpack.c.l.s4 1983009808
    %v3356 = vunpack.c.0.s8 %v3355
    %v3357 = vlaneseq
    %v3358 = vshrl.u32 %v3357, 7
    %v3359 = vsub.s32 %v3356, %v3358
    %v3360 = vrot.slane %v3350, %v3359
    %v3362 = vunpack.c.l.s4 1983009808
    %v3363 = vunpack.c.0.s8 %v3362
    %v3364 = vlaneseq
    %v3365 = vshrl.u32 %v3364, 7
    %v3366 = vsub.s32 %v3363, %v3365
    %v3367 = vrot.slane %v3351, %v3366
    %v3368 = vsel %vm2560, %v3360, %v3360
    %v3369 = vsel %vm2562, %v3360, %v3368
    %v3370 = vrot.slane %v3367, 7
    %v3371 = vsel %vm2565, %v3370, %v3369
    %v3372 = vsel %vm2567, %v3370, %v3371
    %v3373 = vsel %vm2569, %v3370, %v3372
    %v3374 = vsel %vm2571, %v3370, %v3373
    %3376 = vst.msk [vmem:[#allocation5 + $0xe] sm:$0x3] %vm2574, %v3374
    %v3377 = vld [vmem:[#allocation4 + $0x1d] sm:$0x1]
    %v3378 = vld [vmem:[#allocation4 + $0x75] sm:$0x1]
    %v3382 = vunpack.c.l.s4 1983009808
    %v3383 = vunpack.c.0.s8 %v3382
    %v3384 = vlaneseq
    %v3385 = vshrl.u32 %v3384, 7
    %v3386 = vsub.s32 %v3383, %v3385
    %v3387 = vrot.slane %v3377, %v3386
    %v3389 = vunpack.c.l.s4 1983009808
    %v3390 = vunpack.c.0.s8 %v3389
    %v3391 = vlaneseq
    %v3392 = vshrl.u32 %v3391, 7
    %v3393 = vsub.s32 %v3390, %v3392
    %v3394 = vrot.slane %v3378, %v3393
    %v3395 = vsel %vm2560, %v3387, %v3387
    %v3396 = vsel %vm2562, %v3387, %v3395
    %v3397 = vrot.slane %v3394, 7
    %v3398 = vsel %vm2565, %v3397, %v3396
    %v3399 = vsel %vm2567, %v3397, %v3398
    %v3400 = vsel %vm2569, %v3397, %v3399
    %v3401 = vsel %vm2571, %v3397, %v3400
    %3402 = vrot.lane.b32.xlu0 %v3401, 32
    %v3403 = vpop.permute.xlu0 %3402
    %3405 = vst.msk [vmem:[#allocation5 + $0xe] sm:$0x3] %vm2604, %v3403
    %v3406 = vld [vmem:[#allocation4 + $0x1e] sm:$0x1]
    %v3407 = vld [vmem:[#allocation4 + $0x76] sm:$0x1]
    %v3411 = vunpack.c.l.s4 1983009808
    %v3412 = vunpack.c.0.s8 %v3411
    %v3413 = vlaneseq
    %v3414 = vshrl.u32 %v3413, 7
    %v3415 = vsub.s32 %v3412, %v3414
    %v3416 = vrot.slane %v3406, %v3415
    %v3418 = vunpack.c.l.s4 1983009808
    %v3419 = vunpack.c.0.s8 %v3418
    %v3420 = vlaneseq
    %v3421 = vshrl.u32 %v3420, 7
    %v3422 = vsub.s32 %v3419, %v3421
    %v3423 = vrot.slane %v3407, %v3422
    %v3424 = vsel %vm2560, %v3416, %v3416
    %v3425 = vsel %vm2562, %v3416, %v3424
    %v3426 = vrot.slane %v3423, 7
    %v3427 = vsel %vm2565, %v3426, %v3425
    %v3428 = vsel %vm2567, %v3426, %v3427
    %v3429 = vsel %vm2569, %v3426, %v3428
    %v3430 = vsel %vm2571, %v3426, %v3429
    %3431 = vrot.lane.b32.xlu0 %v3430, 64
    %v3432 = vpop.permute.xlu0 %3431
    %3434 = vst.msk [vmem:[#allocation5 + $0xe] sm:$0x3] %vm2634, %v3432
    %v3435 = vld [vmem:[#allocation4 + $0x1f] sm:$0x1]
    %v3436 = vld [vmem:[#allocation4 + $0x77] sm:$0x1]
    %v3440 = vunpack.c.l.s4 1983009808
    %v3441 = vunpack.c.0.s8 %v3440
    %v3442 = vlaneseq
    %v3443 = vshrl.u32 %v3442, 7
    %v3444 = vsub.s32 %v3441, %v3443
    %v3445 = vrot.slane %v3435, %v3444
    %v3447 = vunpack.c.l.s4 1983009808
    %v3448 = vunpack.c.0.s8 %v3447
    %v3449 = vlaneseq
    %v3450 = vshrl.u32 %v3449, 7
    %v3451 = vsub.s32 %v3448, %v3450
    %v3452 = vrot.slane %v3436, %v3451
    %v3453 = vsel %vm2560, %v3445, %v3445
    %v3454 = vsel %vm2562, %v3445, %v3453
    %v3455 = vrot.slane %v3452, 7
    %v3456 = vsel %vm2565, %v3455, %v3454
    %v3457 = vsel %vm2567, %v3455, %v3456
    %v3458 = vsel %vm2569, %v3455, %v3457
    %v3459 = vsel %vm2571, %v3455, %v3458
    %3460 = vrot.lane.b32.xlu0 %v3459, 96
    %v3461 = vpop.permute.xlu0 %3460
    %3463 = vst.msk [vmem:[#allocation5 + $0xe] sm:$0x3] %vm2664, %v3461
    %v3464 = vld [vmem:[#allocation4 + $0x20] sm:$0x1]
    %v3465 = vld [vmem:[#allocation4 + $0x78] sm:$0x1]
    %v3469 = vunpack.c.l.s4 1983009808
    %v3470 = vunpack.c.0.s8 %v3469
    %v3471 = vlaneseq
    %v3472 = vshrl.u32 %v3471, 7
    %v3473 = vsub.s32 %v3470, %v3472
    %v3474 = vrot.slane %v3464, %v3473
    %v3476 = vunpack.c.l.s4 1983009808
    %v3477 = vunpack.c.0.s8 %v3476
    %v3478 = vlaneseq
    %v3479 = vshrl.u32 %v3478, 7
    %v3480 = vsub.s32 %v3477, %v3479
    %v3481 = vrot.slane %v3465, %v3480
    %v3482 = vsel %vm2560, %v3474, %v3474
    %v3483 = vsel %vm2562, %v3474, %v3482
    %v3484 = vrot.slane %v3481, 7
    %v3485 = vsel %vm2565, %v3484, %v3483
    %v3486 = vsel %vm2567, %v3484, %v3485
    %v3487 = vsel %vm2569, %v3484, %v3486
    %v3488 = vsel %vm2571, %v3484, %v3487
    %3490 = vst.msk [vmem:[#allocation5 + $0x10] sm:$0x3] %vm2574, %v3488
    %v3491 = vld [vmem:[#allocation4 + $0x21] sm:$0x1]
    %v3492 = vld [vmem:[#allocation4 + $0x79] sm:$0x1]
    %v3496 = vunpack.c.l.s4 1983009808
    %v3497 = vunpack.c.0.s8 %v3496
    %v3498 = vlaneseq
    %v3499 = vshrl.u32 %v3498, 7
    %v3500 = vsub.s32 %v3497, %v3499
    %v3501 = vrot.slane %v3491, %v3500
    %v3503 = vunpack.c.l.s4 1983009808
    %v3504 = vunpack.c.0.s8 %v3503
    %v3505 = vlaneseq
    %v3506 = vshrl.u32 %v3505, 7
    %v3507 = vsub.s32 %v3504, %v3506
    %v3508 = vrot.slane %v3492, %v3507
    %v3509 = vsel %vm2560, %v3501, %v3501
    %v3510 = vsel %vm2562, %v3501, %v3509
    %v3511 = vrot.slane %v3508, 7
    %v3512 = vsel %vm2565, %v3511, %v3510
    %v3513 = vsel %vm2567, %v3511, %v3512
    %v3514 = vsel %vm2569, %v3511, %v3513
    %v3515 = vsel %vm2571, %v3511, %v3514
    %3516 = vrot.lane.b32.xlu0 %v3515, 32
    %v3517 = vpop.permute.xlu0 %3516
    %3519 = vst.msk [vmem:[#allocation5 + $0x10] sm:$0x3] %vm2604, %v3517
    %v3520 = vld [vmem:[#allocation4 + $0x22] sm:$0x1]
    %v3521 = vld [vmem:[#allocation4 + $0x7a] sm:$0x1]
    %v3525 = vunpack.c.l.s4 1983009808
    %v3526 = vunpack.c.0.s8 %v3525
    %v3527 = vlaneseq
    %v3528 = vshrl.u32 %v3527, 7
    %v3529 = vsub.s32 %v3526, %v3528
    %v3530 = vrot.slane %v3520, %v3529
    %v3532 = vunpack.c.l.s4 1983009808
    %v3533 = vunpack.c.0.s8 %v3532
    %v3534 = vlaneseq
    %v3535 = vshrl.u32 %v3534, 7
    %v3536 = vsub.s32 %v3533, %v3535
    %v3537 = vrot.slane %v3521, %v3536
    %v3538 = vsel %vm2560, %v3530, %v3530
    %v3539 = vsel %vm2562, %v3530, %v3538
    %v3540 = vrot.slane %v3537, 7
    %v3541 = vsel %vm2565, %v3540, %v3539
    %v3542 = vsel %vm2567, %v3540, %v3541
    %v3543 = vsel %vm2569, %v3540, %v3542
    %v3544 = vsel %vm2571, %v3540, %v3543
    %3545 = vrot.lane.b32.xlu0 %v3544, 64
    %v3546 = vpop.permute.xlu0 %3545
    %3548 = vst.msk [vmem:[#allocation5 + $0x10] sm:$0x3] %vm2634, %v3546
    %v3549 = vld [vmem:[#allocation4 + $0x23] sm:$0x1]
    %v3550 = vld [vmem:[#allocation4 + $0x7b] sm:$0x1]
    %v3554 = vunpack.c.l.s4 1983009808
    %v3555 = vunpack.c.0.s8 %v3554
    %v3556 = vlaneseq
    %v3557 = vshrl.u32 %v3556, 7
    %v3558 = vsub.s32 %v3555, %v3557
    %v3559 = vrot.slane %v3549, %v3558
    %v3561 = vunpack.c.l.s4 1983009808
    %v3562 = vunpack.c.0.s8 %v3561
    %v3563 = vlaneseq
    %v3564 = vshrl.u32 %v3563, 7
    %v3565 = vsub.s32 %v3562, %v3564
    %v3566 = vrot.slane %v3550, %v3565
    %v3567 = vsel %vm2560, %v3559, %v3559
    %v3568 = vsel %vm2562, %v3559, %v3567
    %v3569 = vrot.slane %v3566, 7
    %v3570 = vsel %vm2565, %v3569, %v3568
    %v3571 = vsel %vm2567, %v3569, %v3570
    %v3572 = vsel %vm2569, %v3569, %v3571
    %v3573 = vsel %vm2571, %v3569, %v3572
    %3574 = vrot.lane.b32.xlu0 %v3573, 96
    %v3575 = vpop.permute.xlu0 %3574
    %3577 = vst.msk [vmem:[#allocation5 + $0x10] sm:$0x3] %vm2664, %v3575
    %v3578 = vld [vmem:[#allocation4 + $0x24] sm:$0x1]
    %v3579 = vld [vmem:[#allocation4 + $0x7c] sm:$0x1]
    %v3583 = vunpack.c.l.s4 1983009808
    %v3584 = vunpack.c.0.s8 %v3583
    %v3585 = vlaneseq
    %v3586 = vshrl.u32 %v3585, 7
    %v3587 = vsub.s32 %v3584, %v3586
    %v3588 = vrot.slane %v3578, %v3587
    %v3590 = vunpack.c.l.s4 1983009808
    %v3591 = vunpack.c.0.s8 %v3590
    %v3592 = vlaneseq
    %v3593 = vshrl.u32 %v3592, 7
    %v3594 = vsub.s32 %v3591, %v3593
    %v3595 = vrot.slane %v3579, %v3594
    %v3596 = vsel %vm2560, %v3588, %v3588
    %v3597 = vsel %vm2562, %v3588, %v3596
    %v3598 = vrot.slane %v3595, 7
    %v3599 = vsel %vm2565, %v3598, %v3597
    %v3600 = vsel %vm2567, %v3598, %v3599
    %v3601 = vsel %vm2569, %v3598, %v3600
    %v3602 = vsel %vm2571, %v3598, %v3601
    %3604 = vst.msk [vmem:[#allocation5 + $0x12] sm:$0x3] %vm2574, %v3602
    %v3605 = vld [vmem:[#allocation4 + $0x25] sm:$0x1]
    %v3606 = vld [vmem:[#allocation4 + $0x7d] sm:$0x1]
    %v3610 = vunpack.c.l.s4 1983009808
    %v3611 = vunpack.c.0.s8 %v3610
    %v3612 = vlaneseq
    %v3613 = vshrl.u32 %v3612, 7
    %v3614 = vsub.s32 %v3611, %v3613
    %v3615 = vrot.slane %v3605, %v3614
    %v3617 = vunpack.c.l.s4 1983009808
    %v3618 = vunpack.c.0.s8 %v3617
    %v3619 = vlaneseq
    %v3620 = vshrl.u32 %v3619, 7
    %v3621 = vsub.s32 %v3618, %v3620
    %v3622 = vrot.slane %v3606, %v3621
    %v3623 = vsel %vm2560, %v3615, %v3615
    %v3624 = vsel %vm2562, %v3615, %v3623
    %v3625 = vrot.slane %v3622, 7
    %v3626 = vsel %vm2565, %v3625, %v3624
    %v3627 = vsel %vm2567, %v3625, %v3626
    %v3628 = vsel %vm2569, %v3625, %v3627
    %v3629 = vsel %vm2571, %v3625, %v3628
    %3630 = vrot.lane.b32.xlu0 %v3629, 32
    %v3631 = vpop.permute.xlu0 %3630
    %3633 = vst.msk [vmem:[#allocation5 + $0x12] sm:$0x3] %vm2604, %v3631
    %v3634 = vld [vmem:[#allocation4 + $0x26] sm:$0x1]
    %v3635 = vld [vmem:[#allocation4 + $0x7e] sm:$0x1]
    %v3639 = vunpack.c.l.s4 1983009808
    %v3640 = vunpack.c.0.s8 %v3639
    %v3641 = vlaneseq
    %v3642 = vshrl.u32 %v3641, 7
    %v3643 = vsub.s32 %v3640, %v3642
    %v3644 = vrot.slane %v3634, %v3643
    %v3646 = vunpack.c.l.s4 1983009808
    %v3647 = vunpack.c.0.s8 %v3646
    %v3648 = vlaneseq
    %v3649 = vshrl.u32 %v3648, 7
    %v3650 = vsub.s32 %v3647, %v3649
    %v3651 = vrot.slane %v3635, %v3650
    %v3652 = vsel %vm2560, %v3644, %v3644
    %v3653 = vsel %vm2562, %v3644, %v3652
    %v3654 = vrot.slane %v3651, 7
    %v3655 = vsel %vm2565, %v3654, %v3653
    %v3656 = vsel %vm2567, %v3654, %v3655
    %v3657 = vsel %vm2569, %v3654, %v3656
    %v3658 = vsel %vm2571, %v3654, %v3657
    %3659 = vrot.lane.b32.xlu0 %v3658, 64
    %v3660 = vpop.permute.xlu0 %3659
    %3662 = vst.msk [vmem:[#allocation5 + $0x12] sm:$0x3] %vm2634, %v3660
    %v3663 = vld [vmem:[#allocation4 + $0x27] sm:$0x1]
    %v3664 = vld [vmem:[#allocation4 + $0x7f] sm:$0x1]
    %v3668 = vunpack.c.l.s4 1983009808
    %v3669 = vunpack.c.0.s8 %v3668
    %v3670 = vlaneseq
    %v3671 = vshrl.u32 %v3670, 7
    %v3672 = vsub.s32 %v3669, %v3671
    %v3673 = vrot.slane %v3663, %v3672
    %v3675 = vunpack.c.l.s4 1983009808
    %v3676 = vunpack.c.0.s8 %v3675
    %v3677 = vlaneseq
    %v3678 = vshrl.u32 %v3677, 7
    %v3679 = vsub.s32 %v3676, %v3678
    %v3680 = vrot.slane %v3664, %v3679
    %v3681 = vsel %vm2560, %v3673, %v3673
    %v3682 = vsel %vm2562, %v3673, %v3681
    %v3683 = vrot.slane %v3680, 7
    %v3684 = vsel %vm2565, %v3683, %v3682
    %v3685 = vsel %vm2567, %v3683, %v3684
    %v3686 = vsel %vm2569, %v3683, %v3685
    %v3687 = vsel %vm2571, %v3683, %v3686
    %3688 = vrot.lane.b32.xlu0 %v3687, 96
    %v3689 = vpop.permute.xlu0 %3688
    %3691 = vst.msk [vmem:[#allocation5 + $0x12] sm:$0x3] %vm2664, %v3689
    %v3692 = vld [vmem:[#allocation4 + $0x28] sm:$0x1]
    %v3693 = vld [vmem:[#allocation4 + $0x80] sm:$0x1]
    %v3697 = vunpack.c.l.s4 1983009808
    %v3698 = vunpack.c.0.s8 %v3697
    %v3699 = vlaneseq
    %v3700 = vshrl.u32 %v3699, 7
    %v3701 = vsub.s32 %v3698, %v3700
    %v3702 = vrot.slane %v3692, %v3701
    %v3704 = vunpack.c.l.s4 1983009808
    %v3705 = vunpack.c.0.s8 %v3704
    %v3706 = vlaneseq
    %v3707 = vshrl.u32 %v3706, 7
    %v3708 = vsub.s32 %v3705, %v3707
    %v3709 = vrot.slane %v3693, %v3708
    %v3710 = vsel %vm2560, %v3702, %v3702
    %v3711 = vsel %vm2562, %v3702, %v3710
    %v3712 = vrot.slane %v3709, 7
    %v3713 = vsel %vm2565, %v3712, %v3711
    %v3714 = vsel %vm2567, %v3712, %v3713
    %v3715 = vsel %vm2569, %v3712, %v3714
    %v3716 = vsel %vm2571, %v3712, %v3715
    %3718 = vst.msk [vmem:[#allocation5 + $0x14] sm:$0x3] %vm2574, %v3716
    %v3719 = vld [vmem:[#allocation4 + $0x29] sm:$0x1]
    %v3720 = vld [vmem:[#allocation4 + $0x81] sm:$0x1]
    %v3724 = vunpack.c.l.s4 1983009808
    %v3725 = vunpack.c.0.s8 %v3724
    %v3726 = vlaneseq
    %v3727 = vshrl.u32 %v3726, 7
    %v3728 = vsub.s32 %v3725, %v3727
    %v3729 = vrot.slane %v3719, %v3728
    %v3731 = vunpack.c.l.s4 1983009808
    %v3732 = vunpack.c.0.s8 %v3731
    %v3733 = vlaneseq
    %v3734 = vshrl.u32 %v3733, 7
    %v3735 = vsub.s32 %v3732, %v3734
    %v3736 = vrot.slane %v3720, %v3735
    %v3737 = vsel %vm2560, %v3729, %v3729
    %v3738 = vsel %vm2562, %v3729, %v3737
    %v3739 = vrot.slane %v3736, 7
    %v3740 = vsel %vm2565, %v3739, %v3738
    %v3741 = vsel %vm2567, %v3739, %v3740
    %v3742 = vsel %vm2569, %v3739, %v3741
    %v3743 = vsel %vm2571, %v3739, %v3742
    %3744 = vrot.lane.b32.xlu0 %v3743, 32
    %v3745 = vpop.permute.xlu0 %3744
    %3747 = vst.msk [vmem:[#allocation5 + $0x14] sm:$0x3] %vm2604, %v3745
    %v3748 = vld [vmem:[#allocation4 + $0x2a] sm:$0x1]
    %v3749 = vld [vmem:[#allocation4 + $0x82] sm:$0x1]
    %v3753 = vunpack.c.l.s4 1983009808
    %v3754 = vunpack.c.0.s8 %v3753
    %v3755 = vlaneseq
    %v3756 = vshrl.u32 %v3755, 7
    %v3757 = vsub.s32 %v3754, %v3756
    %v3758 = vrot.slane %v3748, %v3757
    %v3760 = vunpack.c.l.s4 1983009808
    %v3761 = vunpack.c.0.s8 %v3760
    %v3762 = vlaneseq
    %v3763 = vshrl.u32 %v3762, 7
    %v3764 = vsub.s32 %v3761, %v3763
    %v3765 = vrot.slane %v3749, %v3764
    %v3766 = vsel %vm2560, %v3758, %v3758
    %v3767 = vsel %vm2562, %v3758, %v3766
    %v3768 = vrot.slane %v3765, 7
    %v3769 = vsel %vm2565, %v3768, %v3767
    %v3770 = vsel %vm2567, %v3768, %v3769
    %v3771 = vsel %vm2569, %v3768, %v3770
    %v3772 = vsel %vm2571, %v3768, %v3771
    %3773 = vrot.lane.b32.xlu0 %v3772, 64
    %v3774 = vpop.permute.xlu0 %3773
    %3776 = vst.msk [vmem:[#allocation5 + $0x14] sm:$0x3] %vm2634, %v3774
    %v3777 = vld [vmem:[#allocation4 + $0x2b] sm:$0x1]
    %v3778 = vld [vmem:[#allocation4 + $0x83] sm:$0x1]
    %v3782 = vunpack.c.l.s4 1983009808
    %v3783 = vunpack.c.0.s8 %v3782
    %v3784 = vlaneseq
    %v3785 = vshrl.u32 %v3784, 7
    %v3786 = vsub.s32 %v3783, %v3785
    %v3787 = vrot.slane %v3777, %v3786
    %v3789 = vunpack.c.l.s4 1983009808
    %v3790 = vunpack.c.0.s8 %v3789
    %v3791 = vlaneseq
    %v3792 = vshrl.u32 %v3791, 7
    %v3793 = vsub.s32 %v3790, %v3792
    %v3794 = vrot.slane %v3778, %v3793
    %v3795 = vsel %vm2560, %v3787, %v3787
    %v3796 = vsel %vm2562, %v3787, %v3795
    %v3797 = vrot.slane %v3794, 7
    %v3798 = vsel %vm2565, %v3797, %v3796
    %v3799 = vsel %vm2567, %v3797, %v3798
    %v3800 = vsel %vm2569, %v3797, %v3799
    %v3801 = vsel %vm2571, %v3797, %v3800
    %3802 = vrot.lane.b32.xlu0 %v3801, 96
    %v3803 = vpop.permute.xlu0 %3802
    %3805 = vst.msk [vmem:[#allocation5 + $0x14] sm:$0x3] %vm2664, %v3803
    %v3806 = vld [vmem:[#allocation4 + $0x2c] sm:$0x1]
    %v3807 = vld [vmem:[#allocation4 + $0x84] sm:$0x1]
    %v3811 = vunpack.c.l.s4 1983009808
    %v3812 = vunpack.c.0.s8 %v3811
    %v3813 = vlaneseq
    %v3814 = vshrl.u32 %v3813, 7
    %v3815 = vsub.s32 %v3812, %v3814
    %v3816 = vrot.slane %v3806, %v3815
    %v3818 = vunpack.c.l.s4 1983009808
    %v3819 = vunpack.c.0.s8 %v3818
    %v3820 = vlaneseq
    %v3821 = vshrl.u32 %v3820, 7
    %v3822 = vsub.s32 %v3819, %v3821
    %v3823 = vrot.slane %v3807, %v3822
    %v3824 = vsel %vm2560, %v3816, %v3816
    %v3825 = vsel %vm2562, %v3816, %v3824
    %v3826 = vrot.slane %v3823, 7
    %v3827 = vsel %vm2565, %v3826, %v3825
    %v3828 = vsel %vm2567, %v3826, %v3827
    %v3829 = vsel %vm2569, %v3826, %v3828
    %v3830 = vsel %vm2571, %v3826, %v3829
    %3832 = vst.msk [vmem:[#allocation5 + $0x16] sm:$0x3] %vm2574, %v3830
    %v3833 = vld [vmem:[#allocation4 + $0x2d] sm:$0x1]
    %v3834 = vld [vmem:[#allocation4 + $0x85] sm:$0x1]
    %v3838 = vunpack.c.l.s4 1983009808
    %v3839 = vunpack.c.0.s8 %v3838
    %v3840 = vlaneseq
    %v3841 = vshrl.u32 %v3840, 7
    %v3842 = vsub.s32 %v3839, %v3841
    %v3843 = vrot.slane %v3833, %v3842
    %v3845 = vunpack.c.l.s4 1983009808
    %v3846 = vunpack.c.0.s8 %v3845
    %v3847 = vlaneseq
    %v3848 = vshrl.u32 %v3847, 7
    %v3849 = vsub.s32 %v3846, %v3848
    %v3850 = vrot.slane %v3834, %v3849
    %v3851 = vsel %vm2560, %v3843, %v3843
    %v3852 = vsel %vm2562, %v3843, %v3851
    %v3853 = vrot.slane %v3850, 7
    %v3854 = vsel %vm2565, %v3853, %v3852
    %v3855 = vsel %vm2567, %v3853, %v3854
    %v3856 = vsel %vm2569, %v3853, %v3855
    %v3857 = vsel %vm2571, %v3853, %v3856
    %3858 = vrot.lane.b32.xlu0 %v3857, 32
    %v3859 = vpop.permute.xlu0 %3858
    %3861 = vst.msk [vmem:[#allocation5 + $0x16] sm:$0x3] %vm2604, %v3859
    %v3862 = vld [vmem:[#allocation4 + $0x2e] sm:$0x1]
    %v3863 = vld [vmem:[#allocation4 + $0x86] sm:$0x1]
    %v3867 = vunpack.c.l.s4 1983009808
    %v3868 = vunpack.c.0.s8 %v3867
    %v3869 = vlaneseq
    %v3870 = vshrl.u32 %v3869, 7
    %v3871 = vsub.s32 %v3868, %v3870
    %v3872 = vrot.slane %v3862, %v3871
    %v3874 = vunpack.c.l.s4 1983009808
    %v3875 = vunpack.c.0.s8 %v3874
    %v3876 = vlaneseq
    %v3877 = vshrl.u32 %v3876, 7
    %v3878 = vsub.s32 %v3875, %v3877
    %v3879 = vrot.slane %v3863, %v3878
    %v3880 = vsel %vm2560, %v3872, %v3872
    %v3881 = vsel %vm2562, %v3872, %v3880
    %v3882 = vrot.slane %v3879, 7
    %v3883 = vsel %vm2565, %v3882, %v3881
    %v3884 = vsel %vm2567, %v3882, %v3883
    %v3885 = vsel %vm2569, %v3882, %v3884
    %v3886 = vsel %vm2571, %v3882, %v3885
    %3887 = vrot.lane.b32.xlu0 %v3886, 64
    %v3888 = vpop.permute.xlu0 %3887
    %3890 = vst.msk [vmem:[#allocation5 + $0x16] sm:$0x3] %vm2634, %v3888
    %v3891 = vld [vmem:[#allocation4 + $0x2f] sm:$0x1]
    %v3892 = vld [vmem:[#allocation4 + $0x87] sm:$0x1]
    %v3896 = vunpack.c.l.s4 1983009808
    %v3897 = vunpack.c.0.s8 %v3896
    %v3898 = vlaneseq
    %v3899 = vshrl.u32 %v3898, 7
    %v3900 = vsub.s32 %v3897, %v3899
    %v3901 = vrot.slane %v3891, %v3900
    %v3903 = vunpack.c.l.s4 1983009808
    %v3904 = vunpack.c.0.s8 %v3903
    %v3905 = vlaneseq
    %v3906 = vshrl.u32 %v3905, 7
    %v3907 = vsub.s32 %v3904, %v3906
    %v3908 = vrot.slane %v3892, %v3907
    %v3909 = vsel %vm2560, %v3901, %v3901
    %v3910 = vsel %vm2562, %v3901, %v3909
    %v3911 = vrot.slane %v3908, 7
    %v3912 = vsel %vm2565, %v3911, %v3910
    %v3913 = vsel %vm2567, %v3911, %v3912
    %v3914 = vsel %vm2569, %v3911, %v3913
    %v3915 = vsel %vm2571, %v3911, %v3914
    %3916 = vrot.lane.b32.xlu0 %v3915, 96
    %v3917 = vpop.permute.xlu0 %3916
    %3919 = vst.msk [vmem:[#allocation5 + $0x16] sm:$0x3] %vm2664, %v3917
    %v3920 = vld [vmem:[#allocation4 + $0x30] sm:$0x1]
    %v3921 = vld [vmem:[#allocation4 + $0x88] sm:$0x1]
    %v3925 = vunpack.c.l.s4 1983009808
    %v3926 = vunpack.c.0.s8 %v3925
    %v3927 = vlaneseq
    %v3928 = vshrl.u32 %v3927, 7
    %v3929 = vsub.s32 %v3926, %v3928
    %v3930 = vrot.slane %v3920, %v3929
    %v3932 = vunpack.c.l.s4 1983009808
    %v3933 = vunpack.c.0.s8 %v3932
    %v3934 = vlaneseq
    %v3935 = vshrl.u32 %v3934, 7
    %v3936 = vsub.s32 %v3933, %v3935
    %v3937 = vrot.slane %v3921, %v3936
    %v3938 = vsel %vm2560, %v3930, %v3930
    %v3939 = vsel %vm2562, %v3930, %v3938
    %v3940 = vrot.slane %v3937, 7
    %v3941 = vsel %vm2565, %v3940, %v3939
    %v3942 = vsel %vm2567, %v3940, %v3941
    %v3943 = vsel %vm2569, %v3940, %v3942
    %v3944 = vsel %vm2571, %v3940, %v3943
    %3946 = vst.msk [vmem:[#allocation5 + $0x18] sm:$0x3] %vm2574, %v3944
    %v3947 = vld [vmem:[#allocation4 + $0x31] sm:$0x1]
    %v3948 = vld [vmem:[#allocation4 + $0x89] sm:$0x1]
    %v3952 = vunpack.c.l.s4 1983009808
    %v3953 = vunpack.c.0.s8 %v3952
    %v3954 = vlaneseq
    %v3955 = vshrl.u32 %v3954, 7
    %v3956 = vsub.s32 %v3953, %v3955
    %v3957 = vrot.slane %v3947, %v3956
    %v3959 = vunpack.c.l.s4 1983009808
    %v3960 = vunpack.c.0.s8 %v3959
    %v3961 = vlaneseq
    %v3962 = vshrl.u32 %v3961, 7
    %v3963 = vsub.s32 %v3960, %v3962
    %v3964 = vrot.slane %v3948, %v3963
    %v3965 = vsel %vm2560, %v3957, %v3957
    %v3966 = vsel %vm2562, %v3957, %v3965
    %v3967 = vrot.slane %v3964, 7
    %v3968 = vsel %vm2565, %v3967, %v3966
    %v3969 = vsel %vm2567, %v3967, %v3968
    %v3970 = vsel %vm2569, %v3967, %v3969
    %v3971 = vsel %vm2571, %v3967, %v3970
    %3972 = vrot.lane.b32.xlu0 %v3971, 32
    %v3973 = vpop.permute.xlu0 %3972
    %3975 = vst.msk [vmem:[#allocation5 + $0x18] sm:$0x3] %vm2604, %v3973
    %v3976 = vld [vmem:[#allocation4 + $0x32] sm:$0x1]
    %v3977 = vld [vmem:[#allocation4 + $0x8a] sm:$0x1]
    %v3981 = vunpack.c.l.s4 1983009808
    %v3982 = vunpack.c.0.s8 %v3981
    %v3983 = vlaneseq
    %v3984 = vshrl.u32 %v3983, 7
    %v3985 = vsub.s32 %v3982, %v3984
    %v3986 = vrot.slane %v3976, %v3985
    %v3988 = vunpack.c.l.s4 1983009808
    %v3989 = vunpack.c.0.s8 %v3988
    %v3990 = vlaneseq
    %v3991 = vshrl.u32 %v3990, 7
    %v3992 = vsub.s32 %v3989, %v3991
    %v3993 = vrot.slane %v3977, %v3992
    %v3994 = vsel %vm2560, %v3986, %v3986
    %v3995 = vsel %vm2562, %v3986, %v3994
    %v3996 = vrot.slane %v3993, 7
    %v3997 = vsel %vm2565, %v3996, %v3995
    %v3998 = vsel %vm2567, %v3996, %v3997
    %v3999 = vsel %vm2569, %v3996, %v3998
    %v4000 = vsel %vm2571, %v3996, %v3999
    %4001 = vrot.lane.b32.xlu0 %v4000, 64
    %v4002 = vpop.permute.xlu0 %4001
    %4004 = vst.msk [vmem:[#allocation5 + $0x18] sm:$0x3] %vm2634, %v4002
    %v4005 = vld [vmem:[#allocation4 + $0x33] sm:$0x1]
    %v4006 = vld [vmem:[#allocation4 + $0x8b] sm:$0x1]
    %v4010 = vunpack.c.l.s4 1983009808
    %v4011 = vunpack.c.0.s8 %v4010
    %v4012 = vlaneseq
    %v4013 = vshrl.u32 %v4012, 7
    %v4014 = vsub.s32 %v4011, %v4013
    %v4015 = vrot.slane %v4005, %v4014
    %v4017 = vunpack.c.l.s4 1983009808
    %v4018 = vunpack.c.0.s8 %v4017
    %v4019 = vlaneseq
    %v4020 = vshrl.u32 %v4019, 7
    %v4021 = vsub.s32 %v4018, %v4020
    %v4022 = vrot.slane %v4006, %v4021
    %v4023 = vsel %vm2560, %v4015, %v4015
    %v4024 = vsel %vm2562, %v4015, %v4023
    %v4025 = vrot.slane %v4022, 7
    %v4026 = vsel %vm2565, %v4025, %v4024
    %v4027 = vsel %vm2567, %v4025, %v4026
    %v4028 = vsel %vm2569, %v4025, %v4027
    %v4029 = vsel %vm2571, %v4025, %v4028
    %4030 = vrot.lane.b32.xlu0 %v4029, 96
    %v4031 = vpop.permute.xlu0 %4030
    %4033 = vst.msk [vmem:[#allocation5 + $0x18] sm:$0x3] %vm2664, %v4031
    %v4034 = vld [vmem:[#allocation4 + $0x34] sm:$0x1]
    %v4035 = vld [vmem:[#allocation4 + $0x8c] sm:$0x1]
    %v4039 = vunpack.c.l.s4 1983009808
    %v4040 = vunpack.c.0.s8 %v4039
    %v4041 = vlaneseq
    %v4042 = vshrl.u32 %v4041, 7
    %v4043 = vsub.s32 %v4040, %v4042
    %v4044 = vrot.slane %v4034, %v4043
    %v4046 = vunpack.c.l.s4 1983009808
    %v4047 = vunpack.c.0.s8 %v4046
    %v4048 = vlaneseq
    %v4049 = vshrl.u32 %v4048, 7
    %v4050 = vsub.s32 %v4047, %v4049
    %v4051 = vrot.slane %v4035, %v4050
    %v4052 = vsel %vm2560, %v4044, %v4044
    %v4053 = vsel %vm2562, %v4044, %v4052
    %v4054 = vrot.slane %v4051, 7
    %v4055 = vsel %vm2565, %v4054, %v4053
    %v4056 = vsel %vm2567, %v4054, %v4055
    %v4057 = vsel %vm2569, %v4054, %v4056
    %v4058 = vsel %vm2571, %v4054, %v4057
    %4060 = vst.msk [vmem:[#allocation5 + $0x1a] sm:$0x3] %vm2574, %v4058
    %v4061 = vld [vmem:[#allocation4 + $0x35] sm:$0x1]
    %v4062 = vld [vmem:[#allocation4 + $0x8d] sm:$0x1]
    %v4066 = vunpack.c.l.s4 1983009808
    %v4067 = vunpack.c.0.s8 %v4066
    %v4068 = vlaneseq
    %v4069 = vshrl.u32 %v4068, 7
    %v4070 = vsub.s32 %v4067, %v4069
    %v4071 = vrot.slane %v4061, %v4070
    %v4073 = vunpack.c.l.s4 1983009808
    %v4074 = vunpack.c.0.s8 %v4073
    %v4075 = vlaneseq
    %v4076 = vshrl.u32 %v4075, 7
    %v4077 = vsub.s32 %v4074, %v4076
    %v4078 = vrot.slane %v4062, %v4077
    %v4079 = vsel %vm2560, %v4071, %v4071
    %v4080 = vsel %vm2562, %v4071, %v4079
    %v4081 = vrot.slane %v4078, 7
    %v4082 = vsel %vm2565, %v4081, %v4080
    %v4083 = vsel %vm2567, %v4081, %v4082
    %v4084 = vsel %vm2569, %v4081, %v4083
    %v4085 = vsel %vm2571, %v4081, %v4084
    %4086 = vrot.lane.b32.xlu0 %v4085, 32
    %v4087 = vpop.permute.xlu0 %4086
    %4089 = vst.msk [vmem:[#allocation5 + $0x1a] sm:$0x3] %vm2604, %v4087
    %v4090 = vld [vmem:[#allocation4 + $0x36] sm:$0x1]
    %v4091 = vld [vmem:[#allocation4 + $0x8e] sm:$0x1]
    %v4095 = vunpack.c.l.s4 1983009808
    %v4096 = vunpack.c.0.s8 %v4095
    %v4097 = vlaneseq
    %v4098 = vshrl.u32 %v4097, 7
    %v4099 = vsub.s32 %v4096, %v4098
    %v4100 = vrot.slane %v4090, %v4099
    %v4102 = vunpack.c.l.s4 1983009808
    %v4103 = vunpack.c.0.s8 %v4102
    %v4104 = vlaneseq
    %v4105 = vshrl.u32 %v4104, 7
    %v4106 = vsub.s32 %v4103, %v4105
    %v4107 = vrot.slane %v4091, %v4106
    %v4108 = vsel %vm2560, %v4100, %v4100
    %v4109 = vsel %vm2562, %v4100, %v4108
    %v4110 = vrot.slane %v4107, 7
    %v4111 = vsel %vm2565, %v4110, %v4109
    %v4112 = vsel %vm2567, %v4110, %v4111
    %v4113 = vsel %vm2569, %v4110, %v4112
    %v4114 = vsel %vm2571, %v4110, %v4113
    %4115 = vrot.lane.b32.xlu0 %v4114, 64
    %v4116 = vpop.permute.xlu0 %4115
    %4118 = vst.msk [vmem:[#allocation5 + $0x1a] sm:$0x3] %vm2634, %v4116
    %v4119 = vld [vmem:[#allocation4 + $0x37] sm:$0x1]
    %v4120 = vld [vmem:[#allocation4 + $0x8f] sm:$0x1]
    %v4124 = vunpack.c.l.s4 1983009808
    %v4125 = vunpack.c.0.s8 %v4124
    %v4126 = vlaneseq
    %v4127 = vshrl.u32 %v4126, 7
    %v4128 = vsub.s32 %v4125, %v4127
    %v4129 = vrot.slane %v4119, %v4128
    %v4131 = vunpack.c.l.s4 1983009808
    %v4132 = vunpack.c.0.s8 %v4131
    %v4133 = vlaneseq
    %v4134 = vshrl.u32 %v4133, 7
    %v4135 = vsub.s32 %v4132, %v4134
    %v4136 = vrot.slane %v4120, %v4135
    %v4137 = vsel %vm2560, %v4129, %v4129
    %v4138 = vsel %vm2562, %v4129, %v4137
    %v4139 = vrot.slane %v4136, 7
    %v4140 = vsel %vm2565, %v4139, %v4138
    %v4141 = vsel %vm2567, %v4139, %v4140
    %v4142 = vsel %vm2569, %v4139, %v4141
    %v4143 = vsel %vm2571, %v4139, %v4142
    %4144 = vrot.lane.b32.xlu0 %v4143, 96
    %v4145 = vpop.permute.xlu0 %4144
    %4147 = vst.msk [vmem:[#allocation5 + $0x1a] sm:$0x3] %vm2664, %v4145
    %v4148 = vld [vmem:[#allocation4 + $0x38] sm:$0x1]
    %v4149 = vld [vmem:[#allocation4 + $0x90] sm:$0x1]
    %v4153 = vunpack.c.l.s4 1983009808
    %v4154 = vunpack.c.0.s8 %v4153
    %v4155 = vlaneseq
    %v4156 = vshrl.u32 %v4155, 7
    %v4157 = vsub.s32 %v4154, %v4156
    %v4158 = vrot.slane %v4148, %v4157
    %v4160 = vunpack.c.l.s4 1983009808
    %v4161 = vunpack.c.0.s8 %v4160
    %v4162 = vlaneseq
    %v4163 = vshrl.u32 %v4162, 7
    %v4164 = vsub.s32 %v4161, %v4163
    %v4165 = vrot.slane %v4149, %v4164
    %v4166 = vsel %vm2560, %v4158, %v4158
    %v4167 = vsel %vm2562, %v4158, %v4166
    %v4168 = vrot.slane %v4165, 7
    %v4169 = vsel %vm2565, %v4168, %v4167
    %v4170 = vsel %vm2567, %v4168, %v4169
    %v4171 = vsel %vm2569, %v4168, %v4170
    %v4172 = vsel %vm2571, %v4168, %v4171
    %4174 = vst.msk [vmem:[#allocation5 + $0x1c] sm:$0x3] %vm2574, %v4172
    %v4175 = vld [vmem:[#allocation4 + $0x39] sm:$0x1]
    %v4176 = vld [vmem:[#allocation4 + $0x91] sm:$0x1]
    %v4180 = vunpack.c.l.s4 1983009808
    %v4181 = vunpack.c.0.s8 %v4180
    %v4182 = vlaneseq
    %v4183 = vshrl.u32 %v4182, 7
    %v4184 = vsub.s32 %v4181, %v4183
    %v4185 = vrot.slane %v4175, %v4184
    %v4187 = vunpack.c.l.s4 1983009808
    %v4188 = vunpack.c.0.s8 %v4187
    %v4189 = vlaneseq
    %v4190 = vshrl.u32 %v4189, 7
    %v4191 = vsub.s32 %v4188, %v4190
    %v4192 = vrot.slane %v4176, %v4191
    %v4193 = vsel %vm2560, %v4185, %v4185
    %v4194 = vsel %vm2562, %v4185, %v4193
    %v4195 = vrot.slane %v4192, 7
    %v4196 = vsel %vm2565, %v4195, %v4194
    %v4197 = vsel %vm2567, %v4195, %v4196
    %v4198 = vsel %vm2569, %v4195, %v4197
    %v4199 = vsel %vm2571, %v4195, %v4198
    %4200 = vrot.lane.b32.xlu0 %v4199, 32
    %v4201 = vpop.permute.xlu0 %4200
    %4203 = vst.msk [vmem:[#allocation5 + $0x1c] sm:$0x3] %vm2604, %v4201
    %v4204 = vld [vmem:[#allocation4 + $0x3a] sm:$0x1]
    %v4205 = vld [vmem:[#allocation4 + $0x92] sm:$0x1]
    %v4209 = vunpack.c.l.s4 1983009808
    %v4210 = vunpack.c.0.s8 %v4209
    %v4211 = vlaneseq
    %v4212 = vshrl.u32 %v4211, 7
    %v4213 = vsub.s32 %v4210, %v4212
    %v4214 = vrot.slane %v4204, %v4213
    %v4216 = vunpack.c.l.s4 1983009808
    %v4217 = vunpack.c.0.s8 %v4216
    %v4218 = vlaneseq
    %v4219 = vshrl.u32 %v4218, 7
    %v4220 = vsub.s32 %v4217, %v4219
    %v4221 = vrot.slane %v4205, %v4220
    %v4222 = vsel %vm2560, %v4214, %v4214
    %v4223 = vsel %vm2562, %v4214, %v4222
    %v4224 = vrot.slane %v4221, 7
    %v4225 = vsel %vm2565, %v4224, %v4223
    %v4226 = vsel %vm2567, %v4224, %v4225
    %v4227 = vsel %vm2569, %v4224, %v4226
    %v4228 = vsel %vm2571, %v4224, %v4227
    %4229 = vrot.lane.b32.xlu0 %v4228, 64
    %v4230 = vpop.permute.xlu0 %4229
    %4232 = vst.msk [vmem:[#allocation5 + $0x1c] sm:$0x3] %vm2634, %v4230
    %v4233 = vld [vmem:[#allocation4 + $0x3b] sm:$0x1]
    %v4234 = vld [vmem:[#allocation4 + $0x93] sm:$0x1]
    %v4238 = vunpack.c.l.s4 1983009808
    %v4239 = vunpack.c.0.s8 %v4238
    %v4240 = vlaneseq
    %v4241 = vshrl.u32 %v4240, 7
    %v4242 = vsub.s32 %v4239, %v4241
    %v4243 = vrot.slane %v4233, %v4242
    %v4245 = vunpack.c.l.s4 1983009808
    %v4246 = vunpack.c.0.s8 %v4245
    %v4247 = vlaneseq
    %v4248 = vshrl.u32 %v4247, 7
    %v4249 = vsub.s32 %v4246, %v4248
    %v4250 = vrot.slane %v4234, %v4249
    %v4251 = vsel %vm2560, %v4243, %v4243
    %v4252 = vsel %vm2562, %v4243, %v4251
    %v4253 = vrot.slane %v4250, 7
    %v4254 = vsel %vm2565, %v4253, %v4252
    %v4255 = vsel %vm2567, %v4253, %v4254
    %v4256 = vsel %vm2569, %v4253, %v4255
    %v4257 = vsel %vm2571, %v4253, %v4256
    %4258 = vrot.lane.b32.xlu0 %v4257, 96
    %v4259 = vpop.permute.xlu0 %4258
    %4261 = vst.msk [vmem:[#allocation5 + $0x1c] sm:$0x3] %vm2664, %v4259
    %v4262 = vld [vmem:[#allocation4 + $0x3c] sm:$0x1]
    %v4263 = vld [vmem:[#allocation4 + $0x94] sm:$0x1]
    %v4267 = vunpack.c.l.s4 1983009808
    %v4268 = vunpack.c.0.s8 %v4267
    %v4269 = vlaneseq
    %v4270 = vshrl.u32 %v4269, 7
    %v4271 = vsub.s32 %v4268, %v4270
    %v4272 = vrot.slane %v4262, %v4271
    %v4274 = vunpack.c.l.s4 1983009808
    %v4275 = vunpack.c.0.s8 %v4274
    %v4276 = vlaneseq
    %v4277 = vshrl.u32 %v4276, 7
    %v4278 = vsub.s32 %v4275, %v4277
    %v4279 = vrot.slane %v4263, %v4278
    %v4280 = vsel %vm2560, %v4272, %v4272
    %v4281 = vsel %vm2562, %v4272, %v4280
    %v4282 = vrot.slane %v4279, 7
    %v4283 = vsel %vm2565, %v4282, %v4281
    %v4284 = vsel %vm2567, %v4282, %v4283
    %v4285 = vsel %vm2569, %v4282, %v4284
    %v4286 = vsel %vm2571, %v4282, %v4285
    %4288 = vst.msk [vmem:[#allocation5 + $0x1e] sm:$0x3] %vm2574, %v4286
    %v4289 = vld [vmem:[#allocation4 + $0x3d] sm:$0x1]
    %v4290 = vld [vmem:[#allocation4 + $0x95] sm:$0x1]
    %v4294 = vunpack.c.l.s4 1983009808
    %v4295 = vunpack.c.0.s8 %v4294
    %v4296 = vlaneseq
    %v4297 = vshrl.u32 %v4296, 7
    %v4298 = vsub.s32 %v4295, %v4297
    %v4299 = vrot.slane %v4289, %v4298
    %v4301 = vunpack.c.l.s4 1983009808
    %v4302 = vunpack.c.0.s8 %v4301
    %v4303 = vlaneseq
    %v4304 = vshrl.u32 %v4303, 7
    %v4305 = vsub.s32 %v4302, %v4304
    %v4306 = vrot.slane %v4290, %v4305
    %v4307 = vsel %vm2560, %v4299, %v4299
    %v4308 = vsel %vm2562, %v4299, %v4307
    %v4309 = vrot.slane %v4306, 7
    %v4310 = vsel %vm2565, %v4309, %v4308
    %v4311 = vsel %vm2567, %v4309, %v4310
    %v4312 = vsel %vm2569, %v4309, %v4311
    %v4313 = vsel %vm2571, %v4309, %v4312
    %4314 = vrot.lane.b32.xlu0 %v4313, 32
    %v4315 = vpop.permute.xlu0 %4314
    %4317 = vst.msk [vmem:[#allocation5 + $0x1e] sm:$0x3] %vm2604, %v4315
    %v4318 = vld [vmem:[#allocation4 + $0x3e] sm:$0x1]
    %v4319 = vld [vmem:[#allocation4 + $0x96] sm:$0x1]
    %v4323 = vunpack.c.l.s4 1983009808
    %v4324 = vunpack.c.0.s8 %v4323
    %v4325 = vlaneseq
    %v4326 = vshrl.u32 %v4325, 7
    %v4327 = vsub.s32 %v4324, %v4326
    %v4328 = vrot.slane %v4318, %v4327
    %v4330 = vunpack.c.l.s4 1983009808
    %v4331 = vunpack.c.0.s8 %v4330
    %v4332 = vlaneseq
    %v4333 = vshrl.u32 %v4332, 7
    %v4334 = vsub.s32 %v4331, %v4333
    %v4335 = vrot.slane %v4319, %v4334
    %v4336 = vsel %vm2560, %v4328, %v4328
    %v4337 = vsel %vm2562, %v4328, %v4336
    %v4338 = vrot.slane %v4335, 7
    %v4339 = vsel %vm2565, %v4338, %v4337
    %v4340 = vsel %vm2567, %v4338, %v4339
    %v4341 = vsel %vm2569, %v4338, %v4340
    %v4342 = vsel %vm2571, %v4338, %v4341
    %4343 = vrot.lane.b32.xlu0 %v4342, 64
    %v4344 = vpop.permute.xlu0 %4343
    %4346 = vst.msk [vmem:[#allocation5 + $0x1e] sm:$0x3] %vm2634, %v4344
    %v4347 = vld [vmem:[#allocation4 + $0x3f] sm:$0x1]
    %v4348 = vld [vmem:[#allocation4 + $0x97] sm:$0x1]
    %v4352 = vunpack.c.l.s4 1983009808
    %v4353 = vunpack.c.0.s8 %v4352
    %v4354 = vlaneseq
    %v4355 = vshrl.u32 %v4354, 7
    %v4356 = vsub.s32 %v4353, %v4355
    %v4357 = vrot.slane %v4347, %v4356
    %v4359 = vunpack.c.l.s4 1983009808
    %v4360 = vunpack.c.0.s8 %v4359
    %v4361 = vlaneseq
    %v4362 = vshrl.u32 %v4361, 7
    %v4363 = vsub.s32 %v4360, %v4362
    %v4364 = vrot.slane %v4348, %v4363
    %v4365 = vsel %vm2560, %v4357, %v4357
    %v4366 = vsel %vm2562, %v4357, %v4365
    %v4367 = vrot.slane %v4364, 7
    %v4368 = vsel %vm2565, %v4367, %v4366
    %v4369 = vsel %vm2567, %v4367, %v4368
    %v4370 = vsel %vm2569, %v4367, %v4369
    %v4371 = vsel %vm2571, %v4367, %v4370
    %4372 = vrot.lane.b32.xlu0 %v4371, 96
    %v4373 = vpop.permute.xlu0 %4372
    %4375 = vst.msk [vmem:[#allocation5 + $0x1e] sm:$0x3] %vm2664, %v4373
    %v4376 = vld [vmem:[#allocation4 + $0x40] sm:$0x1]
    %v4377 = vld [vmem:[#allocation4 + $0x98] sm:$0x1]
    %v4381 = vunpack.c.l.s4 1983009808
    %v4382 = vunpack.c.0.s8 %v4381
    %v4383 = vlaneseq
    %v4384 = vshrl.u32 %v4383, 7
    %v4385 = vsub.s32 %v4382, %v4384
    %v4386 = vrot.slane %v4376, %v4385
    %v4388 = vunpack.c.l.s4 1983009808
    %v4389 = vunpack.c.0.s8 %v4388
    %v4390 = vlaneseq
    %v4391 = vshrl.u32 %v4390, 7
    %v4392 = vsub.s32 %v4389, %v4391
    %v4393 = vrot.slane %v4377, %v4392
    %v4394 = vsel %vm2560, %v4386, %v4386
    %v4395 = vsel %vm2562, %v4386, %v4394
    %v4396 = vrot.slane %v4393, 7
    %v4397 = vsel %vm2565, %v4396, %v4395
    %v4398 = vsel %vm2567, %v4396, %v4397
    %v4399 = vsel %vm2569, %v4396, %v4398
    %v4400 = vsel %vm2571, %v4396, %v4399
    %4402 = vst.msk [vmem:[#allocation5 + $0x20] sm:$0x3] %vm2574, %v4400
    %v4403 = vld [vmem:[#allocation4 + $0x41] sm:$0x1]
    %v4404 = vld [vmem:[#allocation4 + $0x99] sm:$0x1]
    %v4408 = vunpack.c.l.s4 1983009808
    %v4409 = vunpack.c.0.s8 %v4408
    %v4410 = vlaneseq
    %v4411 = vshrl.u32 %v4410, 7
    %v4412 = vsub.s32 %v4409, %v4411
    %v4413 = vrot.slane %v4403, %v4412
    %v4415 = vunpack.c.l.s4 1983009808
    %v4416 = vunpack.c.0.s8 %v4415
    %v4417 = vlaneseq
    %v4418 = vshrl.u32 %v4417, 7
    %v4419 = vsub.s32 %v4416, %v4418
    %v4420 = vrot.slane %v4404, %v4419
    %v4421 = vsel %vm2560, %v4413, %v4413
    %v4422 = vsel %vm2562, %v4413, %v4421
    %v4423 = vrot.slane %v4420, 7
    %v4424 = vsel %vm2565, %v4423, %v4422
    %v4425 = vsel %vm2567, %v4423, %v4424
    %v4426 = vsel %vm2569, %v4423, %v4425
    %v4427 = vsel %vm2571, %v4423, %v4426
    %4428 = vrot.lane.b32.xlu0 %v4427, 32
    %v4429 = vpop.permute.xlu0 %4428
    %4431 = vst.msk [vmem:[#allocation5 + $0x20] sm:$0x3] %vm2604, %v4429
    %v4432 = vld [vmem:[#allocation4 + $0x42] sm:$0x1]
    %v4433 = vld [vmem:[#allocation4 + $0x9a] sm:$0x1]
    %v4437 = vunpack.c.l.s4 1983009808
    %v4438 = vunpack.c.0.s8 %v4437
    %v4439 = vlaneseq
    %v4440 = vshrl.u32 %v4439, 7
    %v4441 = vsub.s32 %v4438, %v4440
    %v4442 = vrot.slane %v4432, %v4441
    %v4444 = vunpack.c.l.s4 1983009808
    %v4445 = vunpack.c.0.s8 %v4444
    %v4446 = vlaneseq
    %v4447 = vshrl.u32 %v4446, 7
    %v4448 = vsub.s32 %v4445, %v4447
    %v4449 = vrot.slane %v4433, %v4448
    %v4450 = vsel %vm2560, %v4442, %v4442
    %v4451 = vsel %vm2562, %v4442, %v4450
    %v4452 = vrot.slane %v4449, 7
    %v4453 = vsel %vm2565, %v4452, %v4451
    %v4454 = vsel %vm2567, %v4452, %v4453
    %v4455 = vsel %vm2569, %v4452, %v4454
    %v4456 = vsel %vm2571, %v4452, %v4455
    %4457 = vrot.lane.b32.xlu0 %v4456, 64
    %v4458 = vpop.permute.xlu0 %4457
    %4460 = vst.msk [vmem:[#allocation5 + $0x20] sm:$0x3] %vm2634, %v4458
    %v4461 = vld [vmem:[#allocation4 + $0x43] sm:$0x1]
    %v4462 = vld [vmem:[#allocation4 + $0x9b] sm:$0x1]
    %v4466 = vunpack.c.l.s4 1983009808
    %v4467 = vunpack.c.0.s8 %v4466
    %v4468 = vlaneseq
    %v4469 = vshrl.u32 %v4468, 7
    %v4470 = vsub.s32 %v4467, %v4469
    %v4471 = vrot.slane %v4461, %v4470
    %v4473 = vunpack.c.l.s4 1983009808
    %v4474 = vunpack.c.0.s8 %v4473
    %v4475 = vlaneseq
    %v4476 = vshrl.u32 %v4475, 7
    %v4477 = vsub.s32 %v4474, %v4476
    %v4478 = vrot.slane %v4462, %v4477
    %v4479 = vsel %vm2560, %v4471, %v4471
    %v4480 = vsel %vm2562, %v4471, %v4479
    %v4481 = vrot.slane %v4478, 7
    %v4482 = vsel %vm2565, %v4481, %v4480
    %v4483 = vsel %vm2567, %v4481, %v4482
    %v4484 = vsel %vm2569, %v4481, %v4483
    %v4485 = vsel %vm2571, %v4481, %v4484
    %4486 = vrot.lane.b32.xlu0 %v4485, 96
    %v4487 = vpop.permute.xlu0 %4486
    %4489 = vst.msk [vmem:[#allocation5 + $0x20] sm:$0x3] %vm2664, %v4487
    %v4490 = vld [vmem:[#allocation4 + $0x44] sm:$0x1]
    %v4491 = vld [vmem:[#allocation4 + $0x9c] sm:$0x1]
    %v4495 = vunpack.c.l.s4 1983009808
    %v4496 = vunpack.c.0.s8 %v4495
    %v4497 = vlaneseq
    %v4498 = vshrl.u32 %v4497, 7
    %v4499 = vsub.s32 %v4496, %v4498
    %v4500 = vrot.slane %v4490, %v4499
    %v4502 = vunpack.c.l.s4 1983009808
    %v4503 = vunpack.c.0.s8 %v4502
    %v4504 = vlaneseq
    %v4505 = vshrl.u32 %v4504, 7
    %v4506 = vsub.s32 %v4503, %v4505
    %v4507 = vrot.slane %v4491, %v4506
    %v4508 = vsel %vm2560, %v4500, %v4500
    %v4509 = vsel %vm2562, %v4500, %v4508
    %v4510 = vrot.slane %v4507, 7
    %v4511 = vsel %vm2565, %v4510, %v4509
    %v4512 = vsel %vm2567, %v4510, %v4511
    %v4513 = vsel %vm2569, %v4510, %v4512
    %v4514 = vsel %vm2571, %v4510, %v4513
    %4516 = vst.msk [vmem:[#allocation5 + $0x22] sm:$0x3] %vm2574, %v4514
    %v4517 = vld [vmem:[#allocation4 + $0x45] sm:$0x1]
    %v4518 = vld [vmem:[#allocation4 + $0x9d] sm:$0x1]
    %v4522 = vunpack.c.l.s4 1983009808
    %v4523 = vunpack.c.0.s8 %v4522
    %v4524 = vlaneseq
    %v4525 = vshrl.u32 %v4524, 7
    %v4526 = vsub.s32 %v4523, %v4525
    %v4527 = vrot.slane %v4517, %v4526
    %v4529 = vunpack.c.l.s4 1983009808
    %v4530 = vunpack.c.0.s8 %v4529
    %v4531 = vlaneseq
    %v4532 = vshrl.u32 %v4531, 7
    %v4533 = vsub.s32 %v4530, %v4532
    %v4534 = vrot.slane %v4518, %v4533
    %v4535 = vsel %vm2560, %v4527, %v4527
    %v4536 = vsel %vm2562, %v4527, %v4535
    %v4537 = vrot.slane %v4534, 7
    %v4538 = vsel %vm2565, %v4537, %v4536
    %v4539 = vsel %vm2567, %v4537, %v4538
    %v4540 = vsel %vm2569, %v4537, %v4539
    %v4541 = vsel %vm2571, %v4537, %v4540
    %4542 = vrot.lane.b32.xlu0 %v4541, 32
    %v4543 = vpop.permute.xlu0 %4542
    %4545 = vst.msk [vmem:[#allocation5 + $0x22] sm:$0x3] %vm2604, %v4543
    %v4546 = vld [vmem:[#allocation4 + $0x46] sm:$0x1]
    %v4547 = vld [vmem:[#allocation4 + $0x9e] sm:$0x1]
    %v4551 = vunpack.c.l.s4 1983009808
    %v4552 = vunpack.c.0.s8 %v4551
    %v4553 = vlaneseq
    %v4554 = vshrl.u32 %v4553, 7
    %v4555 = vsub.s32 %v4552, %v4554
    %v4556 = vrot.slane %v4546, %v4555
    %v4558 = vunpack.c.l.s4 1983009808
    %v4559 = vunpack.c.0.s8 %v4558
    %v4560 = vlaneseq
    %v4561 = vshrl.u32 %v4560, 7
    %v4562 = vsub.s32 %v4559, %v4561
    %v4563 = vrot.slane %v4547, %v4562
    %v4564 = vsel %vm2560, %v4556, %v4556
    %v4565 = vsel %vm2562, %v4556, %v4564
    %v4566 = vrot.slane %v4563, 7
    %v4567 = vsel %vm2565, %v4566, %v4565
    %v4568 = vsel %vm2567, %v4566, %v4567
    %v4569 = vsel %vm2569, %v4566, %v4568
    %v4570 = vsel %vm2571, %v4566, %v4569
    %4571 = vrot.lane.b32.xlu0 %v4570, 64
    %v4572 = vpop.permute.xlu0 %4571
    %4574 = vst.msk [vmem:[#allocation5 + $0x22] sm:$0x3] %vm2634, %v4572
    %v4575 = vld [vmem:[#allocation4 + $0x47] sm:$0x1]
    %v4576 = vld [vmem:[#allocation4 + $0x9f] sm:$0x1]
    %v4580 = vunpack.c.l.s4 1983009808
    %v4581 = vunpack.c.0.s8 %v4580
    %v4582 = vlaneseq
    %v4583 = vshrl.u32 %v4582, 7
    %v4584 = vsub.s32 %v4581, %v4583
    %v4585 = vrot.slane %v4575, %v4584
    %v4587 = vunpack.c.l.s4 1983009808
    %v4588 = vunpack.c.0.s8 %v4587
    %v4589 = vlaneseq
    %v4590 = vshrl.u32 %v4589, 7
    %v4591 = vsub.s32 %v4588, %v4590
    %v4592 = vrot.slane %v4576, %v4591
    %v4593 = vsel %vm2560, %v4585, %v4585
    %v4594 = vsel %vm2562, %v4585, %v4593
    %v4595 = vrot.slane %v4592, 7
    %v4596 = vsel %vm2565, %v4595, %v4594
    %v4597 = vsel %vm2567, %v4595, %v4596
    %v4598 = vsel %vm2569, %v4595, %v4597
    %v4599 = vsel %vm2571, %v4595, %v4598
    %4600 = vrot.lane.b32.xlu0 %v4599, 96
    %v4601 = vpop.permute.xlu0 %4600
    %4603 = vst.msk [vmem:[#allocation5 + $0x22] sm:$0x3] %vm2664, %v4601
    %v4604 = vld [vmem:[#allocation4 + $0x48] sm:$0x1]
    %v4605 = vld [vmem:[#allocation4 + $0xa0] sm:$0x1]
    %v4609 = vunpack.c.l.s4 1983009808
    %v4610 = vunpack.c.0.s8 %v4609
    %v4611 = vlaneseq
    %v4612 = vshrl.u32 %v4611, 7
    %v4613 = vsub.s32 %v4610, %v4612
    %v4614 = vrot.slane %v4604, %v4613
    %v4616 = vunpack.c.l.s4 1983009808
    %v4617 = vunpack.c.0.s8 %v4616
    %v4618 = vlaneseq
    %v4619 = vshrl.u32 %v4618, 7
    %v4620 = vsub.s32 %v4617, %v4619
    %v4621 = vrot.slane %v4605, %v4620
    %v4622 = vsel %vm2560, %v4614, %v4614
    %v4623 = vsel %vm2562, %v4614, %v4622
    %v4624 = vrot.slane %v4621, 7
    %v4625 = vsel %vm2565, %v4624, %v4623
    %v4626 = vsel %vm2567, %v4624, %v4625
    %v4627 = vsel %vm2569, %v4624, %v4626
    %v4628 = vsel %vm2571, %v4624, %v4627
    %4630 = vst.msk [vmem:[#allocation5 + $0x24] sm:$0x3] %vm2574, %v4628
    %v4631 = vld [vmem:[#allocation4 + $0x49] sm:$0x1]
    %v4632 = vld [vmem:[#allocation4 + $0xa1] sm:$0x1]
    %v4636 = vunpack.c.l.s4 1983009808
    %v4637 = vunpack.c.0.s8 %v4636
    %v4638 = vlaneseq
    %v4639 = vshrl.u32 %v4638, 7
    %v4640 = vsub.s32 %v4637, %v4639
    %v4641 = vrot.slane %v4631, %v4640
    %v4643 = vunpack.c.l.s4 1983009808
    %v4644 = vunpack.c.0.s8 %v4643
    %v4645 = vlaneseq
    %v4646 = vshrl.u32 %v4645, 7
    %v4647 = vsub.s32 %v4644, %v4646
    %v4648 = vrot.slane %v4632, %v4647
    %v4649 = vsel %vm2560, %v4641, %v4641
    %v4650 = vsel %vm2562, %v4641, %v4649
    %v4651 = vrot.slane %v4648, 7
    %v4652 = vsel %vm2565, %v4651, %v4650
    %v4653 = vsel %vm2567, %v4651, %v4652
    %v4654 = vsel %vm2569, %v4651, %v4653
    %v4655 = vsel %vm2571, %v4651, %v4654
    %4656 = vrot.lane.b32.xlu0 %v4655, 32
    %v4657 = vpop.permute.xlu0 %4656
    %4659 = vst.msk [vmem:[#allocation5 + $0x24] sm:$0x3] %vm2604, %v4657
    %v4660 = vld [vmem:[#allocation4 + $0x4a] sm:$0x1]
    %v4661 = vld [vmem:[#allocation4 + $0xa2] sm:$0x1]
    %v4665 = vunpack.c.l.s4 1983009808
    %v4666 = vunpack.c.0.s8 %v4665
    %v4667 = vlaneseq
    %v4668 = vshrl.u32 %v4667, 7
    %v4669 = vsub.s32 %v4666, %v4668
    %v4670 = vrot.slane %v4660, %v4669
    %v4672 = vunpack.c.l.s4 1983009808
    %v4673 = vunpack.c.0.s8 %v4672
    %v4674 = vlaneseq
    %v4675 = vshrl.u32 %v4674, 7
    %v4676 = vsub.s32 %v4673, %v4675
    %v4677 = vrot.slane %v4661, %v4676
    %v4678 = vsel %vm2560, %v4670, %v4670
    %v4679 = vsel %vm2562, %v4670, %v4678
    %v4680 = vrot.slane %v4677, 7
    %v4681 = vsel %vm2565, %v4680, %v4679
    %v4682 = vsel %vm2567, %v4680, %v4681
    %v4683 = vsel %vm2569, %v4680, %v4682
    %v4684 = vsel %vm2571, %v4680, %v4683
    %4685 = vrot.lane.b32.xlu0 %v4684, 64
    %v4686 = vpop.permute.xlu0 %4685
    %4688 = vst.msk [vmem:[#allocation5 + $0x24] sm:$0x3] %vm2634, %v4686
    %v4689 = vld [vmem:[#allocation4 + $0x4b] sm:$0x1]
    %v4690 = vld [vmem:[#allocation4 + $0xa3] sm:$0x1]
    %v4694 = vunpack.c.l.s4 1983009808
    %v4695 = vunpack.c.0.s8 %v4694
    %v4696 = vlaneseq
    %v4697 = vshrl.u32 %v4696, 7
    %v4698 = vsub.s32 %v4695, %v4697
    %v4699 = vrot.slane %v4689, %v4698
    %v4701 = vunpack.c.l.s4 1983009808
    %v4702 = vunpack.c.0.s8 %v4701
    %v4703 = vlaneseq
    %v4704 = vshrl.u32 %v4703, 7
    %v4705 = vsub.s32 %v4702, %v4704
    %v4706 = vrot.slane %v4690, %v4705
    %v4707 = vsel %vm2560, %v4699, %v4699
    %v4708 = vsel %vm2562, %v4699, %v4707
    %v4709 = vrot.slane %v4706, 7
    %v4710 = vsel %vm2565, %v4709, %v4708
    %v4711 = vsel %vm2567, %v4709, %v4710
    %v4712 = vsel %vm2569, %v4709, %v4711
    %v4713 = vsel %vm2571, %v4709, %v4712
    %4714 = vrot.lane.b32.xlu0 %v4713, 96
    %v4715 = vpop.permute.xlu0 %4714
    %4717 = vst.msk [vmem:[#allocation5 + $0x24] sm:$0x3] %vm2664, %v4715
    %v4718 = vld [vmem:[#allocation4 + $0x4c] sm:$0x1]
    %v4719 = vld [vmem:[#allocation4 + $0xa4] sm:$0x1]
    %v4723 = vunpack.c.l.s4 1983009808
    %v4724 = vunpack.c.0.s8 %v4723
    %v4725 = vlaneseq
    %v4726 = vshrl.u32 %v4725, 7
    %v4727 = vsub.s32 %v4724, %v4726
    %v4728 = vrot.slane %v4718, %v4727
    %v4730 = vunpack.c.l.s4 1983009808
    %v4731 = vunpack.c.0.s8 %v4730
    %v4732 = vlaneseq
    %v4733 = vshrl.u32 %v4732, 7
    %v4734 = vsub.s32 %v4731, %v4733
    %v4735 = vrot.slane %v4719, %v4734
    %v4736 = vsel %vm2560, %v4728, %v4728
    %v4737 = vsel %vm2562, %v4728, %v4736
    %v4738 = vrot.slane %v4735, 7
    %v4739 = vsel %vm2565, %v4738, %v4737
    %v4740 = vsel %vm2567, %v4738, %v4739
    %v4741 = vsel %vm2569, %v4738, %v4740
    %v4742 = vsel %vm2571, %v4738, %v4741
    %4744 = vst.msk [vmem:[#allocation5 + $0x26] sm:$0x3] %vm2574, %v4742
    %v4745 = vld [vmem:[#allocation4 + $0x4d] sm:$0x1]
    %v4746 = vld [vmem:[#allocation4 + $0xa5] sm:$0x1]
    %v4750 = vunpack.c.l.s4 1983009808
    %v4751 = vunpack.c.0.s8 %v4750
    %v4752 = vlaneseq
    %v4753 = vshrl.u32 %v4752, 7
    %v4754 = vsub.s32 %v4751, %v4753
    %v4755 = vrot.slane %v4745, %v4754
    %v4757 = vunpack.c.l.s4 1983009808
    %v4758 = vunpack.c.0.s8 %v4757
    %v4759 = vlaneseq
    %v4760 = vshrl.u32 %v4759, 7
    %v4761 = vsub.s32 %v4758, %v4760
    %v4762 = vrot.slane %v4746, %v4761
    %v4763 = vsel %vm2560, %v4755, %v4755
    %v4764 = vsel %vm2562, %v4755, %v4763
    %v4765 = vrot.slane %v4762, 7
    %v4766 = vsel %vm2565, %v4765, %v4764
    %v4767 = vsel %vm2567, %v4765, %v4766
    %v4768 = vsel %vm2569, %v4765, %v4767
    %v4769 = vsel %vm2571, %v4765, %v4768
    %4770 = vrot.lane.b32.xlu0 %v4769, 32
    %v4771 = vpop.permute.xlu0 %4770
    %4773 = vst.msk [vmem:[#allocation5 + $0x26] sm:$0x3] %vm2604, %v4771
    %v4774 = vld [vmem:[#allocation4 + $0x4e] sm:$0x1]
    %v4775 = vld [vmem:[#allocation4 + $0xa6] sm:$0x1]
    %v4779 = vunpack.c.l.s4 1983009808
    %v4780 = vunpack.c.0.s8 %v4779
    %v4781 = vlaneseq
    %v4782 = vshrl.u32 %v4781, 7
    %v4783 = vsub.s32 %v4780, %v4782
    %v4784 = vrot.slane %v4774, %v4783
    %v4786 = vunpack.c.l.s4 1983009808
    %v4787 = vunpack.c.0.s8 %v4786
    %v4788 = vlaneseq
    %v4789 = vshrl.u32 %v4788, 7
    %v4790 = vsub.s32 %v4787, %v4789
    %v4791 = vrot.slane %v4775, %v4790
    %v4792 = vsel %vm2560, %v4784, %v4784
    %v4793 = vsel %vm2562, %v4784, %v4792
    %v4794 = vrot.slane %v4791, 7
    %v4795 = vsel %vm2565, %v4794, %v4793
    %v4796 = vsel %vm2567, %v4794, %v4795
    %v4797 = vsel %vm2569, %v4794, %v4796
    %v4798 = vsel %vm2571, %v4794, %v4797
    %4799 = vrot.lane.b32.xlu0 %v4798, 64
    %v4800 = vpop.permute.xlu0 %4799
    %4802 = vst.msk [vmem:[#allocation5 + $0x26] sm:$0x3] %vm2634, %v4800
    %v4803 = vld [vmem:[#allocation4 + $0x4f] sm:$0x1]
    %v4804 = vld [vmem:[#allocation4 + $0xa7] sm:$0x1]
    %v4808 = vunpack.c.l.s4 1983009808
    %v4809 = vunpack.c.0.s8 %v4808
    %v4810 = vlaneseq
    %v4811 = vshrl.u32 %v4810, 7
    %v4812 = vsub.s32 %v4809, %v4811
    %v4813 = vrot.slane %v4803, %v4812
    %v4815 = vunpack.c.l.s4 1983009808
    %v4816 = vunpack.c.0.s8 %v4815
    %v4817 = vlaneseq
    %v4818 = vshrl.u32 %v4817, 7
    %v4819 = vsub.s32 %v4816, %v4818
    %v4820 = vrot.slane %v4804, %v4819
    %v4821 = vsel %vm2560, %v4813, %v4813
    %v4822 = vsel %vm2562, %v4813, %v4821
    %v4823 = vrot.slane %v4820, 7
    %v4824 = vsel %vm2565, %v4823, %v4822
    %v4825 = vsel %vm2567, %v4823, %v4824
    %v4826 = vsel %vm2569, %v4823, %v4825
    %v4827 = vsel %vm2571, %v4823, %v4826
    %4828 = vrot.lane.b32.xlu0 %v4827, 96
    %v4829 = vpop.permute.xlu0 %4828
    %4831 = vst.msk [vmem:[#allocation5 + $0x26] sm:$0x3] %vm2664, %v4829
    %v4832 = vld [vmem:[#allocation4 + $0x50] sm:$0x1]
    %v4833 = vld [vmem:[#allocation4 + $0xa8] sm:$0x1]
    %v4837 = vunpack.c.l.s4 1983009808
    %v4838 = vunpack.c.0.s8 %v4837
    %v4839 = vlaneseq
    %v4840 = vshrl.u32 %v4839, 7
    %v4841 = vsub.s32 %v4838, %v4840
    %v4842 = vrot.slane %v4832, %v4841
    %v4844 = vunpack.c.l.s4 1983009808
    %v4845 = vunpack.c.0.s8 %v4844
    %v4846 = vlaneseq
    %v4847 = vshrl.u32 %v4846, 7
    %v4848 = vsub.s32 %v4845, %v4847
    %v4849 = vrot.slane %v4833, %v4848
    %v4850 = vsel %vm2560, %v4842, %v4842
    %v4851 = vsel %vm2562, %v4842, %v4850
    %v4852 = vrot.slane %v4849, 7
    %v4853 = vsel %vm2565, %v4852, %v4851
    %v4854 = vsel %vm2567, %v4852, %v4853
    %v4855 = vsel %vm2569, %v4852, %v4854
    %v4856 = vsel %vm2571, %v4852, %v4855
    %4858 = vst.msk [vmem:[#allocation5 + $0x28] sm:$0x3] %vm2574, %v4856
    %v4859 = vld [vmem:[#allocation4 + $0x51] sm:$0x1]
    %v4860 = vld [vmem:[#allocation4 + $0xa9] sm:$0x1]
    %v4864 = vunpack.c.l.s4 1983009808
    %v4865 = vunpack.c.0.s8 %v4864
    %v4866 = vlaneseq
    %v4867 = vshrl.u32 %v4866, 7
    %v4868 = vsub.s32 %v4865, %v4867
    %v4869 = vrot.slane %v4859, %v4868
    %v4871 = vunpack.c.l.s4 1983009808
    %v4872 = vunpack.c.0.s8 %v4871
    %v4873 = vlaneseq
    %v4874 = vshrl.u32 %v4873, 7
    %v4875 = vsub.s32 %v4872, %v4874
    %v4876 = vrot.slane %v4860, %v4875
    %v4877 = vsel %vm2560, %v4869, %v4869
    %v4878 = vsel %vm2562, %v4869, %v4877
    %v4879 = vrot.slane %v4876, 7
    %v4880 = vsel %vm2565, %v4879, %v4878
    %v4881 = vsel %vm2567, %v4879, %v4880
    %v4882 = vsel %vm2569, %v4879, %v4881
    %v4883 = vsel %vm2571, %v4879, %v4882
    %4884 = vrot.lane.b32.xlu0 %v4883, 32
    %v4885 = vpop.permute.xlu0 %4884
    %4887 = vst.msk [vmem:[#allocation5 + $0x28] sm:$0x3] %vm2604, %v4885
    %v4888 = vld [vmem:[#allocation4 + $0x52] sm:$0x1]
    %v4889 = vld [vmem:[#allocation4 + $0xaa] sm:$0x1]
    %v4893 = vunpack.c.l.s4 1983009808
    %v4894 = vunpack.c.0.s8 %v4893
    %v4895 = vlaneseq
    %v4896 = vshrl.u32 %v4895, 7
    %v4897 = vsub.s32 %v4894, %v4896
    %v4898 = vrot.slane %v4888, %v4897
    %v4900 = vunpack.c.l.s4 1983009808
    %v4901 = vunpack.c.0.s8 %v4900
    %v4902 = vlaneseq
    %v4903 = vshrl.u32 %v4902, 7
    %v4904 = vsub.s32 %v4901, %v4903
    %v4905 = vrot.slane %v4889, %v4904
    %v4906 = vsel %vm2560, %v4898, %v4898
    %v4907 = vsel %vm2562, %v4898, %v4906
    %v4908 = vrot.slane %v4905, 7
    %v4909 = vsel %vm2565, %v4908, %v4907
    %v4910 = vsel %vm2567, %v4908, %v4909
    %v4911 = vsel %vm2569, %v4908, %v4910
    %v4912 = vsel %vm2571, %v4908, %v4911
    %4913 = vrot.lane.b32.xlu0 %v4912, 64
    %v4914 = vpop.permute.xlu0 %4913
    %4916 = vst.msk [vmem:[#allocation5 + $0x28] sm:$0x3] %vm2634, %v4914
    %v4917 = vld [vmem:[#allocation4 + $0x53] sm:$0x1]
    %v4918 = vld [vmem:[#allocation4 + $0xab] sm:$0x1]
    %v4922 = vunpack.c.l.s4 1983009808
    %v4923 = vunpack.c.0.s8 %v4922
    %v4924 = vlaneseq
    %v4925 = vshrl.u32 %v4924, 7
    %v4926 = vsub.s32 %v4923, %v4925
    %v4927 = vrot.slane %v4917, %v4926
    %v4929 = vunpack.c.l.s4 1983009808
    %v4930 = vunpack.c.0.s8 %v4929
    %v4931 = vlaneseq
    %v4932 = vshrl.u32 %v4931, 7
    %v4933 = vsub.s32 %v4930, %v4932
    %v4934 = vrot.slane %v4918, %v4933
    %v4935 = vsel %vm2560, %v4927, %v4927
    %v4936 = vsel %vm2562, %v4927, %v4935
    %v4937 = vrot.slane %v4934, 7
    %v4938 = vsel %vm2565, %v4937, %v4936
    %v4939 = vsel %vm2567, %v4937, %v4938
    %v4940 = vsel %vm2569, %v4937, %v4939
    %v4941 = vsel %vm2571, %v4937, %v4940
    %4942 = vrot.lane.b32.xlu0 %v4941, 96
    %v4943 = vpop.permute.xlu0 %4942
    %4945 = vst.msk [vmem:[#allocation5 + $0x28] sm:$0x3] %vm2664, %v4943
    %v4946 = vld [vmem:[#allocation4 + $0x54] sm:$0x1]
    %v4947 = vld [vmem:[#allocation4 + $0xac] sm:$0x1]
    %v4951 = vunpack.c.l.s4 1983009808
    %v4952 = vunpack.c.0.s8 %v4951
    %v4953 = vlaneseq
    %v4954 = vshrl.u32 %v4953, 7
    %v4955 = vsub.s32 %v4952, %v4954
    %v4956 = vrot.slane %v4946, %v4955
    %v4958 = vunpack.c.l.s4 1983009808
    %v4959 = vunpack.c.0.s8 %v4958
    %v4960 = vlaneseq
    %v4961 = vshrl.u32 %v4960, 7
    %v4962 = vsub.s32 %v4959, %v4961
    %v4963 = vrot.slane %v4947, %v4962
    %v4964 = vsel %vm2560, %v4956, %v4956
    %v4965 = vsel %vm2562, %v4956, %v4964
    %v4966 = vrot.slane %v4963, 7
    %v4967 = vsel %vm2565, %v4966, %v4965
    %v4968 = vsel %vm2567, %v4966, %v4967
    %v4969 = vsel %vm2569, %v4966, %v4968
    %v4970 = vsel %vm2571, %v4966, %v4969
    %4972 = vst.msk [vmem:[#allocation5 + $0x2a] sm:$0x3] %vm2574, %v4970
    %v4973 = vld [vmem:[#allocation4 + $0x55] sm:$0x1]
    %v4974 = vld [vmem:[#allocation4 + $0xad] sm:$0x1]
    %v4978 = vunpack.c.l.s4 1983009808
    %v4979 = vunpack.c.0.s8 %v4978
    %v4980 = vlaneseq
    %v4981 = vshrl.u32 %v4980, 7
    %v4982 = vsub.s32 %v4979, %v4981
    %v4983 = vrot.slane %v4973, %v4982
    %v4985 = vunpack.c.l.s4 1983009808
    %v4986 = vunpack.c.0.s8 %v4985
    %v4987 = vlaneseq
    %v4988 = vshrl.u32 %v4987, 7
    %v4989 = vsub.s32 %v4986, %v4988
    %v4990 = vrot.slane %v4974, %v4989
    %v4991 = vsel %vm2560, %v4983, %v4983
    %v4992 = vsel %vm2562, %v4983, %v4991
    %v4993 = vrot.slane %v4990, 7
    %v4994 = vsel %vm2565, %v4993, %v4992
    %v4995 = vsel %vm2567, %v4993, %v4994
    %v4996 = vsel %vm2569, %v4993, %v4995
    %v4997 = vsel %vm2571, %v4993, %v4996
    %4998 = vrot.lane.b32.xlu0 %v4997, 32
    %v4999 = vpop.permute.xlu0 %4998
    %5001 = vst.msk [vmem:[#allocation5 + $0x2a] sm:$0x3] %vm2604, %v4999
    %v5002 = vld [vmem:[#allocation4 + $0x56] sm:$0x1]
    %v5003 = vld [vmem:[#allocation4 + $0xae] sm:$0x1]
    %v5007 = vunpack.c.l.s4 1983009808
    %v5008 = vunpack.c.0.s8 %v5007
    %v5009 = vlaneseq
    %v5010 = vshrl.u32 %v5009, 7
    %v5011 = vsub.s32 %v5008, %v5010
    %v5012 = vrot.slane %v5002, %v5011
    %v5014 = vunpack.c.l.s4 1983009808
    %v5015 = vunpack.c.0.s8 %v5014
    %v5016 = vlaneseq
    %v5017 = vshrl.u32 %v5016, 7
    %v5018 = vsub.s32 %v5015, %v5017
    %v5019 = vrot.slane %v5003, %v5018
    %v5020 = vsel %vm2560, %v5012, %v5012
    %v5021 = vsel %vm2562, %v5012, %v5020
    %v5022 = vrot.slane %v5019, 7
    %v5023 = vsel %vm2565, %v5022, %v5021
    %v5024 = vsel %vm2567, %v5022, %v5023
    %v5025 = vsel %vm2569, %v5022, %v5024
    %v5026 = vsel %vm2571, %v5022, %v5025
    %5027 = vrot.lane.b32.xlu0 %v5026, 64
    %v5028 = vpop.permute.xlu0 %5027
    %5030 = vst.msk [vmem:[#allocation5 + $0x2a] sm:$0x3] %vm2634, %v5028
    %v5031 = vld [vmem:[#allocation4 + $0x57] sm:$0x1]
    %v5032 = vld [vmem:[#allocation4 + $0xaf] sm:$0x1]
    %v5036 = vunpack.c.l.s4 1983009808
    %v5037 = vunpack.c.0.s8 %v5036
    %v5038 = vlaneseq
    %v5039 = vshrl.u32 %v5038, 7
    %v5040 = vsub.s32 %v5037, %v5039
    %v5041 = vrot.slane %v5031, %v5040
    %v5043 = vunpack.c.l.s4 1983009808
    %v5044 = vunpack.c.0.s8 %v5043
    %v5045 = vlaneseq
    %v5046 = vshrl.u32 %v5045, 7
    %v5047 = vsub.s32 %v5044, %v5046
    %v5048 = vrot.slane %v5032, %v5047
    %v5049 = vsel %vm2560, %v5041, %v5041
    %v5050 = vsel %vm2562, %v5041, %v5049
    %v5051 = vrot.slane %v5048, 7
    %v5052 = vsel %vm2565, %v5051, %v5050
    %v5053 = vsel %vm2567, %v5051, %v5052
    %v5054 = vsel %vm2569, %v5051, %v5053
    %v5055 = vsel %vm2571, %v5051, %v5054
    %5056 = vrot.lane.b32.xlu0 %v5055, 96
    %v5057 = vpop.permute.xlu0 %5056
    %5059 = vst.msk [vmem:[#allocation5 + $0x2a] sm:$0x3] %vm2664, %v5057
    %v5060 = vld [vmem:[#allocation5] sm:$0xff]
    %v5061 = vld [vmem:[#allocation5 + $0x8] sm:$0xff]
    %v5062 = vld [vmem:[#allocation5 + $0x10] sm:$0xff]
    %v5063 = vld [vmem:[#allocation5 + $0x18] sm:$0xff]
    %v5064 = vld [vmem:[#allocation5 + $0x20] sm:$0xff]
    %v5065 = vld [vmem:[#allocation5 + $0x28] sm:$0xf]
    %v5066 = vld [vmem:[#allocation15] sm:$0xff]
    %v5067 = vld [vmem:[#allocation15 + $0x8] sm:$0xff]
    %v5068 = vld [vmem:[#allocation15 + $0x10] sm:$0xff]
    %v5069 = vld [vmem:[#allocation15 + $0x18] sm:$0xff]
    %v5070 = vld [vmem:[#allocation15 + $0x20] sm:$0xff]
    %v5071 = vld [vmem:[#allocation15 + $0x28] sm:$0xff]
    %v5072 = vld [vmem:[#allocation15 + $0x30] sm:$0xff]
    %v5073 = vld [vmem:[#allocation15 + $0x38] sm:$0xff]
    %v5074 = vld [vmem:[#allocation15 + $0x40] sm:$0xff]
    %v5075 = vld [vmem:[#allocation15 + $0x48] sm:$0xff]
    %v5076 = vld [vmem:[#allocation15 + $0x50] sm:$0xff]
    %v5077 = vld [vmem:[#allocation15 + $0x58] sm:$0xff]
    %v5078 = vld [vmem:[#allocation15 + $0x60] sm:$0xff]
    %v5079 = vld [vmem:[#allocation15 + $0x68] sm:$0xff]
    %v5080 = vld [vmem:[#allocation15 + $0x70] sm:$0xff]
    %v5081 = vld [vmem:[#allocation15 + $0x78] sm:$0xff]
    %v5082 = vld [vmem:[#allocation15 + $0x80] sm:$0xff]
    %v5083 = vld [vmem:[#allocation15 + $0x88] sm:$0xff]
    %v5084 = vld [vmem:[#allocation15 + $0x90] sm:$0xff]
    %v5085 = vld [vmem:[#allocation15 + $0x98] sm:$0xff]
    %v5086 = vld [vmem:[#allocation15 + $0xa0] sm:$0xff]
    %v5087 = vld [vmem:[#allocation15 + $0xa8] sm:$0xff]
    %v5088 = vld [vmem:[#allocation15 + $0xb0] sm:$0xff]
    %v5089 = vld [vmem:[#allocation15 + $0xb8] sm:$0xff]
    %v5090 = vld [vmem:[#allocation15 + $0xc0] sm:$0xff]
    %v5091 = vld [vmem:[#allocation15 + $0xc8] sm:$0xff]
    %v5092 = vld [vmem:[#allocation15 + $0xd0] sm:$0xff]
    %v5093 = vld [vmem:[#allocation15 + $0xd8] sm:$0xff]
    %v5094 = vld [vmem:[#allocation15 + $0xe0] sm:$0xff]
    %v5095 = vld [vmem:[#allocation15 + $0xe8] sm:$0xff]
    %v5096 = vld [vmem:[#allocation15 + $0xf0] sm:$0xff]
    %v5097 = vld [vmem:[#allocation15 + $0xf8] sm:$0xff]
    %v5098 = vld [vmem:[#allocation15 + $0x100] sm:$0xff]
    %v5099 = vld [vmem:[#allocation15 + $0x108] sm:$0xff]
    %v5100 = vld [vmem:[#allocation15 + $0x110] sm:$0xff]
    %v5101 = vld [vmem:[#allocation15 + $0x118] sm:$0xff]
    %v5102 = vld [vmem:[#allocation15 + $0x120] sm:$0xff]
    %v5103 = vld [vmem:[#allocation15 + $0x128] sm:$0xff]
    %v5104 = vld [vmem:[#allocation15 + $0x130] sm:$0xff]
    %v5105 = vld [vmem:[#allocation15 + $0x138] sm:$0xff]
    %v5106 = vld [vmem:[#allocation15 + $0x140] sm:$0xff]
    %v5107 = vld [vmem:[#allocation15 + $0x148] sm:$0xff]
    %v5108 = vld [vmem:[#allocation15 + $0x150] sm:$0xff]
    %v5109 = vld [vmem:[#allocation15 + $0x158] sm:$0xff]
    %v5110 = vld [vmem:[#allocation15 + $0x160] sm:$0xff]
    %v5111 = vld [vmem:[#allocation15 + $0x168] sm:$0xff]
    %v5112 = vld [vmem:[#allocation15 + $0x170] sm:$0xff]
    %v5113 = vld [vmem:[#allocation15 + $0x178] sm:$0xff]
    %v5114 = vld [vmem:[#allocation15 + $0x180] sm:$0xff]
    %v5115 = vld [vmem:[#allocation15 + $0x188] sm:$0xff]
    %v5116 = vld [vmem:[#allocation15 + $0x190] sm:$0xff]
    %v5117 = vld [vmem:[#allocation15 + $0x198] sm:$0xff]
    %v5118 = vld [vmem:[#allocation15 + $0x1a0] sm:$0xff]
    %v5119 = vld [vmem:[#allocation15 + $0x1a8] sm:$0xff]
    %v5120 = vld [vmem:[#allocation15 + $0x1b0] sm:$0xff]
    %v5121 = vld [vmem:[#allocation15 + $0x1b8] sm:$0xff]
    %v5122 = vld [vmem:[#allocation15 + $0x1c0] sm:$0xff]
    %v5123 = vld [vmem:[#allocation15 + $0x1c8] sm:$0xff]
    %v5124 = vld [vmem:[#allocation15 + $0x1d0] sm:$0xff]
    %v5125 = vld [vmem:[#allocation15 + $0x1d8] sm:$0xff]
    %v5126 = vld [vmem:[#allocation15 + $0x1e0] sm:$0xff]
    %v5127 = vld [vmem:[#allocation15 + $0x1e8] sm:$0xff]
    %v5128 = vld [vmem:[#allocation15 + $0x1f0] sm:$0xff]
    %v5129 = vld [vmem:[#allocation15 + $0x1f8] sm:$0xff]
    %v5130 = vld [vmem:[#allocation15 + $0x200] sm:$0xff]
    %v5131 = vld [vmem:[#allocation15 + $0x208] sm:$0xff]
    %v5132 = vld [vmem:[#allocation15 + $0x210] sm:$0xff]
    %v5133 = vld [vmem:[#allocation15 + $0x218] sm:$0xff]
    %v5134 = vld [vmem:[#allocation15 + $0x220] sm:$0xff]
    %v5135 = vld [vmem:[#allocation15 + $0x228] sm:$0xff]
    %v5136 = vld [vmem:[#allocation15 + $0x230] sm:$0xff]
    %v5137 = vld [vmem:[#allocation15 + $0x238] sm:$0xff]
    %v5138 = vld [vmem:[#allocation15 + $0x240] sm:$0xff]
    %v5139 = vld [vmem:[#allocation15 + $0x248] sm:$0xff]
    %v5140 = vld [vmem:[#allocation15 + $0x250] sm:$0xff]
    %v5141 = vld [vmem:[#allocation15 + $0x258] sm:$0xff]
    %v5142 = vld [vmem:[#allocation15 + $0x260] sm:$0xff]
    %v5143 = vld [vmem:[#allocation15 + $0x268] sm:$0xff]
    %v5144 = vld [vmem:[#allocation15 + $0x270] sm:$0xff]
    %v5145 = vld [vmem:[#allocation15 + $0x278] sm:$0xff]
    %v5146 = vld [vmem:[#allocation15 + $0x280] sm:$0xff]
    %v5147 = vld [vmem:[#allocation15 + $0x288] sm:$0xff]
    %v5148 = vld [vmem:[#allocation15 + $0x290] sm:$0xff]
    %v5149 = vld [vmem:[#allocation15 + $0x298] sm:$0xff]
    %v5150 = vld [vmem:[#allocation15 + $0x2a0] sm:$0xff]
    %v5151 = vld [vmem:[#allocation15 + $0x2a8] sm:$0xff]
    %v5152 = vld [vmem:[#allocation15 + $0x2b0] sm:$0xff]
    %v5153 = vld [vmem:[#allocation15 + $0x2b8] sm:$0xff]
    %v5154 = vld [vmem:[#allocation15 + $0x2c0] sm:$0xff]
    %v5155 = vld [vmem:[#allocation15 + $0x2c8] sm:$0xff]
    %v5156 = vld [vmem:[#allocation15 + $0x2d0] sm:$0xff]
    %v5157 = vld [vmem:[#allocation15 + $0x2d8] sm:$0xff]
    %v5158 = vld [vmem:[#allocation15 + $0x2e0] sm:$0xff]
    %v5159 = vld [vmem:[#allocation15 + $0x2e8] sm:$0xff]
    %v5160 = vld [vmem:[#allocation15 + $0x2f0] sm:$0xff]
    %v5161 = vld [vmem:[#allocation15 + $0x2f8] sm:$0xff]
    %v5162 = vld [vmem:[#allocation15 + $0x300] sm:$0xff]
    %v5163 = vld [vmem:[#allocation15 + $0x308] sm:$0xff]
    %v5164 = vld [vmem:[#allocation15 + $0x310] sm:$0xff]
    %v5165 = vld [vmem:[#allocation15 + $0x318] sm:$0xff]
    %v5166 = vld [vmem:[#allocation15 + $0x320] sm:$0xff]
    %v5167 = vld [vmem:[#allocation15 + $0x328] sm:$0xff]
    %v5168 = vld [vmem:[#allocation15 + $0x330] sm:$0xff]
    %v5169 = vld [vmem:[#allocation15 + $0x338] sm:$0xff]
    %v5170 = vld [vmem:[#allocation15 + $0x340] sm:$0xff]
    %v5171 = vld [vmem:[#allocation15 + $0x348] sm:$0xff]
    %v5172 = vld [vmem:[#allocation15 + $0x350] sm:$0xff]
    %v5173 = vld [vmem:[#allocation15 + $0x358] sm:$0xff]
    %v5174 = vld [vmem:[#allocation15 + $0x360] sm:$0xff]
    %v5175 = vld [vmem:[#allocation15 + $0x368] sm:$0xff]
    %v5176 = vld [vmem:[#allocation15 + $0x370] sm:$0xff]
    %v5177 = vld [vmem:[#allocation15 + $0x378] sm:$0xff]
    %v5178 = vld [vmem:[#allocation15 + $0x380] sm:$0xff]
    %v5179 = vld [vmem:[#allocation15 + $0x388] sm:$0xff]
    %v5180 = vld [vmem:[#allocation15 + $0x390] sm:$0xff]
    %v5181 = vld [vmem:[#allocation15 + $0x398] sm:$0xff]
    %v5182 = vld [vmem:[#allocation15 + $0x3a0] sm:$0xff]
    %v5183 = vld [vmem:[#allocation15 + $0x3a8] sm:$0xff]
    %v5184 = vld [vmem:[#allocation15 + $0x3b0] sm:$0xff]
    %v5185 = vld [vmem:[#allocation15 + $0x3b8] sm:$0xff]
    %v5186 = vld [vmem:[#allocation15 + $0x3c0] sm:$0xff]
    %v5187 = vld [vmem:[#allocation15 + $0x3c8] sm:$0xff]
    %v5188 = vld [vmem:[#allocation15 + $0x3d0] sm:$0xff]
    %v5189 = vld [vmem:[#allocation15 + $0x3d8] sm:$0xff]
    %v5190 = vld [vmem:[#allocation15 + $0x3e0] sm:$0xff]
    %v5191 = vld [vmem:[#allocation15 + $0x3e8] sm:$0xff]
    %v5192 = vld [vmem:[#allocation15 + $0x3f0] sm:$0xff]
    %v5193 = vld [vmem:[#allocation15 + $0x3f8] sm:$0xff]
    %v5194 = vld [vmem:[#allocation15 + $0x400] sm:$0xff]
    %v5195 = vld [vmem:[#allocation15 + $0x408] sm:$0xff]
    %v5196 = vld [vmem:[#allocation15 + $0x410] sm:$0xff]
    %v5197 = vld [vmem:[#allocation15 + $0x418] sm:$0xff]
    %v5198 = vld [vmem:[#allocation15 + $0x420] sm:$0xff]
    %v5199 = vld [vmem:[#allocation15 + $0x428] sm:$0xff]
    %v5200 = vld [vmem:[#allocation15 + $0x430] sm:$0xff]
    %v5201 = vld [vmem:[#allocation15 + $0x438] sm:$0xff]
    %v5202 = vld [vmem:[#allocation15 + $0x440] sm:$0xff]
    %v5203 = vld [vmem:[#allocation15 + $0x448] sm:$0xff]
    %v5204 = vld [vmem:[#allocation15 + $0x450] sm:$0xff]
    %v5205 = vld [vmem:[#allocation15 + $0x458] sm:$0xff]
    %v5206 = vld [vmem:[#allocation15 + $0x460] sm:$0xff]
    %v5207 = vld [vmem:[#allocation15 + $0x468] sm:$0xff]
    %v5208 = vld [vmem:[#allocation15 + $0x470] sm:$0xff]
    %v5209 = vld [vmem:[#allocation15 + $0x478] sm:$0xff]
    %v5210 = vld [vmem:[#allocation15 + $0x480] sm:$0xff]
    %v5211 = vld [vmem:[#allocation15 + $0x488] sm:$0xff]
    %v5212 = vld [vmem:[#allocation15 + $0x490] sm:$0xff]
    %v5213 = vld [vmem:[#allocation15 + $0x498] sm:$0xff]
    %v5214 = vld [vmem:[#allocation15 + $0x4a0] sm:$0xff]
    %v5215 = vld [vmem:[#allocation15 + $0x4a8] sm:$0xff]
    %v5216 = vld [vmem:[#allocation15 + $0x4b0] sm:$0xff]
    %v5217 = vld [vmem:[#allocation15 + $0x4b8] sm:$0xff]
    %v5218 = vld [vmem:[#allocation15 + $0x4c0] sm:$0xff]
    %v5219 = vld [vmem:[#allocation15 + $0x4c8] sm:$0xff]
    %v5220 = vld [vmem:[#allocation15 + $0x4d0] sm:$0xff]
    %v5221 = vld [vmem:[#allocation15 + $0x4d8] sm:$0xff]
    %v5222 = vld [vmem:[#allocation15 + $0x4e0] sm:$0xff]
    %v5223 = vld [vmem:[#allocation15 + $0x4e8] sm:$0xff]
    %v5224 = vld [vmem:[#allocation15 + $0x4f0] sm:$0xff]
    %v5225 = vld [vmem:[#allocation15 + $0x4f8] sm:$0xff]
    %v5226 = vld [vmem:[#allocation15 + $0x500] sm:$0xff]
    %v5227 = vld [vmem:[#allocation15 + $0x508] sm:$0xff]
    %v5228 = vld [vmem:[#allocation15 + $0x510] sm:$0xff]
    %v5229 = vld [vmem:[#allocation15 + $0x518] sm:$0xff]
    %v5230 = vld [vmem:[#allocation15 + $0x520] sm:$0xff]
    %v5231 = vld [vmem:[#allocation15 + $0x528] sm:$0xff]
    %v5232 = vld [vmem:[#allocation15 + $0x530] sm:$0xff]
    %v5233 = vld [vmem:[#allocation15 + $0x538] sm:$0xff]
    %v5234 = vld [vmem:[#allocation15 + $0x540] sm:$0xff]
    %v5235 = vld [vmem:[#allocation15 + $0x548] sm:$0xff]
    %v5236 = vld [vmem:[#allocation15 + $0x550] sm:$0xff]
    %v5237 = vld [vmem:[#allocation15 + $0x558] sm:$0xff]
    %v5238 = vld [vmem:[#allocation15 + $0x560] sm:$0xff]
    %v5239 = vld [vmem:[#allocation15 + $0x568] sm:$0xff]
    %v5240 = vld [vmem:[#allocation15 + $0x570] sm:$0xff]
    %v5241 = vld [vmem:[#allocation15 + $0x578] sm:$0xff]
    %v5242 = vld [vmem:[#allocation15 + $0x580] sm:$0xff]
    %v5243 = vld [vmem:[#allocation15 + $0x588] sm:$0xff]
    %v5244 = vld [vmem:[#allocation15 + $0x590] sm:$0xff]
    %v5245 = vld [vmem:[#allocation15 + $0x598] sm:$0xff]
    %v5246 = vld [vmem:[#allocation15 + $0x5a0] sm:$0xff]
    %v5247 = vld [vmem:[#allocation15 + $0x5a8] sm:$0xff]
    %v5248 = vld [vmem:[#allocation15 + $0x5b0] sm:$0xff]
    %v5249 = vld [vmem:[#allocation15 + $0x5b8] sm:$0xff]
    %v5250 = vld [vmem:[#allocation15 + $0x5c0] sm:$0xff]
    %v5251 = vld [vmem:[#allocation15 + $0x5c8] sm:$0xff]
    %v5252 = vld [vmem:[#allocation15 + $0x5d0] sm:$0xff]
    %v5253 = vld [vmem:[#allocation15 + $0x5d8] sm:$0xff]
    %v5254 = vld [vmem:[#allocation15 + $0x5e0] sm:$0xff]
    %v5255 = vld [vmem:[#allocation15 + $0x5e8] sm:$0xff]
    %v5256 = vld [vmem:[#allocation15 + $0x5f0] sm:$0xff]
    %v5257 = vld [vmem:[#allocation15 + $0x5f8] sm:$0xff]
    %v5258 = vld [vmem:[#allocation15 + $0x600] sm:$0xff]
    %v5259 = vld [vmem:[#allocation15 + $0x608] sm:$0xff]
    %v5260 = vld [vmem:[#allocation15 + $0x610] sm:$0xff]
    %v5261 = vld [vmem:[#allocation15 + $0x618] sm:$0xff]
    %v5262 = vld [vmem:[#allocation15 + $0x620] sm:$0xff]
    %v5263 = vld [vmem:[#allocation15 + $0x628] sm:$0xff]
    %v5264 = vld [vmem:[#allocation15 + $0x630] sm:$0xff]
    %v5265 = vld [vmem:[#allocation15 + $0x638] sm:$0xff]
    %v5266 = vld [vmem:[#allocation15 + $0x640] sm:$0xff]
    %v5267 = vld [vmem:[#allocation15 + $0x648] sm:$0xff]
    %v5268 = vld [vmem:[#allocation15 + $0x650] sm:$0xff]
    %v5269 = vld [vmem:[#allocation15 + $0x658] sm:$0xff]
    %v5270 = vld [vmem:[#allocation15 + $0x660] sm:$0xff]
    %v5271 = vld [vmem:[#allocation15 + $0x668] sm:$0xff]
    %v5272 = vld [vmem:[#allocation15 + $0x670] sm:$0xff]
    %v5273 = vld [vmem:[#allocation15 + $0x678] sm:$0xff]
    %v5274 = vld [vmem:[#allocation15 + $0x680] sm:$0xff]
    %v5275 = vld [vmem:[#allocation15 + $0x688] sm:$0xff]
    %v5276 = vld [vmem:[#allocation15 + $0x690] sm:$0xff]
    %v5277 = vld [vmem:[#allocation15 + $0x698] sm:$0xff]
    %v5278 = vld [vmem:[#allocation15 + $0x6a0] sm:$0xff]
    %v5279 = vld [vmem:[#allocation15 + $0x6a8] sm:$0xff]
    %v5280 = vld [vmem:[#allocation15 + $0x6b0] sm:$0xff]
    %v5281 = vld [vmem:[#allocation15 + $0x6b8] sm:$0xff]
    %v5282 = vld [vmem:[#allocation15 + $0x6c0] sm:$0xff]
    %v5283 = vld [vmem:[#allocation15 + $0x6c8] sm:$0xff]
    %v5284 = vld [vmem:[#allocation15 + $0x6d0] sm:$0xff]
    %v5285 = vld [vmem:[#allocation15 + $0x6d8] sm:$0xff]
    %v5286 = vld [vmem:[#allocation15 + $0x6e0] sm:$0xff]
    %v5287 = vld [vmem:[#allocation15 + $0x6e8] sm:$0xff]
    %v5288 = vld [vmem:[#allocation15 + $0x6f0] sm:$0xff]
    %v5289 = vld [vmem:[#allocation15 + $0x6f8] sm:$0xff]
    %v5290 = vld [vmem:[#allocation15 + $0x700] sm:$0xff]
    %v5291 = vld [vmem:[#allocation15 + $0x708] sm:$0xff]
    %v5292 = vld [vmem:[#allocation15 + $0x710] sm:$0xff]
    %v5293 = vld [vmem:[#allocation15 + $0x718] sm:$0xff]
    %v5294 = vld [vmem:[#allocation15 + $0x720] sm:$0xff]
    %v5295 = vld [vmem:[#allocation15 + $0x728] sm:$0xff]
    %v5296 = vld [vmem:[#allocation15 + $0x730] sm:$0xff]
    %v5297 = vld [vmem:[#allocation15 + $0x738] sm:$0xff]
    %v5298 = vld [vmem:[#allocation15 + $0x740] sm:$0xff]
    %v5299 = vld [vmem:[#allocation15 + $0x748] sm:$0xff]
    %v5300 = vld [vmem:[#allocation15 + $0x750] sm:$0xff]
    %v5301 = vld [vmem:[#allocation15 + $0x758] sm:$0xff]
    %v5302 = vld [vmem:[#allocation15 + $0x760] sm:$0xff]
    %v5303 = vld [vmem:[#allocation15 + $0x768] sm:$0xff]
    %v5304 = vld [vmem:[#allocation15 + $0x770] sm:$0xff]
    %v5305 = vld [vmem:[#allocation15 + $0x778] sm:$0xff]
    %v5306 = vld [vmem:[#allocation15 + $0x780] sm:$0xff]
    %v5307 = vld [vmem:[#allocation15 + $0x788] sm:$0xff]
    %v5308 = vld [vmem:[#allocation15 + $0x790] sm:$0xff]
    %v5309 = vld [vmem:[#allocation15 + $0x798] sm:$0xff]
    %v5310 = vld [vmem:[#allocation15 + $0x7a0] sm:$0xff]
    %v5311 = vld [vmem:[#allocation15 + $0x7a8] sm:$0xff]
    %v5312 = vld [vmem:[#allocation15 + $0x7b0] sm:$0xff]
    %v5313 = vld [vmem:[#allocation15 + $0x7b8] sm:$0xff]
    %v5314 = vld [vmem:[#allocation15 + $0x7c0] sm:$0xff]
    %v5315 = vld [vmem:[#allocation15 + $0x7c8] sm:$0xff]
    %v5316 = vld [vmem:[#allocation15 + $0x7d0] sm:$0xff]
    %v5317 = vld [vmem:[#allocation15 + $0x7d8] sm:$0xff]
    %v5318 = vld [vmem:[#allocation15 + $0x7e0] sm:$0xff]
    %v5319 = vld [vmem:[#allocation15 + $0x7e8] sm:$0xff]
    %v5320 = vld [vmem:[#allocation15 + $0x7f0] sm:$0xff]
    %v5321 = vld [vmem:[#allocation15 + $0x7f8] sm:$0xff]
    %v5322 = vld [vmem:[#allocation15 + $0x800] sm:$0xff]
    %v5323 = vld [vmem:[#allocation15 + $0x808] sm:$0xff]
    %v5324 = vld [vmem:[#allocation15 + $0x810] sm:$0xff]
    %v5325 = vld [vmem:[#allocation15 + $0x818] sm:$0xff]
    %v5326 = vld [vmem:[#allocation15 + $0x820] sm:$0xff]
    %v5327 = vld [vmem:[#allocation15 + $0x828] sm:$0xff]
    %v5328 = vld [vmem:[#allocation15 + $0x830] sm:$0xff]
    %v5329 = vld [vmem:[#allocation15 + $0x838] sm:$0xff]
    %v5330 = vld [vmem:[#allocation15 + $0x840] sm:$0xff]
    %v5331 = vld [vmem:[#allocation15 + $0x848] sm:$0xff]
    %v5332 = vld [vmem:[#allocation15 + $0x850] sm:$0xff]
    %v5333 = vld [vmem:[#allocation15 + $0x858] sm:$0xff]
    %v5334 = vld [vmem:[#allocation15 + $0x860] sm:$0xff]
    %v5335 = vld [vmem:[#allocation15 + $0x868] sm:$0xff]
    %v5336 = vld [vmem:[#allocation15 + $0x870] sm:$0xff]
    %v5337 = vld [vmem:[#allocation15 + $0x878] sm:$0xff]
    %v5338 = vld [vmem:[#allocation15 + $0x880] sm:$0xff]
    %v5339 = vld [vmem:[#allocation15 + $0x888] sm:$0xff]
    %v5340 = vld [vmem:[#allocation15 + $0x890] sm:$0xff]
    %v5341 = vld [vmem:[#allocation15 + $0x898] sm:$0xff]
    %v5342 = vld [vmem:[#allocation15 + $0x8a0] sm:$0xff]
    %v5343 = vld [vmem:[#allocation15 + $0x8a8] sm:$0xff]
    %v5344 = vld [vmem:[#allocation15 + $0x8b0] sm:$0xff]
    %v5345 = vld [vmem:[#allocation15 + $0x8b8] sm:$0xff]
    %v5346 = vld [vmem:[#allocation15 + $0x8c0] sm:$0xff]
    %v5347 = vld [vmem:[#allocation15 + $0x8c8] sm:$0xff]
    %v5348 = vld [vmem:[#allocation15 + $0x8d0] sm:$0xff]
    %v5349 = vld [vmem:[#allocation15 + $0x8d8] sm:$0xff]
    %v5350 = vld [vmem:[#allocation15 + $0x8e0] sm:$0xff]
    %v5351 = vld [vmem:[#allocation15 + $0x8e8] sm:$0xff]
    %v5352 = vld [vmem:[#allocation15 + $0x8f0] sm:$0xff]
    %v5353 = vld [vmem:[#allocation15 + $0x8f8] sm:$0xff]
    %v5354 = vld [vmem:[#allocation15 + $0x900] sm:$0xff]
    %v5355 = vld [vmem:[#allocation15 + $0x908] sm:$0xff]
    %v5356 = vld [vmem:[#allocation15 + $0x910] sm:$0xff]
    %v5357 = vld [vmem:[#allocation15 + $0x918] sm:$0xff]
    %v5358 = vld [vmem:[#allocation15 + $0x920] sm:$0xff]
    %v5359 = vld [vmem:[#allocation15 + $0x928] sm:$0xff]
    %v5360 = vld [vmem:[#allocation15 + $0x930] sm:$0xff]
    %v5361 = vld [vmem:[#allocation15 + $0x938] sm:$0xff]
    %v5362 = vld [vmem:[#allocation15 + $0x940] sm:$0xff]
    %v5363 = vld [vmem:[#allocation15 + $0x948] sm:$0xff]
    %v5364 = vld [vmem:[#allocation15 + $0x950] sm:$0xff]
    %v5365 = vld [vmem:[#allocation15 + $0x958] sm:$0xff]
    %v5366 = vld [vmem:[#allocation15 + $0x960] sm:$0xff]
    %v5367 = vld [vmem:[#allocation15 + $0x968] sm:$0xff]
    %v5368 = vld [vmem:[#allocation15 + $0x970] sm:$0xff]
    %v5369 = vld [vmem:[#allocation15 + $0x978] sm:$0xff]
    %v5370 = vld [vmem:[#allocation15 + $0x980] sm:$0xff]
    %v5371 = vld [vmem:[#allocation15 + $0x988] sm:$0xff]
    %v5372 = vld [vmem:[#allocation15 + $0x990] sm:$0xff]
    %v5373 = vld [vmem:[#allocation15 + $0x998] sm:$0xff]
    %v5374 = vld [vmem:[#allocation15 + $0x9a0] sm:$0xff]
    %v5375 = vld [vmem:[#allocation15 + $0x9a8] sm:$0xff]
    %v5376 = vld [vmem:[#allocation15 + $0x9b0] sm:$0xff]
    %v5377 = vld [vmem:[#allocation15 + $0x9b8] sm:$0xff]
    %v5378 = vld [vmem:[#allocation15 + $0x9c0] sm:$0xff]
    %v5379 = vld [vmem:[#allocation15 + $0x9c8] sm:$0xff]
    %v5380 = vld [vmem:[#allocation15 + $0x9d0] sm:$0xff]
    %v5381 = vld [vmem:[#allocation15 + $0x9d8] sm:$0xff]
    %v5382 = vld [vmem:[#allocation15 + $0x9e0] sm:$0xff]
    %v5383 = vld [vmem:[#allocation15 + $0x9e8] sm:$0xff]
    %v5384 = vld [vmem:[#allocation15 + $0x9f0] sm:$0xff]
    %v5385 = vld [vmem:[#allocation15 + $0x9f8] sm:$0xff]
    %v5386 = vld [vmem:[#allocation15 + $0xa00] sm:$0xff]
    %v5387 = vld [vmem:[#allocation15 + $0xa08] sm:$0xff]
    %v5388 = vld [vmem:[#allocation15 + $0xa10] sm:$0xff]
    %v5389 = vld [vmem:[#allocation15 + $0xa18] sm:$0xff]
    %v5390 = vld [vmem:[#allocation15 + $0xa20] sm:$0xff]
    %v5391 = vld [vmem:[#allocation15 + $0xa28] sm:$0xff]
    %v5392 = vld [vmem:[#allocation15 + $0xa30] sm:$0xff]
    %v5393 = vld [vmem:[#allocation15 + $0xa38] sm:$0xff]
    %v5394 = vld [vmem:[#allocation15 + $0xa40] sm:$0xff]
    %v5395 = vld [vmem:[#allocation15 + $0xa48] sm:$0xff]
    %v5396 = vld [vmem:[#allocation15 + $0xa50] sm:$0xff]
    %v5397 = vld [vmem:[#allocation15 + $0xa58] sm:$0xff]
    %v5398 = vld [vmem:[#allocation15 + $0xa60] sm:$0xff]
    %v5399 = vld [vmem:[#allocation15 + $0xa68] sm:$0xff]
    %v5400 = vld [vmem:[#allocation15 + $0xa70] sm:$0xff]
    %v5401 = vld [vmem:[#allocation15 + $0xa78] sm:$0xff]
    %v5402 = vld [vmem:[#allocation15 + $0xa80] sm:$0xff]
    %v5403 = vld [vmem:[#allocation15 + $0xa88] sm:$0xff]
    %v5404 = vld [vmem:[#allocation15 + $0xa90] sm:$0xff]
    %v5405 = vld [vmem:[#allocation15 + $0xa98] sm:$0xff]
    %v5406 = vld [vmem:[#allocation15 + $0xaa0] sm:$0xff]
    %v5407 = vld [vmem:[#allocation15 + $0xaa8] sm:$0xff]
    %v5408 = vld [vmem:[#allocation15 + $0xab0] sm:$0xff]
    %v5409 = vld [vmem:[#allocation15 + $0xab8] sm:$0xff]
    %v5410 = vld [vmem:[#allocation15 + $0xac0] sm:$0xff]
    %v5411 = vld [vmem:[#allocation15 + $0xac8] sm:$0xff]
    %v5412 = vld [vmem:[#allocation15 + $0xad0] sm:$0xff]
    %v5413 = vld [vmem:[#allocation15 + $0xad8] sm:$0xff]
    %v5414 = vld [vmem:[#allocation15 + $0xae0] sm:$0xff]
    %v5415 = vld [vmem:[#allocation15 + $0xae8] sm:$0xff]
    %v5416 = vld [vmem:[#allocation15 + $0xaf0] sm:$0xff]
    %v5417 = vld [vmem:[#allocation15 + $0xaf8] sm:$0xff]
    %v5418 = vld [vmem:[#allocation15 + $0xb00] sm:$0xff]
    %v5419 = vld [vmem:[#allocation15 + $0xb08] sm:$0xff]
    %v5420 = vld [vmem:[#allocation15 + $0xb10] sm:$0xff]
    %v5421 = vld [vmem:[#allocation15 + $0xb18] sm:$0xff]
    %v5422 = vld [vmem:[#allocation15 + $0xb20] sm:$0xff]
    %v5423 = vld [vmem:[#allocation15 + $0xb28] sm:$0xff]
    %v5424 = vld [vmem:[#allocation15 + $0xb30] sm:$0xff]
    %v5425 = vld [vmem:[#allocation15 + $0xb38] sm:$0xff]
    %v5426 = vld [vmem:[#allocation15 + $0xb40] sm:$0xff]
    %v5427 = vld [vmem:[#allocation15 + $0xb48] sm:$0xff]
    %v5428 = vld [vmem:[#allocation15 + $0xb50] sm:$0xff]
    %v5429 = vld [vmem:[#allocation15 + $0xb58] sm:$0xff]
    %v5430 = vld [vmem:[#allocation15 + $0xb60] sm:$0xff]
    %v5431 = vld [vmem:[#allocation15 + $0xb68] sm:$0xff]
    %v5432 = vld [vmem:[#allocation15 + $0xb70] sm:$0xff]
    %v5433 = vld [vmem:[#allocation15 + $0xb78] sm:$0xff]
    %v5434 = vld [vmem:[#allocation15 + $0xb80] sm:$0xff]
    %v5435 = vld [vmem:[#allocation15 + $0xb88] sm:$0xff]
    %v5436 = vld [vmem:[#allocation15 + $0xb90] sm:$0xff]
    %v5437 = vld [vmem:[#allocation15 + $0xb98] sm:$0xff]
    %v5438 = vld [vmem:[#allocation15 + $0xba0] sm:$0xff]
    %v5439 = vld [vmem:[#allocation15 + $0xba8] sm:$0xff]
    %v5440 = vld [vmem:[#allocation15 + $0xbb0] sm:$0xff]
    %v5441 = vld [vmem:[#allocation15 + $0xbb8] sm:$0xff]
    %v5442 = vld [vmem:[#allocation15 + $0xbc0] sm:$0xff]
    %v5443 = vld [vmem:[#allocation15 + $0xbc8] sm:$0xff]
    %v5444 = vld [vmem:[#allocation15 + $0xbd0] sm:$0xff]
    %v5445 = vld [vmem:[#allocation15 + $0xbd8] sm:$0xff]
    %v5446 = vld [vmem:[#allocation15 + $0xbe0] sm:$0xff]
    %v5447 = vld [vmem:[#allocation15 + $0xbe8] sm:$0xff]
    %v5448 = vld [vmem:[#allocation15 + $0xbf0] sm:$0xff]
    %v5449 = vld [vmem:[#allocation15 + $0xbf8] sm:$0xff]
    %v5450 = vld [vmem:[#allocation15 + $0xc00] sm:$0xff]
    %v5451 = vld [vmem:[#allocation15 + $0xc08] sm:$0xff]
    %v5452 = vld [vmem:[#allocation15 + $0xc10] sm:$0xff]
    %v5453 = vld [vmem:[#allocation15 + $0xc18] sm:$0xff]
    %v5454 = vld [vmem:[#allocation15 + $0xc20] sm:$0xff]
    %v5455 = vld [vmem:[#allocation15 + $0xc28] sm:$0xff]
    %v5456 = vld [vmem:[#allocation15 + $0xc30] sm:$0xff]
    %v5457 = vld [vmem:[#allocation15 + $0xc38] sm:$0xff]
    %v5458 = vld [vmem:[#allocation15 + $0xc40] sm:$0xff]
    %v5459 = vld [vmem:[#allocation15 + $0xc48] sm:$0xff]
    %v5460 = vld [vmem:[#allocation15 + $0xc50] sm:$0xff]
    %v5461 = vld [vmem:[#allocation15 + $0xc58] sm:$0xff]
    %v5462 = vld [vmem:[#allocation15 + $0xc60] sm:$0xff]
    %v5463 = vld [vmem:[#allocation15 + $0xc68] sm:$0xff]
    %v5464 = vld [vmem:[#allocation15 + $0xc70] sm:$0xff]
    %v5465 = vld [vmem:[#allocation15 + $0xc78] sm:$0xff]
    %v5466 = vld [vmem:[#allocation15 + $0xc80] sm:$0xff]
    %v5467 = vld [vmem:[#allocation15 + $0xc88] sm:$0xff]
    %v5468 = vld [vmem:[#allocation15 + $0xc90] sm:$0xff]
    %v5469 = vld [vmem:[#allocation15 + $0xc98] sm:$0xff]
    %v5470 = vld [vmem:[#allocation15 + $0xca0] sm:$0xff]
    %v5471 = vld [vmem:[#allocation15 + $0xca8] sm:$0xff]
    %v5472 = vld [vmem:[#allocation15 + $0xcb0] sm:$0xff]
    %v5473 = vld [vmem:[#allocation15 + $0xcb8] sm:$0xff]
    %v5474 = vld [vmem:[#allocation15 + $0xcc0] sm:$0xff]
    %v5475 = vld [vmem:[#allocation15 + $0xcc8] sm:$0xff]
    %v5476 = vld [vmem:[#allocation15 + $0xcd0] sm:$0xff]
    %v5477 = vld [vmem:[#allocation15 + $0xcd8] sm:$0xff]
    %v5478 = vld [vmem:[#allocation15 + $0xce0] sm:$0xff]
    %v5479 = vld [vmem:[#allocation15 + $0xce8] sm:$0xff]
    %v5480 = vld [vmem:[#allocation15 + $0xcf0] sm:$0xff]
    %v5481 = vld [vmem:[#allocation15 + $0xcf8] sm:$0xff]
    %v5482 = vld [vmem:[#allocation15 + $0xd00] sm:$0xff]
    %v5483 = vld [vmem:[#allocation15 + $0xd08] sm:$0xff]
    %v5484 = vld [vmem:[#allocation15 + $0xd10] sm:$0xff]
    %v5485 = vld [vmem:[#allocation15 + $0xd18] sm:$0xff]
    %v5486 = vld [vmem:[#allocation15 + $0xd20] sm:$0xff]
    %v5487 = vld [vmem:[#allocation15 + $0xd28] sm:$0xff]
    %v5488 = vld [vmem:[#allocation15 + $0xd30] sm:$0xff]
    %v5489 = vld [vmem:[#allocation15 + $0xd38] sm:$0xff]
    %v5490 = vld [vmem:[#allocation15 + $0xd40] sm:$0xff]
    %v5491 = vld [vmem:[#allocation15 + $0xd48] sm:$0xff]
    %v5492 = vld [vmem:[#allocation15 + $0xd50] sm:$0xff]
    %v5493 = vld [vmem:[#allocation15 + $0xd58] sm:$0xff]
    %v5494 = vld [vmem:[#allocation15 + $0xd60] sm:$0xff]
    %v5495 = vld [vmem:[#allocation15 + $0xd68] sm:$0xff]
    %v5496 = vld [vmem:[#allocation15 + $0xd70] sm:$0xff]
    %v5497 = vld [vmem:[#allocation15 + $0xd78] sm:$0xff]
    %v5498 = vld [vmem:[#allocation15 + $0xd80] sm:$0xff]
    %v5499 = vld [vmem:[#allocation15 + $0xd88] sm:$0xff]
    %v5500 = vld [vmem:[#allocation15 + $0xd90] sm:$0xff]
    %v5501 = vld [vmem:[#allocation15 + $0xd98] sm:$0xff]
    %v5502 = vld [vmem:[#allocation15 + $0xda0] sm:$0xff]
    %v5503 = vld [vmem:[#allocation15 + $0xda8] sm:$0xff]
    %v5504 = vld [vmem:[#allocation15 + $0xdb0] sm:$0xff]
    %v5505 = vld [vmem:[#allocation15 + $0xdb8] sm:$0xff]
    %v5506 = vld [vmem:[#allocation15 + $0xdc0] sm:$0xff]
    %v5507 = vld [vmem:[#allocation15 + $0xdc8] sm:$0xff]
    %v5508 = vld [vmem:[#allocation15 + $0xdd0] sm:$0xff]
    %v5509 = vld [vmem:[#allocation15 + $0xdd8] sm:$0xff]
    %v5510 = vld [vmem:[#allocation15 + $0xde0] sm:$0xff]
    %v5511 = vld [vmem:[#allocation15 + $0xde8] sm:$0xff]
    %v5512 = vld [vmem:[#allocation15 + $0xdf0] sm:$0xff]
    %v5513 = vld [vmem:[#allocation15 + $0xdf8] sm:$0xff]
    %v5514 = vld [vmem:[#allocation15 + $0xe00] sm:$0xff]
    %v5515 = vld [vmem:[#allocation15 + $0xe08] sm:$0xff]
    %v5516 = vld [vmem:[#allocation15 + $0xe10] sm:$0xff]
    %v5517 = vld [vmem:[#allocation15 + $0xe18] sm:$0xff]
    %v5518 = vld [vmem:[#allocation15 + $0xe20] sm:$0xff]
    %v5519 = vld [vmem:[#allocation15 + $0xe28] sm:$0xff]
    %v5520 = vld [vmem:[#allocation15 + $0xe30] sm:$0xff]
    %v5521 = vld [vmem:[#allocation15 + $0xe38] sm:$0xff]
    %v5522 = vld [vmem:[#allocation15 + $0xe40] sm:$0xff]
    %v5523 = vld [vmem:[#allocation15 + $0xe48] sm:$0xff]
    %v5524 = vld [vmem:[#allocation15 + $0xe50] sm:$0xff]
    %v5525 = vld [vmem:[#allocation15 + $0xe58] sm:$0xff]
    %v5526 = vld [vmem:[#allocation15 + $0xe60] sm:$0xff]
    %v5527 = vld [vmem:[#allocation15 + $0xe68] sm:$0xff]
    %v5528 = vld [vmem:[#allocation15 + $0xe70] sm:$0xff]
    %v5529 = vld [vmem:[#allocation15 + $0xe78] sm:$0xff]
    %v5530 = vld [vmem:[#allocation15 + $0xe80] sm:$0xff]
    %v5531 = vld [vmem:[#allocation15 + $0xe88] sm:$0xff]
    %v5532 = vld [vmem:[#allocation15 + $0xe90] sm:$0xff]
    %v5533 = vld [vmem:[#allocation15 + $0xe98] sm:$0xff]
    %v5534 = vld [vmem:[#allocation15 + $0xea0] sm:$0xff]
    %v5535 = vld [vmem:[#allocation15 + $0xea8] sm:$0xff]
    %v5536 = vld [vmem:[#allocation15 + $0xeb0] sm:$0xff]
    %v5537 = vld [vmem:[#allocation15 + $0xeb8] sm:$0xff]
    %v5538 = vld [vmem:[#allocation15 + $0xec0] sm:$0xff]
    %v5539 = vld [vmem:[#allocation15 + $0xec8] sm:$0xff]
    %v5540 = vld [vmem:[#allocation15 + $0xed0] sm:$0xff]
    %v5541 = vld [vmem:[#allocation15 + $0xed8] sm:$0xff]
    %v5542 = vld [vmem:[#allocation15 + $0xee0] sm:$0xff]
    %v5543 = vld [vmem:[#allocation15 + $0xee8] sm:$0xff]
    %v5544 = vld [vmem:[#allocation15 + $0xef0] sm:$0xff]
    %v5545 = vld [vmem:[#allocation15 + $0xef8] sm:$0xff]
    %v5546 = vld [vmem:[#allocation15 + $0xf00] sm:$0xff]
    %v5547 = vld [vmem:[#allocation15 + $0xf08] sm:$0xff]
    %v5548 = vld [vmem:[#allocation15 + $0xf10] sm:$0xff]
    %v5549 = vld [vmem:[#allocation15 + $0xf18] sm:$0xff]
    %v5550 = vld [vmem:[#allocation15 + $0xf20] sm:$0xff]
    %v5551 = vld [vmem:[#allocation15 + $0xf28] sm:$0xff]
    %v5552 = vld [vmem:[#allocation15 + $0xf30] sm:$0xff]
    %v5553 = vld [vmem:[#allocation15 + $0xf38] sm:$0xff]
    %v5554 = vld [vmem:[#allocation15 + $0xf40] sm:$0xff]
    %v5555 = vld [vmem:[#allocation15 + $0xf48] sm:$0xff]
    %v5556 = vld [vmem:[#allocation15 + $0xf50] sm:$0xff]
    %v5557 = vld [vmem:[#allocation15 + $0xf58] sm:$0xff]
    %v5558 = vld [vmem:[#allocation15 + $0xf60] sm:$0xff]
    %v5559 = vld [vmem:[#allocation15 + $0xf68] sm:$0xff]
    %v5560 = vld [vmem:[#allocation15 + $0xf70] sm:$0xff]
    %v5561 = vld [vmem:[#allocation15 + $0xf78] sm:$0xff]
    %v5562 = vld [vmem:[#allocation15 + $0xf80] sm:$0xff]
    %v5563 = vld [vmem:[#allocation15 + $0xf88] sm:$0xff]
    %v5564 = vld [vmem:[#allocation15 + $0xf90] sm:$0xff]
    %v5565 = vld [vmem:[#allocation15 + $0xf98] sm:$0xff]
    %v5566 = vld [vmem:[#allocation15 + $0xfa0] sm:$0xff]
    %v5567 = vld [vmem:[#allocation15 + $0xfa8] sm:$0xff]
    %v5568 = vld [vmem:[#allocation15 + $0xfb0] sm:$0xff]
    %v5569 = vld [vmem:[#allocation15 + $0xfb8] sm:$0xff]
    %v5570 = vld [vmem:[#allocation15 + $0xfc0] sm:$0xff]
    %v5571 = vld [vmem:[#allocation15 + $0xfc8] sm:$0xff]
    %v5572 = vld [vmem:[#allocation15 + $0xfd0] sm:$0xff]
    %v5573 = vld [vmem:[#allocation15 + $0xfd8] sm:$0xff]
    %v5574 = vld [vmem:[#allocation15 + $0xfe0] sm:$0xff]
    %v5575 = vld [vmem:[#allocation15 + $0xfe8] sm:$0xff]
    %v5576 = vld [vmem:[#allocation15 + $0xff0] sm:$0xff]
    %v5577 = vld [vmem:[#allocation15 + $0xff8] sm:$0xff]
    %v5578 = vld [vmem:[#allocation15 + $0x1000] sm:$0xff]
    %v5579 = vld [vmem:[#allocation15 + $0x1008] sm:$0xff]
    %v5580 = vld [vmem:[#allocation15 + $0x1010] sm:$0xff]
    %v5581 = vld [vmem:[#allocation15 + $0x1018] sm:$0xff]
    %v5582 = vld [vmem:[#allocation15 + $0x1020] sm:$0xff]
    %v5583 = vld [vmem:[#allocation15 + $0x1028] sm:$0xff]
    %v5584 = vld [vmem:[#allocation15 + $0x1030] sm:$0xff]
    %v5585 = vld [vmem:[#allocation15 + $0x1038] sm:$0xff]
    %v5586 = vld [vmem:[#allocation15 + $0x1040] sm:$0xff]
    %v5587 = vld [vmem:[#allocation15 + $0x1048] sm:$0xff]
    %v5588 = vld [vmem:[#allocation15 + $0x1050] sm:$0xff]
    %v5589 = vld [vmem:[#allocation15 + $0x1058] sm:$0xff]
    %v5590 = vld [vmem:[#allocation15 + $0x1060] sm:$0xff]
    %v5591 = vld [vmem:[#allocation15 + $0x1068] sm:$0xff]
    %v5592 = vld [vmem:[#allocation15 + $0x1070] sm:$0xff]
    %v5593 = vld [vmem:[#allocation15 + $0x1078] sm:$0xff]
    %v5594 = vld [vmem:[#allocation15 + $0x1080] sm:$0xff]
    %v5595 = vld [vmem:[#allocation15 + $0x1088] sm:$0xff]
    %v5596 = vld [vmem:[#allocation15 + $0x1090] sm:$0xff]
    %v5597 = vld [vmem:[#allocation15 + $0x1098] sm:$0xff]
    %v5598 = vld [vmem:[#allocation15 + $0x10a0] sm:$0xff]
    %v5599 = vld [vmem:[#allocation15 + $0x10a8] sm:$0xff]
    %v5600 = vld [vmem:[#allocation15 + $0x10b0] sm:$0xff]
    %v5601 = vld [vmem:[#allocation15 + $0x10b8] sm:$0xff]
    %v5602 = vld [vmem:[#allocation15 + $0x10c0] sm:$0xff]
    %v5603 = vld [vmem:[#allocation15 + $0x10c8] sm:$0xff]
    %v5604 = vld [vmem:[#allocation15 + $0x10d0] sm:$0xff]
    %v5605 = vld [vmem:[#allocation15 + $0x10d8] sm:$0xff]
    %v5606 = vld [vmem:[#allocation15 + $0x10e0] sm:$0xff]
    %v5607 = vld [vmem:[#allocation15 + $0x10e8] sm:$0xff]
    %v5608 = vld [vmem:[#allocation15 + $0x10f0] sm:$0xff]
    %v5609 = vld [vmem:[#allocation15 + $0x10f8] sm:$0xff]
    %v5610 = vld [vmem:[#allocation15 + $0x1100] sm:$0xff]
    %v5611 = vld [vmem:[#allocation15 + $0x1108] sm:$0xff]
    %v5612 = vld [vmem:[#allocation15 + $0x1110] sm:$0xff]
    %v5613 = vld [vmem:[#allocation15 + $0x1118] sm:$0xff]
    %v5614 = vld [vmem:[#allocation15 + $0x1120] sm:$0xff]
    %v5615 = vld [vmem:[#allocation15 + $0x1128] sm:$0xff]
    %v5616 = vld [vmem:[#allocation15 + $0x1130] sm:$0xff]
    %v5617 = vld [vmem:[#allocation15 + $0x1138] sm:$0xff]
    %v5618 = vld [vmem:[#allocation15 + $0x1140] sm:$0xff]
    %v5619 = vld [vmem:[#allocation15 + $0x1148] sm:$0xff]
    %v5620 = vld [vmem:[#allocation15 + $0x1150] sm:$0xff]
    %v5621 = vld [vmem:[#allocation15 + $0x1158] sm:$0xff]
    %v5622 = vld [vmem:[#allocation15 + $0x1160] sm:$0xff]
    %v5623 = vld [vmem:[#allocation15 + $0x1168] sm:$0xff]
    %v5624 = vld [vmem:[#allocation15 + $0x1170] sm:$0xff]
    %v5625 = vld [vmem:[#allocation15 + $0x1178] sm:$0xff]
    %v5626 = vld [vmem:[#allocation15 + $0x1180] sm:$0xff]
    %v5627 = vld [vmem:[#allocation15 + $0x1188] sm:$0xff]
    %v5628 = vld [vmem:[#allocation15 + $0x1190] sm:$0xff]
    %v5629 = vld [vmem:[#allocation15 + $0x1198] sm:$0xff]
    %v5630 = vld [vmem:[#allocation15 + $0x11a0] sm:$0xff]
    %v5631 = vld [vmem:[#allocation15 + $0x11a8] sm:$0xff]
    %v5632 = vld [vmem:[#allocation15 + $0x11b0] sm:$0xff]
    %v5633 = vld [vmem:[#allocation15 + $0x11b8] sm:$0xff]
    %v5634 = vld [vmem:[#allocation15 + $0x11c0] sm:$0xff]
    %v5635 = vld [vmem:[#allocation15 + $0x11c8] sm:$0xff]
    %v5636 = vld [vmem:[#allocation15 + $0x11d0] sm:$0xff]
    %v5637 = vld [vmem:[#allocation15 + $0x11d8] sm:$0xff]
    %v5638 = vld [vmem:[#allocation15 + $0x11e0] sm:$0xff]
    %v5639 = vld [vmem:[#allocation15 + $0x11e8] sm:$0xff]
    %v5640 = vld [vmem:[#allocation15 + $0x11f0] sm:$0xff]
    %v5641 = vld [vmem:[#allocation15 + $0x11f8] sm:$0xff]
    %v5642 = vld [vmem:[#allocation15 + $0x1200] sm:$0xff]
    %v5643 = vld [vmem:[#allocation15 + $0x1208] sm:$0xff]
    %v5644 = vld [vmem:[#allocation15 + $0x1210] sm:$0xff]
    %v5645 = vld [vmem:[#allocation15 + $0x1218] sm:$0xff]
    %v5646 = vld [vmem:[#allocation15 + $0x1220] sm:$0xff]
    %v5647 = vld [vmem:[#allocation15 + $0x1228] sm:$0xff]
    %v5648 = vld [vmem:[#allocation15 + $0x1230] sm:$0xff]
    %v5649 = vld [vmem:[#allocation15 + $0x1238] sm:$0xff]
    %v5650 = vld [vmem:[#allocation15 + $0x1240] sm:$0xff]
    %v5651 = vld [vmem:[#allocation15 + $0x1248] sm:$0xff]
    %v5652 = vld [vmem:[#allocation15 + $0x1250] sm:$0xff]
    %v5653 = vld [vmem:[#allocation15 + $0x1258] sm:$0xff]
    %v5654 = vld [vmem:[#allocation15 + $0x1260] sm:$0xff]
    %v5655 = vld [vmem:[#allocation15 + $0x1268] sm:$0xff]
    %v5656 = vld [vmem:[#allocation15 + $0x1270] sm:$0xff]
    %v5657 = vld [vmem:[#allocation15 + $0x1278] sm:$0xff]
    %v5658 = vld [vmem:[#allocation15 + $0x1280] sm:$0xff]
    %v5659 = vld [vmem:[#allocation15 + $0x1288] sm:$0xff]
    %v5660 = vld [vmem:[#allocation15 + $0x1290] sm:$0xff]
    %v5661 = vld [vmem:[#allocation15 + $0x1298] sm:$0xff]
    %v5662 = vld [vmem:[#allocation15 + $0x12a0] sm:$0xff]
    %v5663 = vld [vmem:[#allocation15 + $0x12a8] sm:$0xff]
    %v5664 = vld [vmem:[#allocation15 + $0x12b0] sm:$0xff]
    %v5665 = vld [vmem:[#allocation15 + $0x12b8] sm:$0xff]
    %v5666 = vld [vmem:[#allocation15 + $0x12c0] sm:$0xff]
    %v5667 = vld [vmem:[#allocation15 + $0x12c8] sm:$0xff]
    %v5668 = vld [vmem:[#allocation15 + $0x12d0] sm:$0xff]
    %v5669 = vld [vmem:[#allocation15 + $0x12d8] sm:$0xff]
    %v5670 = vld [vmem:[#allocation15 + $0x12e0] sm:$0xff]
    %v5671 = vld [vmem:[#allocation15 + $0x12e8] sm:$0xff]
    %v5672 = vld [vmem:[#allocation15 + $0x12f0] sm:$0xff]
    %v5673 = vld [vmem:[#allocation15 + $0x12f8] sm:$0xff]
    %v5674 = vld [vmem:[#allocation15 + $0x1300] sm:$0xff]
    %v5675 = vld [vmem:[#allocation15 + $0x1308] sm:$0xff]
    %v5676 = vld [vmem:[#allocation15 + $0x1310] sm:$0xff]
    %v5677 = vld [vmem:[#allocation15 + $0x1318] sm:$0xff]
    %v5678 = vld [vmem:[#allocation15 + $0x1320] sm:$0xff]
    %v5679 = vld [vmem:[#allocation15 + $0x1328] sm:$0xff]
    %v5680 = vld [vmem:[#allocation15 + $0x1330] sm:$0xff]
    %v5681 = vld [vmem:[#allocation15 + $0x1338] sm:$0xff]
    %v5682 = vld [vmem:[#allocation15 + $0x1340] sm:$0xff]
    %v5683 = vld [vmem:[#allocation15 + $0x1348] sm:$0xff]
    %v5684 = vld [vmem:[#allocation15 + $0x1350] sm:$0xff]
    %v5685 = vld [vmem:[#allocation15 + $0x1358] sm:$0xff]
    %v5686 = vld [vmem:[#allocation15 + $0x1360] sm:$0xff]
    %v5687 = vld [vmem:[#allocation15 + $0x1368] sm:$0xff]
    %v5688 = vld [vmem:[#allocation15 + $0x1370] sm:$0xff]
    %v5689 = vld [vmem:[#allocation15 + $0x1378] sm:$0xff]
    %v5690 = vld [vmem:[#allocation15 + $0x1380] sm:$0xff]
    %v5691 = vld [vmem:[#allocation15 + $0x1388] sm:$0xff]
    %v5692 = vld [vmem:[#allocation15 + $0x1390] sm:$0xff]
    %v5693 = vld [vmem:[#allocation15 + $0x1398] sm:$0xff]
    %v5694 = vld [vmem:[#allocation15 + $0x13a0] sm:$0xff]
    %v5695 = vld [vmem:[#allocation15 + $0x13a8] sm:$0xff]
    %v5696 = vld [vmem:[#allocation15 + $0x13b0] sm:$0xff]
    %v5697 = vld [vmem:[#allocation15 + $0x13b8] sm:$0xff]
    %v5698 = vld [vmem:[#allocation15 + $0x13c0] sm:$0xff]
    %v5699 = vld [vmem:[#allocation15 + $0x13c8] sm:$0xff]
    %v5700 = vld [vmem:[#allocation15 + $0x13d0] sm:$0xff]
    %v5701 = vld [vmem:[#allocation15 + $0x13d8] sm:$0xff]
    %v5702 = vld [vmem:[#allocation15 + $0x13e0] sm:$0xff]
    %v5703 = vld [vmem:[#allocation15 + $0x13e8] sm:$0xff]
    %v5704 = vld [vmem:[#allocation15 + $0x13f0] sm:$0xff]
    %v5705 = vld [vmem:[#allocation15 + $0x13f8] sm:$0xff]
    %v5706 = vld [vmem:[#allocation15 + $0x1400] sm:$0xff]
    %v5707 = vld [vmem:[#allocation15 + $0x1408] sm:$0xff]
    %v5708 = vld [vmem:[#allocation15 + $0x1410] sm:$0xff]
    %v5709 = vld [vmem:[#allocation15 + $0x1418] sm:$0xff]
    %v5710 = vld [vmem:[#allocation15 + $0x1420] sm:$0xff]
    %v5711 = vld [vmem:[#allocation15 + $0x1428] sm:$0xff]
    %v5712 = vld [vmem:[#allocation15 + $0x1430] sm:$0xff]
    %v5713 = vld [vmem:[#allocation15 + $0x1438] sm:$0xff]
    %v5714 = vld [vmem:[#allocation15 + $0x1440] sm:$0xff]
    %v5715 = vld [vmem:[#allocation15 + $0x1448] sm:$0xff]
    %v5716 = vld [vmem:[#allocation15 + $0x1450] sm:$0xff]
    %v5717 = vld [vmem:[#allocation15 + $0x1458] sm:$0xff]
    %v5718 = vld [vmem:[#allocation15 + $0x1460] sm:$0xff]
    %v5719 = vld [vmem:[#allocation15 + $0x1468] sm:$0xff]
    %v5720 = vld [vmem:[#allocation15 + $0x1470] sm:$0xff]
    %v5721 = vld [vmem:[#allocation15 + $0x1478] sm:$0xff]
    %v5722 = vld [vmem:[#allocation15 + $0x1480] sm:$0xff]
    %v5723 = vld [vmem:[#allocation15 + $0x1488] sm:$0xff]
    %v5724 = vld [vmem:[#allocation15 + $0x1490] sm:$0xff]
    %v5725 = vld [vmem:[#allocation15 + $0x1498] sm:$0xff]
    %v5726 = vld [vmem:[#allocation15 + $0x14a0] sm:$0xff]
    %v5727 = vld [vmem:[#allocation15 + $0x14a8] sm:$0xff]
    %v5728 = vld [vmem:[#allocation15 + $0x14b0] sm:$0xff]
    %v5729 = vld [vmem:[#allocation15 + $0x14b8] sm:$0xff]
    %v5730 = vld [vmem:[#allocation15 + $0x14c0] sm:$0xff]
    %v5731 = vld [vmem:[#allocation15 + $0x14c8] sm:$0xff]
    %v5732 = vld [vmem:[#allocation15 + $0x14d0] sm:$0xff]
    %v5733 = vld [vmem:[#allocation15 + $0x14d8] sm:$0xff]
    %v5734 = vld [vmem:[#allocation15 + $0x14e0] sm:$0xff]
    %v5735 = vld [vmem:[#allocation15 + $0x14e8] sm:$0xff]
    %v5736 = vld [vmem:[#allocation15 + $0x14f0] sm:$0xff]
    %v5737 = vld [vmem:[#allocation15 + $0x14f8] sm:$0xff]
    %v5738 = vld [vmem:[#allocation15 + $0x1500] sm:$0xff]
    %v5739 = vld [vmem:[#allocation15 + $0x1508] sm:$0xff]
    %v5740 = vld [vmem:[#allocation15 + $0x1510] sm:$0xff]
    %v5741 = vld [vmem:[#allocation15 + $0x1518] sm:$0xff]
    %v5742 = vld [vmem:[#allocation15 + $0x1520] sm:$0xff]
    %v5743 = vld [vmem:[#allocation15 + $0x1528] sm:$0xff]
    %v5744 = vld [vmem:[#allocation15 + $0x1530] sm:$0xff]
    %v5745 = vld [vmem:[#allocation15 + $0x1538] sm:$0xff]
    %v5746 = vld [vmem:[#allocation15 + $0x1540] sm:$0xff]
    %v5747 = vld [vmem:[#allocation15 + $0x1548] sm:$0xff]
    %v5748 = vld [vmem:[#allocation15 + $0x1550] sm:$0xff]
    %v5749 = vld [vmem:[#allocation15 + $0x1558] sm:$0xff]
    %v5750 = vld [vmem:[#allocation15 + $0x1560] sm:$0xff]
    %v5751 = vld [vmem:[#allocation15 + $0x1568] sm:$0xff]
    %v5752 = vld [vmem:[#allocation15 + $0x1570] sm:$0xff]
    %v5753 = vld [vmem:[#allocation15 + $0x1578] sm:$0xff]
    %v5754 = vld [vmem:[#allocation15 + $0x1580] sm:$0xff]
    %v5755 = vld [vmem:[#allocation15 + $0x1588] sm:$0xff]
    %v5756 = vld [vmem:[#allocation15 + $0x1590] sm:$0xff]
    %v5757 = vld [vmem:[#allocation15 + $0x1598] sm:$0xff]
    %v5758 = vld [vmem:[#allocation15 + $0x15a0] sm:$0xff]
    %v5759 = vld [vmem:[#allocation15 + $0x15a8] sm:$0xff]
    %v5760 = vld [vmem:[#allocation15 + $0x15b0] sm:$0xff]
    %v5761 = vld [vmem:[#allocation15 + $0x15b8] sm:$0xff]
    %v5762 = vld [vmem:[#allocation15 + $0x15c0] sm:$0xff]
    %v5763 = vld [vmem:[#allocation15 + $0x15c8] sm:$0xff]
    %v5764 = vld [vmem:[#allocation15 + $0x15d0] sm:$0xff]
    %v5765 = vld [vmem:[#allocation15 + $0x15d8] sm:$0xff]
    %v5766 = vld [vmem:[#allocation15 + $0x15e0] sm:$0xff]
    %v5767 = vld [vmem:[#allocation15 + $0x15e8] sm:$0xff]
    %v5768 = vld [vmem:[#allocation15 + $0x15f0] sm:$0xff]
    %v5769 = vld [vmem:[#allocation15 + $0x15f8] sm:$0xff]
    %v5770 = vld [vmem:[#allocation15 + $0x1600] sm:$0xff]
    %v5771 = vld [vmem:[#allocation15 + $0x1608] sm:$0xff]
    %v5772 = vld [vmem:[#allocation15 + $0x1610] sm:$0xff]
    %v5773 = vld [vmem:[#allocation15 + $0x1618] sm:$0xff]
    %v5774 = vld [vmem:[#allocation15 + $0x1620] sm:$0xff]
    %v5775 = vld [vmem:[#allocation15 + $0x1628] sm:$0xff]
    %v5776 = vld [vmem:[#allocation15 + $0x1630] sm:$0xff]
    %v5777 = vld [vmem:[#allocation15 + $0x1638] sm:$0xff]
    %v5778 = vld [vmem:[#allocation15 + $0x1640] sm:$0xff]
    %v5779 = vld [vmem:[#allocation15 + $0x1648] sm:$0xff]
    %v5780 = vld [vmem:[#allocation15 + $0x1650] sm:$0xff]
    %v5781 = vld [vmem:[#allocation15 + $0x1658] sm:$0xff]
    %v5782 = vld [vmem:[#allocation15 + $0x1660] sm:$0xff]
    %v5783 = vld [vmem:[#allocation15 + $0x1668] sm:$0xff]
    %v5784 = vld [vmem:[#allocation15 + $0x1670] sm:$0xff]
    %v5785 = vld [vmem:[#allocation15 + $0x1678] sm:$0xff]
    %v5786 = vld [vmem:[#allocation15 + $0x1680] sm:$0xff]
    %v5787 = vld [vmem:[#allocation15 + $0x1688] sm:$0xff]
    %v5788 = vld [vmem:[#allocation15 + $0x1690] sm:$0xff]
    %v5789 = vld [vmem:[#allocation15 + $0x1698] sm:$0xff]
    %v5790 = vld [vmem:[#allocation15 + $0x16a0] sm:$0xff]
    %v5791 = vld [vmem:[#allocation15 + $0x16a8] sm:$0xff]
    %v5792 = vld [vmem:[#allocation15 + $0x16b0] sm:$0xff]
    %v5793 = vld [vmem:[#allocation15 + $0x16b8] sm:$0xff]
    %v5794 = vld [vmem:[#allocation15 + $0x16c0] sm:$0xff]
    %v5795 = vld [vmem:[#allocation15 + $0x16c8] sm:$0xff]
    %v5796 = vld [vmem:[#allocation15 + $0x16d0] sm:$0xff]
    %v5797 = vld [vmem:[#allocation15 + $0x16d8] sm:$0xff]
    %v5798 = vld [vmem:[#allocation15 + $0x16e0] sm:$0xff]
    %v5799 = vld [vmem:[#allocation15 + $0x16e8] sm:$0xff]
    %v5800 = vld [vmem:[#allocation15 + $0x16f0] sm:$0xff]
    %v5801 = vld [vmem:[#allocation15 + $0x16f8] sm:$0xff]
    %v5802 = vld [vmem:[#allocation15 + $0x1700] sm:$0xff]
    %v5803 = vld [vmem:[#allocation15 + $0x1708] sm:$0xff]
    %v5804 = vld [vmem:[#allocation15 + $0x1710] sm:$0xff]
    %v5805 = vld [vmem:[#allocation15 + $0x1718] sm:$0xff]
    %v5806 = vld [vmem:[#allocation15 + $0x1720] sm:$0xff]
    %v5807 = vld [vmem:[#allocation15 + $0x1728] sm:$0xff]
    %v5808 = vld [vmem:[#allocation15 + $0x1730] sm:$0xff]
    %v5809 = vld [vmem:[#allocation15 + $0x1738] sm:$0xff]
    %v5810 = vld [vmem:[#allocation15 + $0x1740] sm:$0xff]
    %v5811 = vld [vmem:[#allocation15 + $0x1748] sm:$0xff]
    %v5812 = vld [vmem:[#allocation15 + $0x1750] sm:$0xff]
    %v5813 = vld [vmem:[#allocation15 + $0x1758] sm:$0xff]
    %v5814 = vld [vmem:[#allocation15 + $0x1760] sm:$0xff]
    %v5815 = vld [vmem:[#allocation15 + $0x1768] sm:$0xff]
    %v5816 = vld [vmem:[#allocation15 + $0x1770] sm:$0xff]
    %v5817 = vld [vmem:[#allocation15 + $0x1778] sm:$0xff]
    %v5818 = vld [vmem:[#allocation15 + $0x1780] sm:$0xff]
    %v5819 = vld [vmem:[#allocation15 + $0x1788] sm:$0xff]
    %v5820 = vld [vmem:[#allocation15 + $0x1790] sm:$0xff]
    %v5821 = vld [vmem:[#allocation15 + $0x1798] sm:$0xff]
    %v5822 = vld [vmem:[#allocation15 + $0x17a0] sm:$0xff]
    %v5823 = vld [vmem:[#allocation15 + $0x17a8] sm:$0xff]
    %v5824 = vld [vmem:[#allocation15 + $0x17b0] sm:$0xff]
    %v5825 = vld [vmem:[#allocation15 + $0x17b8] sm:$0xff]
    %v5826 = vld [vmem:[#allocation15 + $0x17c0] sm:$0xff]
    %v5827 = vld [vmem:[#allocation15 + $0x17c8] sm:$0xff]
    %v5828 = vld [vmem:[#allocation15 + $0x17d0] sm:$0xff]
    %v5829 = vld [vmem:[#allocation15 + $0x17d8] sm:$0xff]
    %v5830 = vld [vmem:[#allocation15 + $0x17e0] sm:$0xff]
    %v5831 = vld [vmem:[#allocation15 + $0x17e8] sm:$0xff]
    %v5832 = vld [vmem:[#allocation15 + $0x17f0] sm:$0xff]
    %v5833 = vld [vmem:[#allocation15 + $0x17f8] sm:$0xff]
    %v5834 = vld [vmem:[#allocation15 + $0x1800] sm:$0xff]
    %v5835 = vld [vmem:[#allocation15 + $0x1808] sm:$0xff]
    %v5836 = vld [vmem:[#allocation15 + $0x1810] sm:$0xff]
    %v5837 = vld [vmem:[#allocation15 + $0x1818] sm:$0xff]
    %v5838 = vld [vmem:[#allocation15 + $0x1820] sm:$0xff]
    %v5839 = vld [vmem:[#allocation15 + $0x1828] sm:$0xff]
    %v5840 = vld [vmem:[#allocation15 + $0x1830] sm:$0xff]
    %v5841 = vld [vmem:[#allocation15 + $0x1838] sm:$0xff]
    %v5842 = vld [vmem:[#allocation15 + $0x1840] sm:$0xff]
    %v5843 = vld [vmem:[#allocation15 + $0x1848] sm:$0xff]
    %v5844 = vld [vmem:[#allocation15 + $0x1850] sm:$0xff]
    %v5845 = vld [vmem:[#allocation15 + $0x1858] sm:$0xff]
    %v5846 = vld [vmem:[#allocation15 + $0x1860] sm:$0xff]
    %v5847 = vld [vmem:[#allocation15 + $0x1868] sm:$0xff]
    %v5848 = vld [vmem:[#allocation15 + $0x1870] sm:$0xff]
    %v5849 = vld [vmem:[#allocation15 + $0x1878] sm:$0xff]
    %v5850 = vld [vmem:[#allocation15 + $0x1880] sm:$0xff]
    %v5851 = vld [vmem:[#allocation15 + $0x1888] sm:$0xff]
    %v5852 = vld [vmem:[#allocation15 + $0x1890] sm:$0xff]
    %v5853 = vld [vmem:[#allocation15 + $0x1898] sm:$0xff]
    %v5854 = vld [vmem:[#allocation15 + $0x18a0] sm:$0xff]
    %v5855 = vld [vmem:[#allocation15 + $0x18a8] sm:$0xff]
    %v5856 = vld [vmem:[#allocation15 + $0x18b0] sm:$0xff]
    %v5857 = vld [vmem:[#allocation15 + $0x18b8] sm:$0xff]
    %v5858 = vld [vmem:[#allocation15 + $0x18c0] sm:$0xff]
    %v5859 = vld [vmem:[#allocation15 + $0x18c8] sm:$0xff]
    %v5860 = vld [vmem:[#allocation15 + $0x18d0] sm:$0xff]
    %v5861 = vld [vmem:[#allocation15 + $0x18d8] sm:$0xff]
    %v5862 = vld [vmem:[#allocation15 + $0x18e0] sm:$0xff]
    %v5863 = vld [vmem:[#allocation15 + $0x18e8] sm:$0xff]
    %v5864 = vld [vmem:[#allocation15 + $0x18f0] sm:$0xff]
    %v5865 = vld [vmem:[#allocation15 + $0x18f8] sm:$0xff]
    %v5866 = vld [vmem:[#allocation15 + $0x1900] sm:$0xff]
    %v5867 = vld [vmem:[#allocation15 + $0x1908] sm:$0xff]
    %v5868 = vld [vmem:[#allocation15 + $0x1910] sm:$0xff]
    %v5869 = vld [vmem:[#allocation15 + $0x1918] sm:$0xff]
    %v5870 = vld [vmem:[#allocation15 + $0x1920] sm:$0xff]
    %v5871 = vld [vmem:[#allocation15 + $0x1928] sm:$0xff]
    %v5872 = vld [vmem:[#allocation15 + $0x1930] sm:$0xff]
    %v5873 = vld [vmem:[#allocation15 + $0x1938] sm:$0xff]
    %v5874 = vld [vmem:[#allocation15 + $0x1940] sm:$0xff]
    %v5875 = vld [vmem:[#allocation15 + $0x1948] sm:$0xff]
    %v5876 = vld [vmem:[#allocation15 + $0x1950] sm:$0xff]
    %v5877 = vld [vmem:[#allocation15 + $0x1958] sm:$0xff]
    %v5878 = vld [vmem:[#allocation15 + $0x1960] sm:$0xff]
    %v5879 = vld [vmem:[#allocation15 + $0x1968] sm:$0xff]
    %v5880 = vld [vmem:[#allocation15 + $0x1970] sm:$0xff]
    %v5881 = vld [vmem:[#allocation15 + $0x1978] sm:$0xff]
    %v5882 = vld [vmem:[#allocation15 + $0x1980] sm:$0xff]
    %v5883 = vld [vmem:[#allocation15 + $0x1988] sm:$0xff]
    %v5884 = vld [vmem:[#allocation15 + $0x1990] sm:$0xff]
    %v5885 = vld [vmem:[#allocation15 + $0x1998] sm:$0xff]
    %v5886 = vld [vmem:[#allocation15 + $0x19a0] sm:$0xff]
    %v5887 = vld [vmem:[#allocation15 + $0x19a8] sm:$0xff]
    %v5888 = vld [vmem:[#allocation15 + $0x19b0] sm:$0xff]
    %v5889 = vld [vmem:[#allocation15 + $0x19b8] sm:$0xff]
    %v5890 = vld [vmem:[#allocation15 + $0x19c0] sm:$0xff]
    %v5891 = vld [vmem:[#allocation15 + $0x19c8] sm:$0xff]
    %v5892 = vld [vmem:[#allocation15 + $0x19d0] sm:$0xff]
    %v5893 = vld [vmem:[#allocation15 + $0x19d8] sm:$0xff]
    %v5894 = vld [vmem:[#allocation15 + $0x19e0] sm:$0xff]
    %v5895 = vld [vmem:[#allocation15 + $0x19e8] sm:$0xff]
    %v5896 = vld [vmem:[#allocation15 + $0x19f0] sm:$0xff]
    %v5897 = vld [vmem:[#allocation15 + $0x19f8] sm:$0xff]
    %v5898 = vld [vmem:[#allocation15 + $0x1a00] sm:$0xff]
    %v5899 = vld [vmem:[#allocation15 + $0x1a08] sm:$0xff]
    %v5900 = vld [vmem:[#allocation15 + $0x1a10] sm:$0xff]
    %v5901 = vld [vmem:[#allocation15 + $0x1a18] sm:$0xff]
    %v5902 = vld [vmem:[#allocation15 + $0x1a20] sm:$0xff]
    %v5903 = vld [vmem:[#allocation15 + $0x1a28] sm:$0xff]
    %v5904 = vld [vmem:[#allocation15 + $0x1a30] sm:$0xff]
    %v5905 = vld [vmem:[#allocation15 + $0x1a38] sm:$0xff]
    %v5906 = vld [vmem:[#allocation15 + $0x1a40] sm:$0xff]
    %v5907 = vld [vmem:[#allocation15 + $0x1a48] sm:$0xff]
    %v5908 = vld [vmem:[#allocation15 + $0x1a50] sm:$0xff]
    %v5909 = vld [vmem:[#allocation15 + $0x1a58] sm:$0xff]
    %v5910 = vld [vmem:[#allocation15 + $0x1a60] sm:$0xff]
    %v5911 = vld [vmem:[#allocation15 + $0x1a68] sm:$0xff]
    %v5912 = vld [vmem:[#allocation15 + $0x1a70] sm:$0xff]
    %v5913 = vld [vmem:[#allocation15 + $0x1a78] sm:$0xff]
    %v5914 = vld [vmem:[#allocation15 + $0x1a80] sm:$0xff]
    %v5915 = vld [vmem:[#allocation15 + $0x1a88] sm:$0xff]
    %v5916 = vld [vmem:[#allocation15 + $0x1a90] sm:$0xff]
    %v5917 = vld [vmem:[#allocation15 + $0x1a98] sm:$0xff]
    %v5918 = vld [vmem:[#allocation15 + $0x1aa0] sm:$0xff]
    %v5919 = vld [vmem:[#allocation15 + $0x1aa8] sm:$0xff]
    %v5920 = vld [vmem:[#allocation15 + $0x1ab0] sm:$0xff]
    %v5921 = vld [vmem:[#allocation15 + $0x1ab8] sm:$0xff]
    %v5922 = vld [vmem:[#allocation15 + $0x1ac0] sm:$0xff]
    %v5923 = vld [vmem:[#allocation15 + $0x1ac8] sm:$0xff]
    %v5924 = vld [vmem:[#allocation15 + $0x1ad0] sm:$0xff]
    %v5925 = vld [vmem:[#allocation15 + $0x1ad8] sm:$0xff]
    %v5926 = vld [vmem:[#allocation15 + $0x1ae0] sm:$0xff]
    %v5927 = vld [vmem:[#allocation15 + $0x1ae8] sm:$0xff]
    %v5928 = vld [vmem:[#allocation15 + $0x1af0] sm:$0xff]
    %v5929 = vld [vmem:[#allocation15 + $0x1af8] sm:$0xff]
    %v5930 = vld [vmem:[#allocation15 + $0x1b00] sm:$0xff]
    %v5931 = vld [vmem:[#allocation15 + $0x1b08] sm:$0xff]
    %v5932 = vld [vmem:[#allocation15 + $0x1b10] sm:$0xff]
    %v5933 = vld [vmem:[#allocation15 + $0x1b18] sm:$0xff]
    %v5934 = vld [vmem:[#allocation15 + $0x1b20] sm:$0xff]
    %v5935 = vld [vmem:[#allocation15 + $0x1b28] sm:$0xff]
    %v5936 = vld [vmem:[#allocation15 + $0x1b30] sm:$0xff]
    %v5937 = vld [vmem:[#allocation15 + $0x1b38] sm:$0xff]
    %v5938 = vld [vmem:[#allocation15 + $0x1b40] sm:$0xff]
    %v5939 = vld [vmem:[#allocation15 + $0x1b48] sm:$0xff]
    %v5940 = vld [vmem:[#allocation15 + $0x1b50] sm:$0xff]
    %v5941 = vld [vmem:[#allocation15 + $0x1b58] sm:$0xff]
    %v5942 = vld [vmem:[#allocation15 + $0x1b60] sm:$0xff]
    %v5943 = vld [vmem:[#allocation15 + $0x1b68] sm:$0xff]
    %v5944 = vld [vmem:[#allocation15 + $0x1b70] sm:$0xff]
    %v5945 = vld [vmem:[#allocation15 + $0x1b78] sm:$0xff]
    %v5946 = vld [vmem:[#allocation15 + $0x1b80] sm:$0xff]
    %v5947 = vld [vmem:[#allocation15 + $0x1b88] sm:$0xff]
    %v5948 = vld [vmem:[#allocation15 + $0x1b90] sm:$0xff]
    %v5949 = vld [vmem:[#allocation15 + $0x1b98] sm:$0xff]
    %v5950 = vld [vmem:[#allocation15 + $0x1ba0] sm:$0xff]
    %v5951 = vld [vmem:[#allocation15 + $0x1ba8] sm:$0xff]
    %v5952 = vld [vmem:[#allocation15 + $0x1bb0] sm:$0xff]
    %v5953 = vld [vmem:[#allocation15 + $0x1bb8] sm:$0xff]
    %v5954 = vld [vmem:[#allocation15 + $0x1bc0] sm:$0xff]
    %v5955 = vld [vmem:[#allocation15 + $0x1bc8] sm:$0xff]
    %v5956 = vld [vmem:[#allocation15 + $0x1bd0] sm:$0xff]
    %v5957 = vld [vmem:[#allocation15 + $0x1bd8] sm:$0xff]
    %v5958 = vld [vmem:[#allocation15 + $0x1be0] sm:$0xff]
    %v5959 = vld [vmem:[#allocation15 + $0x1be8] sm:$0xff]
    %v5960 = vld [vmem:[#allocation15 + $0x1bf0] sm:$0xff]
    %v5961 = vld [vmem:[#allocation15 + $0x1bf8] sm:$0xff]
    %v5962 = vld [vmem:[#allocation15 + $0x1c00] sm:$0xff]
    %v5963 = vld [vmem:[#allocation15 + $0x1c08] sm:$0xff]
    %v5964 = vld [vmem:[#allocation15 + $0x1c10] sm:$0xff]
    %v5965 = vld [vmem:[#allocation15 + $0x1c18] sm:$0xff]
    %v5966 = vld [vmem:[#allocation15 + $0x1c20] sm:$0xff]
    %v5967 = vld [vmem:[#allocation15 + $0x1c28] sm:$0xff]
    %v5968 = vld [vmem:[#allocation15 + $0x1c30] sm:$0xff]
    %v5969 = vld [vmem:[#allocation15 + $0x1c38] sm:$0xff]
    %v5970 = vld [vmem:[#allocation15 + $0x1c40] sm:$0xff]
    %v5971 = vld [vmem:[#allocation15 + $0x1c48] sm:$0xff]
    %v5972 = vld [vmem:[#allocation15 + $0x1c50] sm:$0xff]
    %v5973 = vld [vmem:[#allocation15 + $0x1c58] sm:$0xff]
    %v5974 = vld [vmem:[#allocation15 + $0x1c60] sm:$0xff]
    %v5975 = vld [vmem:[#allocation15 + $0x1c68] sm:$0xff]
    %v5976 = vld [vmem:[#allocation15 + $0x1c70] sm:$0xff]
    %v5977 = vld [vmem:[#allocation15 + $0x1c78] sm:$0xff]
    %v5978 = vld [vmem:[#allocation15 + $0x1c80] sm:$0xff]
    %v5979 = vld [vmem:[#allocation15 + $0x1c88] sm:$0xff]
    %v5980 = vld [vmem:[#allocation15 + $0x1c90] sm:$0xff]
    %v5981 = vld [vmem:[#allocation15 + $0x1c98] sm:$0xff]
    %v5982 = vld [vmem:[#allocation15 + $0x1ca0] sm:$0xff]
    %v5983 = vld [vmem:[#allocation15 + $0x1ca8] sm:$0xff]
    %v5984 = vld [vmem:[#allocation15 + $0x1cb0] sm:$0xff]
    %v5985 = vld [vmem:[#allocation15 + $0x1cb8] sm:$0xff]
    %v5986 = vld [vmem:[#allocation15 + $0x1cc0] sm:$0xff]
    %v5987 = vld [vmem:[#allocation15 + $0x1cc8] sm:$0xff]
    %v5988 = vld [vmem:[#allocation15 + $0x1cd0] sm:$0xff]
    %v5989 = vld [vmem:[#allocation15 + $0x1cd8] sm:$0xff]
    %v5990 = vld [vmem:[#allocation15 + $0x1ce0] sm:$0xff]
    %v5991 = vld [vmem:[#allocation15 + $0x1ce8] sm:$0xff]
    %v5992 = vld [vmem:[#allocation15 + $0x1cf0] sm:$0xff]
    %v5993 = vld [vmem:[#allocation15 + $0x1cf8] sm:$0xff]
    %v5994 = vld [vmem:[#allocation15 + $0x1d00] sm:$0xff]
    %v5995 = vld [vmem:[#allocation15 + $0x1d08] sm:$0xff]
    %v5996 = vld [vmem:[#allocation15 + $0x1d10] sm:$0xff]
    %v5997 = vld [vmem:[#allocation15 + $0x1d18] sm:$0xff]
    %v5998 = vld [vmem:[#allocation15 + $0x1d20] sm:$0xff]
    %v5999 = vld [vmem:[#allocation15 + $0x1d28] sm:$0xff]
    %v6000 = vld [vmem:[#allocation15 + $0x1d30] sm:$0xff]
    %v6001 = vld [vmem:[#allocation15 + $0x1d38] sm:$0xff]
    %v6002 = vld [vmem:[#allocation15 + $0x1d40] sm:$0xff]
    %v6003 = vld [vmem:[#allocation15 + $0x1d48] sm:$0xff]
    %v6004 = vld [vmem:[#allocation15 + $0x1d50] sm:$0xff]
    %v6005 = vld [vmem:[#allocation15 + $0x1d58] sm:$0xff]
    %v6006 = vld [vmem:[#allocation15 + $0x1d60] sm:$0xff]
    %v6007 = vld [vmem:[#allocation15 + $0x1d68] sm:$0xff]
    %v6008 = vld [vmem:[#allocation15 + $0x1d70] sm:$0xff]
    %v6009 = vld [vmem:[#allocation15 + $0x1d78] sm:$0xff]
    %v6010 = vld [vmem:[#allocation15 + $0x1d80] sm:$0xff]
    %v6011 = vld [vmem:[#allocation15 + $0x1d88] sm:$0xff]
    %v6012 = vld [vmem:[#allocation15 + $0x1d90] sm:$0xff]
    %v6013 = vld [vmem:[#allocation15 + $0x1d98] sm:$0xff]
    %v6014 = vld [vmem:[#allocation15 + $0x1da0] sm:$0xff]
    %v6015 = vld [vmem:[#allocation15 + $0x1da8] sm:$0xff]
    %v6016 = vld [vmem:[#allocation15 + $0x1db0] sm:$0xff]
    %v6017 = vld [vmem:[#allocation15 + $0x1db8] sm:$0xff]
    %v6018 = vld [vmem:[#allocation15 + $0x1dc0] sm:$0xff]
    %v6019 = vld [vmem:[#allocation15 + $0x1dc8] sm:$0xff]
    %v6020 = vld [vmem:[#allocation15 + $0x1dd0] sm:$0xff]
    %v6021 = vld [vmem:[#allocation15 + $0x1dd8] sm:$0xff]
    %v6022 = vld [vmem:[#allocation15 + $0x1de0] sm:$0xff]
    %v6023 = vld [vmem:[#allocation15 + $0x1de8] sm:$0xff]
    %v6024 = vld [vmem:[#allocation15 + $0x1df0] sm:$0xff]
    %v6025 = vld [vmem:[#allocation15 + $0x1df8] sm:$0xff]
    %v6026 = vld [vmem:[#allocation15 + $0x1e00] sm:$0xff]
    %v6027 = vld [vmem:[#allocation15 + $0x1e08] sm:$0xff]
    %v6028 = vld [vmem:[#allocation15 + $0x1e10] sm:$0xff]
    %v6029 = vld [vmem:[#allocation15 + $0x1e18] sm:$0xff]
    %v6030 = vld [vmem:[#allocation15 + $0x1e20] sm:$0xff]
    %v6031 = vld [vmem:[#allocation15 + $0x1e28] sm:$0xff]
    %v6032 = vld [vmem:[#allocation15 + $0x1e30] sm:$0xff]
    %v6033 = vld [vmem:[#allocation15 + $0x1e38] sm:$0xff]
    %v6034 = vld [vmem:[#allocation15 + $0x1e40] sm:$0xff]
    %v6035 = vld [vmem:[#allocation15 + $0x1e48] sm:$0xff]
    %v6036 = vld [vmem:[#allocation15 + $0x1e50] sm:$0xff]
    %v6037 = vld [vmem:[#allocation15 + $0x1e58] sm:$0xff]
    %v6038 = vld [vmem:[#allocation15 + $0x1e60] sm:$0xff]
    %v6039 = vld [vmem:[#allocation15 + $0x1e68] sm:$0xff]
    %v6040 = vld [vmem:[#allocation15 + $0x1e70] sm:$0xff]
    %v6041 = vld [vmem:[#allocation15 + $0x1e78] sm:$0xff]
    %v6042 = vld [vmem:[#allocation15 + $0x1e80] sm:$0xff]
    %v6043 = vld [vmem:[#allocation15 + $0x1e88] sm:$0xff]
    %v6044 = vld [vmem:[#allocation15 + $0x1e90] sm:$0xff]
    %v6045 = vld [vmem:[#allocation15 + $0x1e98] sm:$0xff]
    %v6046 = vld [vmem:[#allocation15 + $0x1ea0] sm:$0xff]
    %v6047 = vld [vmem:[#allocation15 + $0x1ea8] sm:$0xff]
    %v6048 = vld [vmem:[#allocation15 + $0x1eb0] sm:$0xff]
    %v6049 = vld [vmem:[#allocation15 + $0x1eb8] sm:$0xff]
    %v6050 = vld [vmem:[#allocation15 + $0x1ec0] sm:$0xff]
    %v6051 = vld [vmem:[#allocation15 + $0x1ec8] sm:$0xff]
    %v6052 = vld [vmem:[#allocation15 + $0x1ed0] sm:$0xff]
    %v6053 = vld [vmem:[#allocation15 + $0x1ed8] sm:$0xff]
    %v6054 = vld [vmem:[#allocation15 + $0x1ee0] sm:$0xff]
    %v6055 = vld [vmem:[#allocation15 + $0x1ee8] sm:$0xff]
    %v6056 = vld [vmem:[#allocation15 + $0x1ef0] sm:$0xff]
    %v6057 = vld [vmem:[#allocation15 + $0x1ef8] sm:$0xff]
    %v6058 = vld [vmem:[#allocation15 + $0x1f00] sm:$0xff]
    %v6059 = vld [vmem:[#allocation15 + $0x1f08] sm:$0xff]
    %v6060 = vld [vmem:[#allocation15 + $0x1f10] sm:$0xff]
    %v6061 = vld [vmem:[#allocation15 + $0x1f18] sm:$0xff]
    %v6062 = vld [vmem:[#allocation15 + $0x1f20] sm:$0xff]
    %v6063 = vld [vmem:[#allocation15 + $0x1f28] sm:$0xff]
    %v6064 = vld [vmem:[#allocation15 + $0x1f30] sm:$0xff]
    %v6065 = vld [vmem:[#allocation15 + $0x1f38] sm:$0xff]
    %v6066 = vld [vmem:[#allocation15 + $0x1f40] sm:$0xff]
    %v6067 = vld [vmem:[#allocation15 + $0x1f48] sm:$0xff]
    %v6068 = vld [vmem:[#allocation15 + $0x1f50] sm:$0xff]
    %v6069 = vld [vmem:[#allocation15 + $0x1f58] sm:$0xff]
    %v6070 = vld [vmem:[#allocation15 + $0x1f60] sm:$0xff]
    %v6071 = vld [vmem:[#allocation15 + $0x1f68] sm:$0xff]
    %v6072 = vld [vmem:[#allocation15 + $0x1f70] sm:$0xff]
    %v6073 = vld [vmem:[#allocation15 + $0x1f78] sm:$0xff]
    %v6074 = vld [vmem:[#allocation15 + $0x1f80] sm:$0xff]
    %v6075 = vld [vmem:[#allocation15 + $0x1f88] sm:$0xff]
    %v6076 = vld [vmem:[#allocation15 + $0x1f90] sm:$0xff]
    %v6077 = vld [vmem:[#allocation15 + $0x1f98] sm:$0xff]
    %v6078 = vld [vmem:[#allocation15 + $0x1fa0] sm:$0xff]
    %v6079 = vld [vmem:[#allocation15 + $0x1fa8] sm:$0xff]
    %v6080 = vld [vmem:[#allocation15 + $0x1fb0] sm:$0xff]
    %v6081 = vld [vmem:[#allocation15 + $0x1fb8] sm:$0xff]
    %v6082 = vld [vmem:[#allocation15 + $0x1fc0] sm:$0xff]
    %v6083 = vld [vmem:[#allocation15 + $0x1fc8] sm:$0xff]
    %v6084 = vld [vmem:[#allocation15 + $0x1fd0] sm:$0xff]
    %v6085 = vld [vmem:[#allocation15 + $0x1fd8] sm:$0xff]
    %v6086 = vld [vmem:[#allocation15 + $0x1fe0] sm:$0xff]
    %v6087 = vld [vmem:[#allocation15 + $0x1fe8] sm:$0xff]
    %v6088 = vld [vmem:[#allocation15 + $0x1ff0] sm:$0xff]
    %v6089 = vld [vmem:[#allocation15 + $0x1ff8] sm:$0xff]
    %v6090 = vld [vmem:[#allocation15 + $0x2000] sm:$0xff]
    %v6091 = vld [vmem:[#allocation15 + $0x2008] sm:$0xff]
    %v6092 = vld [vmem:[#allocation15 + $0x2010] sm:$0xff]
    %v6093 = vld [vmem:[#allocation15 + $0x2018] sm:$0xff]
    %v6094 = vld [vmem:[#allocation15 + $0x2020] sm:$0xff]
    %v6095 = vld [vmem:[#allocation15 + $0x2028] sm:$0xff]
    %v6096 = vld [vmem:[#allocation15 + $0x2030] sm:$0xff]
    %v6097 = vld [vmem:[#allocation15 + $0x2038] sm:$0xff]
    %v6098 = vld [vmem:[#allocation15 + $0x2040] sm:$0xff]
    %v6099 = vld [vmem:[#allocation15 + $0x2048] sm:$0xff]
    %v6100 = vld [vmem:[#allocation15 + $0x2050] sm:$0xff]
    %v6101 = vld [vmem:[#allocation15 + $0x2058] sm:$0xff]
    %v6102 = vld [vmem:[#allocation15 + $0x2060] sm:$0xff]
    %v6103 = vld [vmem:[#allocation15 + $0x2068] sm:$0xff]
    %v6104 = vld [vmem:[#allocation15 + $0x2070] sm:$0xff]
    %v6105 = vld [vmem:[#allocation15 + $0x2078] sm:$0xff]
    %v6106 = vld [vmem:[#allocation15 + $0x2080] sm:$0xff]
    %v6107 = vld [vmem:[#allocation15 + $0x2088] sm:$0xff]
    %v6108 = vld [vmem:[#allocation15 + $0x2090] sm:$0xff]
    %v6109 = vld [vmem:[#allocation15 + $0x2098] sm:$0xff]
    %v6110 = vld [vmem:[#allocation15 + $0x20a0] sm:$0xff]
    %v6111 = vld [vmem:[#allocation15 + $0x20a8] sm:$0xff]
    %v6112 = vld [vmem:[#allocation15 + $0x20b0] sm:$0xff]
    %v6113 = vld [vmem:[#allocation15 + $0x20b8] sm:$0xff]
    %v6114 = vld [vmem:[#allocation15 + $0x20c0] sm:$0xff]
    %v6115 = vld [vmem:[#allocation15 + $0x20c8] sm:$0xff]
    %v6116 = vld [vmem:[#allocation15 + $0x20d0] sm:$0xff]
    %v6117 = vld [vmem:[#allocation15 + $0x20d8] sm:$0xff]
    %v6118 = vld [vmem:[#allocation15 + $0x20e0] sm:$0xff]
    %v6119 = vld [vmem:[#allocation15 + $0x20e8] sm:$0xff]
    %v6120 = vld [vmem:[#allocation15 + $0x20f0] sm:$0xff]
    %v6121 = vld [vmem:[#allocation15 + $0x20f8] sm:$0xff]
    %v6122 = vld [vmem:[#allocation15 + $0x2100] sm:$0xff]
    %v6123 = vld [vmem:[#allocation15 + $0x2108] sm:$0xff]
    %v6124 = vld [vmem:[#allocation15 + $0x2110] sm:$0xff]
    %v6125 = vld [vmem:[#allocation15 + $0x2118] sm:$0xff]
    %v6126 = vld [vmem:[#allocation15 + $0x2120] sm:$0xff]
    %v6127 = vld [vmem:[#allocation15 + $0x2128] sm:$0xff]
    %v6128 = vld [vmem:[#allocation15 + $0x2130] sm:$0xff]
    %v6129 = vld [vmem:[#allocation15 + $0x2138] sm:$0xff]
    %v6130 = vld [vmem:[#allocation15 + $0x2140] sm:$0xff]
    %v6131 = vld [vmem:[#allocation15 + $0x2148] sm:$0xff]
    %v6132 = vld [vmem:[#allocation15 + $0x2150] sm:$0xff]
    %v6133 = vld [vmem:[#allocation15 + $0x2158] sm:$0xff]
    %v6134 = vld [vmem:[#allocation15 + $0x2160] sm:$0xff]
    %v6135 = vld [vmem:[#allocation15 + $0x2168] sm:$0xff]
    %v6136 = vld [vmem:[#allocation15 + $0x2170] sm:$0xff]
    %v6137 = vld [vmem:[#allocation15 + $0x2178] sm:$0xff]
    %v6138 = vld [vmem:[#allocation15 + $0x2180] sm:$0xff]
    %v6139 = vld [vmem:[#allocation15 + $0x2188] sm:$0xff]
    %v6140 = vld [vmem:[#allocation15 + $0x2190] sm:$0xff]
    %v6141 = vld [vmem:[#allocation15 + $0x2198] sm:$0xff]
    %v6142 = vld [vmem:[#allocation15 + $0x21a0] sm:$0xff]
    %v6143 = vld [vmem:[#allocation15 + $0x21a8] sm:$0xff]
    %v6144 = vld [vmem:[#allocation15 + $0x21b0] sm:$0xff]
    %v6145 = vld [vmem:[#allocation15 + $0x21b8] sm:$0xff]
    %v6146 = vld [vmem:[#allocation15 + $0x21c0] sm:$0xff]
    %v6147 = vld [vmem:[#allocation15 + $0x21c8] sm:$0xff]
    %v6148 = vld [vmem:[#allocation15 + $0x21d0] sm:$0xff]
    %v6149 = vld [vmem:[#allocation15 + $0x21d8] sm:$0xff]
    %v6150 = vld [vmem:[#allocation15 + $0x21e0] sm:$0xff]
    %v6151 = vld [vmem:[#allocation15 + $0x21e8] sm:$0xff]
    %v6152 = vld [vmem:[#allocation15 + $0x21f0] sm:$0xff]
    %v6153 = vld [vmem:[#allocation15 + $0x21f8] sm:$0xff]
    %v6154 = vld [vmem:[#allocation15 + $0x2200] sm:$0xff]
    %v6155 = vld [vmem:[#allocation15 + $0x2208] sm:$0xff]
    %v6156 = vld [vmem:[#allocation15 + $0x2210] sm:$0xff]
    %v6157 = vld [vmem:[#allocation15 + $0x2218] sm:$0xff]
    %v6158 = vld [vmem:[#allocation15 + $0x2220] sm:$0xff]
    %v6159 = vld [vmem:[#allocation15 + $0x2228] sm:$0xff]
    %v6160 = vld [vmem:[#allocation15 + $0x2230] sm:$0xff]
    %v6161 = vld [vmem:[#allocation15 + $0x2238] sm:$0xff]
    %v6162 = vld [vmem:[#allocation15 + $0x2240] sm:$0xff]
    %v6163 = vld [vmem:[#allocation15 + $0x2248] sm:$0xff]
    %v6164 = vld [vmem:[#allocation15 + $0x2250] sm:$0xff]
    %v6165 = vld [vmem:[#allocation15 + $0x2258] sm:$0xff]
    %v6166 = vld [vmem:[#allocation15 + $0x2260] sm:$0xff]
    %v6167 = vld [vmem:[#allocation15 + $0x2268] sm:$0xff]
    %v6168 = vld [vmem:[#allocation15 + $0x2270] sm:$0xff]
    %v6169 = vld [vmem:[#allocation15 + $0x2278] sm:$0xff]
    %v6170 = vld [vmem:[#allocation15 + $0x2280] sm:$0xff]
    %v6171 = vld [vmem:[#allocation15 + $0x2288] sm:$0xff]
    %v6172 = vld [vmem:[#allocation15 + $0x2290] sm:$0xff]
    %v6173 = vld [vmem:[#allocation15 + $0x2298] sm:$0xff]
    %v6174 = vld [vmem:[#allocation15 + $0x22a0] sm:$0xff]
    %v6175 = vld [vmem:[#allocation15 + $0x22a8] sm:$0xff]
    %v6176 = vld [vmem:[#allocation15 + $0x22b0] sm:$0xff]
    %v6177 = vld [vmem:[#allocation15 + $0x22b8] sm:$0xff]
    %v6178 = vld [vmem:[#allocation15 + $0x22c0] sm:$0xff]
    %v6179 = vld [vmem:[#allocation15 + $0x22c8] sm:$0xff]
    %v6180 = vld [vmem:[#allocation15 + $0x22d0] sm:$0xff]
    %v6181 = vld [vmem:[#allocation15 + $0x22d8] sm:$0xff]
    %v6182 = vld [vmem:[#allocation15 + $0x22e0] sm:$0xff]
    %v6183 = vld [vmem:[#allocation15 + $0x22e8] sm:$0xff]
    %v6184 = vld [vmem:[#allocation15 + $0x22f0] sm:$0xff]
    %v6185 = vld [vmem:[#allocation15 + $0x22f8] sm:$0xff]
    %v6186 = vld [vmem:[#allocation15 + $0x2300] sm:$0xff]
    %v6187 = vld [vmem:[#allocation15 + $0x2308] sm:$0xff]
    %v6188 = vld [vmem:[#allocation15 + $0x2310] sm:$0xff]
    %v6189 = vld [vmem:[#allocation15 + $0x2318] sm:$0xff]
    %v6190 = vld [vmem:[#allocation15 + $0x2320] sm:$0xff]
    %v6191 = vld [vmem:[#allocation15 + $0x2328] sm:$0xff]
    %v6192 = vld [vmem:[#allocation15 + $0x2330] sm:$0xff]
    %v6193 = vld [vmem:[#allocation15 + $0x2338] sm:$0xff]
    %v6194 = vld [vmem:[#allocation15 + $0x2340] sm:$0xff]
    %v6195 = vld [vmem:[#allocation15 + $0x2348] sm:$0xff]
    %v6196 = vld [vmem:[#allocation15 + $0x2350] sm:$0xff]
    %v6197 = vld [vmem:[#allocation15 + $0x2358] sm:$0xff]
    %v6198 = vld [vmem:[#allocation15 + $0x2360] sm:$0xff]
    %v6199 = vld [vmem:[#allocation15 + $0x2368] sm:$0xff]
    %v6200 = vld [vmem:[#allocation15 + $0x2370] sm:$0xff]
    %v6201 = vld [vmem:[#allocation15 + $0x2378] sm:$0xff]
    %v6202 = vld [vmem:[#allocation15 + $0x2380] sm:$0xff]
    %v6203 = vld [vmem:[#allocation15 + $0x2388] sm:$0xff]
    %v6204 = vld [vmem:[#allocation15 + $0x2390] sm:$0xff]
    %v6205 = vld [vmem:[#allocation15 + $0x2398] sm:$0xff]
    %v6206 = vld [vmem:[#allocation15 + $0x23a0] sm:$0xff]
    %v6207 = vld [vmem:[#allocation15 + $0x23a8] sm:$0xff]
    %v6208 = vld [vmem:[#allocation15 + $0x23b0] sm:$0xff]
    %v6209 = vld [vmem:[#allocation15 + $0x23b8] sm:$0xff]
    %v6210 = vld [vmem:[#allocation15 + $0x23c0] sm:$0xff]
    %v6211 = vld [vmem:[#allocation15 + $0x23c8] sm:$0xff]
    %v6212 = vld [vmem:[#allocation15 + $0x23d0] sm:$0xff]
    %v6213 = vld [vmem:[#allocation15 + $0x23d8] sm:$0xff]
    %v6214 = vld [vmem:[#allocation15 + $0x23e0] sm:$0xff]
    %v6215 = vld [vmem:[#allocation15 + $0x23e8] sm:$0xff]
    %v6216 = vld [vmem:[#allocation15 + $0x23f0] sm:$0xff]
    %v6217 = vld [vmem:[#allocation15 + $0x23f8] sm:$0xff]
    %v6218 = vld [vmem:[#allocation15 + $0x2400] sm:$0xff]
    %v6219 = vld [vmem:[#allocation15 + $0x2408] sm:$0xff]
    %v6220 = vld [vmem:[#allocation15 + $0x2410] sm:$0xff]
    %v6221 = vld [vmem:[#allocation15 + $0x2418] sm:$0xff]
    %v6222 = vld [vmem:[#allocation15 + $0x2420] sm:$0xff]
    %v6223 = vld [vmem:[#allocation15 + $0x2428] sm:$0xff]
    %v6224 = vld [vmem:[#allocation15 + $0x2430] sm:$0xff]
    %v6225 = vld [vmem:[#allocation15 + $0x2438] sm:$0xff]
    %v6226 = vld [vmem:[#allocation15 + $0x2440] sm:$0xff]
    %v6227 = vld [vmem:[#allocation15 + $0x2448] sm:$0xff]
    %v6228 = vld [vmem:[#allocation15 + $0x2450] sm:$0xff]
    %v6229 = vld [vmem:[#allocation15 + $0x2458] sm:$0xff]
    %v6230 = vld [vmem:[#allocation15 + $0x2460] sm:$0xff]
    %v6231 = vld [vmem:[#allocation15 + $0x2468] sm:$0xff]
    %v6232 = vld [vmem:[#allocation15 + $0x2470] sm:$0xff]
    %v6233 = vld [vmem:[#allocation15 + $0x2478] sm:$0xff]
    %v6234 = vld [vmem:[#allocation15 + $0x2480] sm:$0xff]
    %v6235 = vld [vmem:[#allocation15 + $0x2488] sm:$0xff]
    %v6236 = vld [vmem:[#allocation15 + $0x2490] sm:$0xff]
    %v6237 = vld [vmem:[#allocation15 + $0x2498] sm:$0xff]
    %v6238 = vld [vmem:[#allocation15 + $0x24a0] sm:$0xff]
    %v6239 = vld [vmem:[#allocation15 + $0x24a8] sm:$0xff]
    %v6240 = vld [vmem:[#allocation15 + $0x24b0] sm:$0xff]
    %v6241 = vld [vmem:[#allocation15 + $0x24b8] sm:$0xff]
    %v6242 = vld [vmem:[#allocation15 + $0x24c0] sm:$0xff]
    %v6243 = vld [vmem:[#allocation15 + $0x24c8] sm:$0xff]
    %v6244 = vld [vmem:[#allocation15 + $0x24d0] sm:$0xff]
    %v6245 = vld [vmem:[#allocation15 + $0x24d8] sm:$0xff]
    %v6246 = vld [vmem:[#allocation15 + $0x24e0] sm:$0xff]
    %v6247 = vld [vmem:[#allocation15 + $0x24e8] sm:$0xff]
    %v6248 = vld [vmem:[#allocation15 + $0x24f0] sm:$0xff]
    %v6249 = vld [vmem:[#allocation15 + $0x24f8] sm:$0xff]
    %v6250 = vld [vmem:[#allocation15 + $0x2500] sm:$0xff]
    %v6251 = vld [vmem:[#allocation15 + $0x2508] sm:$0xff]
    %v6252 = vld [vmem:[#allocation15 + $0x2510] sm:$0xff]
    %v6253 = vld [vmem:[#allocation15 + $0x2518] sm:$0xff]
    %v6254 = vld [vmem:[#allocation15 + $0x2520] sm:$0xff]
    %v6255 = vld [vmem:[#allocation15 + $0x2528] sm:$0xff]
    %v6256 = vld [vmem:[#allocation15 + $0x2530] sm:$0xff]
    %v6257 = vld [vmem:[#allocation15 + $0x2538] sm:$0xff]
    %v6258 = vld [vmem:[#allocation15 + $0x2540] sm:$0xff]
    %v6259 = vld [vmem:[#allocation15 + $0x2548] sm:$0xff]
    %v6260 = vld [vmem:[#allocation15 + $0x2550] sm:$0xff]
    %v6261 = vld [vmem:[#allocation15 + $0x2558] sm:$0xff]
    %v6262 = vld [vmem:[#allocation15 + $0x2560] sm:$0xff]
    %v6263 = vld [vmem:[#allocation15 + $0x2568] sm:$0xff]
    %v6264 = vld [vmem:[#allocation15 + $0x2570] sm:$0xff]
    %v6265 = vld [vmem:[#allocation15 + $0x2578] sm:$0xff]
    %v6266 = vld [vmem:[#allocation15 + $0x2580] sm:$0xff]
    %v6267 = vld [vmem:[#allocation15 + $0x2588] sm:$0xff]
    %v6268 = vld [vmem:[#allocation15 + $0x2590] sm:$0xff]
    %v6269 = vld [vmem:[#allocation15 + $0x2598] sm:$0xff]
    %v6270 = vld [vmem:[#allocation15 + $0x25a0] sm:$0xff]
    %v6271 = vld [vmem:[#allocation15 + $0x25a8] sm:$0xff]
    %v6272 = vld [vmem:[#allocation15 + $0x25b0] sm:$0xff]
    %v6273 = vld [vmem:[#allocation15 + $0x25b8] sm:$0xff]
    %v6274 = vld [vmem:[#allocation15 + $0x25c0] sm:$0xff]
    %v6275 = vld [vmem:[#allocation15 + $0x25c8] sm:$0xff]
    %v6276 = vld [vmem:[#allocation15 + $0x25d0] sm:$0xff]
    %v6277 = vld [vmem:[#allocation15 + $0x25d8] sm:$0xff]
    %v6278 = vld [vmem:[#allocation15 + $0x25e0] sm:$0xff]
    %v6279 = vld [vmem:[#allocation15 + $0x25e8] sm:$0xff]
    %v6280 = vld [vmem:[#allocation15 + $0x25f0] sm:$0xff]
    %v6281 = vld [vmem:[#allocation15 + $0x25f8] sm:$0xff]
    %v6282 = vld [vmem:[#allocation15 + $0x2600] sm:$0xff]
    %v6283 = vld [vmem:[#allocation15 + $0x2608] sm:$0xff]
    %v6284 = vld [vmem:[#allocation15 + $0x2610] sm:$0xff]
    %v6285 = vld [vmem:[#allocation15 + $0x2618] sm:$0xff]
    %v6286 = vld [vmem:[#allocation15 + $0x2620] sm:$0xff]
    %v6287 = vld [vmem:[#allocation15 + $0x2628] sm:$0xff]
    %v6288 = vld [vmem:[#allocation15 + $0x2630] sm:$0xff]
    %v6289 = vld [vmem:[#allocation15 + $0x2638] sm:$0xff]
    %v6290 = vld [vmem:[#allocation15 + $0x2640] sm:$0xff]
    %v6291 = vld [vmem:[#allocation15 + $0x2648] sm:$0xff]
    %v6292 = vld [vmem:[#allocation15 + $0x2650] sm:$0xff]
    %v6293 = vld [vmem:[#allocation15 + $0x2658] sm:$0xff]
    %v6294 = vld [vmem:[#allocation15 + $0x2660] sm:$0xff]
    %v6295 = vld [vmem:[#allocation15 + $0x2668] sm:$0xff]
    %v6296 = vld [vmem:[#allocation15 + $0x2670] sm:$0xff]
    %v6297 = vld [vmem:[#allocation15 + $0x2678] sm:$0xff]
    %v6298 = vld [vmem:[#allocation15 + $0x2680] sm:$0xff]
    %v6299 = vld [vmem:[#allocation15 + $0x2688] sm:$0xff]
    %v6300 = vld [vmem:[#allocation15 + $0x2690] sm:$0xff]
    %v6301 = vld [vmem:[#allocation15 + $0x2698] sm:$0xff]
    %v6302 = vld [vmem:[#allocation15 + $0x26a0] sm:$0xff]
    %v6303 = vld [vmem:[#allocation15 + $0x26a8] sm:$0xff]
    %v6304 = vld [vmem:[#allocation15 + $0x26b0] sm:$0xff]
    %v6305 = vld [vmem:[#allocation15 + $0x26b8] sm:$0xff]
    %v6306 = vld [vmem:[#allocation15 + $0x26c0] sm:$0xff]
    %v6307 = vld [vmem:[#allocation15 + $0x26c8] sm:$0xff]
    %v6308 = vld [vmem:[#allocation15 + $0x26d0] sm:$0xff]
    %v6309 = vld [vmem:[#allocation15 + $0x26d8] sm:$0xff]
    %v6310 = vld [vmem:[#allocation15 + $0x26e0] sm:$0xff]
    %v6311 = vld [vmem:[#allocation15 + $0x26e8] sm:$0xff]
    %v6312 = vld [vmem:[#allocation15 + $0x26f0] sm:$0xff]
    %v6313 = vld [vmem:[#allocation15 + $0x26f8] sm:$0xff]
    %v6314 = vld [vmem:[#allocation15 + $0x2700] sm:$0xff]
    %v6315 = vld [vmem:[#allocation15 + $0x2708] sm:$0xff]
    %v6316 = vld [vmem:[#allocation15 + $0x2710] sm:$0xff]
    %v6317 = vld [vmem:[#allocation15 + $0x2718] sm:$0xff]
    %v6318 = vld [vmem:[#allocation15 + $0x2720] sm:$0xff]
    %v6319 = vld [vmem:[#allocation15 + $0x2728] sm:$0xff]
    %v6320 = vld [vmem:[#allocation15 + $0x2730] sm:$0xff]
    %v6321 = vld [vmem:[#allocation15 + $0x2738] sm:$0xff]
    %v6322 = vld [vmem:[#allocation15 + $0x2740] sm:$0xff]
    %v6323 = vld [vmem:[#allocation15 + $0x2748] sm:$0xff]
    %v6324 = vld [vmem:[#allocation15 + $0x2750] sm:$0xff]
    %v6325 = vld [vmem:[#allocation15 + $0x2758] sm:$0xff]
    %v6326 = vld [vmem:[#allocation15 + $0x2760] sm:$0xff]
    %v6327 = vld [vmem:[#allocation15 + $0x2768] sm:$0xff]
    %v6328 = vld [vmem:[#allocation15 + $0x2770] sm:$0xff]
    %v6329 = vld [vmem:[#allocation15 + $0x2778] sm:$0xff]
    %v6330 = vld [vmem:[#allocation15 + $0x2780] sm:$0xff]
    %v6331 = vld [vmem:[#allocation15 + $0x2788] sm:$0xff]
    %v6332 = vld [vmem:[#allocation15 + $0x2790] sm:$0xff]
    %v6333 = vld [vmem:[#allocation15 + $0x2798] sm:$0xff]
    %v6334 = vld [vmem:[#allocation15 + $0x27a0] sm:$0xff]
    %v6335 = vld [vmem:[#allocation15 + $0x27a8] sm:$0xff]
    %v6336 = vld [vmem:[#allocation15 + $0x27b0] sm:$0xff]
    %v6337 = vld [vmem:[#allocation15 + $0x27b8] sm:$0xff]
    %v6338 = vld [vmem:[#allocation15 + $0x27c0] sm:$0xff]
    %v6339 = vld [vmem:[#allocation15 + $0x27c8] sm:$0xff]
    %v6340 = vld [vmem:[#allocation15 + $0x27d0] sm:$0xff]
    %v6341 = vld [vmem:[#allocation15 + $0x27d8] sm:$0xff]
    %v6342 = vld [vmem:[#allocation15 + $0x27e0] sm:$0xff]
    %v6343 = vld [vmem:[#allocation15 + $0x27e8] sm:$0xff]
    %v6344 = vld [vmem:[#allocation15 + $0x27f0] sm:$0xff]
    %v6345 = vld [vmem:[#allocation15 + $0x27f8] sm:$0xff]
    %v6346 = vld [vmem:[#allocation15 + $0x2800] sm:$0xff]
    %v6347 = vld [vmem:[#allocation15 + $0x2808] sm:$0xff]
    %v6348 = vld [vmem:[#allocation15 + $0x2810] sm:$0xff]
    %v6349 = vld [vmem:[#allocation15 + $0x2818] sm:$0xff]
    %v6350 = vld [vmem:[#allocation15 + $0x2820] sm:$0xff]
    %v6351 = vld [vmem:[#allocation15 + $0x2828] sm:$0xff]
    %v6352 = vld [vmem:[#allocation15 + $0x2830] sm:$0xff]
    %v6353 = vld [vmem:[#allocation15 + $0x2838] sm:$0xff]
    %v6354 = vld [vmem:[#allocation15 + $0x2840] sm:$0xff]
    %v6355 = vld [vmem:[#allocation15 + $0x2848] sm:$0xff]
    %v6356 = vld [vmem:[#allocation15 + $0x2850] sm:$0xff]
    %v6357 = vld [vmem:[#allocation15 + $0x2858] sm:$0xff]
    %v6358 = vld [vmem:[#allocation15 + $0x2860] sm:$0xff]
    %v6359 = vld [vmem:[#allocation15 + $0x2868] sm:$0xff]
    %v6360 = vld [vmem:[#allocation15 + $0x2870] sm:$0xff]
    %v6361 = vld [vmem:[#allocation15 + $0x2878] sm:$0xff]
    %v6362 = vld [vmem:[#allocation15 + $0x2880] sm:$0xff]
    %v6363 = vld [vmem:[#allocation15 + $0x2888] sm:$0xff]
    %v6364 = vld [vmem:[#allocation15 + $0x2890] sm:$0xff]
    %v6365 = vld [vmem:[#allocation15 + $0x2898] sm:$0xff]
    %v6366 = vld [vmem:[#allocation15 + $0x28a0] sm:$0xff]
    %v6367 = vld [vmem:[#allocation15 + $0x28a8] sm:$0xff]
    %v6368 = vld [vmem:[#allocation15 + $0x28b0] sm:$0xff]
    %v6369 = vld [vmem:[#allocation15 + $0x28b8] sm:$0xff]
    %v6370 = vld [vmem:[#allocation15 + $0x28c0] sm:$0xff]
    %v6371 = vld [vmem:[#allocation15 + $0x28c8] sm:$0xff]
    %v6372 = vld [vmem:[#allocation15 + $0x28d0] sm:$0xff]
    %v6373 = vld [vmem:[#allocation15 + $0x28d8] sm:$0xff]
    %v6374 = vld [vmem:[#allocation15 + $0x28e0] sm:$0xff]
    %v6375 = vld [vmem:[#allocation15 + $0x28e8] sm:$0xff]
    %v6376 = vld [vmem:[#allocation15 + $0x28f0] sm:$0xff]
    %v6377 = vld [vmem:[#allocation15 + $0x28f8] sm:$0xff]
    %v6378 = vld [vmem:[#allocation15 + $0x2900] sm:$0xff]
    %v6379 = vld [vmem:[#allocation15 + $0x2908] sm:$0xff]
    %v6380 = vld [vmem:[#allocation15 + $0x2910] sm:$0xff]
    %v6381 = vld [vmem:[#allocation15 + $0x2918] sm:$0xff]
    %v6382 = vld [vmem:[#allocation15 + $0x2920] sm:$0xff]
    %v6383 = vld [vmem:[#allocation15 + $0x2928] sm:$0xff]
    %v6384 = vld [vmem:[#allocation15 + $0x2930] sm:$0xff]
    %v6385 = vld [vmem:[#allocation15 + $0x2938] sm:$0xff]
    %v6386 = vld [vmem:[#allocation15 + $0x2940] sm:$0xff]
    %v6387 = vld [vmem:[#allocation15 + $0x2948] sm:$0xff]
    %v6388 = vld [vmem:[#allocation15 + $0x2950] sm:$0xff]
    %v6389 = vld [vmem:[#allocation15 + $0x2958] sm:$0xff]
    %v6390 = vld [vmem:[#allocation15 + $0x2960] sm:$0xff]
    %v6391 = vld [vmem:[#allocation15 + $0x2968] sm:$0xff]
    %v6392 = vld [vmem:[#allocation15 + $0x2970] sm:$0xff]
    %v6393 = vld [vmem:[#allocation15 + $0x2978] sm:$0xff]
    %v6394 = vld [vmem:[#allocation15 + $0x2980] sm:$0xff]
    %v6395 = vld [vmem:[#allocation15 + $0x2988] sm:$0xff]
    %v6396 = vld [vmem:[#allocation15 + $0x2990] sm:$0xff]
    %v6397 = vld [vmem:[#allocation15 + $0x2998] sm:$0xff]
    %v6398 = vld [vmem:[#allocation15 + $0x29a0] sm:$0xff]
    %v6399 = vld [vmem:[#allocation15 + $0x29a8] sm:$0xff]
    %v6400 = vld [vmem:[#allocation15 + $0x29b0] sm:$0xff]
    %v6401 = vld [vmem:[#allocation15 + $0x29b8] sm:$0xff]
    %v6402 = vld [vmem:[#allocation15 + $0x29c0] sm:$0xff]
    %v6403 = vld [vmem:[#allocation15 + $0x29c8] sm:$0xff]
    %v6404 = vld [vmem:[#allocation15 + $0x29d0] sm:$0xff]
    %v6405 = vld [vmem:[#allocation15 + $0x29d8] sm:$0xff]
    %v6406 = vld [vmem:[#allocation15 + $0x29e0] sm:$0xff]
    %v6407 = vld [vmem:[#allocation15 + $0x29e8] sm:$0xff]
    %v6408 = vld [vmem:[#allocation15 + $0x29f0] sm:$0xff]
    %v6409 = vld [vmem:[#allocation15 + $0x29f8] sm:$0xff]
    %v6410 = vld [vmem:[#allocation15 + $0x2a00] sm:$0xff]
    %v6411 = vld [vmem:[#allocation15 + $0x2a08] sm:$0xff]
    %v6412 = vld [vmem:[#allocation15 + $0x2a10] sm:$0xff]
    %v6413 = vld [vmem:[#allocation15 + $0x2a18] sm:$0xff]
    %v6414 = vld [vmem:[#allocation15 + $0x2a20] sm:$0xff]
    %v6415 = vld [vmem:[#allocation15 + $0x2a28] sm:$0xff]
    %v6416 = vld [vmem:[#allocation15 + $0x2a30] sm:$0xff]
    %v6417 = vld [vmem:[#allocation15 + $0x2a38] sm:$0xff]
    %v6418 = vld [vmem:[#allocation15 + $0x2a40] sm:$0xff]
    %v6419 = vld [vmem:[#allocation15 + $0x2a48] sm:$0xff]
    %v6420 = vld [vmem:[#allocation15 + $0x2a50] sm:$0xff]
    %v6421 = vld [vmem:[#allocation15 + $0x2a58] sm:$0xff]
    %v6422 = vld [vmem:[#allocation15 + $0x2a60] sm:$0xff]
    %v6423 = vld [vmem:[#allocation15 + $0x2a68] sm:$0xff]
    %v6424 = vld [vmem:[#allocation15 + $0x2a70] sm:$0xff]
    %v6425 = vld [vmem:[#allocation15 + $0x2a78] sm:$0xff]
    %v6426 = vld [vmem:[#allocation15 + $0x2a80] sm:$0xff]
    %v6427 = vld [vmem:[#allocation15 + $0x2a88] sm:$0xff]
    %v6428 = vld [vmem:[#allocation15 + $0x2a90] sm:$0xff]
    %v6429 = vld [vmem:[#allocation15 + $0x2a98] sm:$0xff]
    %v6430 = vld [vmem:[#allocation15 + $0x2aa0] sm:$0xff]
    %v6431 = vld [vmem:[#allocation15 + $0x2aa8] sm:$0xff]
    %v6432 = vld [vmem:[#allocation15 + $0x2ab0] sm:$0xff]
    %v6433 = vld [vmem:[#allocation15 + $0x2ab8] sm:$0xff]
    %v6434 = vld [vmem:[#allocation15 + $0x2ac0] sm:$0xff]
    %v6435 = vld [vmem:[#allocation15 + $0x2ac8] sm:$0xff]
    %v6436 = vld [vmem:[#allocation15 + $0x2ad0] sm:$0xff]
    %v6437 = vld [vmem:[#allocation15 + $0x2ad8] sm:$0xff]
    %v6438 = vld [vmem:[#allocation15 + $0x2ae0] sm:$0xff]
    %v6439 = vld [vmem:[#allocation15 + $0x2ae8] sm:$0xff]
    %v6440 = vld [vmem:[#allocation15 + $0x2af0] sm:$0xff]
    %v6441 = vld [vmem:[#allocation15 + $0x2af8] sm:$0xff]
    %v6442 = vld [vmem:[#allocation15 + $0x2b00] sm:$0xff]
    %v6443 = vld [vmem:[#allocation15 + $0x2b08] sm:$0xff]
    %v6444 = vld [vmem:[#allocation15 + $0x2b10] sm:$0xff]
    %v6445 = vld [vmem:[#allocation15 + $0x2b18] sm:$0xff]
    %v6446 = vld [vmem:[#allocation15 + $0x2b20] sm:$0xff]
    %v6447 = vld [vmem:[#allocation15 + $0x2b28] sm:$0xff]
    %v6448 = vld [vmem:[#allocation15 + $0x2b30] sm:$0xff]
    %v6449 = vld [vmem:[#allocation15 + $0x2b38] sm:$0xff]
    %v6450 = vld [vmem:[#allocation15 + $0x2b40] sm:$0xff]
    %v6451 = vld [vmem:[#allocation15 + $0x2b48] sm:$0xff]
    %v6452 = vld [vmem:[#allocation15 + $0x2b50] sm:$0xff]
    %v6453 = vld [vmem:[#allocation15 + $0x2b58] sm:$0xff]
    %v6454 = vld [vmem:[#allocation15 + $0x2b60] sm:$0xff]
    %v6455 = vld [vmem:[#allocation15 + $0x2b68] sm:$0xff]
    %v6456 = vld [vmem:[#allocation15 + $0x2b70] sm:$0xff]
    %v6457 = vld [vmem:[#allocation15 + $0x2b78] sm:$0xff]
    %v6458 = vld [vmem:[#allocation15 + $0x2b80] sm:$0xff]
    %v6459 = vld [vmem:[#allocation15 + $0x2b88] sm:$0xff]
    %v6460 = vld [vmem:[#allocation15 + $0x2b90] sm:$0xff]
    %v6461 = vld [vmem:[#allocation15 + $0x2b98] sm:$0xff]
    %v6462 = vld [vmem:[#allocation15 + $0x2ba0] sm:$0xff]
    %v6463 = vld [vmem:[#allocation15 + $0x2ba8] sm:$0xff]
    %v6464 = vld [vmem:[#allocation15 + $0x2bb0] sm:$0xff]
    %v6465 = vld [vmem:[#allocation15 + $0x2bb8] sm:$0xff]
    %v6466 = vld [vmem:[#allocation15 + $0x2bc0] sm:$0xff]
    %v6467 = vld [vmem:[#allocation15 + $0x2bc8] sm:$0xff]
    %v6468 = vld [vmem:[#allocation15 + $0x2bd0] sm:$0xff]
    %v6469 = vld [vmem:[#allocation15 + $0x2bd8] sm:$0xff]
    %v6470 = vld [vmem:[#allocation15 + $0x2be0] sm:$0xff]
    %v6471 = vld [vmem:[#allocation15 + $0x2be8] sm:$0xff]
    %v6472 = vld [vmem:[#allocation15 + $0x2bf0] sm:$0xff]
    %v6473 = vld [vmem:[#allocation15 + $0x2bf8] sm:$0xff]
    %v6474 = vld [vmem:[#allocation17] sm:$0xf]
    %v6476 = vlaneseq
    %v6477 = vshrl.u32 %v6476, 7
    %v6478 = vsub.s32 0, %v6477
    %v6479 = vrot.slane %v6474, %v6478
    %v6480 = vlaneseq
    %v6481 = vshrl.u32 %v6480, 7
    %v6482 = vsub.s32 1, %v6481
    %v6483 = vrot.slane %v6474, %v6482
    %v6484 = vlaneseq
    %v6485 = vshrl.u32 %v6484, 7
    %v6486 = vsub.s32 2, %v6485
    %v6487 = vrot.slane %v6474, %v6486
    %v6488 = vlaneseq
    %v6489 = vshrl.u32 %v6488, 7
    %v6490 = vsub.s32 3, %v6489
    %v6491 = vrot.slane %v6474, %v6490
    %v6502 = vcombine.high %v5060, %v5060
    %v6504 = vunpack.c.l.s4 1983009808
    %v6505 = vunpack.c.0.s8 %v6504
    %v6506 = vlaneseq
    %v6507 = vshrl.u32 %v6506, 7
    %v6508 = vsub.s32 %v6505, %v6507
    %v6509 = vrot.slane %v5060, %v6508
    %v6511 = vunpack.c.l.s4 1983009808
    %v6512 = vunpack.c.0.s8 %v6511
    %v6513 = vlaneseq
    %v6514 = vshrl.u32 %v6513, 7
    %v6515 = vsub.s32 %v6512, %v6514
    %v6516 = vrot.slane %v6502, %v6515
    %v6517 = vcombine.high %v6509, %v6509
    %v6518 = vcombine.high %v6516, %v6516
    %v6519 = vcombine.high %v5061, %v5061
    %v6521 = vunpack.c.l.s4 1983009808
    %v6522 = vunpack.c.0.s8 %v6521
    %v6523 = vlaneseq
    %v6524 = vshrl.u32 %v6523, 7
    %v6525 = vsub.s32 %v6522, %v6524
    %v6526 = vrot.slane %v5061, %v6525
    %v6528 = vunpack.c.l.s4 1983009808
    %v6529 = vunpack.c.0.s8 %v6528
    %v6530 = vlaneseq
    %v6531 = vshrl.u32 %v6530, 7
    %v6532 = vsub.s32 %v6529, %v6531
    %v6533 = vrot.slane %v6519, %v6532
    %v6534 = vcombine.high %v6526, %v6526
    %v6535 = vcombine.high %v6533, %v6533
    %v6536 = vcombine.high %v5062, %v5062
    %v6538 = vunpack.c.l.s4 1983009808
    %v6539 = vunpack.c.0.s8 %v6538
    %v6540 = vlaneseq
    %v6541 = vshrl.u32 %v6540, 7
    %v6542 = vsub.s32 %v6539, %v6541
    %v6543 = vrot.slane %v5062, %v6542
    %v6545 = vunpack.c.l.s4 1983009808
    %v6546 = vunpack.c.0.s8 %v6545
    %v6547 = vlaneseq
    %v6548 = vshrl.u32 %v6547, 7
    %v6549 = vsub.s32 %v6546, %v6548
    %v6550 = vrot.slane %v6536, %v6549
    %v6551 = vcombine.high %v6543, %v6543
    %v6552 = vcombine.high %v6550, %v6550
    %v6553 = vcombine.high %v5063, %v5063
    %v6555 = vunpack.c.l.s4 1983009808
    %v6556 = vunpack.c.0.s8 %v6555
    %v6557 = vlaneseq
    %v6558 = vshrl.u32 %v6557, 7
    %v6559 = vsub.s32 %v6556, %v6558
    %v6560 = vrot.slane %v5063, %v6559
    %v6562 = vunpack.c.l.s4 1983009808
    %v6563 = vunpack.c.0.s8 %v6562
    %v6564 = vlaneseq
    %v6565 = vshrl.u32 %v6564, 7
    %v6566 = vsub.s32 %v6563, %v6565
    %v6567 = vrot.slane %v6553, %v6566
    %v6568 = vcombine.high %v6560, %v6560
    %v6569 = vcombine.high %v6567, %v6567
    %v6570 = vcombine.high %v5064, %v5064
    %v6572 = vunpack.c.l.s4 1983009808
    %v6573 = vunpack.c.0.s8 %v6572
    %v6574 = vlaneseq
    %v6575 = vshrl.u32 %v6574, 7
    %v6576 = vsub.s32 %v6573, %v6575
    %v6577 = vrot.slane %v5064, %v6576
    %v6579 = vunpack.c.l.s4 1983009808
    %v6580 = vunpack.c.0.s8 %v6579
    %v6581 = vlaneseq
    %v6582 = vshrl.u32 %v6581, 7
    %v6583 = vsub.s32 %v6580, %v6582
    %v6584 = vrot.slane %v6570, %v6583
    %v6585 = vcombine.high %v6577, %v6577
    %v6586 = vcombine.high %v6584, %v6584
    %v6588 = vunpack.c.l.s4 1983009808
    %v6589 = vunpack.c.0.s8 %v6588
    %v6590 = vlaneseq
    %v6591 = vshrl.u32 %v6590, 7
    %v6592 = vsub.s32 %v6589, %v6591
    %v6593 = vrot.slane %v5065, %v6592
    %v6594 = vcombine.high %v6593, %v6593
    %6617 = vmatprep.subr.mxu0 %v5067
    %6618 = vmatpush1.msra.mxu0 %v5066
    %6619 = vmatprep.subr.mxu0 %v5071
    %6620 = vmatpush1.msra.mxu0 %v5070
    %6621 = vmatprep.subr.mxu0 %v5075
    %6622 = vmatpush1.msra.mxu0 %v5074
    %6623 = vmatprep.subr.mxu0 %v5079
    %6624 = vmatpush1.msra.mxu0 %v5078
    %6625 = vmatprep.subr.mxu0 %v5083
    %6626 = vmatpush1.msra.mxu0 %v5082
    %6627 = vmatprep.subr.mxu0 %v5087
    %6628 = vmatpush1.msra.mxu0 %v5086
    %6629 = vmatprep.subr.mxu0 %v5091
    %6630 = vmatpush1.msra.mxu0 %v5090
    %6631 = vmatprep.subr.mxu0 %v5095
    %6632 = vmatpush1.msra.mxu0 %v5094
    %6633 = vmatprep.subr.mxu0 %v5099
    %6634 = vmatpush1.msra.mxu0 %v5098
    %6635 = vmatprep.subr.mxu0 %v5103
    %6636 = vmatpush1.msra.mxu0 %v5102
    %6637 = vmatprep.subr.mxu0 %v5107
    %6638 = vmatpush1.msra.mxu0 %v5106
    %6639 = vmatprep.subr.mxu0 %v5111
    %6640 = vmatpush1.msra.mxu0 %v5110
    %6641 = vmatprep.subr.mxu0 %v5115
    %6642 = vmatpush1.msra.mxu0 %v5114
    %6643 = vmatprep.subr.mxu0 %v5119
    %6644 = vmatpush1.msra.mxu0 %v5118
    %6645 = vmatprep.subr.mxu0 %v5123
    %6646 = vmatpush1.msra.mxu0 %v5122
    %6647 = vmatprep.subr.mxu0 %v5127
    %6648 = vmatpush1.msra.mxu0 %v5126
    %6649 = vmatprep.subr.mxu0 %v5131
    %6650 = vmatpush1.msra.mxu0 %v5130
    %6651 = vmatprep.subr.mxu0 %v5135
    %6652 = vmatpush1.msra.mxu0 %v5134
    %6653 = vmatprep.subr.mxu0 %v5139
    %6654 = vmatpush1.msra.mxu0 %v5138
    %6655 = vmatprep.subr.mxu0 %v5143
    %6656 = vmatpush1.msra.mxu0 %v5142
    %6657 = vmatprep.subr.mxu0 %v5147
    %6658 = vmatpush1.msra.mxu0 %v5146
    %6659 = vmatprep.subr.mxu0 %v5151
    %6660 = vmatpush1.msra.mxu0 %v5150
    %6661 = vmatprep.subr.mxu0 %v5155
    %6662 = vmatpush1.msra.mxu0 %v5154
    %6663 = vmatprep.subr.mxu0 %v5159
    %6664 = vmatpush1.msra.mxu0 %v5158
    %6665 = vmatprep.subr.mxu0 %v5163
    %6666 = vmatpush1.msra.mxu0 %v5162
    %6667 = vmatprep.subr.mxu0 %v5167
    %6668 = vmatpush1.msra.mxu0 %v5166
    %6669 = vmatprep.subr.mxu0 %v5171
    %6670 = vmatpush1.msra.mxu0 %v5170
    %6671 = vmatprep.subr.mxu0 %v5175
    %6672 = vmatpush1.msra.mxu0 %v5174
    %6673 = vmatprep.subr.mxu0 %v5179
    %6674 = vmatpush1.msra.mxu0 %v5178
    %6675 = vmatprep.subr.mxu0 %v5183
    %6676 = vmatpush1.msra.mxu0 %v5182
    %6677 = vmatprep.subr.mxu0 %v5187
    %6678 = vmatpush1.msra.mxu0 %v5186
    %6679 = vmatprep.subr.mxu0 %v5191
    %6680 = vmatpush1.msra.mxu0 %v5190
    %6681 = vmatprep.mubr.f32.mxu0 %v6517
    %6682 = vmatmul.mubr.f32.gmra.mrb[0].mxu0 %v6509
    %v6683 = vpop.f32.mrb[0].mxu0
    %v6684 = vadd.f32 %v6479, %v6683
    %v6685 = vpop.f32.mrb[0].mxu0
    %v6686 = vadd.f32 %v6483, %v6685
    %6687 = vdwg.mxu0
    %6688 = vmatprep.subr.mxu0 %v5195
    %6689 = vmatpush1.msra.mxu0 %v5194
    %6690 = vmatprep.subr.mxu0 %v5199
    %6691 = vmatpush1.msra.mxu0 %v5198
    %6692 = vmatprep.subr.mxu0 %v5203
    %6693 = vmatpush1.msra.mxu0 %v5202
    %6694 = vmatprep.subr.mxu0 %v5207
    %6695 = vmatpush1.msra.mxu0 %v5206
    %6696 = vmatprep.subr.mxu0 %v5211
    %6697 = vmatpush1.msra.mxu0 %v5210
    %6698 = vmatprep.subr.mxu0 %v5215
    %6699 = vmatpush1.msra.mxu0 %v5214
    %6700 = vmatprep.subr.mxu0 %v5219
    %6701 = vmatpush1.msra.mxu0 %v5218
    %6702 = vmatprep.subr.mxu0 %v5223
    %6703 = vmatpush1.msra.mxu0 %v5222
    %6704 = vmatprep.subr.mxu0 %v5227
    %6705 = vmatpush1.msra.mxu0 %v5226
    %6706 = vmatprep.subr.mxu0 %v5231
    %6707 = vmatpush1.msra.mxu0 %v5230
    %6708 = vmatprep.subr.mxu0 %v5235
    %6709 = vmatpush1.msra.mxu0 %v5234
    %6710 = vmatprep.subr.mxu0 %v5239
    %6711 = vmatpush1.msra.mxu0 %v5238
    %6712 = vmatprep.subr.mxu0 %v5243
    %6713 = vmatpush1.msra.mxu0 %v5242
    %6714 = vmatprep.subr.mxu0 %v5247
    %6715 = vmatpush1.msra.mxu0 %v5246
    %6716 = vmatprep.subr.mxu0 %v5251
    %6717 = vmatpush1.msra.mxu0 %v5250
    %6718 = vmatprep.subr.mxu0 %v5255
    %6719 = vmatpush1.msra.mxu0 %v5254
    %6720 = vmatprep.subr.mxu0 %v5259
    %6721 = vmatpush1.msra.mxu0 %v5258
    %6722 = vmatprep.subr.mxu0 %v5263
    %6723 = vmatpush1.msra.mxu0 %v5262
    %6724 = vmatprep.subr.mxu0 %v5267
    %6725 = vmatpush1.msra.mxu0 %v5266
    %6726 = vmatprep.subr.mxu0 %v5271
    %6727 = vmatpush1.msra.mxu0 %v5270
    %6728 = vmatprep.subr.mxu0 %v5275
    %6729 = vmatpush1.msra.mxu0 %v5274
    %6730 = vmatprep.subr.mxu0 %v5279
    %6731 = vmatpush1.msra.mxu0 %v5278
    %6732 = vmatprep.subr.mxu0 %v5283
    %6733 = vmatpush1.msra.mxu0 %v5282
    %6734 = vmatprep.subr.mxu0 %v5287
    %6735 = vmatpush1.msra.mxu0 %v5286
    %6736 = vmatprep.subr.mxu0 %v5291
    %6737 = vmatpush1.msra.mxu0 %v5290
    %6738 = vmatprep.subr.mxu0 %v5295
    %6739 = vmatpush1.msra.mxu0 %v5294
    %6740 = vmatprep.subr.mxu0 %v5299
    %6741 = vmatpush1.msra.mxu0 %v5298
    %6742 = vmatprep.subr.mxu0 %v5303
    %6743 = vmatpush1.msra.mxu0 %v5302
    %6744 = vmatprep.subr.mxu0 %v5307
    %6745 = vmatpush1.msra.mxu0 %v5306
    %6746 = vmatprep.subr.mxu0 %v5311
    %6747 = vmatpush1.msra.mxu0 %v5310
    %6748 = vmatprep.subr.mxu0 %v5315
    %6749 = vmatpush1.msra.mxu0 %v5314
    %6750 = vmatprep.subr.mxu0 %v5319
    %6751 = vmatpush1.msra.mxu0 %v5318
    %6752 = vmatprep.mubr.f32.mxu0 %v6518
    %6753 = vmatmul.mubr.f32.gmra.mrb[0].mxu0 %v6516
    %v6754 = vpop.f32.mrb[0].mxu0
    %v6755 = vadd.f32 %v6684, %v6754
    %v6756 = vpop.f32.mrb[0].mxu0
    %v6757 = vadd.f32 %v6686, %v6756
    %6758 = vdwg.mxu0
    %6759 = vmatprep.subr.mxu0 %v5323
    %6760 = vmatpush1.msra.mxu0 %v5322
    %6761 = vmatprep.subr.mxu0 %v5327
    %6762 = vmatpush1.msra.mxu0 %v5326
    %6763 = vmatprep.subr.mxu0 %v5331
    %6764 = vmatpush1.msra.mxu0 %v5330
    %6765 = vmatprep.subr.mxu0 %v5335
    %6766 = vmatpush1.msra.mxu0 %v5334
    %6767 = vmatprep.subr.mxu0 %v5339
    %6768 = vmatpush1.msra.mxu0 %v5338
    %6769 = vmatprep.subr.mxu0 %v5343
    %6770 = vmatpush1.msra.mxu0 %v5342
    %6771 = vmatprep.subr.mxu0 %v5347
    %6772 = vmatpush1.msra.mxu0 %v5346
    %6773 = vmatprep.subr.mxu0 %v5351
    %6774 = vmatpush1.msra.mxu0 %v5350
    %6775 = vmatprep.subr.mxu0 %v5355
    %6776 = vmatpush1.msra.mxu0 %v5354
    %6777 = vmatprep.subr.mxu0 %v5359
    %6778 = vmatpush1.msra.mxu0 %v5358
    %6779 = vmatprep.subr.mxu0 %v5363
    %6780 = vmatpush1.msra.mxu0 %v5362
    %6781 = vmatprep.subr.mxu0 %v5367
    %6782 = vmatpush1.msra.mxu0 %v5366
    %6783 = vmatprep.subr.mxu0 %v5371
    %6784 = vmatpush1.msra.mxu0 %v5370
    %6785 = vmatprep.subr.mxu0 %v5375
    %6786 = vmatpush1.msra.mxu0 %v5374
    %6787 = vmatprep.subr.mxu0 %v5379
    %6788 = vmatpush1.msra.mxu0 %v5378
    %6789 = vmatprep.subr.mxu0 %v5383
    %6790 = vmatpush1.msra.mxu0 %v5382
    %6791 = vmatprep.subr.mxu0 %v5387
    %6792 = vmatpush1.msra.mxu0 %v5386
    %6793 = vmatprep.subr.mxu0 %v5391
    %6794 = vmatpush1.msra.mxu0 %v5390
    %6795 = vmatprep.subr.mxu0 %v5395
    %6796 = vmatpush1.msra.mxu0 %v5394
    %6797 = vmatprep.subr.mxu0 %v5399
    %6798 = vmatpush1.msra.mxu0 %v5398
    %6799 = vmatprep.subr.mxu0 %v5403
    %6800 = vmatpush1.msra.mxu0 %v5402
    %6801 = vmatprep.subr.mxu0 %v5407
    %6802 = vmatpush1.msra.mxu0 %v5406
    %6803 = vmatprep.subr.mxu0 %v5411
    %6804 = vmatpush1.msra.mxu0 %v5410
    %6805 = vmatprep.subr.mxu0 %v5415
    %6806 = vmatpush1.msra.mxu0 %v5414
    %6807 = vmatprep.subr.mxu0 %v5419
    %6808 = vmatpush1.msra.mxu0 %v5418
    %6809 = vmatprep.subr.mxu0 %v5423
    %6810 = vmatpush1.msra.mxu0 %v5422
    %6811 = vmatprep.subr.mxu0 %v5427
    %6812 = vmatpush1.msra.mxu0 %v5426
    %6813 = vmatprep.subr.mxu0 %v5431
    %6814 = vmatpush1.msra.mxu0 %v5430
    %6815 = vmatprep.subr.mxu0 %v5435
    %6816 = vmatpush1.msra.mxu0 %v5434
    %6817 = vmatprep.subr.mxu0 %v5439
    %6818 = vmatpush1.msra.mxu0 %v5438
    %6819 = vmatprep.subr.mxu0 %v5443
    %6820 = vmatpush1.msra.mxu0 %v5442
    %6821 = vmatprep.subr.mxu0 %v5447
    %6822 = vmatpush1.msra.mxu0 %v5446
    %6823 = vmatprep.mubr.f32.mxu0 %v6534
    %6824 = vmatmul.mubr.f32.gmra.mrb[0].mxu0 %v6526
    %v6825 = vpop.f32.mrb[0].mxu0
    %v6826 = vadd.f32 %v6755, %v6825
    %v6827 = vpop.f32.mrb[0].mxu0
    %v6828 = vadd.f32 %v6757, %v6827
    %6829 = vdwg.mxu0
    %6830 = vmatprep.subr.mxu0 %v5451
    %6831 = vmatpush1.msra.mxu0 %v5450
    %6832 = vmatprep.subr.mxu0 %v5455
    %6833 = vmatpush1.msra.mxu0 %v5454
    %6834 = vmatprep.subr.mxu0 %v5459
    %6835 = vmatpush1.msra.mxu0 %v5458
    %6836 = vmatprep.subr.mxu0 %v5463
    %6837 = vmatpush1.msra.mxu0 %v5462
    %6838 = vmatprep.subr.mxu0 %v5467
    %6839 = vmatpush1.msra.mxu0 %v5466
    %6840 = vmatprep.subr.mxu0 %v5471
    %6841 = vmatpush1.msra.mxu0 %v5470
    %6842 = vmatprep.subr.mxu0 %v5475
    %6843 = vmatpush1.msra.mxu0 %v5474
    %6844 = vmatprep.subr.mxu0 %v5479
    %6845 = vmatpush1.msra.mxu0 %v5478
    %6846 = vmatprep.subr.mxu0 %v5483
    %6847 = vmatpush1.msra.mxu0 %v5482
    %6848 = vmatprep.subr.mxu0 %v5487
    %6849 = vmatpush1.msra.mxu0 %v5486
    %6850 = vmatprep.subr.mxu0 %v5491
    %6851 = vmatpush1.msra.mxu0 %v5490
    %6852 = vmatprep.subr.mxu0 %v5495
    %6853 = vmatpush1.msra.mxu0 %v5494
    %6854 = vmatprep.subr.mxu0 %v5499
    %6855 = vmatpush1.msra.mxu0 %v5498
    %6856 = vmatprep.subr.mxu0 %v5503
    %6857 = vmatpush1.msra.mxu0 %v5502
    %6858 = vmatprep.subr.mxu0 %v5507
    %6859 = vmatpush1.msra.mxu0 %v5506
    %6860 = vmatprep.subr.mxu0 %v5511
    %6861 = vmatpush1.msra.mxu0 %v5510
    %6862 = vmatprep.subr.mxu0 %v5515
    %6863 = vmatpush1.msra.mxu0 %v5514
    %6864 = vmatprep.subr.mxu0 %v5519
    %6865 = vmatpush1.msra.mxu0 %v5518
    %6866 = vmatprep.subr.mxu0 %v5523
    %6867 = vmatpush1.msra.mxu0 %v5522
    %6868 = vmatprep.subr.mxu0 %v5527
    %6869 = vmatpush1.msra.mxu0 %v5526
    %6870 = vmatprep.subr.mxu0 %v5531
    %6871 = vmatpush1.msra.mxu0 %v5530
    %6872 = vmatprep.subr.mxu0 %v5535
    %6873 = vmatpush1.msra.mxu0 %v5534
    %6874 = vmatprep.subr.mxu0 %v5539
    %6875 = vmatpush1.msra.mxu0 %v5538
    %6876 = vmatprep.subr.mxu0 %v5543
    %6877 = vmatpush1.msra.mxu0 %v5542
    %6878 = vmatprep.subr.mxu0 %v5547
    %6879 = vmatpush1.msra.mxu0 %v5546
    %6880 = vmatprep.subr.mxu0 %v5551
    %6881 = vmatpush1.msra.mxu0 %v5550
    %6882 = vmatprep.subr.mxu0 %v5555
    %6883 = vmatpush1.msra.mxu0 %v5554
    %6884 = vmatprep.subr.mxu0 %v5559
    %6885 = vmatpush1.msra.mxu0 %v5558
    %6886 = vmatprep.subr.mxu0 %v5563
    %6887 = vmatpush1.msra.mxu0 %v5562
    %6888 = vmatprep.subr.mxu0 %v5567
    %6889 = vmatpush1.msra.mxu0 %v5566
    %6890 = vmatprep.subr.mxu0 %v5571
    %6891 = vmatpush1.msra.mxu0 %v5570
    %6892 = vmatprep.subr.mxu0 %v5575
    %6893 = vmatpush1.msra.mxu0 %v5574
    %6894 = vmatprep.mubr.f32.mxu0 %v6535
    %6895 = vmatmul.mubr.f32.gmra.mrb[0].mxu0 %v6533
    %v6896 = vpop.f32.mrb[0].mxu0
    %v6897 = vadd.f32 %v6826, %v6896
    %v6898 = vpop.f32.mrb[0].mxu0
    %v6899 = vadd.f32 %v6828, %v6898
    %6900 = vdwg.mxu0
    %6901 = vmatprep.subr.mxu0 %v5579
    %6902 = vmatpush1.msra.mxu0 %v5578
    %6903 = vmatprep.subr.mxu0 %v5583
    %6904 = vmatpush1.msra.mxu0 %v5582
    %6905 = vmatprep.subr.mxu0 %v5587
    %6906 = vmatpush1.msra.mxu0 %v5586
    %6907 = vmatprep.subr.mxu0 %v5591
    %6908 = vmatpush1.msra.mxu0 %v5590
    %6909 = vmatprep.subr.mxu0 %v5595
    %6910 = vmatpush1.msra.mxu0 %v5594
    %6911 = vmatprep.subr.mxu0 %v5599
    %6912 = vmatpush1.msra.mxu0 %v5598
    %6913 = vmatprep.subr.mxu0 %v5603
    %6914 = vmatpush1.msra.mxu0 %v5602
    %6915 = vmatprep.subr.mxu0 %v5607
    %6916 = vmatpush1.msra.mxu0 %v5606
    %6917 = vmatprep.subr.mxu0 %v5611
    %6918 = vmatpush1.msra.mxu0 %v5610
    %6919 = vmatprep.subr.mxu0 %v5615
    %6920 = vmatpush1.msra.mxu0 %v5614
    %6921 = vmatprep.subr.mxu0 %v5619
    %6922 = vmatpush1.msra.mxu0 %v5618
    %6923 = vmatprep.subr.mxu0 %v5623
    %6924 = vmatpush1.msra.mxu0 %v5622
    %6925 = vmatprep.subr.mxu0 %v5627
    %6926 = vmatpush1.msra.mxu0 %v5626
    %6927 = vmatprep.subr.mxu0 %v5631
    %6928 = vmatpush1.msra.mxu0 %v5630
    %6929 = vmatprep.subr.mxu0 %v5635
    %6930 = vmatpush1.msra.mxu0 %v5634
    %6931 = vmatprep.subr.mxu0 %v5639
    %6932 = vmatpush1.msra.mxu0 %v5638
    %6933 = vmatprep.subr.mxu0 %v5643
    %6934 = vmatpush1.msra.mxu0 %v5642
    %6935 = vmatprep.subr.mxu0 %v5647
    %6936 = vmatpush1.msra.mxu0 %v5646
    %6937 = vmatprep.subr.mxu0 %v5651
    %6938 = vmatpush1.msra.mxu0 %v5650
    %6939 = vmatprep.subr.mxu0 %v5655
    %6940 = vmatpush1.msra.mxu0 %v5654
    %6941 = vmatprep.subr.mxu0 %v5659
    %6942 = vmatpush1.msra.mxu0 %v5658
    %6943 = vmatprep.subr.mxu0 %v5663
    %6944 = vmatpush1.msra.mxu0 %v5662
    %6945 = vmatprep.subr.mxu0 %v5667
    %6946 = vmatpush1.msra.mxu0 %v5666
    %6947 = vmatprep.subr.mxu0 %v5671
    %6948 = vmatpush1.msra.mxu0 %v5670
    %6949 = vmatprep.subr.mxu0 %v5675
    %6950 = vmatpush1.msra.mxu0 %v5674
    %6951 = vmatprep.subr.mxu0 %v5679
    %6952 = vmatpush1.msra.mxu0 %v5678
    %6953 = vmatprep.subr.mxu0 %v5683
    %6954 = vmatpush1.msra.mxu0 %v5682
    %6955 = vmatprep.subr.mxu0 %v5687
    %6956 = vmatpush1.msra.mxu0 %v5686
    %6957 = vmatprep.subr.mxu0 %v5691
    %6958 = vmatpush1.msra.mxu0 %v5690
    %6959 = vmatprep.subr.mxu0 %v5695
    %6960 = vmatpush1.msra.mxu0 %v5694
    %6961 = vmatprep.subr.mxu0 %v5699
    %6962 = vmatpush1.msra.mxu0 %v5698
    %6963 = vmatprep.subr.mxu0 %v5703
    %6964 = vmatpush1.msra.mxu0 %v5702
    %6965 = vmatprep.mubr.f32.mxu0 %v6551
    %6966 = vmatmul.mubr.f32.gmra.mrb[0].mxu0 %v6543
    %v6967 = vpop.f32.mrb[0].mxu0
    %v6968 = vadd.f32 %v6897, %v6967
    %v6969 = vpop.f32.mrb[0].mxu0
    %v6970 = vadd.f32 %v6899, %v6969
    %6971 = vdwg.mxu0
    %6972 = vmatprep.subr.mxu0 %v5707
    %6973 = vmatpush1.msra.mxu0 %v5706
    %6974 = vmatprep.subr.mxu0 %v5711
    %6975 = vmatpush1.msra.mxu0 %v5710
    %6976 = vmatprep.subr.mxu0 %v5715
    %6977 = vmatpush1.msra.mxu0 %v5714
    %6978 = vmatprep.subr.mxu0 %v5719
    %6979 = vmatpush1.msra.mxu0 %v5718
    %6980 = vmatprep.subr.mxu0 %v5723
    %6981 = vmatpush1.msra.mxu0 %v5722
    %6982 = vmatprep.subr.mxu0 %v5727
    %6983 = vmatpush1.msra.mxu0 %v5726
    %6984 = vmatprep.subr.mxu0 %v5731
    %6985 = vmatpush1.msra.mxu0 %v5730
    %6986 = vmatprep.subr.mxu0 %v5735
    %6987 = vmatpush1.msra.mxu0 %v5734
    %6988 = vmatprep.subr.mxu0 %v5739
    %6989 = vmatpush1.msra.mxu0 %v5738
    %6990 = vmatprep.subr.mxu0 %v5743
    %6991 = vmatpush1.msra.mxu0 %v5742
    %6992 = vmatprep.subr.mxu0 %v5747
    %6993 = vmatpush1.msra.mxu0 %v5746
    %6994 = vmatprep.subr.mxu0 %v5751
    %6995 = vmatpush1.msra.mxu0 %v5750
    %6996 = vmatprep.subr.mxu0 %v5755
    %6997 = vmatpush1.msra.mxu0 %v5754
    %6998 = vmatprep.subr.mxu0 %v5759
    %6999 = vmatpush1.msra.mxu0 %v5758
    %7000 = vmatprep.subr.mxu0 %v5763
    %7001 = vmatpush1.msra.mxu0 %v5762
    %7002 = vmatprep.subr.mxu0 %v5767
    %7003 = vmatpush1.msra.mxu0 %v5766
    %7004 = vmatprep.subr.mxu0 %v5771
    %7005 = vmatpush1.msra.mxu0 %v5770
    %7006 = vmatprep.subr.mxu0 %v5775
    %7007 = vmatpush1.msra.mxu0 %v5774
    %7008 = vmatprep.subr.mxu0 %v5779
    %7009 = vmatpush1.msra.mxu0 %v5778
    %7010 = vmatprep.subr.mxu0 %v5783
    %7011 = vmatpush1.msra.mxu0 %v5782
    %7012 = vmatprep.subr.mxu0 %v5787
    %7013 = vmatpush1.msra.mxu0 %v5786
    %7014 = vmatprep.subr.mxu0 %v5791
    %7015 = vmatpush1.msra.mxu0 %v5790
    %7016 = vmatprep.subr.mxu0 %v5795
    %7017 = vmatpush1.msra.mxu0 %v5794
    %7018 = vmatprep.subr.mxu0 %v5799
    %7019 = vmatpush1.msra.mxu0 %v5798
    %7020 = vmatprep.subr.mxu0 %v5803
    %7021 = vmatpush1.msra.mxu0 %v5802
    %7022 = vmatprep.subr.mxu0 %v5807
    %7023 = vmatpush1.msra.mxu0 %v5806
    %7024 = vmatprep.subr.mxu0 %v5811
    %7025 = vmatpush1.msra.mxu0 %v5810
    %7026 = vmatprep.subr.mxu0 %v5815
    %7027 = vmatpush1.msra.mxu0 %v5814
    %7028 = vmatprep.subr.mxu0 %v5819
    %7029 = vmatpush1.msra.mxu0 %v5818
    %7030 = vmatprep.subr.mxu0 %v5823
    %7031 = vmatpush1.msra.mxu0 %v5822
    %7032 = vmatprep.subr.mxu0 %v5827
    %7033 = vmatpush1.msra.mxu0 %v5826
    %7034 = vmatprep.subr.mxu0 %v5831
    %7035 = vmatpush1.msra.mxu0 %v5830
    %7036 = vmatprep.mubr.f32.mxu0 %v6552
    %7037 = vmatmul.mubr.f32.gmra.mrb[0].mxu0 %v6550
    %v7038 = vpop.f32.mrb[0].mxu0
    %v7039 = vadd.f32 %v6968, %v7038
    %v7040 = vpop.f32.mrb[0].mxu0
    %v7041 = vadd.f32 %v6970, %v7040
    %7042 = vdwg.mxu0
    %7043 = vmatprep.subr.mxu0 %v5835
    %7044 = vmatpush1.msra.mxu0 %v5834
    %7045 = vmatprep.subr.mxu0 %v5839
    %7046 = vmatpush1.msra.mxu0 %v5838
    %7047 = vmatprep.subr.mxu0 %v5843
    %7048 = vmatpush1.msra.mxu0 %v5842
    %7049 = vmatprep.subr.mxu0 %v5847
    %7050 = vmatpush1.msra.mxu0 %v5846
    %7051 = vmatprep.subr.mxu0 %v5851
    %7052 = vmatpush1.msra.mxu0 %v5850
    %7053 = vmatprep.subr.mxu0 %v5855
    %7054 = vmatpush1.msra.mxu0 %v5854
    %7055 = vmatprep.subr.mxu0 %v5859
    %7056 = vmatpush1.msra.mxu0 %v5858
    %7057 = vmatprep.subr.mxu0 %v5863
    %7058 = vmatpush1.msra.mxu0 %v5862
    %7059 = vmatprep.subr.mxu0 %v5867
    %7060 = vmatpush1.msra.mxu0 %v5866
    %7061 = vmatprep.subr.mxu0 %v5871
    %7062 = vmatpush1.msra.mxu0 %v5870
    %7063 = vmatprep.subr.mxu0 %v5875
    %7064 = vmatpush1.msra.mxu0 %v5874
    %7065 = vmatprep.subr.mxu0 %v5879
    %7066 = vmatpush1.msra.mxu0 %v5878
    %7067 = vmatprep.subr.mxu0 %v5883
    %7068 = vmatpush1.msra.mxu0 %v5882
    %7069 = vmatprep.subr.mxu0 %v5887
    %7070 = vmatpush1.msra.mxu0 %v5886
    %7071 = vmatprep.subr.mxu0 %v5891
    %7072 = vmatpush1.msra.mxu0 %v5890
    %7073 = vmatprep.subr.mxu0 %v5895
    %7074 = vmatpush1.msra.mxu0 %v5894
    %7075 = vmatprep.subr.mxu0 %v5899
    %7076 = vmatpush1.msra.mxu0 %v5898
    %7077 = vmatprep.subr.mxu0 %v5903
    %7078 = vmatpush1.msra.mxu0 %v5902
    %7079 = vmatprep.subr.mxu0 %v5907
    %7080 = vmatpush1.msra.mxu0 %v5906
    %7081 = vmatprep.subr.mxu0 %v5911
    %7082 = vmatpush1.msra.mxu0 %v5910
    %7083 = vmatprep.subr.mxu0 %v5915
    %7084 = vmatpush1.msra.mxu0 %v5914
    %7085 = vmatprep.subr.mxu0 %v5919
    %7086 = vmatpush1.msra.mxu0 %v5918
    %7087 = vmatprep.subr.mxu0 %v5923
    %7088 = vmatpush1.msra.mxu0 %v5922
    %7089 = vmatprep.subr.mxu0 %v5927
    %7090 = vmatpush1.msra.mxu0 %v5926
    %7091 = vmatprep.subr.mxu0 %v5931
    %7092 = vmatpush1.msra.mxu0 %v5930
    %7093 = vmatprep.subr.mxu0 %v5935
    %7094 = vmatpush1.msra.mxu0 %v5934
    %7095 = vmatprep.subr.mxu0 %v5939
    %7096 = vmatpush1.msra.mxu0 %v5938
    %7097 = vmatprep.subr.mxu0 %v5943
    %7098 = vmatpush1.msra.mxu0 %v5942
    %7099 = vmatprep.subr.mxu0 %v5947
    %7100 = vmatpush1.msra.mxu0 %v5946
    %7101 = vmatprep.subr.mxu0 %v5951
    %7102 = vmatpush1.msra.mxu0 %v5950
    %7103 = vmatprep.subr.mxu0 %v5955
    %7104 = vmatpush1.msra.mxu0 %v5954
    %7105 = vmatprep.subr.mxu0 %v5959
    %7106 = vmatpush1.msra.mxu0 %v5958
    %7107 = vmatprep.mubr.f32.mxu0 %v6568
    %7108 = vmatmul.mubr.f32.gmra.mrb[0].mxu0 %v6560
    %v7109 = vpop.f32.mrb[0].mxu0
    %v7110 = vadd.f32 %v7039, %v7109
    %v7111 = vpop.f32.mrb[0].mxu0
    %v7112 = vadd.f32 %v7041, %v7111
    %7113 = vdwg.mxu0
    %7114 = vmatprep.subr.mxu0 %v5963
    %7115 = vmatpush1.msra.mxu0 %v5962
    %7116 = vmatprep.subr.mxu0 %v5967
    %7117 = vmatpush1.msra.mxu0 %v5966
    %7118 = vmatprep.subr.mxu0 %v5971
    %7119 = vmatpush1.msra.mxu0 %v5970
    %7120 = vmatprep.subr.mxu0 %v5975
    %7121 = vmatpush1.msra.mxu0 %v5974
    %7122 = vmatprep.subr.mxu0 %v5979
    %7123 = vmatpush1.msra.mxu0 %v5978
    %7124 = vmatprep.subr.mxu0 %v5983
    %7125 = vmatpush1.msra.mxu0 %v5982
    %7126 = vmatprep.subr.mxu0 %v5987
    %7127 = vmatpush1.msra.mxu0 %v5986
    %7128 = vmatprep.subr.mxu0 %v5991
    %7129 = vmatpush1.msra.mxu0 %v5990
    %7130 = vmatprep.subr.mxu0 %v5995
    %7131 = vmatpush1.msra.mxu0 %v5994
    %7132 = vmatprep.subr.mxu0 %v5999
    %7133 = vmatpush1.msra.mxu0 %v5998
    %7134 = vmatprep.subr.mxu0 %v6003
    %7135 = vmatpush1.msra.mxu0 %v6002
    %7136 = vmatprep.subr.mxu0 %v6007
    %7137 = vmatpush1.msra.mxu0 %v6006
    %7138 = vmatprep.subr.mxu0 %v6011
    %7139 = vmatpush1.msra.mxu0 %v6010
    %7140 = vmatprep.subr.mxu0 %v6015
    %7141 = vmatpush1.msra.mxu0 %v6014
    %7142 = vmatprep.subr.mxu0 %v6019
    %7143 = vmatpush1.msra.mxu0 %v6018
    %7144 = vmatprep.subr.mxu0 %v6023
    %7145 = vmatpush1.msra.mxu0 %v6022
    %7146 = vmatprep.subr.mxu0 %v6027
    %7147 = vmatpush1.msra.mxu0 %v6026
    %7148 = vmatprep.subr.mxu0 %v6031
    %7149 = vmatpush1.msra.mxu0 %v6030
    %7150 = vmatprep.subr.mxu0 %v6035
    %7151 = vmatpush1.msra.mxu0 %v6034
    %7152 = vmatprep.subr.mxu0 %v6039
    %7153 = vmatpush1.msra.mxu0 %v6038
    %7154 = vmatprep.subr.mxu0 %v6043
    %7155 = vmatpush1.msra.mxu0 %v6042
    %7156 = vmatprep.subr.mxu0 %v6047
    %7157 = vmatpush1.msra.mxu0 %v6046
    %7158 = vmatprep.subr.mxu0 %v6051
    %7159 = vmatpush1.msra.mxu0 %v6050
    %7160 = vmatprep.subr.mxu0 %v6055
    %7161 = vmatpush1.msra.mxu0 %v6054
    %7162 = vmatprep.subr.mxu0 %v6059
    %7163 = vmatpush1.msra.mxu0 %v6058
    %7164 = vmatprep.subr.mxu0 %v6063
    %7165 = vmatpush1.msra.mxu0 %v6062
    %7166 = vmatprep.subr.mxu0 %v6067
    %7167 = vmatpush1.msra.mxu0 %v6066
    %7168 = vmatprep.subr.mxu0 %v6071
    %7169 = vmatpush1.msra.mxu0 %v6070
    %7170 = vmatprep.subr.mxu0 %v6075
    %7171 = vmatpush1.msra.mxu0 %v6074
    %7172 = vmatprep.subr.mxu0 %v6079
    %7173 = vmatpush1.msra.mxu0 %v6078
    %7174 = vmatprep.subr.mxu0 %v6083
    %7175 = vmatpush1.msra.mxu0 %v6082
    %7176 = vmatprep.subr.mxu0 %v6087
    %7177 = vmatpush1.msra.mxu0 %v6086
    %7178 = vmatprep.mubr.f32.mxu0 %v6569
    %7179 = vmatmul.mubr.f32.gmra.mrb[0].mxu0 %v6567
    %v7180 = vpop.f32.mrb[0].mxu0
    %v7181 = vadd.f32 %v7110, %v7180
    %v7182 = vpop.f32.mrb[0].mxu0
    %v7183 = vadd.f32 %v7112, %v7182
    %7184 = vdwg.mxu0
    %7185 = vmatprep.subr.mxu0 %v6091
    %7186 = vmatpush1.msra.mxu0 %v6090
    %7187 = vmatprep.subr.mxu0 %v6095
    %7188 = vmatpush1.msra.mxu0 %v6094
    %7189 = vmatprep.subr.mxu0 %v6099
    %7190 = vmatpush1.msra.mxu0 %v6098
    %7191 = vmatprep.subr.mxu0 %v6103
    %7192 = vmatpush1.msra.mxu0 %v6102
    %7193 = vmatprep.subr.mxu0 %v6107
    %7194 = vmatpush1.msra.mxu0 %v6106
    %7195 = vmatprep.subr.mxu0 %v6111
    %7196 = vmatpush1.msra.mxu0 %v6110
    %7197 = vmatprep.subr.mxu0 %v6115
    %7198 = vmatpush1.msra.mxu0 %v6114
    %7199 = vmatprep.subr.mxu0 %v6119
    %7200 = vmatpush1.msra.mxu0 %v6118
    %7201 = vmatprep.subr.mxu0 %v6123
    %7202 = vmatpush1.msra.mxu0 %v6122
    %7203 = vmatprep.subr.mxu0 %v6127
    %7204 = vmatpush1.msra.mxu0 %v6126
    %7205 = vmatprep.subr.mxu0 %v6131
    %7206 = vmatpush1.msra.mxu0 %v6130
    %7207 = vmatprep.subr.mxu0 %v6135
    %7208 = vmatpush1.msra.mxu0 %v6134
    %7209 = vmatprep.subr.mxu0 %v6139
    %7210 = vmatpush1.msra.mxu0 %v6138
    %7211 = vmatprep.subr.mxu0 %v6143
    %7212 = vmatpush1.msra.mxu0 %v6142
    %7213 = vmatprep.subr.mxu0 %v6147
    %7214 = vmatpush1.msra.mxu0 %v6146
    %7215 = vmatprep.subr.mxu0 %v6151
    %7216 = vmatpush1.msra.mxu0 %v6150
    %7217 = vmatprep.subr.mxu0 %v6155
    %7218 = vmatpush1.msra.mxu0 %v6154
    %7219 = vmatprep.subr.mxu0 %v6159
    %7220 = vmatpush1.msra.mxu0 %v6158
    %7221 = vmatprep.subr.mxu0 %v6163
    %7222 = vmatpush1.msra.mxu0 %v6162
    %7223 = vmatprep.subr.mxu0 %v6167
    %7224 = vmatpush1.msra.mxu0 %v6166
    %7225 = vmatprep.subr.mxu0 %v6171
    %7226 = vmatpush1.msra.mxu0 %v6170
    %7227 = vmatprep.subr.mxu0 %v6175
    %7228 = vmatpush1.msra.mxu0 %v6174
    %7229 = vmatprep.subr.mxu0 %v6179
    %7230 = vmatpush1.msra.mxu0 %v6178
    %7231 = vmatprep.subr.mxu0 %v6183
    %7232 = vmatpush1.msra.mxu0 %v6182
    %7233 = vmatprep.subr.mxu0 %v6187
    %7234 = vmatpush1.msra.mxu0 %v6186
    %7235 = vmatprep.subr.mxu0 %v6191
    %7236 = vmatpush1.msra.mxu0 %v6190
    %7237 = vmatprep.subr.mxu0 %v6195
    %7238 = vmatpush1.msra.mxu0 %v6194
    %7239 = vmatprep.subr.mxu0 %v6199
    %7240 = vmatpush1.msra.mxu0 %v6198
    %7241 = vmatprep.subr.mxu0 %v6203
    %7242 = vmatpush1.msra.mxu0 %v6202
    %7243 = vmatprep.subr.mxu0 %v6207
    %7244 = vmatpush1.msra.mxu0 %v6206
    %7245 = vmatprep.subr.mxu0 %v6211
    %7246 = vmatpush1.msra.mxu0 %v6210
    %7247 = vmatprep.subr.mxu0 %v6215
    %7248 = vmatpush1.msra.mxu0 %v6214
    %7249 = vmatprep.mubr.f32.mxu0 %v6585
    %7250 = vmatmul.mubr.f32.gmra.mrb[0].mxu0 %v6577
    %v7251 = vpop.f32.mrb[0].mxu0
    %v7252 = vadd.f32 %v7181, %v7251
    %v7253 = vpop.f32.mrb[0].mxu0
    %v7254 = vadd.f32 %v7183, %v7253
    %7255 = vdwg.mxu0
    %7256 = vmatprep.subr.mxu0 %v6219
    %7257 = vmatpush1.msra.mxu0 %v6218
    %7258 = vmatprep.subr.mxu0 %v6223
    %7259 = vmatpush1.msra.mxu0 %v6222
    %7260 = vmatprep.subr.mxu0 %v6227
    %7261 = vmatpush1.msra.mxu0 %v6226
    %7262 = vmatprep.subr.mxu0 %v6231
    %7263 = vmatpush1.msra.mxu0 %v6230
    %7264 = vmatprep.subr.mxu0 %v6235
    %7265 = vmatpush1.msra.mxu0 %v6234
    %7266 = vmatprep.subr.mxu0 %v6239
    %7267 = vmatpush1.msra.mxu0 %v6238
    %7268 = vmatprep.subr.mxu0 %v6243
    %7269 = vmatpush1.msra.mxu0 %v6242
    %7270 = vmatprep.subr.mxu0 %v6247
    %7271 = vmatpush1.msra.mxu0 %v6246
    %7272 = vmatprep.subr.mxu0 %v6251
    %7273 = vmatpush1.msra.mxu0 %v6250
    %7274 = vmatprep.subr.mxu0 %v6255
    %7275 = vmatpush1.msra.mxu0 %v6254
    %7276 = vmatprep.subr.mxu0 %v6259
    %7277 = vmatpush1.msra.mxu0 %v6258
    %7278 = vmatprep.subr.mxu0 %v6263
    %7279 = vmatpush1.msra.mxu0 %v6262
    %7280 = vmatprep.subr.mxu0 %v6267
    %7281 = vmatpush1.msra.mxu0 %v6266
    %7282 = vmatprep.subr.mxu0 %v6271
    %7283 = vmatpush1.msra.mxu0 %v6270
    %7284 = vmatprep.subr.mxu0 %v6275
    %7285 = vmatpush1.msra.mxu0 %v6274
    %7286 = vmatprep.subr.mxu0 %v6279
    %7287 = vmatpush1.msra.mxu0 %v6278
    %7288 = vmatprep.subr.mxu0 %v6283
    %7289 = vmatpush1.msra.mxu0 %v6282
    %7290 = vmatprep.subr.mxu0 %v6287
    %7291 = vmatpush1.msra.mxu0 %v6286
    %7292 = vmatprep.subr.mxu0 %v6291
    %7293 = vmatpush1.msra.mxu0 %v6290
    %7294 = vmatprep.subr.mxu0 %v6295
    %7295 = vmatpush1.msra.mxu0 %v6294
    %7296 = vmatprep.subr.mxu0 %v6299
    %7297 = vmatpush1.msra.mxu0 %v6298
    %7298 = vmatprep.subr.mxu0 %v6303
    %7299 = vmatpush1.msra.mxu0 %v6302
    %7300 = vmatprep.subr.mxu0 %v6307
    %7301 = vmatpush1.msra.mxu0 %v6306
    %7302 = vmatprep.subr.mxu0 %v6311
    %7303 = vmatpush1.msra.mxu0 %v6310
    %7304 = vmatprep.subr.mxu0 %v6315
    %7305 = vmatpush1.msra.mxu0 %v6314
    %7306 = vmatprep.subr.mxu0 %v6319
    %7307 = vmatpush1.msra.mxu0 %v6318
    %7308 = vmatprep.subr.mxu0 %v6323
    %7309 = vmatpush1.msra.mxu0 %v6322
    %7310 = vmatprep.subr.mxu0 %v6327
    %7311 = vmatpush1.msra.mxu0 %v6326
    %7312 = vmatprep.subr.mxu0 %v6331
    %7313 = vmatpush1.msra.mxu0 %v6330
    %7314 = vmatprep.subr.mxu0 %v6335
    %7315 = vmatpush1.msra.mxu0 %v6334
    %7316 = vmatprep.subr.mxu0 %v6339
    %7317 = vmatpush1.msra.mxu0 %v6338
    %7318 = vmatprep.subr.mxu0 %v6343
    %7319 = vmatpush1.msra.mxu0 %v6342
    %7320 = vmatprep.mubr.f32.mxu0 %v6586
    %7321 = vmatmul.mubr.f32.gmra.mrb[0].mxu0 %v6584
    %v7322 = vpop.f32.mrb[0].mxu0
    %v7323 = vadd.f32 %v7252, %v7322
    %v7324 = vpop.f32.mrb[0].mxu0
    %v7325 = vadd.f32 %v7254, %v7324
    %7326 = vdwg.mxu0
    %7327 = vmatprep.subr.mxu0 %v6347
    %7328 = vmatpush1.msra.mxu0 %v6346
    %7329 = vmatprep.subr.mxu0 %v6351
    %7330 = vmatpush1.msra.mxu0 %v6350
    %7331 = vmatprep.subr.mxu0 %v6355
    %7332 = vmatpush1.msra.mxu0 %v6354
    %7333 = vmatprep.subr.mxu0 %v6359
    %7334 = vmatpush1.msra.mxu0 %v6358
    %7335 = vmatprep.subr.mxu0 %v6363
    %7336 = vmatpush1.msra.mxu0 %v6362
    %7337 = vmatprep.subr.mxu0 %v6367
    %7338 = vmatpush1.msra.mxu0 %v6366
    %7339 = vmatprep.subr.mxu0 %v6371
    %7340 = vmatpush1.msra.mxu0 %v6370
    %7341 = vmatprep.subr.mxu0 %v6375
    %7342 = vmatpush1.msra.mxu0 %v6374
    %7343 = vmatprep.subr.mxu0 %v6379
    %7344 = vmatpush1.msra.mxu0 %v6378
    %7345 = vmatprep.subr.mxu0 %v6383
    %7346 = vmatpush1.msra.mxu0 %v6382
    %7347 = vmatprep.subr.mxu0 %v6387
    %7348 = vmatpush1.msra.mxu0 %v6386
    %7349 = vmatprep.subr.mxu0 %v6391
    %7350 = vmatpush1.msra.mxu0 %v6390
    %7351 = vmatprep.subr.mxu0 %v6395
    %7352 = vmatpush1.msra.mxu0 %v6394
    %7353 = vmatprep.subr.mxu0 %v6399
    %7354 = vmatpush1.msra.mxu0 %v6398
    %7355 = vmatprep.subr.mxu0 %v6403
    %7356 = vmatpush1.msra.mxu0 %v6402
    %7357 = vmatprep.subr.mxu0 %v6407
    %7358 = vmatpush1.msra.mxu0 %v6406
    %7359 = vmatprep.subr.mxu0 %v6411
    %7360 = vmatpush1.msra.mxu0 %v6410
    %7361 = vmatprep.subr.mxu0 %v6415
    %7362 = vmatpush1.msra.mxu0 %v6414
    %7363 = vmatprep.subr.mxu0 %v6419
    %7364 = vmatpush1.msra.mxu0 %v6418
    %7365 = vmatprep.subr.mxu0 %v6423
    %7366 = vmatpush1.msra.mxu0 %v6422
    %7367 = vmatprep.subr.mxu0 %v6427
    %7368 = vmatpush1.msra.mxu0 %v6426
    %7369 = vmatprep.subr.mxu0 %v6431
    %7370 = vmatpush1.msra.mxu0 %v6430
    %7371 = vmatprep.subr.mxu0 %v6435
    %7372 = vmatpush1.msra.mxu0 %v6434
    %7373 = vmatprep.subr.mxu0 %v6439
    %7374 = vmatpush1.msra.mxu0 %v6438
    %7375 = vmatprep.subr.mxu0 %v6443
    %7376 = vmatpush1.msra.mxu0 %v6442
    %7377 = vmatprep.subr.mxu0 %v6447
    %7378 = vmatpush1.msra.mxu0 %v6446
    %7379 = vmatprep.subr.mxu0 %v6451
    %7380 = vmatpush1.msra.mxu0 %v6450
    %7381 = vmatprep.subr.mxu0 %v6455
    %7382 = vmatpush1.msra.mxu0 %v6454
    %7383 = vmatprep.subr.mxu0 %v6459
    %7384 = vmatpush1.msra.mxu0 %v6458
    %7385 = vmatprep.subr.mxu0 %v6463
    %7386 = vmatpush1.msra.mxu0 %v6462
    %7387 = vmatprep.subr.mxu0 %v6467
    %7388 = vmatpush1.msra.mxu0 %v6466
    %7389 = vmatprep.subr.mxu0 %v6471
    %7390 = vmatpush1.msra.mxu0 %v6470
    %7391 = vmatprep.mubr.f32.mxu0 %v6594
    %7392 = vmatmul.mubr.f32.gmra.mrb[0].mxu0 %v6593
    %v7393 = vpop.f32.mrb[0].mxu0
    %v7394 = vadd.f32 %v7323, %v7393
    %v7395 = vpop.f32.mrb[0].mxu0
    %v7396 = vadd.f32 %v7325, %v7395
    %7397 = vdwg.mxu0
    %7398 = vmatprep.subr.mxu0 %v5069
    %7399 = vmatpush1.msra.mxu0 %v5068
    %7400 = vmatprep.subr.mxu0 %v5073
    %7401 = vmatpush1.msra.mxu0 %v5072
    %7402 = vmatprep.subr.mxu0 %v5077
    %7403 = vmatpush1.msra.mxu0 %v5076
    %7404 = vmatprep.subr.mxu0 %v5081
    %7405 = vmatpush1.msra.mxu0 %v5080
    %7406 = vmatprep.subr.mxu0 %v5085
    %7407 = vmatpush1.msra.mxu0 %v5084
    %7408 = vmatprep.subr.mxu0 %v5089
    %7409 = vmatpush1.msra.mxu0 %v5088
    %7410 = vmatprep.subr.mxu0 %v5093
    %7411 = vmatpush1.msra.mxu0 %v5092
    %7412 = vmatprep.subr.mxu0 %v5097
    %7413 = vmatpush1.msra.mxu0 %v5096
    %7414 = vmatprep.subr.mxu0 %v5101
    %7415 = vmatpush1.msra.mxu0 %v5100
    %7416 = vmatprep.subr.mxu0 %v5105
    %7417 = vmatpush1.msra.mxu0 %v5104
    %7418 = vmatprep.subr.mxu0 %v5109
    %7419 = vmatpush1.msra.mxu0 %v5108
    %7420 = vmatprep.subr.mxu0 %v5113
    %7421 = vmatpush1.msra.mxu0 %v5112
    %7422 = vmatprep.subr.mxu0 %v5117
    %7423 = vmatpush1.msra.mxu0 %v5116
    %7424 = vmatprep.subr.mxu0 %v5121
    %7425 = vmatpush1.msra.mxu0 %v5120
    %7426 = vmatprep.subr.mxu0 %v5125
    %7427 = vmatpush1.msra.mxu0 %v5124
    %7428 = vmatprep.subr.mxu0 %v5129
    %7429 = vmatpush1.msra.mxu0 %v5128
    %7430 = vmatprep.subr.mxu0 %v5133
    %7431 = vmatpush1.msra.mxu0 %v5132
    %7432 = vmatprep.subr.mxu0 %v5137
    %7433 = vmatpush1.msra.mxu0 %v5136
    %7434 = vmatprep.subr.mxu0 %v5141
    %7435 = vmatpush1.msra.mxu0 %v5140
    %7436 = vmatprep.subr.mxu0 %v5145
    %7437 = vmatpush1.msra.mxu0 %v5144
    %7438 = vmatprep.subr.mxu0 %v5149
    %7439 = vmatpush1.msra.mxu0 %v5148
    %7440 = vmatprep.subr.mxu0 %v5153
    %7441 = vmatpush1.msra.mxu0 %v5152
    %7442 = vmatprep.subr.mxu0 %v5157
    %7443 = vmatpush1.msra.mxu0 %v5156
    %7444 = vmatprep.subr.mxu0 %v5161
    %7445 = vmatpush1.msra.mxu0 %v5160
    %7446 = vmatprep.subr.mxu0 %v5165
    %7447 = vmatpush1.msra.mxu0 %v5164
    %7448 = vmatprep.subr.mxu0 %v5169
    %7449 = vmatpush1.msra.mxu0 %v5168
    %7450 = vmatprep.subr.mxu0 %v5173
    %7451 = vmatpush1.msra.mxu0 %v5172
    %7452 = vmatprep.subr.mxu0 %v5177
    %7453 = vmatpush1.msra.mxu0 %v5176
    %7454 = vmatprep.subr.mxu0 %v5181
    %7455 = vmatpush1.msra.mxu0 %v5180
    %7456 = vmatprep.subr.mxu0 %v5185
    %7457 = vmatpush1.msra.mxu0 %v5184
    %7458 = vmatprep.subr.mxu0 %v5189
    %7459 = vmatpush1.msra.mxu0 %v5188
    %7460 = vmatprep.subr.mxu0 %v5193
    %7461 = vmatpush1.msra.mxu0 %v5192
    %7462 = vmatprep.mubr.f32.mxu0 %v6517
    %7463 = vmatmul.mubr.f32.gmra.mrb[0].mxu0 %v6509
    %v7464 = vpop.f32.mrb[0].mxu0
    %v7465 = vadd.f32 %v6487, %v7464
    %v7466 = vpop.f32.mrb[0].mxu0
    %v7467 = vadd.f32 %v6491, %v7466
    %7468 = vdwg.mxu0
    %7469 = vmatprep.subr.mxu0 %v5197
    %7470 = vmatpush1.msra.mxu0 %v5196
    %7471 = vmatprep.subr.mxu0 %v5201
    %7472 = vmatpush1.msra.mxu0 %v5200
    %7473 = vmatprep.subr.mxu0 %v5205
    %7474 = vmatpush1.msra.mxu0 %v5204
    %7475 = vmatprep.subr.mxu0 %v5209
    %7476 = vmatpush1.msra.mxu0 %v5208
    %7477 = vmatprep.subr.mxu0 %v5213
    %7478 = vmatpush1.msra.mxu0 %v5212
    %7479 = vmatprep.subr.mxu0 %v5217
    %7480 = vmatpush1.msra.mxu0 %v5216
    %7481 = vmatprep.subr.mxu0 %v5221
    %7482 = vmatpush1.msra.mxu0 %v5220
    %7483 = vmatprep.subr.mxu0 %v5225
    %7484 = vmatpush1.msra.mxu0 %v5224
    %7485 = vmatprep.subr.mxu0 %v5229
    %7486 = vmatpush1.msra.mxu0 %v5228
    %7487 = vmatprep.subr.mxu0 %v5233
    %7488 = vmatpush1.msra.mxu0 %v5232
    %7489 = vmatprep.subr.mxu0 %v5237
    %7490 = vmatpush1.msra.mxu0 %v5236
    %7491 = vmatprep.subr.mxu0 %v5241
    %7492 = vmatpush1.msra.mxu0 %v5240
    %7493 = vmatprep.subr.mxu0 %v5245
    %7494 = vmatpush1.msra.mxu0 %v5244
    %7495 = vmatprep.subr.mxu0 %v5249
    %7496 = vmatpush1.msra.mxu0 %v5248
    %7497 = vmatprep.subr.mxu0 %v5253
    %7498 = vmatpush1.msra.mxu0 %v5252
    %7499 = vmatprep.subr.mxu0 %v5257
    %7500 = vmatpush1.msra.mxu0 %v5256
    %7501 = vmatprep.subr.mxu0 %v5261
    %7502 = vmatpush1.msra.mxu0 %v5260
    %7503 = vmatprep.subr.mxu0 %v5265
    %7504 = vmatpush1.msra.mxu0 %v5264
    %7505 = vmatprep.subr.mxu0 %v5269
    %7506 = vmatpush1.msra.mxu0 %v5268
    %7507 = vmatprep.subr.mxu0 %v5273
    %7508 = vmatpush1.msra.mxu0 %v5272
    %7509 = vmatprep.subr.mxu0 %v5277
    %7510 = vmatpush1.msra.mxu0 %v5276
    %7511 = vmatprep.subr.mxu0 %v5281
    %7512 = vmatpush1.msra.mxu0 %v5280
    %7513 = vmatprep.subr.mxu0 %v5285
    %7514 = vmatpush1.msra.mxu0 %v5284
    %7515 = vmatprep.subr.mxu0 %v5289
    %7516 = vmatpush1.msra.mxu0 %v5288
    %7517 = vmatprep.subr.mxu0 %v5293
    %7518 = vmatpush1.msra.mxu0 %v5292
    %7519 = vmatprep.subr.mxu0 %v5297
    %7520 = vmatpush1.msra.mxu0 %v5296
    %7521 = vmatprep.subr.mxu0 %v5301
    %7522 = vmatpush1.msra.mxu0 %v5300
    %7523 = vmatprep.subr.mxu0 %v5305
    %7524 = vmatpush1.msra.mxu0 %v5304
    %7525 = vmatprep.subr.mxu0 %v5309
    %7526 = vmatpush1.msra.mxu0 %v5308
    %7527 = vmatprep.subr.mxu0 %v5313
    %7528 = vmatpush1.msra.mxu0 %v5312
    %7529 = vmatprep.subr.mxu0 %v5317
    %7530 = vmatpush1.msra.mxu0 %v5316
    %7531 = vmatprep.subr.mxu0 %v5321
    %7532 = vmatpush1.msra.mxu0 %v5320
    %7533 = vmatprep.mubr.f32.mxu0 %v6518
    %7534 = vmatmul.mubr.f32.gmra.mrb[0].mxu0 %v6516
    %v7535 = vpop.f32.mrb[0].mxu0
    %v7536 = vadd.f32 %v7465, %v7535
    %v7537 = vpop.f32.mrb[0].mxu0
    %v7538 = vadd.f32 %v7467, %v7537
    %7539 = vdwg.mxu0
    %7540 = vmatprep.subr.mxu0 %v5325
    %7541 = vmatpush1.msra.mxu0 %v5324
    %7542 = vmatprep.subr.mxu0 %v5329
    %7543 = vmatpush1.msra.mxu0 %v5328
    %7544 = vmatprep.subr.mxu0 %v5333
    %7545 = vmatpush1.msra.mxu0 %v5332
    %7546 = vmatprep.subr.mxu0 %v5337
    %7547 = vmatpush1.msra.mxu0 %v5336
    %7548 = vmatprep.subr.mxu0 %v5341
    %7549 = vmatpush1.msra.mxu0 %v5340
    %7550 = vmatprep.subr.mxu0 %v5345
    %7551 = vmatpush1.msra.mxu0 %v5344
    %7552 = vmatprep.subr.mxu0 %v5349
    %7553 = vmatpush1.msra.mxu0 %v5348
    %7554 = vmatprep.subr.mxu0 %v5353
    %7555 = vmatpush1.msra.mxu0 %v5352
    %7556 = vmatprep.subr.mxu0 %v5357
    %7557 = vmatpush1.msra.mxu0 %v5356
    %7558 = vmatprep.subr.mxu0 %v5361
    %7559 = vmatpush1.msra.mxu0 %v5360
    %7560 = vmatprep.subr.mxu0 %v5365
    %7561 = vmatpush1.msra.mxu0 %v5364
    %7562 = vmatprep.subr.mxu0 %v5369
    %7563 = vmatpush1.msra.mxu0 %v5368
    %7564 = vmatprep.subr.mxu0 %v5373
    %7565 = vmatpush1.msra.mxu0 %v5372
    %7566 = vmatprep.subr.mxu0 %v5377
    %7567 = vmatpush1.msra.mxu0 %v5376
    %7568 = vmatprep.subr.mxu0 %v5381
    %7569 = vmatpush1.msra.mxu0 %v5380
    %7570 = vmatprep.subr.mxu0 %v5385
    %7571 = vmatpush1.msra.mxu0 %v5384
    %7572 = vmatprep.subr.mxu0 %v5389
    %7573 = vmatpush1.msra.mxu0 %v5388
    %7574 = vmatprep.subr.mxu0 %v5393
    %7575 = vmatpush1.msra.mxu0 %v5392
    %7576 = vmatprep.subr.mxu0 %v5397
    %7577 = vmatpush1.msra.mxu0 %v5396
    %7578 = vmatprep.subr.mxu0 %v5401
    %7579 = vmatpush1.msra.mxu0 %v5400
    %7580 = vmatprep.subr.mxu0 %v5405
    %7581 = vmatpush1.msra.mxu0 %v5404
    %7582 = vmatprep.subr.mxu0 %v5409
    %7583 = vmatpush1.msra.mxu0 %v5408
    %7584 = vmatprep.subr.mxu0 %v5413
    %7585 = vmatpush1.msra.mxu0 %v5412
    %7586 = vmatprep.subr.mxu0 %v5417
    %7587 = vmatpush1.msra.mxu0 %v5416
    %7588 = vmatprep.subr.mxu0 %v5421
    %7589 = vmatpush1.msra.mxu0 %v5420
    %7590 = vmatprep.subr.mxu0 %v5425
    %7591 = vmatpush1.msra.mxu0 %v5424
    %7592 = vmatprep.subr.mxu0 %v5429
    %7593 = vmatpush1.msra.mxu0 %v5428
    %7594 = vmatprep.subr.mxu0 %v5433
    %7595 = vmatpush1.msra.mxu0 %v5432
    %7596 = vmatprep.subr.mxu0 %v5437
    %7597 = vmatpush1.msra.mxu0 %v5436
    %7598 = vmatprep.subr.mxu0 %v5441
    %7599 = vmatpush1.msra.mxu0 %v5440
    %7600 = vmatprep.subr.mxu0 %v5445
    %7601 = vmatpush1.msra.mxu0 %v5444
    %7602 = vmatprep.subr.mxu0 %v5449
    %7603 = vmatpush1.msra.mxu0 %v5448
    %7604 = vmatprep.mubr.f32.mxu0 %v6534
    %7605 = vmatmul.mubr.f32.gmra.mrb[0].mxu0 %v6526
    %v7606 = vpop.f32.mrb[0].mxu0
    %v7607 = vadd.f32 %v7536, %v7606
    %v7608 = vpop.f32.mrb[0].mxu0
    %v7609 = vadd.f32 %v7538, %v7608
    %7610 = vdwg.mxu0
    %7611 = vmatprep.subr.mxu0 %v5453
    %7612 = vmatpush1.msra.mxu0 %v5452
    %7613 = vmatprep.subr.mxu0 %v5457
    %7614 = vmatpush1.msra.mxu0 %v5456
    %7615 = vmatprep.subr.mxu0 %v5461
    %7616 = vmatpush1.msra.mxu0 %v5460
    %7617 = vmatprep.subr.mxu0 %v5465
    %7618 = vmatpush1.msra.mxu0 %v5464
    %7619 = vmatprep.subr.mxu0 %v5469
    %7620 = vmatpush1.msra.mxu0 %v5468
    %7621 = vmatprep.subr.mxu0 %v5473
    %7622 = vmatpush1.msra.mxu0 %v5472
    %7623 = vmatprep.subr.mxu0 %v5477
    %7624 = vmatpush1.msra.mxu0 %v5476
    %7625 = vmatprep.subr.mxu0 %v5481
    %7626 = vmatpush1.msra.mxu0 %v5480
    %7627 = vmatprep.subr.mxu0 %v5485
    %7628 = vmatpush1.msra.mxu0 %v5484
    %7629 = vmatprep.subr.mxu0 %v5489
    %7630 = vmatpush1.msra.mxu0 %v5488
    %7631 = vmatprep.subr.mxu0 %v5493
    %7632 = vmatpush1.msra.mxu0 %v5492
    %7633 = vmatprep.subr.mxu0 %v5497
    %7634 = vmatpush1.msra.mxu0 %v5496
    %7635 = vmatprep.subr.mxu0 %v5501
    %7636 = vmatpush1.msra.mxu0 %v5500
    %7637 = vmatprep.subr.mxu0 %v5505
    %7638 = vmatpush1.msra.mxu0 %v5504
    %7639 = vmatprep.subr.mxu0 %v5509
    %7640 = vmatpush1.msra.mxu0 %v5508
    %7641 = vmatprep.subr.mxu0 %v5513
    %7642 = vmatpush1.msra.mxu0 %v5512
    %7643 = vmatprep.subr.mxu0 %v5517
    %7644 = vmatpush1.msra.mxu0 %v5516
    %7645 = vmatprep.subr.mxu0 %v5521
    %7646 = vmatpush1.msra.mxu0 %v5520
    %7647 = vmatprep.subr.mxu0 %v5525
    %7648 = vmatpush1.msra.mxu0 %v5524
    %7649 = vmatprep.subr.mxu0 %v5529
    %7650 = vmatpush1.msra.mxu0 %v5528
    %7651 = vmatprep.subr.mxu0 %v5533
    %7652 = vmatpush1.msra.mxu0 %v5532
    %7653 = vmatprep.subr.mxu0 %v5537
    %7654 = vmatpush1.msra.mxu0 %v5536
    %7655 = vmatprep.subr.mxu0 %v5541
    %7656 = vmatpush1.msra.mxu0 %v5540
    %7657 = vmatprep.subr.mxu0 %v5545
    %7658 = vmatpush1.msra.mxu0 %v5544
    %7659 = vmatprep.subr.mxu0 %v5549
    %7660 = vmatpush1.msra.mxu0 %v5548
    %7661 = vmatprep.subr.mxu0 %v5553
    %7662 = vmatpush1.msra.mxu0 %v5552
    %7663 = vmatprep.subr.mxu0 %v5557
    %7664 = vmatpush1.msra.mxu0 %v5556
    %7665 = vmatprep.subr.mxu0 %v5561
    %7666 = vmatpush1.msra.mxu0 %v5560
    %7667 = vmatprep.subr.mxu0 %v5565
    %7668 = vmatpush1.msra.mxu0 %v5564
    %7669 = vmatprep.subr.mxu0 %v5569
    %7670 = vmatpush1.msra.mxu0 %v5568
    %7671 = vmatprep.subr.mxu0 %v5573
    %7672 = vmatpush1.msra.mxu0 %v5572
    %7673 = vmatprep.subr.mxu0 %v5577
    %7674 = vmatpush1.msra.mxu0 %v5576
    %7675 = vmatprep.mubr.f32.mxu0 %v6535
    %7676 = vmatmul.mubr.f32.gmra.mrb[0].mxu0 %v6533
    %v7677 = vpop.f32.mrb[0].mxu0
    %v7678 = vadd.f32 %v7607, %v7677
    %v7679 = vpop.f32.mrb[0].mxu0
    %v7680 = vadd.f32 %v7609, %v7679
    %7681 = vdwg.mxu0
    %7682 = vmatprep.subr.mxu0 %v5581
    %7683 = vmatpush1.msra.mxu0 %v5580
    %7684 = vmatprep.subr.mxu0 %v5585
    %7685 = vmatpush1.msra.mxu0 %v5584
    %7686 = vmatprep.subr.mxu0 %v5589
    %7687 = vmatpush1.msra.mxu0 %v5588
    %7688 = vmatprep.subr.mxu0 %v5593
    %7689 = vmatpush1.msra.mxu0 %v5592
    %7690 = vmatprep.subr.mxu0 %v5597
    %7691 = vmatpush1.msra.mxu0 %v5596
    %7692 = vmatprep.subr.mxu0 %v5601
    %7693 = vmatpush1.msra.mxu0 %v5600
    %7694 = vmatprep.subr.mxu0 %v5605
    %7695 = vmatpush1.msra.mxu0 %v5604
    %7696 = vmatprep.subr.mxu0 %v5609
    %7697 = vmatpush1.msra.mxu0 %v5608
    %7698 = vmatprep.subr.mxu0 %v5613
    %7699 = vmatpush1.msra.mxu0 %v5612
    %7700 = vmatprep.subr.mxu0 %v5617
    %7701 = vmatpush1.msra.mxu0 %v5616
    %7702 = vmatprep.subr.mxu0 %v5621
    %7703 = vmatpush1.msra.mxu0 %v5620
    %7704 = vmatprep.subr.mxu0 %v5625
    %7705 = vmatpush1.msra.mxu0 %v5624
    %7706 = vmatprep.subr.mxu0 %v5629
    %7707 = vmatpush1.msra.mxu0 %v5628
    %7708 = vmatprep.subr.mxu0 %v5633
    %7709 = vmatpush1.msra.mxu0 %v5632
    %7710 = vmatprep.subr.mxu0 %v5637
    %7711 = vmatpush1.msra.mxu0 %v5636
    %7712 = vmatprep.subr.mxu0 %v5641
    %7713 = vmatpush1.msra.mxu0 %v5640
    %7714 = vmatprep.subr.mxu0 %v5645
    %7715 = vmatpush1.msra.mxu0 %v5644
    %7716 = vmatprep.subr.mxu0 %v5649
    %7717 = vmatpush1.msra.mxu0 %v5648
    %7718 = vmatprep.subr.mxu0 %v5653
    %7719 = vmatpush1.msra.mxu0 %v5652
    %7720 = vmatprep.subr.mxu0 %v5657
    %7721 = vmatpush1.msra.mxu0 %v5656
    %7722 = vmatprep.subr.mxu0 %v5661
    %7723 = vmatpush1.msra.mxu0 %v5660
    %7724 = vmatprep.subr.mxu0 %v5665
    %7725 = vmatpush1.msra.mxu0 %v5664
    %7726 = vmatprep.subr.mxu0 %v5669
    %7727 = vmatpush1.msra.mxu0 %v5668
    %7728 = vmatprep.subr.mxu0 %v5673
    %7729 = vmatpush1.msra.mxu0 %v5672
    %7730 = vmatprep.subr.mxu0 %v5677
    %7731 = vmatpush1.msra.mxu0 %v5676
    %7732 = vmatprep.subr.mxu0 %v5681
    %7733 = vmatpush1.msra.mxu0 %v5680
    %7734 = vmatprep.subr.mxu0 %v5685
    %7735 = vmatpush1.msra.mxu0 %v5684
    %7736 = vmatprep.subr.mxu0 %v5689
    %7737 = vmatpush1.msra.mxu0 %v5688
    %7738 = vmatprep.subr.mxu0 %v5693
    %7739 = vmatpush1.msra.mxu0 %v5692
    %7740 = vmatprep.subr.mxu0 %v5697
    %7741 = vmatpush1.msra.mxu0 %v5696
    %7742 = vmatprep.subr.mxu0 %v5701
    %7743 = vmatpush1.msra.mxu0 %v5700
    %7744 = vmatprep.subr.mxu0 %v5705
    %7745 = vmatpush1.msra.mxu0 %v5704
    %7746 = vmatprep.mubr.f32.mxu0 %v6551
    %7747 = vmatmul.mubr.f32.gmra.mrb[0].mxu0 %v6543
    %v7748 = vpop.f32.mrb[0].mxu0
    %v7749 = vadd.f32 %v7678, %v7748
    %v7750 = vpop.f32.mrb[0].mxu0
    %v7751 = vadd.f32 %v7680, %v7750
    %7752 = vdwg.mxu0
    %7753 = vmatprep.subr.mxu0 %v5709
    %7754 = vmatpush1.msra.mxu0 %v5708
    %7755 = vmatprep.subr.mxu0 %v5713
    %7756 = vmatpush1.msra.mxu0 %v5712
    %7757 = vmatprep.subr.mxu0 %v5717
    %7758 = vmatpush1.msra.mxu0 %v5716
    %7759 = vmatprep.subr.mxu0 %v5721
    %7760 = vmatpush1.msra.mxu0 %v5720
    %7761 = vmatprep.subr.mxu0 %v5725
    %7762 = vmatpush1.msra.mxu0 %v5724
    %7763 = vmatprep.subr.mxu0 %v5729
    %7764 = vmatpush1.msra.mxu0 %v5728
    %7765 = vmatprep.subr.mxu0 %v5733
    %7766 = vmatpush1.msra.mxu0 %v5732
    %7767 = vmatprep.subr.mxu0 %v5737
    %7768 = vmatpush1.msra.mxu0 %v5736
    %7769 = vmatprep.subr.mxu0 %v5741
    %7770 = vmatpush1.msra.mxu0 %v5740
    %7771 = vmatprep.subr.mxu0 %v5745
    %7772 = vmatpush1.msra.mxu0 %v5744
    %7773 = vmatprep.subr.mxu0 %v5749
    %7774 = vmatpush1.msra.mxu0 %v5748
    %7775 = vmatprep.subr.mxu0 %v5753
    %7776 = vmatpush1.msra.mxu0 %v5752
    %7777 = vmatprep.subr.mxu0 %v5757
    %7778 = vmatpush1.msra.mxu0 %v5756
    %7779 = vmatprep.subr.mxu0 %v5761
    %7780 = vmatpush1.msra.mxu0 %v5760
    %7781 = vmatprep.subr.mxu0 %v5765
    %7782 = vmatpush1.msra.mxu0 %v5764
    %7783 = vmatprep.subr.mxu0 %v5769
    %7784 = vmatpush1.msra.mxu0 %v5768
    %7785 = vmatprep.subr.mxu0 %v5773
    %7786 = vmatpush1.msra.mxu0 %v5772
    %7787 = vmatprep.subr.mxu0 %v5777
    %7788 = vmatpush1.msra.mxu0 %v5776
    %7789 = vmatprep.subr.mxu0 %v5781
    %7790 = vmatpush1.msra.mxu0 %v5780
    %7791 = vmatprep.subr.mxu0 %v5785
    %7792 = vmatpush1.msra.mxu0 %v5784
    %7793 = vmatprep.subr.mxu0 %v5789
    %7794 = vmatpush1.msra.mxu0 %v5788
    %7795 = vmatprep.subr.mxu0 %v5793
    %7796 = vmatpush1.msra.mxu0 %v5792
    %7797 = vmatprep.subr.mxu0 %v5797
    %7798 = vmatpush1.msra.mxu0 %v5796
    %7799 = vmatprep.subr.mxu0 %v5801
    %7800 = vmatpush1.msra.mxu0 %v5800
    %7801 = vmatprep.subr.mxu0 %v5805
    %7802 = vmatpush1.msra.mxu0 %v5804
    %7803 = vmatprep.subr.mxu0 %v5809
    %7804 = vmatpush1.msra.mxu0 %v5808
    %7805 = vmatprep.subr.mxu0 %v5813
    %7806 = vmatpush1.msra.mxu0 %v5812
    %7807 = vmatprep.subr.mxu0 %v5817
    %7808 = vmatpush1.msra.mxu0 %v5816
    %7809 = vmatprep.subr.mxu0 %v5821
    %7810 = vmatpush1.msra.mxu0 %v5820
    %7811 = vmatprep.subr.mxu0 %v5825
    %7812 = vmatpush1.msra.mxu0 %v5824
    %7813 = vmatprep.subr.mxu0 %v5829
    %7814 = vmatpush1.msra.mxu0 %v5828
    %7815 = vmatprep.subr.mxu0 %v5833
    %7816 = vmatpush1.msra.mxu0 %v5832
    %7817 = vmatprep.mubr.f32.mxu0 %v6552
    %7818 = vmatmul.mubr.f32.gmra.mrb[0].mxu0 %v6550
    %v7819 = vpop.f32.mrb[0].mxu0
    %v7820 = vadd.f32 %v7749, %v7819
    %v7821 = vpop.f32.mrb[0].mxu0
    %v7822 = vadd.f32 %v7751, %v7821
    %7823 = vdwg.mxu0
    %7824 = vmatprep.subr.mxu0 %v5837
    %7825 = vmatpush1.msra.mxu0 %v5836
    %7826 = vmatprep.subr.mxu0 %v5841
    %7827 = vmatpush1.msra.mxu0 %v5840
    %7828 = vmatprep.subr.mxu0 %v5845
    %7829 = vmatpush1.msra.mxu0 %v5844
    %7830 = vmatprep.subr.mxu0 %v5849
    %7831 = vmatpush1.msra.mxu0 %v5848
    %7832 = vmatprep.subr.mxu0 %v5853
    %7833 = vmatpush1.msra.mxu0 %v5852
    %7834 = vmatprep.subr.mxu0 %v5857
    %7835 = vmatpush1.msra.mxu0 %v5856
    %7836 = vmatprep.subr.mxu0 %v5861
    %7837 = vmatpush1.msra.mxu0 %v5860
    %7838 = vmatprep.subr.mxu0 %v5865
    %7839 = vmatpush1.msra.mxu0 %v5864
    %7840 = vmatprep.subr.mxu0 %v5869
    %7841 = vmatpush1.msra.mxu0 %v5868
    %7842 = vmatprep.subr.mxu0 %v5873
    %7843 = vmatpush1.msra.mxu0 %v5872
    %7844 = vmatprep.subr.mxu0 %v5877
    %7845 = vmatpush1.msra.mxu0 %v5876
    %7846 = vmatprep.subr.mxu0 %v5881
    %7847 = vmatpush1.msra.mxu0 %v5880
    %7848 = vmatprep.subr.mxu0 %v5885
    %7849 = vmatpush1.msra.mxu0 %v5884
    %7850 = vmatprep.subr.mxu0 %v5889
    %7851 = vmatpush1.msra.mxu0 %v5888
    %7852 = vmatprep.subr.mxu0 %v5893
    %7853 = vmatpush1.msra.mxu0 %v5892
    %7854 = vmatprep.subr.mxu0 %v5897
    %7855 = vmatpush1.msra.mxu0 %v5896
    %7856 = vmatprep.subr.mxu0 %v5901
    %7857 = vmatpush1.msra.mxu0 %v5900
    %7858 = vmatprep.subr.mxu0 %v5905
    %7859 = vmatpush1.msra.mxu0 %v5904
    %7860 = vmatprep.subr.mxu0 %v5909
    %7861 = vmatpush1.msra.mxu0 %v5908
    %7862 = vmatprep.subr.mxu0 %v5913
    %7863 = vmatpush1.msra.mxu0 %v5912
    %7864 = vmatprep.subr.mxu0 %v5917
    %7865 = vmatpush1.msra.mxu0 %v5916
    %7866 = vmatprep.subr.mxu0 %v5921
    %7867 = vmatpush1.msra.mxu0 %v5920
    %7868 = vmatprep.subr.mxu0 %v5925
    %7869 = vmatpush1.msra.mxu0 %v5924
    %7870 = vmatprep.subr.mxu0 %v5929
    %7871 = vmatpush1.msra.mxu0 %v5928
    %7872 = vmatprep.subr.mxu0 %v5933
    %7873 = vmatpush1.msra.mxu0 %v5932
    %7874 = vmatprep.subr.mxu0 %v5937
    %7875 = vmatpush1.msra.mxu0 %v5936
    %7876 = vmatprep.subr.mxu0 %v5941
    %7877 = vmatpush1.msra.mxu0 %v5940
    %7878 = vmatprep.subr.mxu0 %v5945
    %7879 = vmatpush1.msra.mxu0 %v5944
    %7880 = vmatprep.subr.mxu0 %v5949
    %7881 = vmatpush1.msra.mxu0 %v5948
    %7882 = vmatprep.subr.mxu0 %v5953
    %7883 = vmatpush1.msra.mxu0 %v5952
    %7884 = vmatprep.subr.mxu0 %v5957
    %7885 = vmatpush1.msra.mxu0 %v5956
    %7886 = vmatprep.subr.mxu0 %v5961
    %7887 = vmatpush1.msra.mxu0 %v5960
    %7888 = vmatprep.mubr.f32.mxu0 %v6568
    %7889 = vmatmul.mubr.f32.gmra.mrb[0].mxu0 %v6560
    %v7890 = vpop.f32.mrb[0].mxu0
    %v7891 = vadd.f32 %v7820, %v7890
    %v7892 = vpop.f32.mrb[0].mxu0
    %v7893 = vadd.f32 %v7822, %v7892
    %7894 = vdwg.mxu0
    %7895 = vmatprep.subr.mxu0 %v5965
    %7896 = vmatpush1.msra.mxu0 %v5964
    %7897 = vmatprep.subr.mxu0 %v5969
    %7898 = vmatpush1.msra.mxu0 %v5968
    %7899 = vmatprep.subr.mxu0 %v5973
    %7900 = vmatpush1.msra.mxu0 %v5972
    %7901 = vmatprep.subr.mxu0 %v5977
    %7902 = vmatpush1.msra.mxu0 %v5976
    %7903 = vmatprep.subr.mxu0 %v5981
    %7904 = vmatpush1.msra.mxu0 %v5980
    %7905 = vmatprep.subr.mxu0 %v5985
    %7906 = vmatpush1.msra.mxu0 %v5984
    %7907 = vmatprep.subr.mxu0 %v5989
    %7908 = vmatpush1.msra.mxu0 %v5988
    %7909 = vmatprep.subr.mxu0 %v5993
    %7910 = vmatpush1.msra.mxu0 %v5992
    %7911 = vmatprep.subr.mxu0 %v5997
    %7912 = vmatpush1.msra.mxu0 %v5996
    %7913 = vmatprep.subr.mxu0 %v6001
    %7914 = vmatpush1.msra.mxu0 %v6000
    %7915 = vmatprep.subr.mxu0 %v6005
    %7916 = vmatpush1.msra.mxu0 %v6004
    %7917 = vmatprep.subr.mxu0 %v6009
    %7918 = vmatpush1.msra.mxu0 %v6008
    %7919 = vmatprep.subr.mxu0 %v6013
    %7920 = vmatpush1.msra.mxu0 %v6012
    %7921 = vmatprep.subr.mxu0 %v6017
    %7922 = vmatpush1.msra.mxu0 %v6016
    %7923 = vmatprep.subr.mxu0 %v6021
    %7924 = vmatpush1.msra.mxu0 %v6020
    %7925 = vmatprep.subr.mxu0 %v6025
    %7926 = vmatpush1.msra.mxu0 %v6024
    %7927 = vmatprep.subr.mxu0 %v6029
    %7928 = vmatpush1.msra.mxu0 %v6028
    %7929 = vmatprep.subr.mxu0 %v6033
    %7930 = vmatpush1.msra.mxu0 %v6032
    %7931 = vmatprep.subr.mxu0 %v6037
    %7932 = vmatpush1.msra.mxu0 %v6036
    %7933 = vmatprep.subr.mxu0 %v6041
    %7934 = vmatpush1.msra.mxu0 %v6040
    %7935 = vmatprep.subr.mxu0 %v6045
    %7936 = vmatpush1.msra.mxu0 %v6044
    %7937 = vmatprep.subr.mxu0 %v6049
    %7938 = vmatpush1.msra.mxu0 %v6048
    %7939 = vmatprep.subr.mxu0 %v6053
    %7940 = vmatpush1.msra.mxu0 %v6052
    %7941 = vmatprep.subr.mxu0 %v6057
    %7942 = vmatpush1.msra.mxu0 %v6056
    %7943 = vmatprep.subr.mxu0 %v6061
    %7944 = vmatpush1.msra.mxu0 %v6060
    %7945 = vmatprep.subr.mxu0 %v6065
    %7946 = vmatpush1.msra.mxu0 %v6064
    %7947 = vmatprep.subr.mxu0 %v6069
    %7948 = vmatpush1.msra.mxu0 %v6068
    %7949 = vmatprep.subr.mxu0 %v6073
    %7950 = vmatpush1.msra.mxu0 %v6072
    %7951 = vmatprep.subr.mxu0 %v6077
    %7952 = vmatpush1.msra.mxu0 %v6076
    %7953 = vmatprep.subr.mxu0 %v6081
    %7954 = vmatpush1.msra.mxu0 %v6080
    %7955 = vmatprep.subr.mxu0 %v6085
    %7956 = vmatpush1.msra.mxu0 %v6084
    %7957 = vmatprep.subr.mxu0 %v6089
    %7958 = vmatpush1.msra.mxu0 %v6088
    %7959 = vmatprep.mubr.f32.mxu0 %v6569
    %7960 = vmatmul.mubr.f32.gmra.mrb[0].mxu0 %v6567
    %v7961 = vpop.f32.mrb[0].mxu0
    %v7962 = vadd.f32 %v7891, %v7961
    %v7963 = vpop.f32.mrb[0].mxu0
    %v7964 = vadd.f32 %v7893, %v7963
    %7965 = vdwg.mxu0
    %7966 = vmatprep.subr.mxu0 %v6093
    %7967 = vmatpush1.msra.mxu0 %v6092
    %7968 = vmatprep.subr.mxu0 %v6097
    %7969 = vmatpush1.msra.mxu0 %v6096
    %7970 = vmatprep.subr.mxu0 %v6101
    %7971 = vmatpush1.msra.mxu0 %v6100
    %7972 = vmatprep.subr.mxu0 %v6105
    %7973 = vmatpush1.msra.mxu0 %v6104
    %7974 = vmatprep.subr.mxu0 %v6109
    %7975 = vmatpush1.msra.mxu0 %v6108
    %7976 = vmatprep.subr.mxu0 %v6113
    %7977 = vmatpush1.msra.mxu0 %v6112
    %7978 = vmatprep.subr.mxu0 %v6117
    %7979 = vmatpush1.msra.mxu0 %v6116
    %7980 = vmatprep.subr.mxu0 %v6121
    %7981 = vmatpush1.msra.mxu0 %v6120
    %7982 = vmatprep.subr.mxu0 %v6125
    %7983 = vmatpush1.msra.mxu0 %v6124
    %7984 = vmatprep.subr.mxu0 %v6129
    %7985 = vmatpush1.msra.mxu0 %v6128
    %7986 = vmatprep.subr.mxu0 %v6133
    %7987 = vmatpush1.msra.mxu0 %v6132
    %7988 = vmatprep.subr.mxu0 %v6137
    %7989 = vmatpush1.msra.mxu0 %v6136
    %7990 = vmatprep.subr.mxu0 %v6141
    %7991 = vmatpush1.msra.mxu0 %v6140
    %7992 = vmatprep.subr.mxu0 %v6145
    %7993 = vmatpush1.msra.mxu0 %v6144
    %7994 = vmatprep.subr.mxu0 %v6149
    %7995 = vmatpush1.msra.mxu0 %v6148
    %7996 = vmatprep.subr.mxu0 %v6153
    %7997 = vmatpush1.msra.mxu0 %v6152
    %7998 = vmatprep.subr.mxu0 %v6157
    %7999 = vmatpush1.msra.mxu0 %v6156
    %8000 = vmatprep.subr.mxu0 %v6161
    %8001 = vmatpush1.msra.mxu0 %v6160
    %8002 = vmatprep.subr.mxu0 %v6165
    %8003 = vmatpush1.msra.mxu0 %v6164
    %8004 = vmatprep.subr.mxu0 %v6169
    %8005 = vmatpush1.msra.mxu0 %v6168
    %8006 = vmatprep.subr.mxu0 %v6173
    %8007 = vmatpush1.msra.mxu0 %v6172
    %8008 = vmatprep.subr.mxu0 %v6177
    %8009 = vmatpush1.msra.mxu0 %v6176
    %8010 = vmatprep.subr.mxu0 %v6181
    %8011 = vmatpush1.msra.mxu0 %v6180
    %8012 = vmatprep.subr.mxu0 %v6185
    %8013 = vmatpush1.msra.mxu0 %v6184
    %8014 = vmatprep.subr.mxu0 %v6189
    %8015 = vmatpush1.msra.mxu0 %v6188
    %8016 = vmatprep.subr.mxu0 %v6193
    %8017 = vmatpush1.msra.mxu0 %v6192
    %8018 = vmatprep.subr.mxu0 %v6197
    %8019 = vmatpush1.msra.mxu0 %v6196
    %8020 = vmatprep.subr.mxu0 %v6201
    %8021 = vmatpush1.msra.mxu0 %v6200
    %8022 = vmatprep.subr.mxu0 %v6205
    %8023 = vmatpush1.msra.mxu0 %v6204
    %8024 = vmatprep.subr.mxu0 %v6209
    %8025 = vmatpush1.msra.mxu0 %v6208
    %8026 = vmatprep.subr.mxu0 %v6213
    %8027 = vmatpush1.msra.mxu0 %v6212
    %8028 = vmatprep.subr.mxu0 %v6217
    %8029 = vmatpush1.msra.mxu0 %v6216
    %8030 = vmatprep.mubr.f32.mxu0 %v6585
    %8031 = vmatmul.mubr.f32.gmra.mrb[0].mxu0 %v6577
    %v8032 = vpop.f32.mrb[0].mxu0
    %v8033 = vadd.f32 %v7962, %v8032
    %v8034 = vpop.f32.mrb[0].mxu0
    %v8035 = vadd.f32 %v7964, %v8034
    %8036 = vdwg.mxu0
    %8037 = vmatprep.subr.mxu0 %v6221
    %8038 = vmatpush1.msra.mxu0 %v6220
    %8039 = vmatprep.subr.mxu0 %v6225
    %8040 = vmatpush1.msra.mxu0 %v6224
    %8041 = vmatprep.subr.mxu0 %v6229
    %8042 = vmatpush1.msra.mxu0 %v6228
    %8043 = vmatprep.subr.mxu0 %v6233
    %8044 = vmatpush1.msra.mxu0 %v6232
    %8045 = vmatprep.subr.mxu0 %v6237
    %8046 = vmatpush1.msra.mxu0 %v6236
    %8047 = vmatprep.subr.mxu0 %v6241
    %8048 = vmatpush1.msra.mxu0 %v6240
    %8049 = vmatprep.subr.mxu0 %v6245
    %8050 = vmatpush1.msra.mxu0 %v6244
    %8051 = vmatprep.subr.mxu0 %v6249
    %8052 = vmatpush1.msra.mxu0 %v6248
    %8053 = vmatprep.subr.mxu0 %v6253
    %8054 = vmatpush1.msra.mxu0 %v6252
    %8055 = vmatprep.subr.mxu0 %v6257
    %8056 = vmatpush1.msra.mxu0 %v6256
    %8057 = vmatprep.subr.mxu0 %v6261
    %8058 = vmatpush1.msra.mxu0 %v6260
    %8059 = vmatprep.subr.mxu0 %v6265
    %8060 = vmatpush1.msra.mxu0 %v6264
    %8061 = vmatprep.subr.mxu0 %v6269
    %8062 = vmatpush1.msra.mxu0 %v6268
    %8063 = vmatprep.subr.mxu0 %v6273
    %8064 = vmatpush1.msra.mxu0 %v6272
    %8065 = vmatprep.subr.mxu0 %v6277
    %8066 = vmatpush1.msra.mxu0 %v6276
    %8067 = vmatprep.subr.mxu0 %v6281
    %8068 = vmatpush1.msra.mxu0 %v6280
    %8069 = vmatprep.subr.mxu0 %v6285
    %8070 = vmatpush1.msra.mxu0 %v6284
    %8071 = vmatprep.subr.mxu0 %v6289
    %8072 = vmatpush1.msra.mxu0 %v6288
    %8073 = vmatprep.subr.mxu0 %v6293
    %8074 = vmatpush1.msra.mxu0 %v6292
    %8075 = vmatprep.subr.mxu0 %v6297
    %8076 = vmatpush1.msra.mxu0 %v6296
    %8077 = vmatprep.subr.mxu0 %v6301
    %8078 = vmatpush1.msra.mxu0 %v6300
    %8079 = vmatprep.subr.mxu0 %v6305
    %8080 = vmatpush1.msra.mxu0 %v6304
    %8081 = vmatprep.subr.mxu0 %v6309
    %8082 = vmatpush1.msra.mxu0 %v6308
    %8083 = vmatprep.subr.mxu0 %v6313
    %8084 = vmatpush1.msra.mxu0 %v6312
    %8085 = vmatprep.subr.mxu0 %v6317
    %8086 = vmatpush1.msra.mxu0 %v6316
    %8087 = vmatprep.subr.mxu0 %v6321
    %8088 = vmatpush1.msra.mxu0 %v6320
    %8089 = vmatprep.subr.mxu0 %v6325
    %8090 = vmatpush1.msra.mxu0 %v6324
    %8091 = vmatprep.subr.mxu0 %v6329
    %8092 = vmatpush1.msra.mxu0 %v6328
    %8093 = vmatprep.subr.mxu0 %v6333
    %8094 = vmatpush1.msra.mxu0 %v6332
    %8095 = vmatprep.subr.mxu0 %v6337
    %8096 = vmatpush1.msra.mxu0 %v6336
    %8097 = vmatprep.subr.mxu0 %v6341
    %8098 = vmatpush1.msra.mxu0 %v6340
    %8099 = vmatprep.subr.mxu0 %v6345
    %8100 = vmatpush1.msra.mxu0 %v6344
    %8101 = vmatprep.mubr.f32.mxu0 %v6586
    %8102 = vmatmul.mubr.f32.gmra.mrb[0].mxu0 %v6584
    %v8103 = vpop.f32.mrb[0].mxu0
    %v8104 = vadd.f32 %v8033, %v8103
    %v8105 = vpop.f32.mrb[0].mxu0
    %v8106 = vadd.f32 %v8035, %v8105
    %8107 = vdwg.mxu0
    %8108 = vmatprep.subr.mxu0 %v6349
    %8109 = vmatpush1.msra.mxu0 %v6348
    %8110 = vmatprep.subr.mxu0 %v6353
    %8111 = vmatpush1.msra.mxu0 %v6352
    %8112 = vmatprep.subr.mxu0 %v6357
    %8113 = vmatpush1.msra.mxu0 %v6356
    %8114 = vmatprep.subr.mxu0 %v6361
    %8115 = vmatpush1.msra.mxu0 %v6360
    %8116 = vmatprep.subr.mxu0 %v6365
    %8117 = vmatpush1.msra.mxu0 %v6364
    %8118 = vmatprep.subr.mxu0 %v6369
    %8119 = vmatpush1.msra.mxu0 %v6368
    %8120 = vmatprep.subr.mxu0 %v6373
    %8121 = vmatpush1.msra.mxu0 %v6372
    %8122 = vmatprep.subr.mxu0 %v6377
    %8123 = vmatpush1.msra.mxu0 %v6376
    %8124 = vmatprep.subr.mxu0 %v6381
    %8125 = vmatpush1.msra.mxu0 %v6380
    %8126 = vmatprep.subr.mxu0 %v6385
    %8127 = vmatpush1.msra.mxu0 %v6384
    %8128 = vmatprep.subr.mxu0 %v6389
    %8129 = vmatpush1.msra.mxu0 %v6388
    %8130 = vmatprep.subr.mxu0 %v6393
    %8131 = vmatpush1.msra.mxu0 %v6392
    %8132 = vmatprep.subr.mxu0 %v6397
    %8133 = vmatpush1.msra.mxu0 %v6396
    %8134 = vmatprep.subr.mxu0 %v6401
    %8135 = vmatpush1.msra.mxu0 %v6400
    %8136 = vmatprep.subr.mxu0 %v6405
    %8137 = vmatpush1.msra.mxu0 %v6404
    %8138 = vmatprep.subr.mxu0 %v6409
    %8139 = vmatpush1.msra.mxu0 %v6408
    %8140 = vmatprep.subr.mxu0 %v6413
    %8141 = vmatpush1.msra.mxu0 %v6412
    %8142 = vmatprep.subr.mxu0 %v6417
    %8143 = vmatpush1.msra.mxu0 %v6416
    %8144 = vmatprep.subr.mxu0 %v6421
    %8145 = vmatpush1.msra.mxu0 %v6420
    %8146 = vmatprep.subr.mxu0 %v6425
    %8147 = vmatpush1.msra.mxu0 %v6424
    %8148 = vmatprep.subr.mxu0 %v6429
    %8149 = vmatpush1.msra.mxu0 %v6428
    %8150 = vmatprep.subr.mxu0 %v6433
    %8151 = vmatpush1.msra.mxu0 %v6432
    %8152 = vmatprep.subr.mxu0 %v6437
    %8153 = vmatpush1.msra.mxu0 %v6436
    %8154 = vmatprep.subr.mxu0 %v6441
    %8155 = vmatpush1.msra.mxu0 %v6440
    %8156 = vmatprep.subr.mxu0 %v6445
    %8157 = vmatpush1.msra.mxu0 %v6444
    %8158 = vmatprep.subr.mxu0 %v6449
    %8159 = vmatpush1.msra.mxu0 %v6448
    %8160 = vmatprep.subr.mxu0 %v6453
    %8161 = vmatpush1.msra.mxu0 %v6452
    %8162 = vmatprep.subr.mxu0 %v6457
    %8163 = vmatpush1.msra.mxu0 %v6456
    %8164 = vmatprep.subr.mxu0 %v6461
    %8165 = vmatpush1.msra.mxu0 %v6460
    %8166 = vmatprep.subr.mxu0 %v6465
    %8167 = vmatpush1.msra.mxu0 %v6464
    %8168 = vmatprep.subr.mxu0 %v6469
    %8169 = vmatpush1.msra.mxu0 %v6468
    %8170 = vmatprep.subr.mxu0 %v6473
    %8171 = vmatpush1.msra.mxu0 %v6472
    %8172 = vmatprep.mubr.f32.mxu0 %v6594
    %8173 = vmatmul.mubr.f32.gmra.mrb[0].mxu0 %v6593
    %v8174 = vpop.f32.mrb[0].mxu0
    %v8175 = vadd.f32 %v8104, %v8174
    %v8176 = vpop.f32.mrb[0].mxu0
    %v8177 = vadd.f32 %v8106, %v8176
    %8178 = vdwg.mxu0
    %v8179 = vmax.f32 %v7394, 0.0
    %v8180 = vmax.f32 %v7396, 0.0
    %v8181 = vmax.f32 %v8175, 0.0
    %v8182 = vmax.f32 %v8177, 0.0
    %v8183 = vld [vmem:[#allocation18] sm:$0xff]
    %v8184 = vld [vmem:[#allocation18 + $0x8] sm:$0xff]
    %v8185 = vld [vmem:[#allocation18 + $0x10] sm:$0xff]
    %v8186 = vld [vmem:[#allocation18 + $0x18] sm:$0xff]
    %v8187 = vld [vmem:[#allocation18 + $0x20] sm:$0xff]
    %v8188 = vld [vmem:[#allocation18 + $0x28] sm:$0xff]
    %v8189 = vld [vmem:[#allocation18 + $0x30] sm:$0xff]
    %v8190 = vld [vmem:[#allocation18 + $0x38] sm:$0xff]
    %v8191 = vld [vmem:[#allocation18 + $0x40] sm:$0xff]
    %v8192 = vld [vmem:[#allocation18 + $0x48] sm:$0xff]
    %v8193 = vld [vmem:[#allocation18 + $0x50] sm:$0xff]
    %v8194 = vld [vmem:[#allocation18 + $0x58] sm:$0xff]
    %v8195 = vld [vmem:[#allocation18 + $0x60] sm:$0xff]
    %v8196 = vld [vmem:[#allocation18 + $0x68] sm:$0xff]
    %v8197 = vld [vmem:[#allocation18 + $0x70] sm:$0xff]
    %v8198 = vld [vmem:[#allocation18 + $0x78] sm:$0xff]
    %v8199 = vld [vmem:[#allocation18 + $0x80] sm:$0xff]
    %v8200 = vld [vmem:[#allocation18 + $0x88] sm:$0xff]
    %v8201 = vld [vmem:[#allocation18 + $0x90] sm:$0xff]
    %v8202 = vld [vmem:[#allocation18 + $0x98] sm:$0xff]
    %v8203 = vld [vmem:[#allocation18 + $0xa0] sm:$0xff]
    %v8204 = vld [vmem:[#allocation18 + $0xa8] sm:$0xff]
    %v8205 = vld [vmem:[#allocation18 + $0xb0] sm:$0xff]
    %v8206 = vld [vmem:[#allocation18 + $0xb8] sm:$0xff]
    %v8207 = vld [vmem:[#allocation18 + $0xc0] sm:$0xff]
    %v8208 = vld [vmem:[#allocation18 + $0xc8] sm:$0xff]
    %v8209 = vld [vmem:[#allocation18 + $0xd0] sm:$0xff]
    %v8210 = vld [vmem:[#allocation18 + $0xd8] sm:$0xff]
    %v8211 = vld [vmem:[#allocation18 + $0xe0] sm:$0xff]
    %v8212 = vld [vmem:[#allocation18 + $0xe8] sm:$0xff]
    %v8213 = vld [vmem:[#allocation18 + $0xf0] sm:$0xff]
    %v8214 = vld [vmem:[#allocation18 + $0xf8] sm:$0xff]
    %v8215 = vld [vmem:[#allocation18 + $0x100] sm:$0xff]
    %v8216 = vld [vmem:[#allocation18 + $0x108] sm:$0xff]
    %v8217 = vld [vmem:[#allocation18 + $0x110] sm:$0xff]
    %v8218 = vld [vmem:[#allocation18 + $0x118] sm:$0xff]
    %v8219 = vld [vmem:[#allocation18 + $0x120] sm:$0xff]
    %v8220 = vld [vmem:[#allocation18 + $0x128] sm:$0xff]
    %v8221 = vld [vmem:[#allocation18 + $0x130] sm:$0xff]
    %v8222 = vld [vmem:[#allocation18 + $0x138] sm:$0xff]
    %v8223 = vld [vmem:[#allocation18 + $0x140] sm:$0xff]
    %v8224 = vld [vmem:[#allocation18 + $0x148] sm:$0xff]
    %v8225 = vld [vmem:[#allocation18 + $0x150] sm:$0xff]
    %v8226 = vld [vmem:[#allocation18 + $0x158] sm:$0xff]
    %v8227 = vld [vmem:[#allocation18 + $0x160] sm:$0xff]
    %v8228 = vld [vmem:[#allocation18 + $0x168] sm:$0xff]
    %v8229 = vld [vmem:[#allocation18 + $0x170] sm:$0xff]
    %v8230 = vld [vmem:[#allocation18 + $0x178] sm:$0xff]
    %v8231 = vld [vmem:[#allocation18 + $0x180] sm:$0xff]
    %v8232 = vld [vmem:[#allocation18 + $0x188] sm:$0xff]
    %v8233 = vld [vmem:[#allocation18 + $0x190] sm:$0xff]
    %v8234 = vld [vmem:[#allocation18 + $0x198] sm:$0xff]
    %v8235 = vld [vmem:[#allocation18 + $0x1a0] sm:$0xff]
    %v8236 = vld [vmem:[#allocation18 + $0x1a8] sm:$0xff]
    %v8237 = vld [vmem:[#allocation18 + $0x1b0] sm:$0xff]
    %v8238 = vld [vmem:[#allocation18 + $0x1b8] sm:$0xff]
    %v8239 = vld [vmem:[#allocation18 + $0x1c0] sm:$0xff]
    %v8240 = vld [vmem:[#allocation18 + $0x1c8] sm:$0xff]
    %v8241 = vld [vmem:[#allocation18 + $0x1d0] sm:$0xff]
    %v8242 = vld [vmem:[#allocation18 + $0x1d8] sm:$0xff]
    %v8243 = vld [vmem:[#allocation18 + $0x1e0] sm:$0xff]
    %v8244 = vld [vmem:[#allocation18 + $0x1e8] sm:$0xff]
    %v8245 = vld [vmem:[#allocation18 + $0x1f0] sm:$0xff]
    %v8246 = vld [vmem:[#allocation18 + $0x1f8] sm:$0xff]
    %v8247 = vld [vmem:[#allocation18 + $0x200] sm:$0xff]
    %v8248 = vld [vmem:[#allocation18 + $0x208] sm:$0xff]
    %v8249 = vld [vmem:[#allocation18 + $0x210] sm:$0xff]
    %v8250 = vld [vmem:[#allocation18 + $0x218] sm:$0xff]
    %v8251 = vld [vmem:[#allocation18 + $0x220] sm:$0xff]
    %v8252 = vld [vmem:[#allocation18 + $0x228] sm:$0xff]
    %v8253 = vld [vmem:[#allocation18 + $0x230] sm:$0xff]
    %v8254 = vld [vmem:[#allocation18 + $0x238] sm:$0xff]
    %v8255 = vld [vmem:[#allocation18 + $0x240] sm:$0xff]
    %v8256 = vld [vmem:[#allocation18 + $0x248] sm:$0xff]
    %v8257 = vld [vmem:[#allocation18 + $0x250] sm:$0xff]
    %v8258 = vld [vmem:[#allocation18 + $0x258] sm:$0xff]
    %v8259 = vld [vmem:[#allocation18 + $0x260] sm:$0xff]
    %v8260 = vld [vmem:[#allocation18 + $0x268] sm:$0xff]
    %v8261 = vld [vmem:[#allocation18 + $0x270] sm:$0xff]
    %v8262 = vld [vmem:[#allocation18 + $0x278] sm:$0xff]
    %v8263 = vld [vmem:[#allocation18 + $0x280] sm:$0xff]
    %v8264 = vld [vmem:[#allocation18 + $0x288] sm:$0xff]
    %v8265 = vld [vmem:[#allocation18 + $0x290] sm:$0xff]
    %v8266 = vld [vmem:[#allocation18 + $0x298] sm:$0xff]
    %v8267 = vld [vmem:[#allocation18 + $0x2a0] sm:$0xff]
    %v8268 = vld [vmem:[#allocation18 + $0x2a8] sm:$0xff]
    %v8269 = vld [vmem:[#allocation18 + $0x2b0] sm:$0xff]
    %v8270 = vld [vmem:[#allocation18 + $0x2b8] sm:$0xff]
    %v8271 = vld [vmem:[#allocation18 + $0x2c0] sm:$0xff]
    %v8272 = vld [vmem:[#allocation18 + $0x2c8] sm:$0xff]
    %v8273 = vld [vmem:[#allocation18 + $0x2d0] sm:$0xff]
    %v8274 = vld [vmem:[#allocation18 + $0x2d8] sm:$0xff]
    %v8275 = vld [vmem:[#allocation18 + $0x2e0] sm:$0xff]
    %v8276 = vld [vmem:[#allocation18 + $0x2e8] sm:$0xff]
    %v8277 = vld [vmem:[#allocation18 + $0x2f0] sm:$0xff]
    %v8278 = vld [vmem:[#allocation18 + $0x2f8] sm:$0xff]
    %v8279 = vld [vmem:[#allocation18 + $0x300] sm:$0xff]
    %v8280 = vld [vmem:[#allocation18 + $0x308] sm:$0xff]
    %v8281 = vld [vmem:[#allocation18 + $0x310] sm:$0xff]
    %v8282 = vld [vmem:[#allocation18 + $0x318] sm:$0xff]
    %v8283 = vld [vmem:[#allocation18 + $0x320] sm:$0xff]
    %v8284 = vld [vmem:[#allocation18 + $0x328] sm:$0xff]
    %v8285 = vld [vmem:[#allocation18 + $0x330] sm:$0xff]
    %v8286 = vld [vmem:[#allocation18 + $0x338] sm:$0xff]
    %v8287 = vld [vmem:[#allocation18 + $0x340] sm:$0xff]
    %v8288 = vld [vmem:[#allocation18 + $0x348] sm:$0xff]
    %v8289 = vld [vmem:[#allocation18 + $0x350] sm:$0xff]
    %v8290 = vld [vmem:[#allocation18 + $0x358] sm:$0xff]
    %v8291 = vld [vmem:[#allocation18 + $0x360] sm:$0xff]
    %v8292 = vld [vmem:[#allocation18 + $0x368] sm:$0xff]
    %v8293 = vld [vmem:[#allocation18 + $0x370] sm:$0xff]
    %v8294 = vld [vmem:[#allocation18 + $0x378] sm:$0xff]
    %v8295 = vld [vmem:[#allocation18 + $0x380] sm:$0xff]
    %v8296 = vld [vmem:[#allocation18 + $0x388] sm:$0xff]
    %v8297 = vld [vmem:[#allocation18 + $0x390] sm:$0xff]
    %v8298 = vld [vmem:[#allocation18 + $0x398] sm:$0xff]
    %v8299 = vld [vmem:[#allocation18 + $0x3a0] sm:$0xff]
    %v8300 = vld [vmem:[#allocation18 + $0x3a8] sm:$0xff]
    %v8301 = vld [vmem:[#allocation18 + $0x3b0] sm:$0xff]
    %v8302 = vld [vmem:[#allocation18 + $0x3b8] sm:$0xff]
    %v8303 = vld [vmem:[#allocation18 + $0x3c0] sm:$0xff]
    %v8304 = vld [vmem:[#allocation18 + $0x3c8] sm:$0xff]
    %v8305 = vld [vmem:[#allocation18 + $0x3d0] sm:$0xff]
    %v8306 = vld [vmem:[#allocation18 + $0x3d8] sm:$0xff]
    %v8307 = vld [vmem:[#allocation18 + $0x3e0] sm:$0xff]
    %v8308 = vld [vmem:[#allocation18 + $0x3e8] sm:$0xff]
    %v8309 = vld [vmem:[#allocation18 + $0x3f0] sm:$0xff]
    %v8310 = vld [vmem:[#allocation18 + $0x3f8] sm:$0xff]
    %v8311 = vld [vmem:[#allocation18 + $0x400] sm:$0xff]
    %v8312 = vld [vmem:[#allocation18 + $0x408] sm:$0xff]
    %v8313 = vld [vmem:[#allocation18 + $0x410] sm:$0xff]
    %v8314 = vld [vmem:[#allocation18 + $0x418] sm:$0xff]
    %v8315 = vld [vmem:[#allocation18 + $0x420] sm:$0xff]
    %v8316 = vld [vmem:[#allocation18 + $0x428] sm:$0xff]
    %v8317 = vld [vmem:[#allocation18 + $0x430] sm:$0xff]
    %v8318 = vld [vmem:[#allocation18 + $0x438] sm:$0xff]
    %v8319 = vld [vmem:[#allocation18 + $0x440] sm:$0xff]
    %v8320 = vld [vmem:[#allocation18 + $0x448] sm:$0xff]
    %v8321 = vld [vmem:[#allocation18 + $0x450] sm:$0xff]
    %v8322 = vld [vmem:[#allocation18 + $0x458] sm:$0xff]
    %v8323 = vld [vmem:[#allocation18 + $0x460] sm:$0xff]
    %v8324 = vld [vmem:[#allocation18 + $0x468] sm:$0xff]
    %v8325 = vld [vmem:[#allocation18 + $0x470] sm:$0xff]
    %v8326 = vld [vmem:[#allocation18 + $0x478] sm:$0xff]
    %v8327 = vld [vmem:[#allocation18 + $0x480] sm:$0xff]
    %v8328 = vld [vmem:[#allocation18 + $0x488] sm:$0xff]
    %v8329 = vld [vmem:[#allocation18 + $0x490] sm:$0xff]
    %v8330 = vld [vmem:[#allocation18 + $0x498] sm:$0xff]
    %v8331 = vld [vmem:[#allocation18 + $0x4a0] sm:$0xff]
    %v8332 = vld [vmem:[#allocation18 + $0x4a8] sm:$0xff]
    %v8333 = vld [vmem:[#allocation18 + $0x4b0] sm:$0xff]
    %v8334 = vld [vmem:[#allocation18 + $0x4b8] sm:$0xff]
    %v8335 = vld [vmem:[#allocation18 + $0x4c0] sm:$0xff]
    %v8336 = vld [vmem:[#allocation18 + $0x4c8] sm:$0xff]
    %v8337 = vld [vmem:[#allocation18 + $0x4d0] sm:$0xff]
    %v8338 = vld [vmem:[#allocation18 + $0x4d8] sm:$0xff]
    %v8339 = vld [vmem:[#allocation18 + $0x4e0] sm:$0xff]
    %v8340 = vld [vmem:[#allocation18 + $0x4e8] sm:$0xff]
    %v8341 = vld [vmem:[#allocation18 + $0x4f0] sm:$0xff]
    %v8342 = vld [vmem:[#allocation18 + $0x4f8] sm:$0xff]
    %v8343 = vld [vmem:[#allocation18 + $0x500] sm:$0xff]
    %v8344 = vld [vmem:[#allocation18 + $0x508] sm:$0xff]
    %v8345 = vld [vmem:[#allocation18 + $0x510] sm:$0xff]
    %v8346 = vld [vmem:[#allocation18 + $0x518] sm:$0xff]
    %v8347 = vld [vmem:[#allocation18 + $0x520] sm:$0xff]
    %v8348 = vld [vmem:[#allocation18 + $0x528] sm:$0xff]
    %v8349 = vld [vmem:[#allocation18 + $0x530] sm:$0xff]
    %v8350 = vld [vmem:[#allocation18 + $0x538] sm:$0xff]
    %v8351 = vld [vmem:[#allocation18 + $0x540] sm:$0xff]
    %v8352 = vld [vmem:[#allocation18 + $0x548] sm:$0xff]
    %v8353 = vld [vmem:[#allocation18 + $0x550] sm:$0xff]
    %v8354 = vld [vmem:[#allocation18 + $0x558] sm:$0xff]
    %v8355 = vld [vmem:[#allocation18 + $0x560] sm:$0xff]
    %v8356 = vld [vmem:[#allocation18 + $0x568] sm:$0xff]
    %v8357 = vld [vmem:[#allocation18 + $0x570] sm:$0xff]
    %v8358 = vld [vmem:[#allocation18 + $0x578] sm:$0xff]
    %v8359 = vld [vmem:[#allocation18 + $0x580] sm:$0xff]
    %v8360 = vld [vmem:[#allocation18 + $0x588] sm:$0xff]
    %v8361 = vld [vmem:[#allocation18 + $0x590] sm:$0xff]
    %v8362 = vld [vmem:[#allocation18 + $0x598] sm:$0xff]
    %v8363 = vld [vmem:[#allocation18 + $0x5a0] sm:$0xff]
    %v8364 = vld [vmem:[#allocation18 + $0x5a8] sm:$0xff]
    %v8365 = vld [vmem:[#allocation18 + $0x5b0] sm:$0xff]
    %v8366 = vld [vmem:[#allocation18 + $0x5b8] sm:$0xff]
    %v8367 = vld [vmem:[#allocation18 + $0x5c0] sm:$0xff]
    %v8368 = vld [vmem:[#allocation18 + $0x5c8] sm:$0xff]
    %v8369 = vld [vmem:[#allocation18 + $0x5d0] sm:$0xff]
    %v8370 = vld [vmem:[#allocation18 + $0x5d8] sm:$0xff]
    %v8371 = vld [vmem:[#allocation18 + $0x5e0] sm:$0xff]
    %v8372 = vld [vmem:[#allocation18 + $0x5e8] sm:$0xff]
    %v8373 = vld [vmem:[#allocation18 + $0x5f0] sm:$0xff]
    %v8374 = vld [vmem:[#allocation18 + $0x5f8] sm:$0xff]
    %v8375 = vld [vmem:[#allocation18 + $0x600] sm:$0xff]
    %v8376 = vld [vmem:[#allocation18 + $0x608] sm:$0xff]
    %v8377 = vld [vmem:[#allocation18 + $0x610] sm:$0xff]
    %v8378 = vld [vmem:[#allocation18 + $0x618] sm:$0xff]
    %v8379 = vld [vmem:[#allocation18 + $0x620] sm:$0xff]
    %v8380 = vld [vmem:[#allocation18 + $0x628] sm:$0xff]
    %v8381 = vld [vmem:[#allocation18 + $0x630] sm:$0xff]
    %v8382 = vld [vmem:[#allocation18 + $0x638] sm:$0xff]
    %v8383 = vld [vmem:[#allocation18 + $0x640] sm:$0xff]
    %v8384 = vld [vmem:[#allocation18 + $0x648] sm:$0xff]
    %v8385 = vld [vmem:[#allocation18 + $0x650] sm:$0xff]
    %v8386 = vld [vmem:[#allocation18 + $0x658] sm:$0xff]
    %v8387 = vld [vmem:[#allocation18 + $0x660] sm:$0xff]
    %v8388 = vld [vmem:[#allocation18 + $0x668] sm:$0xff]
    %v8389 = vld [vmem:[#allocation18 + $0x670] sm:$0xff]
    %v8390 = vld [vmem:[#allocation18 + $0x678] sm:$0xff]
    %v8391 = vld [vmem:[#allocation18 + $0x680] sm:$0xff]
    %v8392 = vld [vmem:[#allocation18 + $0x688] sm:$0xff]
    %v8393 = vld [vmem:[#allocation18 + $0x690] sm:$0xff]
    %v8394 = vld [vmem:[#allocation18 + $0x698] sm:$0xff]
    %v8395 = vld [vmem:[#allocation18 + $0x6a0] sm:$0xff]
    %v8396 = vld [vmem:[#allocation18 + $0x6a8] sm:$0xff]
    %v8397 = vld [vmem:[#allocation18 + $0x6b0] sm:$0xff]
    %v8398 = vld [vmem:[#allocation18 + $0x6b8] sm:$0xff]
    %v8399 = vld [vmem:[#allocation18 + $0x6c0] sm:$0xff]
    %v8400 = vld [vmem:[#allocation18 + $0x6c8] sm:$0xff]
    %v8401 = vld [vmem:[#allocation18 + $0x6d0] sm:$0xff]
    %v8402 = vld [vmem:[#allocation18 + $0x6d8] sm:$0xff]
    %v8403 = vld [vmem:[#allocation18 + $0x6e0] sm:$0xff]
    %v8404 = vld [vmem:[#allocation18 + $0x6e8] sm:$0xff]
    %v8405 = vld [vmem:[#allocation18 + $0x6f0] sm:$0xff]
    %v8406 = vld [vmem:[#allocation18 + $0x6f8] sm:$0xff]
    %v8407 = vld [vmem:[#allocation18 + $0x700] sm:$0xff]
    %v8408 = vld [vmem:[#allocation18 + $0x708] sm:$0xff]
    %v8409 = vld [vmem:[#allocation18 + $0x710] sm:$0xff]
    %v8410 = vld [vmem:[#allocation18 + $0x718] sm:$0xff]
    %v8411 = vld [vmem:[#allocation18 + $0x720] sm:$0xff]
    %v8412 = vld [vmem:[#allocation18 + $0x728] sm:$0xff]
    %v8413 = vld [vmem:[#allocation18 + $0x730] sm:$0xff]
    %v8414 = vld [vmem:[#allocation18 + $0x738] sm:$0xff]
    %v8415 = vld [vmem:[#allocation18 + $0x740] sm:$0xff]
    %v8416 = vld [vmem:[#allocation18 + $0x748] sm:$0xff]
    %v8417 = vld [vmem:[#allocation18 + $0x750] sm:$0xff]
    %v8418 = vld [vmem:[#allocation18 + $0x758] sm:$0xff]
    %v8419 = vld [vmem:[#allocation18 + $0x760] sm:$0xff]
    %v8420 = vld [vmem:[#allocation18 + $0x768] sm:$0xff]
    %v8421 = vld [vmem:[#allocation18 + $0x770] sm:$0xff]
    %v8422 = vld [vmem:[#allocation18 + $0x778] sm:$0xff]
    %v8423 = vld [vmem:[#allocation18 + $0x780] sm:$0xff]
    %v8424 = vld [vmem:[#allocation18 + $0x788] sm:$0xff]
    %v8425 = vld [vmem:[#allocation18 + $0x790] sm:$0xff]
    %v8426 = vld [vmem:[#allocation18 + $0x798] sm:$0xff]
    %v8427 = vld [vmem:[#allocation18 + $0x7a0] sm:$0xff]
    %v8428 = vld [vmem:[#allocation18 + $0x7a8] sm:$0xff]
    %v8429 = vld [vmem:[#allocation18 + $0x7b0] sm:$0xff]
    %v8430 = vld [vmem:[#allocation18 + $0x7b8] sm:$0xff]
    %v8431 = vld [vmem:[#allocation18 + $0x7c0] sm:$0xff]
    %v8432 = vld [vmem:[#allocation18 + $0x7c8] sm:$0xff]
    %v8433 = vld [vmem:[#allocation18 + $0x7d0] sm:$0xff]
    %v8434 = vld [vmem:[#allocation18 + $0x7d8] sm:$0xff]
    %v8435 = vld [vmem:[#allocation18 + $0x7e0] sm:$0xff]
    %v8436 = vld [vmem:[#allocation18 + $0x7e8] sm:$0xff]
    %v8437 = vld [vmem:[#allocation18 + $0x7f0] sm:$0xff]
    %v8438 = vld [vmem:[#allocation18 + $0x7f8] sm:$0xff]
    %v8439 = vld [vmem:[#allocation21] sm:$0xf]
    %v8441 = vlaneseq
    %v8442 = vshrl.u32 %v8441, 7
    %v8443 = vsub.s32 0, %v8442
    %v8444 = vrot.slane %v8439, %v8443
    %v8445 = vlaneseq
    %v8446 = vshrl.u32 %v8445, 7
    %v8447 = vsub.s32 1, %v8446
    %v8448 = vrot.slane %v8439, %v8447
    %v8449 = vlaneseq
    %v8450 = vshrl.u32 %v8449, 7
    %v8451 = vsub.s32 2, %v8450
    %v8452 = vrot.slane %v8439, %v8451
    %v8453 = vlaneseq
    %v8454 = vshrl.u32 %v8453, 7
    %v8455 = vsub.s32 3, %v8454
    %v8456 = vrot.slane %v8439, %v8455
    %8461 = vmatprep.subr.mxu0 %v8184
    %8462 = vmatpush1.msra.mxu0 %v8183
    %8463 = vmatprep.subr.mxu0 %v8188
    %8464 = vmatpush1.msra.mxu0 %v8187
    %8465 = vmatprep.subr.mxu0 %v8192
    %8466 = vmatpush1.msra.mxu0 %v8191
    %8467 = vmatprep.subr.mxu0 %v8196
    %8468 = vmatpush1.msra.mxu0 %v8195
    %8469 = vmatprep.subr.mxu0 %v8200
    %8470 = vmatpush1.msra.mxu0 %v8199
    %8471 = vmatprep.subr.mxu0 %v8204
    %8472 = vmatpush1.msra.mxu0 %v8203
    %8473 = vmatprep.subr.mxu0 %v8208
    %8474 = vmatpush1.msra.mxu0 %v8207
    %8475 = vmatprep.subr.mxu0 %v8212
    %8476 = vmatpush1.msra.mxu0 %v8211
    %8477 = vmatprep.subr.mxu0 %v8216
    %8478 = vmatpush1.msra.mxu0 %v8215
    %8479 = vmatprep.subr.mxu0 %v8220
    %8480 = vmatpush1.msra.mxu0 %v8219
    %8481 = vmatprep.subr.mxu0 %v8224
    %8482 = vmatpush1.msra.mxu0 %v8223
    %8483 = vmatprep.subr.mxu0 %v8228
    %8484 = vmatpush1.msra.mxu0 %v8227
    %8485 = vmatprep.subr.mxu0 %v8232
    %8486 = vmatpush1.msra.mxu0 %v8231
    %8487 = vmatprep.subr.mxu0 %v8236
    %8488 = vmatpush1.msra.mxu0 %v8235
    %8489 = vmatprep.subr.mxu0 %v8240
    %8490 = vmatpush1.msra.mxu0 %v8239
    %8491 = vmatprep.subr.mxu0 %v8244
    %8492 = vmatpush1.msra.mxu0 %v8243
    %8493 = vmatprep.subr.mxu0 %v8248
    %8494 = vmatpush1.msra.mxu0 %v8247
    %8495 = vmatprep.subr.mxu0 %v8252
    %8496 = vmatpush1.msra.mxu0 %v8251
    %8497 = vmatprep.subr.mxu0 %v8256
    %8498 = vmatpush1.msra.mxu0 %v8255
    %8499 = vmatprep.subr.mxu0 %v8260
    %8500 = vmatpush1.msra.mxu0 %v8259
    %8501 = vmatprep.subr.mxu0 %v8264
    %8502 = vmatpush1.msra.mxu0 %v8263
    %8503 = vmatprep.subr.mxu0 %v8268
    %8504 = vmatpush1.msra.mxu0 %v8267
    %8505 = vmatprep.subr.mxu0 %v8272
    %8506 = vmatpush1.msra.mxu0 %v8271
    %8507 = vmatprep.subr.mxu0 %v8276
    %8508 = vmatpush1.msra.mxu0 %v8275
    %8509 = vmatprep.subr.mxu0 %v8280
    %8510 = vmatpush1.msra.mxu0 %v8279
    %8511 = vmatprep.subr.mxu0 %v8284
    %8512 = vmatpush1.msra.mxu0 %v8283
    %8513 = vmatprep.subr.mxu0 %v8288
    %8514 = vmatpush1.msra.mxu0 %v8287
    %8515 = vmatprep.subr.mxu0 %v8292
    %8516 = vmatpush1.msra.mxu0 %v8291
    %8517 = vmatprep.subr.mxu0 %v8296
    %8518 = vmatpush1.msra.mxu0 %v8295
    %8519 = vmatprep.subr.mxu0 %v8300
    %8520 = vmatpush1.msra.mxu0 %v8299
    %8521 = vmatprep.subr.mxu0 %v8304
    %8522 = vmatpush1.msra.mxu0 %v8303
    %8523 = vmatprep.subr.mxu0 %v8308
    %8524 = vmatpush1.msra.mxu0 %v8307
    %8525 = vmatprep.mubr.f32.mxu0 %v8180
    %8526 = vmatmul.mubr.f32.gmra.mrb[0].mxu0 %v8179
    %v8527 = vpop.f32.mrb[0].mxu0
    %v8528 = vadd.f32 %v8444, %v8527
    %v8529 = vpop.f32.mrb[0].mxu0
    %v8530 = vadd.f32 %v8448, %v8529
    %8531 = vdwg.mxu0
    %8532 = vmatprep.subr.mxu0 %v8312
    %8533 = vmatpush1.msra.mxu0 %v8311
    %8534 = vmatprep.subr.mxu0 %v8316
    %8535 = vmatpush1.msra.mxu0 %v8315
    %8536 = vmatprep.subr.mxu0 %v8320
    %8537 = vmatpush1.msra.mxu0 %v8319
    %8538 = vmatprep.subr.mxu0 %v8324
    %8539 = vmatpush1.msra.mxu0 %v8323
    %8540 = vmatprep.subr.mxu0 %v8328
    %8541 = vmatpush1.msra.mxu0 %v8327
    %8542 = vmatprep.subr.mxu0 %v8332
    %8543 = vmatpush1.msra.mxu0 %v8331
    %8544 = vmatprep.subr.mxu0 %v8336
    %8545 = vmatpush1.msra.mxu0 %v8335
    %8546 = vmatprep.subr.mxu0 %v8340
    %8547 = vmatpush1.msra.mxu0 %v8339
    %8548 = vmatprep.subr.mxu0 %v8344
    %8549 = vmatpush1.msra.mxu0 %v8343
    %8550 = vmatprep.subr.mxu0 %v8348
    %8551 = vmatpush1.msra.mxu0 %v8347
    %8552 = vmatprep.subr.mxu0 %v8352
    %8553 = vmatpush1.msra.mxu0 %v8351
    %8554 = vmatprep.subr.mxu0 %v8356
    %8555 = vmatpush1.msra.mxu0 %v8355
    %8556 = vmatprep.subr.mxu0 %v8360
    %8557 = vmatpush1.msra.mxu0 %v8359
    %8558 = vmatprep.subr.mxu0 %v8364
    %8559 = vmatpush1.msra.mxu0 %v8363
    %8560 = vmatprep.subr.mxu0 %v8368
    %8561 = vmatpush1.msra.mxu0 %v8367
    %8562 = vmatprep.subr.mxu0 %v8372
    %8563 = vmatpush1.msra.mxu0 %v8371
    %8564 = vmatprep.subr.mxu0 %v8376
    %8565 = vmatpush1.msra.mxu0 %v8375
    %8566 = vmatprep.subr.mxu0 %v8380
    %8567 = vmatpush1.msra.mxu0 %v8379
    %8568 = vmatprep.subr.mxu0 %v8384
    %8569 = vmatpush1.msra.mxu0 %v8383
    %8570 = vmatprep.subr.mxu0 %v8388
    %8571 = vmatpush1.msra.mxu0 %v8387
    %8572 = vmatprep.subr.mxu0 %v8392
    %8573 = vmatpush1.msra.mxu0 %v8391
    %8574 = vmatprep.subr.mxu0 %v8396
    %8575 = vmatpush1.msra.mxu0 %v8395
    %8576 = vmatprep.subr.mxu0 %v8400
    %8577 = vmatpush1.msra.mxu0 %v8399
    %8578 = vmatprep.subr.mxu0 %v8404
    %8579 = vmatpush1.msra.mxu0 %v8403
    %8580 = vmatprep.subr.mxu0 %v8408
    %8581 = vmatpush1.msra.mxu0 %v8407
    %8582 = vmatprep.subr.mxu0 %v8412
    %8583 = vmatpush1.msra.mxu0 %v8411
    %8584 = vmatprep.subr.mxu0 %v8416
    %8585 = vmatpush1.msra.mxu0 %v8415
    %8586 = vmatprep.subr.mxu0 %v8420
    %8587 = vmatpush1.msra.mxu0 %v8419
    %8588 = vmatprep.subr.mxu0 %v8424
    %8589 = vmatpush1.msra.mxu0 %v8423
    %8590 = vmatprep.subr.mxu0 %v8428
    %8591 = vmatpush1.msra.mxu0 %v8427
    %8592 = vmatprep.subr.mxu0 %v8432
    %8593 = vmatpush1.msra.mxu0 %v8431
    %8594 = vmatprep.subr.mxu0 %v8436
    %8595 = vmatpush1.msra.mxu0 %v8435
    %8596 = vmatprep.mubr.f32.mxu0 %v8182
    %8597 = vmatmul.mubr.f32.gmra.mrb[0].mxu0 %v8181
    %v8598 = vpop.f32.mrb[0].mxu0
    %v8599 = vadd.f32 %v8528, %v8598
    %v8600 = vpop.f32.mrb[0].mxu0
    %v8601 = vadd.f32 %v8530, %v8600
    %8602 = vdwg.mxu0
    %8603 = vmatprep.subr.mxu0 %v8186
    %8604 = vmatpush1.msra.mxu0 %v8185
    %8605 = vmatprep.subr.mxu0 %v8190
    %8606 = vmatpush1.msra.mxu0 %v8189
    %8607 = vmatprep.subr.mxu0 %v8194
    %8608 = vmatpush1.msra.mxu0 %v8193
    %8609 = vmatprep.subr.mxu0 %v8198
    %8610 = vmatpush1.msra.mxu0 %v8197
    %8611 = vmatprep.subr.mxu0 %v8202
    %8612 = vmatpush1.msra.mxu0 %v8201
    %8613 = vmatprep.subr.mxu0 %v8206
    %8614 = vmatpush1.msra.mxu0 %v8205
    %8615 = vmatprep.subr.mxu0 %v8210
    %8616 = vmatpush1.msra.mxu0 %v8209
    %8617 = vmatprep.subr.mxu0 %v8214
    %8618 = vmatpush1.msra.mxu0 %v8213
    %8619 = vmatprep.subr.mxu0 %v8218
    %8620 = vmatpush1.msra.mxu0 %v8217
    %8621 = vmatprep.subr.mxu0 %v8222
    %8622 = vmatpush1.msra.mxu0 %v8221
    %8623 = vmatprep.subr.mxu0 %v8226
    %8624 = vmatpush1.msra.mxu0 %v8225
    %8625 = vmatprep.subr.mxu0 %v8230
    %8626 = vmatpush1.msra.mxu0 %v8229
    %8627 = vmatprep.subr.mxu0 %v8234
    %8628 = vmatpush1.msra.mxu0 %v8233
    %8629 = vmatprep.subr.mxu0 %v8238
    %8630 = vmatpush1.msra.mxu0 %v8237
    %8631 = vmatprep.subr.mxu0 %v8242
    %8632 = vmatpush1.msra.mxu0 %v8241
    %8633 = vmatprep.subr.mxu0 %v8246
    %8634 = vmatpush1.msra.mxu0 %v8245
    %8635 = vmatprep.subr.mxu0 %v8250
    %8636 = vmatpush1.msra.mxu0 %v8249
    %8637 = vmatprep.subr.mxu0 %v8254
    %8638 = vmatpush1.msra.mxu0 %v8253
    %8639 = vmatprep.subr.mxu0 %v8258
    %8640 = vmatpush1.msra.mxu0 %v8257
    %8641 = vmatprep.subr.mxu0 %v8262
    %8642 = vmatpush1.msra.mxu0 %v8261
    %8643 = vmatprep.subr.mxu0 %v8266
    %8644 = vmatpush1.msra.mxu0 %v8265
    %8645 = vmatprep.subr.mxu0 %v8270
    %8646 = vmatpush1.msra.mxu0 %v8269
    %8647 = vmatprep.subr.mxu0 %v8274
    %8648 = vmatpush1.msra.mxu0 %v8273
    %8649 = vmatprep.subr.mxu0 %v8278
    %8650 = vmatpush1.msra.mxu0 %v8277
    %8651 = vmatprep.subr.mxu0 %v8282
    %8652 = vmatpush1.msra.mxu0 %v8281
    %8653 = vmatprep.subr.mxu0 %v8286
    %8654 = vmatpush1.msra.mxu0 %v8285
    %8655 = vmatprep.subr.mxu0 %v8290
    %8656 = vmatpush1.msra.mxu0 %v8289
    %8657 = vmatprep.subr.mxu0 %v8294
    %8658 = vmatpush1.msra.mxu0 %v8293
    %8659 = vmatprep.subr.mxu0 %v8298
    %8660 = vmatpush1.msra.mxu0 %v8297
    %8661 = vmatprep.subr.mxu0 %v8302
    %8662 = vmatpush1.msra.mxu0 %v8301
    %8663 = vmatprep.subr.mxu0 %v8306
    %8664 = vmatpush1.msra.mxu0 %v8305
    %8665 = vmatprep.subr.mxu0 %v8310
    %8666 = vmatpush1.msra.mxu0 %v8309
    %8667 = vmatprep.mubr.f32.mxu0 %v8180
    %8668 = vmatmul.mubr.f32.gmra.mrb[0].mxu0 %v8179
    %v8669 = vpop.f32.mrb[0].mxu0
    %v8670 = vadd.f32 %v8452, %v8669
    %v8671 = vpop.f32.mrb[0].mxu0
    %v8672 = vadd.f32 %v8456, %v8671
    %8673 = vdwg.mxu0
    %8674 = vmatprep.subr.mxu0 %v8314
    %8675 = vmatpush1.msra.mxu0 %v8313
    %8676 = vmatprep.subr.mxu0 %v8318
    %8677 = vmatpush1.msra.mxu0 %v8317
    %8678 = vmatprep.subr.mxu0 %v8322
    %8679 = vmatpush1.msra.mxu0 %v8321
    %8680 = vmatprep.subr.mxu0 %v8326
    %8681 = vmatpush1.msra.mxu0 %v8325
    %8682 = vmatprep.subr.mxu0 %v8330
    %8683 = vmatpush1.msra.mxu0 %v8329
    %8684 = vmatprep.subr.mxu0 %v8334
    %8685 = vmatpush1.msra.mxu0 %v8333
    %8686 = vmatprep.subr.mxu0 %v8338
    %8687 = vmatpush1.msra.mxu0 %v8337
    %8688 = vmatprep.subr.mxu0 %v8342
    %8689 = vmatpush1.msra.mxu0 %v8341
    %8690 = vmatprep.subr.mxu0 %v8346
    %8691 = vmatpush1.msra.mxu0 %v8345
    %8692 = vmatprep.subr.mxu0 %v8350
    %8693 = vmatpush1.msra.mxu0 %v8349
    %8694 = vmatprep.subr.mxu0 %v8354
    %8695 = vmatpush1.msra.mxu0 %v8353
    %8696 = vmatprep.subr.mxu0 %v8358
    %8697 = vmatpush1.msra.mxu0 %v8357
    %8698 = vmatprep.subr.mxu0 %v8362
    %8699 = vmatpush1.msra.mxu0 %v8361
    %8700 = vmatprep.subr.mxu0 %v8366
    %8701 = vmatpush1.msra.mxu0 %v8365
    %8702 = vmatprep.subr.mxu0 %v8370
    %8703 = vmatpush1.msra.mxu0 %v8369
    %8704 = vmatprep.subr.mxu0 %v8374
    %8705 = vmatpush1.msra.mxu0 %v8373
    %8706 = vmatprep.subr.mxu0 %v8378
    %8707 = vmatpush1.msra.mxu0 %v8377
    %8708 = vmatprep.subr.mxu0 %v8382
    %8709 = vmatpush1.msra.mxu0 %v8381
    %8710 = vmatprep.subr.mxu0 %v8386
    %8711 = vmatpush1.msra.mxu0 %v8385
    %8712 = vmatprep.subr.mxu0 %v8390
    %8713 = vmatpush1.msra.mxu0 %v8389
    %8714 = vmatprep.subr.mxu0 %v8394
    %8715 = vmatpush1.msra.mxu0 %v8393
    %8716 = vmatprep.subr.mxu0 %v8398
    %8717 = vmatpush1.msra.mxu0 %v8397
    %8718 = vmatprep.subr.mxu0 %v8402
    %8719 = vmatpush1.msra.mxu0 %v8401
    %8720 = vmatprep.subr.mxu0 %v8406
    %8721 = vmatpush1.msra.mxu0 %v8405
    %8722 = vmatprep.subr.mxu0 %v8410
    %8723 = vmatpush1.msra.mxu0 %v8409
    %8724 = vmatprep.subr.mxu0 %v8414
    %8725 = vmatpush1.msra.mxu0 %v8413
    %8726 = vmatprep.subr.mxu0 %v8418
    %8727 = vmatpush1.msra.mxu0 %v8417
    %8728 = vmatprep.subr.mxu0 %v8422
    %8729 = vmatpush1.msra.mxu0 %v8421
    %8730 = vmatprep.subr.mxu0 %v8426
    %8731 = vmatpush1.msra.mxu0 %v8425
    %8732 = vmatprep.subr.mxu0 %v8430
    %8733 = vmatpush1.msra.mxu0 %v8429
    %8734 = vmatprep.subr.mxu0 %v8434
    %8735 = vmatpush1.msra.mxu0 %v8433
    %8736 = vmatprep.subr.mxu0 %v8438
    %8737 = vmatpush1.msra.mxu0 %v8437
    %8738 = vmatprep.mubr.f32.mxu0 %v8182
    %8739 = vmatmul.mubr.f32.gmra.mrb[0].mxu0 %v8181
    %v8740 = vpop.f32.mrb[0].mxu0
    %v8741 = vadd.f32 %v8670, %v8740
    %v8742 = vpop.f32.mrb[0].mxu0
    %v8743 = vadd.f32 %v8672, %v8742
    %8744 = vdwg.mxu0
    %v8745 = vld [vmem:[#allocation6] sm:$0x3]
    %v8746 = vld [vmem:[#allocation20] ss:$4 sm:$0xf]
    %8748 = vset.pattern.permute.xlu0 0
    %8749 = vperm.xlu0 %8748, %v8745
    %v8750 = vpop.permute.xlu0 %8749
    %v8753 = vlaneseq
    %v8754 = vshrl.u32 %v8753, 7
    %v8755 = vsub.s32 0, %v8754
    %v8756 = vrot.slane %v8746, %v8755
    %v8757 = vlaneseq
    %v8758 = vshrl.u32 %v8757, 7
    %v8759 = vsub.s32 1, %v8758
    %v8760 = vrot.slane %v8746, %v8759
    %v8761 = vlaneseq
    %v8762 = vshrl.u32 %v8761, 7
    %v8763 = vsub.s32 2, %v8762
    %v8764 = vrot.slane %v8746, %v8763
    %v8765 = vlaneseq
    %v8766 = vshrl.u32 %v8765, 7
    %v8767 = vsub.s32 3, %v8766
    %v8768 = vrot.slane %v8746, %v8767
    %v8773 = vmul.f32 %v8750, %v8756
    %v8774 = vmul.f32 %v8750, %v8760
    %v8775 = vmul.f32 %v8750, %v8764
    %v8776 = vmul.f32 %v8750, %v8768
    %v8777 = vadd.f32 %v8599, %v8773
    %v8778 = vadd.f32 %v8601, %v8774
    %v8779 = vadd.f32 %v8741, %v8775
    %v8780 = vadd.f32 %v8743, %v8776
    %s8781 = scalar_lea.vmem [#allocation20], 1
    %v8782 = vld [vmem:[%s8781] ss:$4 sm:$0xf]
    %8783 = vset.pattern.permute.xlu0 1
    %8784 = vperm.xlu0 %8783, %v8745
    %v8785 = vpop.permute.xlu0 %8784
    %v8788 = vlaneseq
    %v8789 = vshrl.u32 %v8788, 7
    %v8790 = vsub.s32 0, %v8789
    %v8791 = vrot.slane %v8782, %v8790
    %v8792 = vlaneseq
    %v8793 = vshrl.u32 %v8792, 7
    %v8794 = vsub.s32 1, %v8793
    %v8795 = vrot.slane %v8782, %v8794
    %v8796 = vlaneseq
    %v8797 = vshrl.u32 %v8796, 7
    %v8798 = vsub.s32 2, %v8797
    %v8799 = vrot.slane %v8782, %v8798
    %v8800 = vlaneseq
    %v8801 = vshrl.u32 %v8800, 7
    %v8802 = vsub.s32 3, %v8801
    %v8803 = vrot.slane %v8782, %v8802
    %v8808 = vmul.f32 %v8785, %v8791
    %v8809 = vmul.f32 %v8785, %v8795
    %v8810 = vmul.f32 %v8785, %v8799
    %v8811 = vmul.f32 %v8785, %v8803
    %v8812 = vadd.f32 %v8777, %v8808
    %v8813 = vadd.f32 %v8778, %v8809
    %v8814 = vadd.f32 %v8779, %v8810
    %v8815 = vadd.f32 %v8780, %v8811
    %s8816 = scalar_lea.vmem [#allocation20], 2
    %v8817 = vld [vmem:[%s8816] ss:$4 sm:$0xf]
    %8818 = vset.pattern.permute.xlu0 2
    %8819 = vperm.xlu0 %8818, %v8745
    %v8820 = vpop.permute.xlu0 %8819
    %v8823 = vlaneseq
    %v8824 = vshrl.u32 %v8823, 7
    %v8825 = vsub.s32 0, %v8824
    %v8826 = vrot.slane %v8817, %v8825
    %v8827 = vlaneseq
    %v8828 = vshrl.u32 %v8827, 7
    %v8829 = vsub.s32 1, %v8828
    %v8830 = vrot.slane %v8817, %v8829
    %v8831 = vlaneseq
    %v8832 = vshrl.u32 %v8831, 7
    %v8833 = vsub.s32 2, %v8832
    %v8834 = vrot.slane %v8817, %v8833
    %v8835 = vlaneseq
    %v8836 = vshrl.u32 %v8835, 7
    %v8837 = vsub.s32 3, %v8836
    %v8838 = vrot.slane %v8817, %v8837
    %v8843 = vmul.f32 %v8820, %v8826
    %v8844 = vmul.f32 %v8820, %v8830
    %v8845 = vmul.f32 %v8820, %v8834
    %v8846 = vmul.f32 %v8820, %v8838
    %v8847 = vadd.f32 %v8812, %v8843
    %v8848 = vadd.f32 %v8813, %v8844
    %v8849 = vadd.f32 %v8814, %v8845
    %v8850 = vadd.f32 %v8815, %v8846
    %v8851 = vmax.f32 %v8847, 0.0
    %v8852 = vmax.f32 %v8848, 0.0
    %v8853 = vmax.f32 %v8849, 0.0
    %v8854 = vmax.f32 %v8850, 0.0
    %v8859 = vcombine.low %v8851, %v8852
    %v8860 = vcombine.low %v8853, %v8854
    %v8862 = vunpack.c.l.s4 1983009808
    %v8863 = vunpack.c.0.s8 %v8862
    %v8864 = vlaneseq
    %v8865 = vshrl.u32 %v8864, 7
    %v8866 = vsub.s32 %v8863, %v8865
    %v8867 = vrot.slane %v8859, %v8866
    %v8869 = vunpack.c.l.s4 1983009808
    %v8870 = vunpack.c.0.s8 %v8869
    %v8871 = vlaneseq
    %v8872 = vshrl.u32 %v8871, 7
    %v8873 = vsub.s32 %v8870, %v8872
    %v8874 = vrot.slane %v8860, %v8873
    %v8875 = vcombine.low %v8867, %v8874
    %8877 = vst [vmem:[#allocation23] sm:$0xff] %v8875
    // Predicated region
    $region86: #{forward.1} parent=1 // pred_check
      _
    $region87: #{forward.1} parent=1 // pred_check_branch
      %8879 = sbr.rel (0) target = $region89
    $region88: #{forward.1} parent=1 // pred_region
      %s8881 = ssub.s32 128, 128
      %8882 = vsyncadd [#allocation8], %s8881
      %s8884 = sshll.u32 [#allocation23], 4
      %s8885 = int_to_ptr.vmem [resolvable:$true] %s8884
      %8887 = dma.vmem_to_hbm [thread:$0]  %s8885, 128, %s11, [#allocation8]
    $region89: #{forward.1} parent=1 // pred_fallthru
      _
    // Predicated region
    $region90: #{forward.1} parent=1 // pred_check
      _
    $region91: #{forward.1} parent=1 // pred_check_branch
      %8889 = sbr.rel (0) target = $region93
    $region92: #{forward.1} parent=1 // pred_region
      %8890 = dma.done [#allocation8], 128
    $region93: #{forward.1} parent=1 // pred_fallthru
      _
    %8891 = vsyncpa [#allocation7], 1
    %8892 = vsyncpa [#allocation10], 1
    %8893 = vsyncpa [#allocation13], 1
    %8894 = vsyncpa [#allocation16], 1
    %8895 = vsyncpa [#allocation19], 1
    %8896 = vsyncpa [#allocation22], 1
    %8897 = vsyncpa [#allocation8], 1

</llo_original>
